<compile_context>
chip_gen: v6e
topology: v6e:2x2x1
jax: 0.10.0
libtpu: 0.0.40
codegen_flags: <defaults>
</compile_context>

<pallas_src>
import numpy as np
import jax
import jax.numpy as jnp
from jax.experimental import pallas as pl
from jax.experimental.pallas import tpu as pltpu


# ----------------------------------------------------------------------------
# In-kernel layer helpers (only 2-D dots, broadcasts and elementwise ops)
# ----------------------------------------------------------------------------
def _conv_like(x, s_ref, w_ref, b_ref, act):
    """act( W_row @ concat_k(X @ S_k) + bias ) — Conv2d and ConvTranspose2d."""
    kk, hw, _ = s_ref.shape
    xb = x.astype(jnp.bfloat16)
    if hw == 1:
        # single input pixel: X @ S_k is an outer product -> broadcast multiply
        parts = [xb * s_ref[k] for k in range(kk)]                 # (cin, ohw)
    else:
        parts = [
            jnp.dot(xb, s_ref[k],
                    preferred_element_type=jnp.float32).astype(jnp.bfloat16)
            for k in range(kk)
        ]
    g = jnp.concatenate(parts, axis=0)                             # (kk*cin, ohw) bf16
    acc = jnp.dot(w_ref[...], g, preferred_element_type=jnp.float32)
    acc = acc + b_ref[...]                                         # f32 (cout,1) bcast
    if act == "relu":
        return jnp.maximum(acc, 0.0)
    return jnp.tanh(acc)


def _max_pool(x, s_ref):
    """max_k (X @ S_k): each S_k gathers one pooling-window element (exact)."""
    kk = s_ref.shape[0]
    xb = x.astype(jnp.bfloat16)
    out = jnp.dot(xb, s_ref[0], preferred_element_type=jnp.float32)
    for k in range(1, kk):
        out = jnp.maximum(
            out, jnp.dot(xb, s_ref[k], preferred_element_type=jnp.float32))
    return out


# ----------------------------------------------------------------------------
# The single fused kernel: whole autoencoder forward for ONE batch element
# ----------------------------------------------------------------------------
def _autoencoder_kernel(
        x_ref,
        e1s_ref, e1w_ref, e1b_ref, p1s_ref,
        e2s_ref, e2w_ref, e2b_ref, p2s_ref,
        d1s_ref, d1w_ref, d1b_ref,
        d2s_ref, d2w_ref, d2b_ref,
        d3s_ref, d3w_ref, d3b_ref,
        out_ref):
    x = x_ref[0]                                              # (3, 16*16) f32
    x = _conv_like(x, e1s_ref, e1w_ref, e1b_ref, "relu")      # Conv2d(3,16,3,s3,p1)+ReLU
    x = _max_pool(x, p1s_ref)                                 # MaxPool2d(2, s2)
    x = _conv_like(x, e2s_ref, e2w_ref, e2b_ref, "relu")      # Conv2d(16,8,3,s2,p1)+ReLU
    x = _max_pool(x, p2s_ref)                                 # MaxPool2d(2, s1)
    x = _conv_like(x, d1s_ref, d1w_ref, d1b_ref, "relu")      # ConvT(8,16,3,s2)+ReLU
    x = _conv_like(x, d2s_ref, d2w_ref, d2b_ref, "relu")      # ConvT(16,8,6,s3)+ReLU
    x = _conv_like(x, d3s_ref, d3w_ref, d3b_ref, "tanh")      # ConvT(8,3,2,s2)+Tanh
    out_ref[0] = x                                            # (3, 24*24) lane-dense


# ----------------------------------------------------------------------------
# One-time (init) construction of matmul-ready constants (batch-independent)
# ----------------------------------------------------------------------------
def _conv_mats(weight, bias, h, w, stride, padding):
    """Conv2d -> per-tap gather S_k and row-stacked weight W_row=[W_1|...|W_kk]."""
    weight = np.asarray(weight, dtype=np.float32)   # (Cout, Cin, KH, KW)
    bias = np.asarray(bias, dtype=np.float32)
    cout, cin, khs, kws = weight.shape
    out_h = (h + 2 * padding - khs) // stride + 1
    out_w = (w + 2 * padding - kws) // stride + 1
    kk = khs * kws
    s = np.zeros((kk, h * w, out_h * out_w), np.float32)
    w_row = np.zeros((cout, kk * cin), np.float32)
    for kh in range(khs):
        for kw in range(kws):
            k = kh * kws + kw
            for oh in range(out_h):
                ih = oh * stride + kh - padding
                if ih < 0 or ih >= h:
                    continue
                for ow in range(out_w):
                    iw = ow * stride + kw - padding
                    if iw < 0 or iw >= w:
                        continue
                    s[k, ih * w + iw, oh * out_w + ow] = 1.0
            w_row[:, k * cin:(k + 1) * cin] = weight[:, :, kh, kw]
    return s, w_row, bias.reshape(cout, 1), out_h, out_w


def _convT_mats(weight, bias, h, w, stride):
    """ConvTranspose2d (padding=0) -> per-tap scatter S_k and row-stacked W."""
    weight = np.asarray(weight, dtype=np.float32)   # (Cin, Cout, KH, KW)
    bias = np.asarray(bias, dtype=np.float32)
    cin, cout, khs, kws = weight.shape
    out_h = (h - 1) * stride + khs
    out_w = (w - 1) * stride + kws
    kk = khs * kws
    s = np.zeros((kk, h * w, out_h * out_w), np.float32)
    w_row = np.zeros((cout, kk * cin), np.float32)
    for kh in range(khs):
        for kw in range(kws):
            k = kh * kws + kw
            for ih in range(h):
                oh = ih * stride + kh
                for iw in range(w):
                    ow = iw * stride + kw
                    s[k, ih * w + iw, oh * out_w + ow] = 1.0
            w_row[:, k * cin:(k + 1) * cin] = weight[:, :, kh, kw].T
    return s, w_row, bias.reshape(cout, 1), out_h, out_w


def _pool_mats(h, w, k, stride):
    """MaxPool2d (padding=0) -> per-window-element gather matrices."""
    out_h = (h - k) // stride + 1
    out_w = (w - k) // stride + 1
    s = np.zeros((k * k, h * w, out_h * out_w), np.float32)
    for kh in range(k):
        for kw in range(k):
            t = kh * k + kw
            for oh in range(out_h):
                for ow in range(out_w):
                    s[t, (oh * stride + kh) * w + (ow * stride + kw),
                      oh * out_w + ow] = 1.0
    return s, out_h, out_w


def _conv_flops(s, w_row):
    kk, hw, ohw = s.shape
    cout, kcin = w_row.shape
    return kk * 2 * (kcin // kk) * hw * ohw + 2 * cout * kcin * ohw


def _pool_flops(s, channels):
    kk, hw, ohw = s.shape
    return kk * 2 * channels * hw * ohw


def build_operands(params, height, width):
    """Precompute kernel operands once (bf16 matmul operands, f32 biases)."""
    ops = []
    flops = 0
    h, w = height, width

    def add_conv(s, w_row, b):
        nonlocal flops
        flops += _conv_flops(s, w_row)
        ops.append(jnp.asarray(s, jnp.bfloat16))      # 0/1 -> exact in bf16
        ops.append(jnp.asarray(w_row, jnp.bfloat16))
        ops.append(jnp.asarray(b, jnp.float32))       # bias add stays f32

    def add_pool(s, channels):
        nonlocal flops
        flops += _pool_flops(s, channels)
        ops.append(jnp.asarray(s, jnp.bfloat16))

    # encoder
    s, wr, b, h, w = _conv_mats(params["enc1_w"], params["enc1_b"], h, w, 3, 1)
    add_conv(s, wr, b)
    s, h, w = _pool_mats(h, w, 2, 2)
    add_pool(s, 16)
    s, wr, b, h, w = _conv_mats(params["enc2_w"], params["enc2_b"], h, w, 2, 1)
    add_conv(s, wr, b)
    s, h, w = _pool_mats(h, w, 2, 1)
    add_pool(s, 8)
    # decoder
    s, wr, b, h, w = _convT_mats(params["dec1_w"], params["dec1_b"], h, w, 2)
    add_conv(s, wr, b)
    s, wr, b, h, w = _convT_mats(params["dec2_w"], params["dec2_b"], h, w, 3)
    add_conv(s, wr, b)
    s, wr, b, h, w = _convT_mats(params["dec3_w"], params["dec3_b"], h, w, 2)
    add_conv(s, wr, b)

    transcendentals = int(params["dec3_w"].shape[1]) * h * w   # tanh on output
    return ops, (h, w), int(flops), transcendentals


# ----------------------------------------------------------------------------
# Wrapper: one pallas_call with a batch grid, reshape-only NCHW <-> (C, H*W)
# ----------------------------------------------------------------------------
def make_forward(out_channels, out_hw, flops_per_item, transc_per_item):
    out_h, out_w = out_hw
    ohw = out_h * out_w

    def _const_spec(o):
        nd = o.ndim
        return pl.BlockSpec(o.shape, lambda i, _n=nd: (0,) * _n)

    @jax.jit
    def forward(x_nchw, operands):
        b, c, h, w = x_nchw.shape
        hw = h * w
        x3d = x_nchw.reshape(b, c, hw)               # pure reshape, no transpose

        in_specs = [pl.BlockSpec((1, c, hw), lambda i: (i, 0, 0))]
        in_specs += [_const_spec(o) for o in operands]
        out_spec = pl.BlockSpec((1, out_channels, ohw), lambda i: (i, 0, 0))

        op_bytes = sum(int(o.size) * o.dtype.itemsize for o in operands)
        bytes_accessed = (op_bytes
                          + int(x3d.size) * x3d.dtype.itemsize
                          + b * out_channels * ohw * 4)

        out3d = pl.pallas_call(
            _autoencoder_kernel,
            out_shape=jax.ShapeDtypeStruct((b, out_channels, ohw), jnp.float32),
            grid=(b,),
            in_specs=in_specs,
            out_specs=out_spec,
            compiler_params=pltpu.CompilerParams(
                dimension_semantics=("parallel",),      # v7x: 2 TCs split batch
                vmem_limit_bytes=32 * 1024 * 1024),
            cost_estimate=pl.CostEstimate(
                flops=int(b * flops_per_item),
                transcendentals=int(b * transc_per_item),
                bytes_accessed=int(bytes_accessed)),
        )(x3d, *operands)
        return out3d.reshape(b, out_channels, out_h, out_w)

    return forward


# ----------------------------------------------------------------------------
# Parameters (PyTorch layer shapes) and a pure-JAX reference for validation
# ----------------------------------------------------------------------------
def init_params(key):
    ks = jax.random.split(key, 10)

    def w(k, shape, scale=0.1):
        return (scale * jax.random.normal(k, shape)).astype(jnp.float32)

    return {
        "enc1_w": w(ks[0], (16, 3, 3, 3)), "enc1_b": w(ks[1], (16,)),
        "enc2_w": w(ks[2], (8, 16, 3, 3)), "enc2_b": w(ks[3], (8,)),
        "dec1_w": w(ks[4], (8, 16, 3, 3)), "dec1_b": w(ks[5], (16,)),
        "dec2_w": w(ks[6], (16, 8, 6, 6)), "dec2_b": w(ks[7], (8,)),
        "dec3_w": w(ks[8], (8, 3, 2, 2)), "dec3_b": w(ks[9], (3,)),
    }


def _ref_conv(x, w, b, stride, padding):
    out = jax.lax.conv_general_dilated(
        x, w, window_strides=(stride, stride),
        padding=[(padding, padding), (padding, padding)],
        dimension_numbers=("NCHW", "OIHW", "NCHW"),
        precision=jax.lax.Precision.HIGHEST)
    return out + b.reshape(1, -1, 1, 1)


def _ref_convT(x, w, b, stride):
    k = w.shape[2]
    w_flip = jnp.transpose(w, (1, 0, 2, 3))[:, :, ::-1, ::-1]
    out = jax.lax.conv_general_dilated(
        x, w_flip, window_strides=(1, 1),
        padding=[(k - 1, k - 1), (k - 1, k - 1)],
        lhs_dilation=(stride, stride),
        dimension_numbers=("NCHW", "OIHW", "NCHW"),
        precision=jax.lax.Precision.HIGHEST)
    return out + b.reshape(1, -1, 1, 1)


def _ref_pool(x, k, stride):
    return jax.lax.reduce_window(
        x, -jnp.inf, jax.lax.max,
        window_dimensions=(1, 1, k, k),
        window_strides=(1, 1, stride, stride),
        padding="VALID")


def reference_forward(x, params):
    relu = lambda t: jnp.maximum(t, 0.0)
    t = relu(_ref_conv(x, params["enc1_w"], params["enc1_b"], 3, 1))
    t = _ref_pool(t, 2, 2)
    t = relu(_ref_conv(t, params["enc2_w"], params["enc2_b"], 2, 1))
    t = _ref_pool(t, 2, 1)
    t = relu(_ref_convT(t, params["dec1_w"], params["dec1_b"], 2))
    t = relu(_ref_convT(t, params["dec2_w"], params["dec2_b"], 3))
    t = jnp.tanh(_ref_convT(t, params["dec3_w"], params["dec3_b"], 2))
    return t


# ----------------------------------------------------------------------------
if __name__ == "__main__":
    key = jax.random.PRNGKey(0)
    pkey, xkey = jax.random.split(key)
    params = init_params(pkey)

    # Small NCHW input consistent with the module: (B=2, C=3, H=W=16)
    B, C, H, W = 2, 3, 16, 16
    x = jax.random.normal(xkey, (B, C, H, W), dtype=jnp.float32)

    operands, out_hw, flops, transc = build_operands(params, H, W)
    out_channels = params["dec3_w"].shape[1]            # 3
    forward = make_forward(out_channels, out_hw, flops, transc)

    out = jax.block_until_ready(forward(x, operands))

    # 16 -> conv(s3,p1,k3)=6 -> pool(2,2)=3 -> conv(s2,p1,k3)=2 -> pool(2,1)=1
    #    -> convT(k3,s2)=3 -> convT(k6,s3)=12 -> convT(k2,s2)=24
    assert out.shape == (2, 3, 24, 24), out.shape
    assert out.dtype == jnp.float32

    ref = jax.block_until_ready(reference_forward(x, params))
    np.testing.assert_allclose(np.asarray(out), np.asarray(ref),
                               rtol=2e-2, atol=2e-2)

    print("KERNEL_OK")
</pallas_src>

<mosaic_0001>
module attributes {stable_mosaic.version = 11 : i64} {
  func.func @_autoencoder_kernel(%arg0: i32, %arg1: memref<1x3x256xf32, #tpu.memory_space<vmem>>, %arg2: memref<9x256x36xbf16, #tpu.memory_space<vmem>>, %arg3: memref<16x27xbf16, #tpu.memory_space<vmem>>, %arg4: memref<16x1xf32, #tpu.memory_space<vmem>>, %arg5: memref<4x36x9xbf16, #tpu.memory_space<vmem>>, %arg6: memref<9x9x4xbf16, #tpu.memory_space<vmem>>, %arg7: memref<8x144xbf16, #tpu.memory_space<vmem>>, %arg8: memref<8x1xf32, #tpu.memory_space<vmem>>, %arg9: memref<4x4x1xbf16, #tpu.memory_space<vmem>>, %arg10: memref<9x1x9xbf16, #tpu.memory_space<vmem>>, %arg11: memref<16x72xbf16, #tpu.memory_space<vmem>>, %arg12: memref<16x1xf32, #tpu.memory_space<vmem>>, %arg13: memref<36x9x144xbf16, #tpu.memory_space<vmem>>, %arg14: memref<8x576xbf16, #tpu.memory_space<vmem>>, %arg15: memref<8x1xf32, #tpu.memory_space<vmem>>, %arg16: memref<4x144x576xbf16, #tpu.memory_space<vmem>>, %arg17: memref<3x32xbf16, #tpu.memory_space<vmem>>, %arg18: memref<3x1xf32, #tpu.memory_space<vmem>>, %arg19: memref<1x3x576xf32, #tpu.memory_space<vmem>>) attributes {dimension_semantics = [#tpu.dimension_semantics<parallel>], iteration_bounds = array<i64: 2>, scalar_prefetch = 0 : i64, scratch_operands = 0 : i64, tpu.core_type = #tpu.core_type<tc>, window_params = [{transform_indices = @transform_0, window_bounds = array<i64: 1, 3, 256>}, {pipeline_mode = #tpu.pipeline_mode<synchronous>, transform_indices = @transform_1, window_bounds = array<i64: 9, 256, 36>}, {pipeline_mode = #tpu.pipeline_mode<synchronous>, transform_indices = @transform_2, window_bounds = array<i64: 16, 27>}, {pipeline_mode = #tpu.pipeline_mode<synchronous>, transform_indices = @transform_3, window_bounds = array<i64: 16, 1>}, {pipeline_mode = #tpu.pipeline_mode<synchronous>, transform_indices = @transform_4, window_bounds = array<i64: 4, 36, 9>}, {pipeline_mode = #tpu.pipeline_mode<synchronous>, transform_indices = @transform_5, window_bounds = array<i64: 9, 9, 4>}, {pipeline_mode = #tpu.pipeline_mode<synchronous>, transform_indices = @transform_6, window_bounds = array<i64: 8, 144>}, {pipeline_mode = #tpu.pipeline_mode<synchronous>, transform_indices = @transform_7, window_bounds = array<i64: 8, 1>}, {pipeline_mode = #tpu.pipeline_mode<synchronous>, transform_indices = @transform_8, window_bounds = array<i64: 4, 4, 1>}, {pipeline_mode = #tpu.pipeline_mode<synchronous>, transform_indices = @transform_9, window_bounds = array<i64: 9, 1, 9>}, {pipeline_mode = #tpu.pipeline_mode<synchronous>, transform_indices = @transform_10, window_bounds = array<i64: 16, 72>}, {pipeline_mode = #tpu.pipeline_mode<synchronous>, transform_indices = @transform_11, window_bounds = array<i64: 16, 1>}, {pipeline_mode = #tpu.pipeline_mode<synchronous>, transform_indices = @transform_12, window_bounds = array<i64: 36, 9, 144>}, {pipeline_mode = #tpu.pipeline_mode<synchronous>, transform_indices = @transform_13, window_bounds = array<i64: 8, 576>}, {pipeline_mode = #tpu.pipeline_mode<synchronous>, transform_indices = @transform_14, window_bounds = array<i64: 8, 1>}, {pipeline_mode = #tpu.pipeline_mode<synchronous>, transform_indices = @transform_15, window_bounds = array<i64: 4, 144, 576>}, {pipeline_mode = #tpu.pipeline_mode<synchronous>, transform_indices = @transform_16, window_bounds = array<i64: 3, 32>}, {pipeline_mode = #tpu.pipeline_mode<synchronous>, transform_indices = @transform_17, window_bounds = array<i64: 3, 1>}, {transform_indices = @transform_18, window_bounds = array<i64: 1, 3, 576>}]} {
    %c0 = arith.constant 0 : index
    %c0_0 = arith.constant 0 : index
    %c0_1 = arith.constant 0 : index
    %0 = vector.load %arg1[%c0, %c0_0, %c0_1] : memref<1x3x256xf32, #tpu.memory_space<vmem>>, vector<1x3x256xf32>
    %1 = vector.shape_cast %0 : vector<1x3x256xf32> to vector<3x256xf32>
    %2 = arith.truncf %1 : vector<3x256xf32> to vector<3x256xbf16>
    %c0_2 = arith.constant 0 : index
    %c0_3 = arith.constant 0 : index
    %c0_4 = arith.constant 0 : index
    %3 = vector.load %arg2[%c0_2, %c0_3, %c0_4] : memref<9x256x36xbf16, #tpu.memory_space<vmem>>, vector<1x256x36xbf16>
    %4 = vector.shape_cast %3 : vector<1x256x36xbf16> to vector<256x36xbf16>
    %cst = arith.constant dense<0.000000e+00> : vector<3x36xf32>
    %5 = tpu.matmul %2, %4, %cst {dimension_numbers = #tpu.dot_dimension_numbers<[1], [0], [0], [1], [0, 0, 1, 1], [], []>} : vector<3x256xbf16>, vector<256x36xbf16>, vector<3x36xf32> -> vector<3x36xf32>
    %6 = arith.truncf %5 : vector<3x36xf32> to vector<3x36xbf16>
    %c1 = arith.constant 1 : index
    %c0_5 = arith.constant 0 : index
    %c0_6 = arith.constant 0 : index
    %7 = vector.load %arg2[%c1, %c0_5, %c0_6] : memref<9x256x36xbf16, #tpu.memory_space<vmem>>, vector<1x256x36xbf16>
    %8 = vector.shape_cast %7 : vector<1x256x36xbf16> to vector<256x36xbf16>
    %cst_7 = arith.constant dense<0.000000e+00> : vector<3x36xf32>
    %9 = tpu.matmul %2, %8, %cst_7 {dimension_numbers = #tpu.dot_dimension_numbers<[1], [0], [0], [1], [0, 0, 1, 1], [], []>} : vector<3x256xbf16>, vector<256x36xbf16>, vector<3x36xf32> -> vector<3x36xf32>
    %10 = arith.truncf %9 : vector<3x36xf32> to vector<3x36xbf16>
    %c2 = arith.constant 2 : index
    %c0_8 = arith.constant 0 : index
    %c0_9 = arith.constant 0 : index
    %11 = vector.load %arg2[%c2, %c0_8, %c0_9] : memref<9x256x36xbf16, #tpu.memory_space<vmem>>, vector<1x256x36xbf16>
    %12 = vector.shape_cast %11 : vector<1x256x36xbf16> to vector<256x36xbf16>
    %cst_10 = arith.constant dense<0.000000e+00> : vector<3x36xf32>
    %13 = tpu.matmul %2, %12, %cst_10 {dimension_numbers = #tpu.dot_dimension_numbers<[1], [0], [0], [1], [0, 0, 1, 1], [], []>} : vector<3x256xbf16>, vector<256x36xbf16>, vector<3x36xf32> -> vector<3x36xf32>
    %14 = arith.truncf %13 : vector<3x36xf32> to vector<3x36xbf16>
    %c3 = arith.constant 3 : index
    %c0_11 = arith.constant 0 : index
    %c0_12 = arith.constant 0 : index
    %15 = vector.load %arg2[%c3, %c0_11, %c0_12] : memref<9x256x36xbf16, #tpu.memory_space<vmem>>, vector<1x256x36xbf16>
    %16 = vector.shape_cast %15 : vector<1x256x36xbf16> to vector<256x36xbf16>
    %cst_13 = arith.constant dense<0.000000e+00> : vector<3x36xf32>
    %17 = tpu.matmul %2, %16, %cst_13 {dimension_numbers = #tpu.dot_dimension_numbers<[1], [0], [0], [1], [0, 0, 1, 1], [], []>} : vector<3x256xbf16>, vector<256x36xbf16>, vector<3x36xf32> -> vector<3x36xf32>
    %18 = arith.truncf %17 : vector<3x36xf32> to vector<3x36xbf16>
    %c4 = arith.constant 4 : index
    %c0_14 = arith.constant 0 : index
    %c0_15 = arith.constant 0 : index
    %19 = vector.load %arg2[%c4, %c0_14, %c0_15] : memref<9x256x36xbf16, #tpu.memory_space<vmem>>, vector<1x256x36xbf16>
    %20 = vector.shape_cast %19 : vector<1x256x36xbf16> to vector<256x36xbf16>
    %cst_16 = arith.constant dense<0.000000e+00> : vector<3x36xf32>
    %21 = tpu.matmul %2, %20, %cst_16 {dimension_numbers = #tpu.dot_dimension_numbers<[1], [0], [0], [1], [0, 0, 1, 1], [], []>} : vector<3x256xbf16>, vector<256x36xbf16>, vector<3x36xf32> -> vector<3x36xf32>
    %22 = arith.truncf %21 : vector<3x36xf32> to vector<3x36xbf16>
    %c5 = arith.constant 5 : index
    %c0_17 = arith.constant 0 : index
    %c0_18 = arith.constant 0 : index
    %23 = vector.load %arg2[%c5, %c0_17, %c0_18] : memref<9x256x36xbf16, #tpu.memory_space<vmem>>, vector<1x256x36xbf16>
    %24 = vector.shape_cast %23 : vector<1x256x36xbf16> to vector<256x36xbf16>
    %cst_19 = arith.constant dense<0.000000e+00> : vector<3x36xf32>
    %25 = tpu.matmul %2, %24, %cst_19 {dimension_numbers = #tpu.dot_dimension_numbers<[1], [0], [0], [1], [0, 0, 1, 1], [], []>} : vector<3x256xbf16>, vector<256x36xbf16>, vector<3x36xf32> -> vector<3x36xf32>
    %26 = arith.truncf %25 : vector<3x36xf32> to vector<3x36xbf16>
    %c6 = arith.constant 6 : index
    %c0_20 = arith.constant 0 : index
    %c0_21 = arith.constant 0 : index
    %27 = vector.load %arg2[%c6, %c0_20, %c0_21] : memref<9x256x36xbf16, #tpu.memory_space<vmem>>, vector<1x256x36xbf16>
    %28 = vector.shape_cast %27 : vector<1x256x36xbf16> to vector<256x36xbf16>
    %cst_22 = arith.constant dense<0.000000e+00> : vector<3x36xf32>
    %29 = tpu.matmul %2, %28, %cst_22 {dimension_numbers = #tpu.dot_dimension_numbers<[1], [0], [0], [1], [0, 0, 1, 1], [], []>} : vector<3x256xbf16>, vector<256x36xbf16>, vector<3x36xf32> -> vector<3x36xf32>
    %30 = arith.truncf %29 : vector<3x36xf32> to vector<3x36xbf16>
    %c7 = arith.constant 7 : index
    %c0_23 = arith.constant 0 : index
    %c0_24 = arith.constant 0 : index
    %31 = vector.load %arg2[%c7, %c0_23, %c0_24] : memref<9x256x36xbf16, #tpu.memory_space<vmem>>, vector<1x256x36xbf16>
    %32 = vector.shape_cast %31 : vector<1x256x36xbf16> to vector<256x36xbf16>
    %cst_25 = arith.constant dense<0.000000e+00> : vector<3x36xf32>
    %33 = tpu.matmul %2, %32, %cst_25 {dimension_numbers = #tpu.dot_dimension_numbers<[1], [0], [0], [1], [0, 0, 1, 1], [], []>} : vector<3x256xbf16>, vector<256x36xbf16>, vector<3x36xf32> -> vector<3x36xf32>
    %34 = arith.truncf %33 : vector<3x36xf32> to vector<3x36xbf16>
    %c8 = arith.constant 8 : index
    %c0_26 = arith.constant 0 : index
    %c0_27 = arith.constant 0 : index
    %35 = vector.load %arg2[%c8, %c0_26, %c0_27] : memref<9x256x36xbf16, #tpu.memory_space<vmem>>, vector<1x256x36xbf16>
    %36 = vector.shape_cast %35 : vector<1x256x36xbf16> to vector<256x36xbf16>
    %cst_28 = arith.constant dense<0.000000e+00> : vector<3x36xf32>
    %37 = tpu.matmul %2, %36, %cst_28 {dimension_numbers = #tpu.dot_dimension_numbers<[1], [0], [0], [1], [0, 0, 1, 1], [], []>} : vector<3x256xbf16>, vector<256x36xbf16>, vector<3x36xf32> -> vector<3x36xf32>
    %38 = arith.truncf %37 : vector<3x36xf32> to vector<3x36xbf16>
    %39 = tpu.concatenate %6, %10, %14, %18, %22, %26, %30, %34, %38 in 0 : vector<3x36xbf16>, vector<3x36xbf16>, vector<3x36xbf16>, vector<3x36xbf16>, vector<3x36xbf16>, vector<3x36xbf16>, vector<3x36xbf16>, vector<3x36xbf16>, vector<3x36xbf16> -> vector<27x36xbf16>
    %c0_29 = arith.constant 0 : index
    %c0_30 = arith.constant 0 : index
    %40 = vector.load %arg3[%c0_29, %c0_30] : memref<16x27xbf16, #tpu.memory_space<vmem>>, vector<16x27xbf16>
    %cst_31 = arith.constant dense<0.000000e+00> : vector<16x36xf32>
    %41 = tpu.matmul %40, %39, %cst_31 {dimension_numbers = #tpu.dot_dimension_numbers<[1], [0], [0], [1], [0, 0, 1, 1], [], []>} : vector<16x27xbf16>, vector<27x36xbf16>, vector<16x36xf32> -> vector<16x36xf32>
    %c0_32 = arith.constant 0 : index
    %c0_33 = arith.constant 0 : index
    %42 = vector.load %arg4[%c0_32, %c0_33] : memref<16x1xf32, #tpu.memory_space<vmem>>, vector<16x1xf32>
    %43 = vector.broadcast %42 : vector<16x1xf32> to vector<16x36xf32>
    %44 = arith.addf %41, %43 : vector<16x36xf32>
    %cst_34 = arith.constant 0.000000e+00 : f32
    %45 = vector.broadcast %cst_34 : f32 to vector<16x36xf32>
    %46 = arith.maximumf %44, %45 : vector<16x36xf32>
    %47 = arith.truncf %46 : vector<16x36xf32> to vector<16x36xbf16>
    %c0_35 = arith.constant 0 : index
    %c0_36 = arith.constant 0 : index
    %c0_37 = arith.constant 0 : index
    %48 = vector.load %arg5[%c0_35, %c0_36, %c0_37] : memref<4x36x9xbf16, #tpu.memory_space<vmem>>, vector<1x36x9xbf16>
    %49 = vector.shape_cast %48 : vector<1x36x9xbf16> to vector<36x9xbf16>
    %cst_38 = arith.constant dense<0.000000e+00> : vector<16x9xf32>
    %50 = tpu.matmul %47, %49, %cst_38 {dimension_numbers = #tpu.dot_dimension_numbers<[1], [0], [0], [1], [0, 0, 1, 1], [], []>} : vector<16x36xbf16>, vector<36x9xbf16>, vector<16x9xf32> -> vector<16x9xf32>
    %c1_39 = arith.constant 1 : index
    %c0_40 = arith.constant 0 : index
    %c0_41 = arith.constant 0 : index
    %51 = vector.load %arg5[%c1_39, %c0_40, %c0_41] : memref<4x36x9xbf16, #tpu.memory_space<vmem>>, vector<1x36x9xbf16>
    %52 = vector.shape_cast %51 : vector<1x36x9xbf16> to vector<36x9xbf16>
    %cst_42 = arith.constant dense<0.000000e+00> : vector<16x9xf32>
    %53 = tpu.matmul %47, %52, %cst_42 {dimension_numbers = #tpu.dot_dimension_numbers<[1], [0], [0], [1], [0, 0, 1, 1], [], []>} : vector<16x36xbf16>, vector<36x9xbf16>, vector<16x9xf32> -> vector<16x9xf32>
    %54 = arith.maximumf %50, %53 : vector<16x9xf32>
    %c2_43 = arith.constant 2 : index
    %c0_44 = arith.constant 0 : index
    %c0_45 = arith.constant 0 : index
    %55 = vector.load %arg5[%c2_43, %c0_44, %c0_45] : memref<4x36x9xbf16, #tpu.memory_space<vmem>>, vector<1x36x9xbf16>
    %56 = vector.shape_cast %55 : vector<1x36x9xbf16> to vector<36x9xbf16>
    %cst_46 = arith.constant dense<0.000000e+00> : vector<16x9xf32>
    %57 = tpu.matmul %47, %56, %cst_46 {dimension_numbers = #tpu.dot_dimension_numbers<[1], [0], [0], [1], [0, 0, 1, 1], [], []>} : vector<16x36xbf16>, vector<36x9xbf16>, vector<16x9xf32> -> vector<16x9xf32>
    %58 = arith.maximumf %54, %57 : vector<16x9xf32>
    %c3_47 = arith.constant 3 : index
    %c0_48 = arith.constant 0 : index
    %c0_49 = arith.constant 0 : index
    %59 = vector.load %arg5[%c3_47, %c0_48, %c0_49] : memref<4x36x9xbf16, #tpu.memory_space<vmem>>, vector<1x36x9xbf16>
    %60 = vector.shape_cast %59 : vector<1x36x9xbf16> to vector<36x9xbf16>
    %cst_50 = arith.constant dense<0.000000e+00> : vector<16x9xf32>
    %61 = tpu.matmul %47, %60, %cst_50 {dimension_numbers = #tpu.dot_dimension_numbers<[1], [0], [0], [1], [0, 0, 1, 1], [], []>} : vector<16x36xbf16>, vector<36x9xbf16>, vector<16x9xf32> -> vector<16x9xf32>
    %62 = arith.maximumf %58, %61 : vector<16x9xf32>
    %63 = arith.truncf %62 : vector<16x9xf32> to vector<16x9xbf16>
    %c0_51 = arith.constant 0 : index
    %c0_52 = arith.constant 0 : index
    %c0_53 = arith.constant 0 : index
    %64 = vector.load %arg6[%c0_51, %c0_52, %c0_53] : memref<9x9x4xbf16, #tpu.memory_space<vmem>>, vector<1x9x4xbf16>
    %65 = vector.shape_cast %64 : vector<1x9x4xbf16> to vector<9x4xbf16>
    %cst_54 = arith.constant dense<0.000000e+00> : vector<16x4xf32>
    %66 = tpu.matmul %63, %65, %cst_54 {dimension_numbers = #tpu.dot_dimension_numbers<[1], [0], [0], [1], [0, 0, 1, 1], [], []>} : vector<16x9xbf16>, vector<9x4xbf16>, vector<16x4xf32> -> vector<16x4xf32>
    %67 = arith.truncf %66 : vector<16x4xf32> to vector<16x4xbf16>
    %c1_55 = arith.constant 1 : index
    %c0_56 = arith.constant 0 : index
    %c0_57 = arith.constant 0 : index
    %68 = vector.load %arg6[%c1_55, %c0_56, %c0_57] : memref<9x9x4xbf16, #tpu.memory_space<vmem>>, vector<1x9x4xbf16>
    %69 = vector.shape_cast %68 : vector<1x9x4xbf16> to vector<9x4xbf16>
    %cst_58 = arith.constant dense<0.000000e+00> : vector<16x4xf32>
    %70 = tpu.matmul %63, %69, %cst_58 {dimension_numbers = #tpu.dot_dimension_numbers<[1], [0], [0], [1], [0, 0, 1, 1], [], []>} : vector<16x9xbf16>, vector<9x4xbf16>, vector<16x4xf32> -> vector<16x4xf32>
    %71 = arith.truncf %70 : vector<16x4xf32> to vector<16x4xbf16>
    %c2_59 = arith.constant 2 : index
    %c0_60 = arith.constant 0 : index
    %c0_61 = arith.constant 0 : index
    %72 = vector.load %arg6[%c2_59, %c0_60, %c0_61] : memref<9x9x4xbf16, #tpu.memory_space<vmem>>, vector<1x9x4xbf16>
    %73 = vector.shape_cast %72 : vector<1x9x4xbf16> to vector<9x4xbf16>
    %cst_62 = arith.constant dense<0.000000e+00> : vector<16x4xf32>
    %74 = tpu.matmul %63, %73, %cst_62 {dimension_numbers = #tpu.dot_dimension_numbers<[1], [0], [0], [1], [0, 0, 1, 1], [], []>} : vector<16x9xbf16>, vector<9x4xbf16>, vector<16x4xf32> -> vector<16x4xf32>
    %75 = arith.truncf %74 : vector<16x4xf32> to vector<16x4xbf16>
    %c3_63 = arith.constant 3 : index
    %c0_64 = arith.constant 0 : index
    %c0_65 = arith.constant 0 : index
    %76 = vector.load %arg6[%c3_63, %c0_64, %c0_65] : memref<9x9x4xbf16, #tpu.memory_space<vmem>>, vector<1x9x4xbf16>
    %77 = vector.shape_cast %76 : vector<1x9x4xbf16> to vector<9x4xbf16>
    %cst_66 = arith.constant dense<0.000000e+00> : vector<16x4xf32>
    %78 = tpu.matmul %63, %77, %cst_66 {dimension_numbers = #tpu.dot_dimension_numbers<[1], [0], [0], [1], [0, 0, 1, 1], [], []>} : vector<16x9xbf16>, vector<9x4xbf16>, vector<16x4xf32> -> vector<16x4xf32>
    %79 = arith.truncf %78 : vector<16x4xf32> to vector<16x4xbf16>
    %c4_67 = arith.constant 4 : index
    %c0_68 = arith.constant 0 : index
    %c0_69 = arith.constant 0 : index
    %80 = vector.load %arg6[%c4_67, %c0_68, %c0_69] : memref<9x9x4xbf16, #tpu.memory_space<vmem>>, vector<1x9x4xbf16>
    %81 = vector.shape_cast %80 : vector<1x9x4xbf16> to vector<9x4xbf16>
    %cst_70 = arith.constant dense<0.000000e+00> : vector<16x4xf32>
    %82 = tpu.matmul %63, %81, %cst_70 {dimension_numbers = #tpu.dot_dimension_numbers<[1], [0], [0], [1], [0, 0, 1, 1], [], []>} : vector<16x9xbf16>, vector<9x4xbf16>, vector<16x4xf32> -> vector<16x4xf32>
    %83 = arith.truncf %82 : vector<16x4xf32> to vector<16x4xbf16>
    %c5_71 = arith.constant 5 : index
    %c0_72 = arith.constant 0 : index
    %c0_73 = arith.constant 0 : index
    %84 = vector.load %arg6[%c5_71, %c0_72, %c0_73] : memref<9x9x4xbf16, #tpu.memory_space<vmem>>, vector<1x9x4xbf16>
    %85 = vector.shape_cast %84 : vector<1x9x4xbf16> to vector<9x4xbf16>
    %cst_74 = arith.constant dense<0.000000e+00> : vector<16x4xf32>
    %86 = tpu.matmul %63, %85, %cst_74 {dimension_numbers = #tpu.dot_dimension_numbers<[1], [0], [0], [1], [0, 0, 1, 1], [], []>} : vector<16x9xbf16>, vector<9x4xbf16>, vector<16x4xf32> -> vector<16x4xf32>
    %87 = arith.truncf %86 : vector<16x4xf32> to vector<16x4xbf16>
    %c6_75 = arith.constant 6 : index
    %c0_76 = arith.constant 0 : index
    %c0_77 = arith.constant 0 : index
    %88 = vector.load %arg6[%c6_75, %c0_76, %c0_77] : memref<9x9x4xbf16, #tpu.memory_space<vmem>>, vector<1x9x4xbf16>
    %89 = vector.shape_cast %88 : vector<1x9x4xbf16> to vector<9x4xbf16>
    %cst_78 = arith.constant dense<0.000000e+00> : vector<16x4xf32>
    %90 = tpu.matmul %63, %89, %cst_78 {dimension_numbers = #tpu.dot_dimension_numbers<[1], [0], [0], [1], [0, 0, 1, 1], [], []>} : vector<16x9xbf16>, vector<9x4xbf16>, vector<16x4xf32> -> vector<16x4xf32>
    %91 = arith.truncf %90 : vector<16x4xf32> to vector<16x4xbf16>
    %c7_79 = arith.constant 7 : index
    %c0_80 = arith.constant 0 : index
    %c0_81 = arith.constant 0 : index
    %92 = vector.load %arg6[%c7_79, %c0_80, %c0_81] : memref<9x9x4xbf16, #tpu.memory_space<vmem>>, vector<1x9x4xbf16>
    %93 = vector.shape_cast %92 : vector<1x9x4xbf16> to vector<9x4xbf16>
    %cst_82 = arith.constant dense<0.000000e+00> : vector<16x4xf32>
    %94 = tpu.matmul %63, %93, %cst_82 {dimension_numbers = #tpu.dot_dimension_numbers<[1], [0], [0], [1], [0, 0, 1, 1], [], []>} : vector<16x9xbf16>, vector<9x4xbf16>, vector<16x4xf32> -> vector<16x4xf32>
    %95 = arith.truncf %94 : vector<16x4xf32> to vector<16x4xbf16>
    %c8_83 = arith.constant 8 : index
    %c0_84 = arith.constant 0 : index
    %c0_85 = arith.constant 0 : index
    %96 = vector.load %arg6[%c8_83, %c0_84, %c0_85] : memref<9x9x4xbf16, #tpu.memory_space<vmem>>, vector<1x9x4xbf16>
    %97 = vector.shape_cast %96 : vector<1x9x4xbf16> to vector<9x4xbf16>
    %cst_86 = arith.constant dense<0.000000e+00> : vector<16x4xf32>
    %98 = tpu.matmul %63, %97, %cst_86 {dimension_numbers = #tpu.dot_dimension_numbers<[1], [0], [0], [1], [0, 0, 1, 1], [], []>} : vector<16x9xbf16>, vector<9x4xbf16>, vector<16x4xf32> -> vector<16x4xf32>
    %99 = arith.truncf %98 : vector<16x4xf32> to vector<16x4xbf16>
    %100 = tpu.concatenate %67, %71, %75, %79, %83, %87, %91, %95, %99 in 0 : vector<16x4xbf16>, vector<16x4xbf16>, vector<16x4xbf16>, vector<16x4xbf16>, vector<16x4xbf16>, vector<16x4xbf16>, vector<16x4xbf16>, vector<16x4xbf16>, vector<16x4xbf16> -> vector<144x4xbf16>
    %c0_87 = arith.constant 0 : index
    %c0_88 = arith.constant 0 : index
    %101 = vector.load %arg7[%c0_87, %c0_88] : memref<8x144xbf16, #tpu.memory_space<vmem>>, vector<8x144xbf16>
    %cst_89 = arith.constant dense<0.000000e+00> : vector<8x4xf32>
    %102 = tpu.matmul %101, %100, %cst_89 {dimension_numbers = #tpu.dot_dimension_numbers<[1], [0], [0], [1], [0, 0, 1, 1], [], []>} : vector<8x144xbf16>, vector<144x4xbf16>, vector<8x4xf32> -> vector<8x4xf32>
    %c0_90 = arith.constant 0 : index
    %c0_91 = arith.constant 0 : index
    %103 = vector.load %arg8[%c0_90, %c0_91] : memref<8x1xf32, #tpu.memory_space<vmem>>, vector<8x1xf32>
    %104 = vector.broadcast %103 : vector<8x1xf32> to vector<8x4xf32>
    %105 = arith.addf %102, %104 : vector<8x4xf32>
    %cst_92 = arith.constant 0.000000e+00 : f32
    %106 = vector.broadcast %cst_92 : f32 to vector<8x4xf32>
    %107 = arith.maximumf %105, %106 : vector<8x4xf32>
    %108 = arith.truncf %107 : vector<8x4xf32> to vector<8x4xbf16>
    %c0_93 = arith.constant 0 : index
    %c0_94 = arith.constant 0 : index
    %c0_95 = arith.constant 0 : index
    %109 = vector.load %arg9[%c0_93, %c0_94, %c0_95] : memref<4x4x1xbf16, #tpu.memory_space<vmem>>, vector<1x4x1xbf16>
    %110 = vector.shape_cast %109 : vector<1x4x1xbf16> to vector<4x1xbf16>
    %cst_96 = arith.constant dense<0.000000e+00> : vector<8x1xf32>
    %111 = tpu.matmul %108, %110, %cst_96 {dimension_numbers = #tpu.dot_dimension_numbers<[1], [0], [0], [1], [0, 0, 1, 1], [], []>} : vector<8x4xbf16>, vector<4x1xbf16>, vector<8x1xf32> -> vector<8x1xf32>
    %c1_97 = arith.constant 1 : index
    %c0_98 = arith.constant 0 : index
    %c0_99 = arith.constant 0 : index
    %112 = vector.load %arg9[%c1_97, %c0_98, %c0_99] : memref<4x4x1xbf16, #tpu.memory_space<vmem>>, vector<1x4x1xbf16>
    %113 = vector.shape_cast %112 : vector<1x4x1xbf16> to vector<4x1xbf16>
    %cst_100 = arith.constant dense<0.000000e+00> : vector<8x1xf32>
    %114 = tpu.matmul %108, %113, %cst_100 {dimension_numbers = #tpu.dot_dimension_numbers<[1], [0], [0], [1], [0, 0, 1, 1], [], []>} : vector<8x4xbf16>, vector<4x1xbf16>, vector<8x1xf32> -> vector<8x1xf32>
    %115 = arith.maximumf %111, %114 : vector<8x1xf32>
    %c2_101 = arith.constant 2 : index
    %c0_102 = arith.constant 0 : index
    %c0_103 = arith.constant 0 : index
    %116 = vector.load %arg9[%c2_101, %c0_102, %c0_103] : memref<4x4x1xbf16, #tpu.memory_space<vmem>>, vector<1x4x1xbf16>
    %117 = vector.shape_cast %116 : vector<1x4x1xbf16> to vector<4x1xbf16>
    %cst_104 = arith.constant dense<0.000000e+00> : vector<8x1xf32>
    %118 = tpu.matmul %108, %117, %cst_104 {dimension_numbers = #tpu.dot_dimension_numbers<[1], [0], [0], [1], [0, 0, 1, 1], [], []>} : vector<8x4xbf16>, vector<4x1xbf16>, vector<8x1xf32> -> vector<8x1xf32>
    %119 = arith.maximumf %115, %118 : vector<8x1xf32>
    %c3_105 = arith.constant 3 : index
    %c0_106 = arith.constant 0 : index
    %c0_107 = arith.constant 0 : index
    %120 = vector.load %arg9[%c3_105, %c0_106, %c0_107] : memref<4x4x1xbf16, #tpu.memory_space<vmem>>, vector<1x4x1xbf16>
    %121 = vector.shape_cast %120 : vector<1x4x1xbf16> to vector<4x1xbf16>
    %cst_108 = arith.constant dense<0.000000e+00> : vector<8x1xf32>
    %122 = tpu.matmul %108, %121, %cst_108 {dimension_numbers = #tpu.dot_dimension_numbers<[1], [0], [0], [1], [0, 0, 1, 1], [], []>} : vector<8x4xbf16>, vector<4x1xbf16>, vector<8x1xf32> -> vector<8x1xf32>
    %123 = arith.maximumf %119, %122 : vector<8x1xf32>
    %124 = arith.truncf %123 : vector<8x1xf32> to vector<8x1xbf16>
    %c0_109 = arith.constant 0 : index
    %c0_110 = arith.constant 0 : index
    %c0_111 = arith.constant 0 : index
    %125 = vector.load %arg10[%c0_109, %c0_110, %c0_111] : memref<9x1x9xbf16, #tpu.memory_space<vmem>>, vector<1x1x9xbf16>
    %126 = vector.shape_cast %125 : vector<1x1x9xbf16> to vector<1x9xbf16>
    %127 = vector.broadcast %124 : vector<8x1xbf16> to vector<8x9xbf16>
    %128 = vector.broadcast %126 : vector<1x9xbf16> to vector<8x9xbf16>
    %129 = arith.mulf %127, %128 : vector<8x9xbf16>
    %c1_112 = arith.constant 1 : index
    %c0_113 = arith.constant 0 : index
    %c0_114 = arith.constant 0 : index
    %130 = vector.load %arg10[%c1_112, %c0_113, %c0_114] : memref<9x1x9xbf16, #tpu.memory_space<vmem>>, vector<1x1x9xbf16>
    %131 = vector.shape_cast %130 : vector<1x1x9xbf16> to vector<1x9xbf16>
    %132 = vector.broadcast %124 : vector<8x1xbf16> to vector<8x9xbf16>
    %133 = vector.broadcast %131 : vector<1x9xbf16> to vector<8x9xbf16>
    %134 = arith.mulf %132, %133 : vector<8x9xbf16>
    %c2_115 = arith.constant 2 : index
    %c0_116 = arith.constant 0 : index
    %c0_117 = arith.constant 0 : index
    %135 = vector.load %arg10[%c2_115, %c0_116, %c0_117] : memref<9x1x9xbf16, #tpu.memory_space<vmem>>, vector<1x1x9xbf16>
    %136 = vector.shape_cast %135 : vector<1x1x9xbf16> to vector<1x9xbf16>
    %137 = vector.broadcast %124 : vector<8x1xbf16> to vector<8x9xbf16>
    %138 = vector.broadcast %136 : vector<1x9xbf16> to vector<8x9xbf16>
    %139 = arith.mulf %137, %138 : vector<8x9xbf16>
    %c3_118 = arith.constant 3 : index
    %c0_119 = arith.constant 0 : index
    %c0_120 = arith.constant 0 : index
    %140 = vector.load %arg10[%c3_118, %c0_119, %c0_120] : memref<9x1x9xbf16, #tpu.memory_space<vmem>>, vector<1x1x9xbf16>
    %141 = vector.shape_cast %140 : vector<1x1x9xbf16> to vector<1x9xbf16>
    %142 = vector.broadcast %124 : vector<8x1xbf16> to vector<8x9xbf16>
    %143 = vector.broadcast %141 : vector<1x9xbf16> to vector<8x9xbf16>
    %144 = arith.mulf %142, %143 : vector<8x9xbf16>
    %c4_121 = arith.constant 4 : index
    %c0_122 = arith.constant 0 : index
    %c0_123 = arith.constant 0 : index
    %145 = vector.load %arg10[%c4_121, %c0_122, %c0_123] : memref<9x1x9xbf16, #tpu.memory_space<vmem>>, vector<1x1x9xbf16>
    %146 = vector.shape_cast %145 : vector<1x1x9xbf16> to vector<1x9xbf16>
    %147 = vector.broadcast %124 : vector<8x1xbf16> to vector<8x9xbf16>
    %148 = vector.broadcast %146 : vector<1x9xbf16> to vector<8x9xbf16>
    %149 = arith.mulf %147, %148 : vector<8x9xbf16>
    %c5_124 = arith.constant 5 : index
    %c0_125 = arith.constant 0 : index
    %c0_126 = arith.constant 0 : index
    %150 = vector.load %arg10[%c5_124, %c0_125, %c0_126] : memref<9x1x9xbf16, #tpu.memory_space<vmem>>, vector<1x1x9xbf16>
    %151 = vector.shape_cast %150 : vector<1x1x9xbf16> to vector<1x9xbf16>
    %152 = vector.broadcast %124 : vector<8x1xbf16> to vector<8x9xbf16>
    %153 = vector.broadcast %151 : vector<1x9xbf16> to vector<8x9xbf16>
    %154 = arith.mulf %152, %153 : vector<8x9xbf16>
    %c6_127 = arith.constant 6 : index
    %c0_128 = arith.constant 0 : index
    %c0_129 = arith.constant 0 : index
    %155 = vector.load %arg10[%c6_127, %c0_128, %c0_129] : memref<9x1x9xbf16, #tpu.memory_space<vmem>>, vector<1x1x9xbf16>
    %156 = vector.shape_cast %155 : vector<1x1x9xbf16> to vector<1x9xbf16>
    %157 = vector.broadcast %124 : vector<8x1xbf16> to vector<8x9xbf16>
    %158 = vector.broadcast %156 : vector<1x9xbf16> to vector<8x9xbf16>
    %159 = arith.mulf %157, %158 : vector<8x9xbf16>
    %c7_130 = arith.constant 7 : index
    %c0_131 = arith.constant 0 : index
    %c0_132 = arith.constant 0 : index
    %160 = vector.load %arg10[%c7_130, %c0_131, %c0_132] : memref<9x1x9xbf16, #tpu.memory_space<vmem>>, vector<1x1x9xbf16>
    %161 = vector.shape_cast %160 : vector<1x1x9xbf16> to vector<1x9xbf16>
    %162 = vector.broadcast %124 : vector<8x1xbf16> to vector<8x9xbf16>
    %163 = vector.broadcast %161 : vector<1x9xbf16> to vector<8x9xbf16>
    %164 = arith.mulf %162, %163 : vector<8x9xbf16>
    %c8_133 = arith.constant 8 : index
    %c0_134 = arith.constant 0 : index
    %c0_135 = arith.constant 0 : index
    %165 = vector.load %arg10[%c8_133, %c0_134, %c0_135] : memref<9x1x9xbf16, #tpu.memory_space<vmem>>, vector<1x1x9xbf16>
    %166 = vector.shape_cast %165 : vector<1x1x9xbf16> to vector<1x9xbf16>
    %167 = vector.broadcast %124 : vector<8x1xbf16> to vector<8x9xbf16>
    %168 = vector.broadcast %166 : vector<1x9xbf16> to vector<8x9xbf16>
    %169 = arith.mulf %167, %168 : vector<8x9xbf16>
    %170 = tpu.concatenate %129, %134, %139, %144, %149, %154, %159, %164, %169 in 0 : vector<8x9xbf16>, vector<8x9xbf16>, vector<8x9xbf16>, vector<8x9xbf16>, vector<8x9xbf16>, vector<8x9xbf16>, vector<8x9xbf16>, vector<8x9xbf16>, vector<8x9xbf16> -> vector<72x9xbf16>
    %c0_136 = arith.constant 0 : index
    %c0_137 = arith.constant 0 : index
    %171 = vector.load %arg11[%c0_136, %c0_137] : memref<16x72xbf16, #tpu.memory_space<vmem>>, vector<16x72xbf16>
    %cst_138 = arith.constant dense<0.000000e+00> : vector<16x9xf32>
    %172 = tpu.matmul %171, %170, %cst_138 {dimension_numbers = #tpu.dot_dimension_numbers<[1], [0], [0], [1], [0, 0, 1, 1], [], []>} : vector<16x72xbf16>, vector<72x9xbf16>, vector<16x9xf32> -> vector<16x9xf32>
    %c0_139 = arith.constant 0 : index
    %c0_140 = arith.constant 0 : index
    %173 = vector.load %arg12[%c0_139, %c0_140] : memref<16x1xf32, #tpu.memory_space<vmem>>, vector<16x1xf32>
    %174 = vector.broadcast %173 : vector<16x1xf32> to vector<16x9xf32>
    %175 = arith.addf %172, %174 : vector<16x9xf32>
    %cst_141 = arith.constant 0.000000e+00 : f32
    %176 = vector.broadcast %cst_141 : f32 to vector<16x9xf32>
    %177 = arith.maximumf %175, %176 : vector<16x9xf32>
    %178 = arith.truncf %177 : vector<16x9xf32> to vector<16x9xbf16>
    %c0_142 = arith.constant 0 : index
    %c0_143 = arith.constant 0 : index
    %c0_144 = arith.constant 0 : index
    %179 = vector.load %arg13[%c0_142, %c0_143, %c0_144] : memref<36x9x144xbf16, #tpu.memory_space<vmem>>, vector<1x9x144xbf16>
    %180 = vector.shape_cast %179 : vector<1x9x144xbf16> to vector<9x144xbf16>
    %cst_145 = arith.constant dense<0.000000e+00> : vector<16x144xf32>
    %181 = tpu.matmul %178, %180, %cst_145 {dimension_numbers = #tpu.dot_dimension_numbers<[1], [0], [0], [1], [0, 0, 1, 1], [], []>} : vector<16x9xbf16>, vector<9x144xbf16>, vector<16x144xf32> -> vector<16x144xf32>
    %182 = arith.truncf %181 : vector<16x144xf32> to vector<16x144xbf16>
    %c1_146 = arith.constant 1 : index
    %c0_147 = arith.constant 0 : index
    %c0_148 = arith.constant 0 : index
    %183 = vector.load %arg13[%c1_146, %c0_147, %c0_148] : memref<36x9x144xbf16, #tpu.memory_space<vmem>>, vector<1x9x144xbf16>
    %184 = vector.shape_cast %183 : vector<1x9x144xbf16> to vector<9x144xbf16>
    %cst_149 = arith.constant dense<0.000000e+00> : vector<16x144xf32>
    %185 = tpu.matmul %178, %184, %cst_149 {dimension_numbers = #tpu.dot_dimension_numbers<[1], [0], [0], [1], [0, 0, 1, 1], [], []>} : vector<16x9xbf16>, vector<9x144xbf16>, vector<16x144xf32> -> vector<16x144xf32>
    %186 = arith.truncf %185 : vector<16x144xf32> to vector<16x144xbf16>
    %c2_150 = arith.constant 2 : index
    %c0_151 = arith.constant 0 : index
    %c0_152 = arith.constant 0 : index
    %187 = vector.load %arg13[%c2_150, %c0_151, %c0_152] : memref<36x9x144xbf16, #tpu.memory_space<vmem>>, vector<1x9x144xbf16>
    %188 = vector.shape_cast %187 : vector<1x9x144xbf16> to vector<9x144xbf16>
    %cst_153 = arith.constant dense<0.000000e+00> : vector<16x144xf32>
    %189 = tpu.matmul %178, %188, %cst_153 {dimension_numbers = #tpu.dot_dimension_numbers<[1], [0], [0], [1], [0, 0, 1, 1], [], []>} : vector<16x9xbf16>, vector<9x144xbf16>, vector<16x144xf32> -> vector<16x144xf32>
    %190 = arith.truncf %189 : vector<16x144xf32> to vector<16x144xbf16>
    %c3_154 = arith.constant 3 : index
    %c0_155 = arith.constant 0 : index
    %c0_156 = arith.constant 0 : index
    %191 = vector.load %arg13[%c3_154, %c0_155, %c0_156] : memref<36x9x144xbf16, #tpu.memory_space<vmem>>, vector<1x9x144xbf16>
    %192 = vector.shape_cast %191 : vector<1x9x144xbf16> to vector<9x144xbf16>
    %cst_157 = arith.constant dense<0.000000e+00> : vector<16x144xf32>
    %193 = tpu.matmul %178, %192, %cst_157 {dimension_numbers = #tpu.dot_dimension_numbers<[1], [0], [0], [1], [0, 0, 1, 1], [], []>} : vector<16x9xbf16>, vector<9x144xbf16>, vector<16x144xf32> -> vector<16x144xf32>
    %194 = arith.truncf %193 : vector<16x144xf32> to vector<16x144xbf16>
    %c4_158 = arith.constant 4 : index
    %c0_159 = arith.constant 0 : index
    %c0_160 = arith.constant 0 : index
    %195 = vector.load %arg13[%c4_158, %c0_159, %c0_160] : memref<36x9x144xbf16, #tpu.memory_space<vmem>>, vector<1x9x144xbf16>
    %196 = vector.shape_cast %195 : vector<1x9x144xbf16> to vector<9x144xbf16>
    %cst_161 = arith.constant dense<0.000000e+00> : vector<16x144xf32>
    %197 = tpu.matmul %178, %196, %cst_161 {dimension_numbers = #tpu.dot_dimension_numbers<[1], [0], [0], [1], [0, 0, 1, 1], [], []>} : vector<16x9xbf16>, vector<9x144xbf16>, vector<16x144xf32> -> vector<16x144xf32>
    %198 = arith.truncf %197 : vector<16x144xf32> to vector<16x144xbf16>
    %c5_162 = arith.constant 5 : index
    %c0_163 = arith.constant 0 : index
    %c0_164 = arith.constant 0 : index
    %199 = vector.load %arg13[%c5_162, %c0_163, %c0_164] : memref<36x9x144xbf16, #tpu.memory_space<vmem>>, vector<1x9x144xbf16>
    %200 = vector.shape_cast %199 : vector<1x9x144xbf16> to vector<9x144xbf16>
    %cst_165 = arith.constant dense<0.000000e+00> : vector<16x144xf32>
    %201 = tpu.matmul %178, %200, %cst_165 {dimension_numbers = #tpu.dot_dimension_numbers<[1], [0], [0], [1], [0, 0, 1, 1], [], []>} : vector<16x9xbf16>, vector<9x144xbf16>, vector<16x144xf32> -> vector<16x144xf32>
    %202 = arith.truncf %201 : vector<16x144xf32> to vector<16x144xbf16>
    %c6_166 = arith.constant 6 : index
    %c0_167 = arith.constant 0 : index
    %c0_168 = arith.constant 0 : index
    %203 = vector.load %arg13[%c6_166, %c0_167, %c0_168] : memref<36x9x144xbf16, #tpu.memory_space<vmem>>, vector<1x9x144xbf16>
    %204 = vector.shape_cast %203 : vector<1x9x144xbf16> to vector<9x144xbf16>
    %cst_169 = arith.constant dense<0.000000e+00> : vector<16x144xf32>
    %205 = tpu.matmul %178, %204, %cst_169 {dimension_numbers = #tpu.dot_dimension_numbers<[1], [0], [0], [1], [0, 0, 1, 1], [], []>} : vector<16x9xbf16>, vector<9x144xbf16>, vector<16x144xf32> -> vector<16x144xf32>
    %206 = arith.truncf %205 : vector<16x144xf32> to vector<16x144xbf16>
    %c7_170 = arith.constant 7 : index
    %c0_171 = arith.constant 0 : index
    %c0_172 = arith.constant 0 : index
    %207 = vector.load %arg13[%c7_170, %c0_171, %c0_172] : memref<36x9x144xbf16, #tpu.memory_space<vmem>>, vector<1x9x144xbf16>
    %208 = vector.shape_cast %207 : vector<1x9x144xbf16> to vector<9x144xbf16>
    %cst_173 = arith.constant dense<0.000000e+00> : vector<16x144xf32>
    %209 = tpu.matmul %178, %208, %cst_173 {dimension_numbers = #tpu.dot_dimension_numbers<[1], [0], [0], [1], [0, 0, 1, 1], [], []>} : vector<16x9xbf16>, vector<9x144xbf16>, vector<16x144xf32> -> vector<16x144xf32>
    %210 = arith.truncf %209 : vector<16x144xf32> to vector<16x144xbf16>
    %c8_174 = arith.constant 8 : index
    %c0_175 = arith.constant 0 : index
    %c0_176 = arith.constant 0 : index
    %211 = vector.load %arg13[%c8_174, %c0_175, %c0_176] : memref<36x9x144xbf16, #tpu.memory_space<vmem>>, vector<1x9x144xbf16>
    %212 = vector.shape_cast %211 : vector<1x9x144xbf16> to vector<9x144xbf16>
    %cst_177 = arith.constant dense<0.000000e+00> : vector<16x144xf32>
    %213 = tpu.matmul %178, %212, %cst_177 {dimension_numbers = #tpu.dot_dimension_numbers<[1], [0], [0], [1], [0, 0, 1, 1], [], []>} : vector<16x9xbf16>, vector<9x144xbf16>, vector<16x144xf32> -> vector<16x144xf32>
    %214 = arith.truncf %213 : vector<16x144xf32> to vector<16x144xbf16>
    %c9 = arith.constant 9 : index
    %c0_178 = arith.constant 0 : index
    %c0_179 = arith.constant 0 : index
    %215 = vector.load %arg13[%c9, %c0_178, %c0_179] : memref<36x9x144xbf16, #tpu.memory_space<vmem>>, vector<1x9x144xbf16>
    %216 = vector.shape_cast %215 : vector<1x9x144xbf16> to vector<9x144xbf16>
    %cst_180 = arith.constant dense<0.000000e+00> : vector<16x144xf32>
    %217 = tpu.matmul %178, %216, %cst_180 {dimension_numbers = #tpu.dot_dimension_numbers<[1], [0], [0], [1], [0, 0, 1, 1], [], []>} : vector<16x9xbf16>, vector<9x144xbf16>, vector<16x144xf32> -> vector<16x144xf32>
    %218 = arith.truncf %217 : vector<16x144xf32> to vector<16x144xbf16>
    %c10 = arith.constant 10 : index
    %c0_181 = arith.constant 0 : index
    %c0_182 = arith.constant 0 : index
    %219 = vector.load %arg13[%c10, %c0_181, %c0_182] : memref<36x9x144xbf16, #tpu.memory_space<vmem>>, vector<1x9x144xbf16>
    %220 = vector.shape_cast %219 : vector<1x9x144xbf16> to vector<9x144xbf16>
    %cst_183 = arith.constant dense<0.000000e+00> : vector<16x144xf32>
    %221 = tpu.matmul %178, %220, %cst_183 {dimension_numbers = #tpu.dot_dimension_numbers<[1], [0], [0], [1], [0, 0, 1, 1], [], []>} : vector<16x9xbf16>, vector<9x144xbf16>, vector<16x144xf32> -> vector<16x144xf32>
    %222 = arith.truncf %221 : vector<16x144xf32> to vector<16x144xbf16>
    %c11 = arith.constant 11 : index
    %c0_184 = arith.constant 0 : index
    %c0_185 = arith.constant 0 : index
    %223 = vector.load %arg13[%c11, %c0_184, %c0_185] : memref<36x9x144xbf16, #tpu.memory_space<vmem>>, vector<1x9x144xbf16>
    %224 = vector.shape_cast %223 : vector<1x9x144xbf16> to vector<9x144xbf16>
    %cst_186 = arith.constant dense<0.000000e+00> : vector<16x144xf32>
    %225 = tpu.matmul %178, %224, %cst_186 {dimension_numbers = #tpu.dot_dimension_numbers<[1], [0], [0], [1], [0, 0, 1, 1], [], []>} : vector<16x9xbf16>, vector<9x144xbf16>, vector<16x144xf32> -> vector<16x144xf32>
    %226 = arith.truncf %225 : vector<16x144xf32> to vector<16x144xbf16>
    %c12 = arith.constant 12 : index
    %c0_187 = arith.constant 0 : index
    %c0_188 = arith.constant 0 : index
    %227 = vector.load %arg13[%c12, %c0_187, %c0_188] : memref<36x9x144xbf16, #tpu.memory_space<vmem>>, vector<1x9x144xbf16>
    %228 = vector.shape_cast %227 : vector<1x9x144xbf16> to vector<9x144xbf16>
    %cst_189 = arith.constant dense<0.000000e+00> : vector<16x144xf32>
    %229 = tpu.matmul %178, %228, %cst_189 {dimension_numbers = #tpu.dot_dimension_numbers<[1], [0], [0], [1], [0, 0, 1, 1], [], []>} : vector<16x9xbf16>, vector<9x144xbf16>, vector<16x144xf32> -> vector<16x144xf32>
    %230 = arith.truncf %229 : vector<16x144xf32> to vector<16x144xbf16>
    %c13 = arith.constant 13 : index
    %c0_190 = arith.constant 0 : index
    %c0_191 = arith.constant 0 : index
    %231 = vector.load %arg13[%c13, %c0_190, %c0_191] : memref<36x9x144xbf16, #tpu.memory_space<vmem>>, vector<1x9x144xbf16>
    %232 = vector.shape_cast %231 : vector<1x9x144xbf16> to vector<9x144xbf16>
    %cst_192 = arith.constant dense<0.000000e+00> : vector<16x144xf32>
    %233 = tpu.matmul %178, %232, %cst_192 {dimension_numbers = #tpu.dot_dimension_numbers<[1], [0], [0], [1], [0, 0, 1, 1], [], []>} : vector<16x9xbf16>, vector<9x144xbf16>, vector<16x144xf32> -> vector<16x144xf32>
    %234 = arith.truncf %233 : vector<16x144xf32> to vector<16x144xbf16>
    %c14 = arith.constant 14 : index
    %c0_193 = arith.constant 0 : index
    %c0_194 = arith.constant 0 : index
    %235 = vector.load %arg13[%c14, %c0_193, %c0_194] : memref<36x9x144xbf16, #tpu.memory_space<vmem>>, vector<1x9x144xbf16>
    %236 = vector.shape_cast %235 : vector<1x9x144xbf16> to vector<9x144xbf16>
    %cst_195 = arith.constant dense<0.000000e+00> : vector<16x144xf32>
    %237 = tpu.matmul %178, %236, %cst_195 {dimension_numbers = #tpu.dot_dimension_numbers<[1], [0], [0], [1], [0, 0, 1, 1], [], []>} : vector<16x9xbf16>, vector<9x144xbf16>, vector<16x144xf32> -> vector<16x144xf32>
    %238 = arith.truncf %237 : vector<16x144xf32> to vector<16x144xbf16>
    %c15 = arith.constant 15 : index
    %c0_196 = arith.constant 0 : index
    %c0_197 = arith.constant 0 : index
    %239 = vector.load %arg13[%c15, %c0_196, %c0_197] : memref<36x9x144xbf16, #tpu.memory_space<vmem>>, vector<1x9x144xbf16>
    %240 = vector.shape_cast %239 : vector<1x9x144xbf16> to vector<9x144xbf16>
    %cst_198 = arith.constant dense<0.000000e+00> : vector<16x144xf32>
    %241 = tpu.matmul %178, %240, %cst_198 {dimension_numbers = #tpu.dot_dimension_numbers<[1], [0], [0], [1], [0, 0, 1, 1], [], []>} : vector<16x9xbf16>, vector<9x144xbf16>, vector<16x144xf32> -> vector<16x144xf32>
    %242 = arith.truncf %241 : vector<16x144xf32> to vector<16x144xbf16>
    %c16 = arith.constant 16 : index
    %c0_199 = arith.constant 0 : index
    %c0_200 = arith.constant 0 : index
    %243 = vector.load %arg13[%c16, %c0_199, %c0_200] : memref<36x9x144xbf16, #tpu.memory_space<vmem>>, vector<1x9x144xbf16>
    %244 = vector.shape_cast %243 : vector<1x9x144xbf16> to vector<9x144xbf16>
    %cst_201 = arith.constant dense<0.000000e+00> : vector<16x144xf32>
    %245 = tpu.matmul %178, %244, %cst_201 {dimension_numbers = #tpu.dot_dimension_numbers<[1], [0], [0], [1], [0, 0, 1, 1], [], []>} : vector<16x9xbf16>, vector<9x144xbf16>, vector<16x144xf32> -> vector<16x144xf32>
    %246 = arith.truncf %245 : vector<16x144xf32> to vector<16x144xbf16>
    %c17 = arith.constant 17 : index
    %c0_202 = arith.constant 0 : index
    %c0_203 = arith.constant 0 : index
    %247 = vector.load %arg13[%c17, %c0_202, %c0_203] : memref<36x9x144xbf16, #tpu.memory_space<vmem>>, vector<1x9x144xbf16>
    %248 = vector.shape_cast %247 : vector<1x9x144xbf16> to vector<9x144xbf16>
    %cst_204 = arith.constant dense<0.000000e+00> : vector<16x144xf32>
    %249 = tpu.matmul %178, %248, %cst_204 {dimension_numbers = #tpu.dot_dimension_numbers<[1], [0], [0], [1], [0, 0, 1, 1], [], []>} : vector<16x9xbf16>, vector<9x144xbf16>, vector<16x144xf32> -> vector<16x144xf32>
    %250 = arith.truncf %249 : vector<16x144xf32> to vector<16x144xbf16>
    %c18 = arith.constant 18 : index
    %c0_205 = arith.constant 0 : index
    %c0_206 = arith.constant 0 : index
    %251 = vector.load %arg13[%c18, %c0_205, %c0_206] : memref<36x9x144xbf16, #tpu.memory_space<vmem>>, vector<1x9x144xbf16>
    %252 = vector.shape_cast %251 : vector<1x9x144xbf16> to vector<9x144xbf16>
    %cst_207 = arith.constant dense<0.000000e+00> : vector<16x144xf32>
    %253 = tpu.matmul %178, %252, %cst_207 {dimension_numbers = #tpu.dot_dimension_numbers<[1], [0], [0], [1], [0, 0, 1, 1], [], []>} : vector<16x9xbf16>, vector<9x144xbf16>, vector<16x144xf32> -> vector<16x144xf32>
    %254 = arith.truncf %253 : vector<16x144xf32> to vector<16x144xbf16>
    %c19 = arith.constant 19 : index
    %c0_208 = arith.constant 0 : index
    %c0_209 = arith.constant 0 : index
    %255 = vector.load %arg13[%c19, %c0_208, %c0_209] : memref<36x9x144xbf16, #tpu.memory_space<vmem>>, vector<1x9x144xbf16>
    %256 = vector.shape_cast %255 : vector<1x9x144xbf16> to vector<9x144xbf16>
    %cst_210 = arith.constant dense<0.000000e+00> : vector<16x144xf32>
    %257 = tpu.matmul %178, %256, %cst_210 {dimension_numbers = #tpu.dot_dimension_numbers<[1], [0], [0], [1], [0, 0, 1, 1], [], []>} : vector<16x9xbf16>, vector<9x144xbf16>, vector<16x144xf32> -> vector<16x144xf32>
    %258 = arith.truncf %257 : vector<16x144xf32> to vector<16x144xbf16>
    %c20 = arith.constant 20 : index
    %c0_211 = arith.constant 0 : index
    %c0_212 = arith.constant 0 : index
    %259 = vector.load %arg13[%c20, %c0_211, %c0_212] : memref<36x9x144xbf16, #tpu.memory_space<vmem>>, vector<1x9x144xbf16>
    %260 = vector.shape_cast %259 : vector<1x9x144xbf16> to vector<9x144xbf16>
    %cst_213 = arith.constant dense<0.000000e+00> : vector<16x144xf32>
    %261 = tpu.matmul %178, %260, %cst_213 {dimension_numbers = #tpu.dot_dimension_numbers<[1], [0], [0], [1], [0, 0, 1, 1], [], []>} : vector<16x9xbf16>, vector<9x144xbf16>, vector<16x144xf32> -> vector<16x144xf32>
    %262 = arith.truncf %261 : vector<16x144xf32> to vector<16x144xbf16>
    %c21 = arith.constant 21 : index
    %c0_214 = arith.constant 0 : index
    %c0_215 = arith.constant 0 : index
    %263 = vector.load %arg13[%c21, %c0_214, %c0_215] : memref<36x9x144xbf16, #tpu.memory_space<vmem>>, vector<1x9x144xbf16>
    %264 = vector.shape_cast %263 : vector<1x9x144xbf16> to vector<9x144xbf16>
    %cst_216 = arith.constant dense<0.000000e+00> : vector<16x144xf32>
    %265 = tpu.matmul %178, %264, %cst_216 {dimension_numbers = #tpu.dot_dimension_numbers<[1], [0], [0], [1], [0, 0, 1, 1], [], []>} : vector<16x9xbf16>, vector<9x144xbf16>, vector<16x144xf32> -> vector<16x144xf32>
    %266 = arith.truncf %265 : vector<16x144xf32> to vector<16x144xbf16>
    %c22 = arith.constant 22 : index
    %c0_217 = arith.constant 0 : index
    %c0_218 = arith.constant 0 : index
    %267 = vector.load %arg13[%c22, %c0_217, %c0_218] : memref<36x9x144xbf16, #tpu.memory_space<vmem>>, vector<1x9x144xbf16>
    %268 = vector.shape_cast %267 : vector<1x9x144xbf16> to vector<9x144xbf16>
    %cst_219 = arith.constant dense<0.000000e+00> : vector<16x144xf32>
    %269 = tpu.matmul %178, %268, %cst_219 {dimension_numbers = #tpu.dot_dimension_numbers<[1], [0], [0], [1], [0, 0, 1, 1], [], []>} : vector<16x9xbf16>, vector<9x144xbf16>, vector<16x144xf32> -> vector<16x144xf32>
    %270 = arith.truncf %269 : vector<16x144xf32> to vector<16x144xbf16>
    %c23 = arith.constant 23 : index
    %c0_220 = arith.constant 0 : index
    %c0_221 = arith.constant 0 : index
    %271 = vector.load %arg13[%c23, %c0_220, %c0_221] : memref<36x9x144xbf16, #tpu.memory_space<vmem>>, vector<1x9x144xbf16>
    %272 = vector.shape_cast %271 : vector<1x9x144xbf16> to vector<9x144xbf16>
    %cst_222 = arith.constant dense<0.000000e+00> : vector<16x144xf32>
    %273 = tpu.matmul %178, %272, %cst_222 {dimension_numbers = #tpu.dot_dimension_numbers<[1], [0], [0], [1], [0, 0, 1, 1], [], []>} : vector<16x9xbf16>, vector<9x144xbf16>, vector<16x144xf32> -> vector<16x144xf32>
    %274 = arith.truncf %273 : vector<16x144xf32> to vector<16x144xbf16>
    %c24 = arith.constant 24 : index
    %c0_223 = arith.constant 0 : index
    %c0_224 = arith.constant 0 : index
    %275 = vector.load %arg13[%c24, %c0_223, %c0_224] : memref<36x9x144xbf16, #tpu.memory_space<vmem>>, vector<1x9x144xbf16>
    %276 = vector.shape_cast %275 : vector<1x9x144xbf16> to vector<9x144xbf16>
    %cst_225 = arith.constant dense<0.000000e+00> : vector<16x144xf32>
    %277 = tpu.matmul %178, %276, %cst_225 {dimension_numbers = #tpu.dot_dimension_numbers<[1], [0], [0], [1], [0, 0, 1, 1], [], []>} : vector<16x9xbf16>, vector<9x144xbf16>, vector<16x144xf32> -> vector<16x144xf32>
    %278 = arith.truncf %277 : vector<16x144xf32> to vector<16x144xbf16>
    %c25 = arith.constant 25 : index
    %c0_226 = arith.constant 0 : index
    %c0_227 = arith.constant 0 : index
    %279 = vector.load %arg13[%c25, %c0_226, %c0_227] : memref<36x9x144xbf16, #tpu.memory_space<vmem>>, vector<1x9x144xbf16>
    %280 = vector.shape_cast %279 : vector<1x9x144xbf16> to vector<9x144xbf16>
    %cst_228 = arith.constant dense<0.000000e+00> : vector<16x144xf32>
    %281 = tpu.matmul %178, %280, %cst_228 {dimension_numbers = #tpu.dot_dimension_numbers<[1], [0], [0], [1], [0, 0, 1, 1], [], []>} : vector<16x9xbf16>, vector<9x144xbf16>, vector<16x144xf32> -> vector<16x144xf32>
    %282 = arith.truncf %281 : vector<16x144xf32> to vector<16x144xbf16>
    %c26 = arith.constant 26 : index
    %c0_229 = arith.constant 0 : index
    %c0_230 = arith.constant 0 : index
    %283 = vector.load %arg13[%c26, %c0_229, %c0_230] : memref<36x9x144xbf16, #tpu.memory_space<vmem>>, vector<1x9x144xbf16>
    %284 = vector.shape_cast %283 : vector<1x9x144xbf16> to vector<9x144xbf16>
    %cst_231 = arith.constant dense<0.000000e+00> : vector<16x144xf32>
    %285 = tpu.matmul %178, %284, %cst_231 {dimension_numbers = #tpu.dot_dimension_numbers<[1], [0], [0], [1], [0, 0, 1, 1], [], []>} : vector<16x9xbf16>, vector<9x144xbf16>, vector<16x144xf32> -> vector<16x144xf32>
    %286 = arith.truncf %285 : vector<16x144xf32> to vector<16x144xbf16>
    %c27 = arith.constant 27 : index
    %c0_232 = arith.constant 0 : index
    %c0_233 = arith.constant 0 : index
    %287 = vector.load %arg13[%c27, %c0_232, %c0_233] : memref<36x9x144xbf16, #tpu.memory_space<vmem>>, vector<1x9x144xbf16>
    %288 = vector.shape_cast %287 : vector<1x9x144xbf16> to vector<9x144xbf16>
    %cst_234 = arith.constant dense<0.000000e+00> : vector<16x144xf32>
    %289 = tpu.matmul %178, %288, %cst_234 {dimension_numbers = #tpu.dot_dimension_numbers<[1], [0], [0], [1], [0, 0, 1, 1], [], []>} : vector<16x9xbf16>, vector<9x144xbf16>, vector<16x144xf32> -> vector<16x144xf32>
    %290 = arith.truncf %289 : vector<16x144xf32> to vector<16x144xbf16>
    %c28 = arith.constant 28 : index
    %c0_235 = arith.constant 0 : index
    %c0_236 = arith.constant 0 : index
    %291 = vector.load %arg13[%c28, %c0_235, %c0_236] : memref<36x9x144xbf16, #tpu.memory_space<vmem>>, vector<1x9x144xbf16>
    %292 = vector.shape_cast %291 : vector<1x9x144xbf16> to vector<9x144xbf16>
    %cst_237 = arith.constant dense<0.000000e+00> : vector<16x144xf32>
    %293 = tpu.matmul %178, %292, %cst_237 {dimension_numbers = #tpu.dot_dimension_numbers<[1], [0], [0], [1], [0, 0, 1, 1], [], []>} : vector<16x9xbf16>, vector<9x144xbf16>, vector<16x144xf32> -> vector<16x144xf32>
    %294 = arith.truncf %293 : vector<16x144xf32> to vector<16x144xbf16>
    %c29 = arith.constant 29 : index
    %c0_238 = arith.constant 0 : index
    %c0_239 = arith.constant 0 : index
    %295 = vector.load %arg13[%c29, %c0_238, %c0_239] : memref<36x9x144xbf16, #tpu.memory_space<vmem>>, vector<1x9x144xbf16>
    %296 = vector.shape_cast %295 : vector<1x9x144xbf16> to vector<9x144xbf16>
    %cst_240 = arith.constant dense<0.000000e+00> : vector<16x144xf32>
    %297 = tpu.matmul %178, %296, %cst_240 {dimension_numbers = #tpu.dot_dimension_numbers<[1], [0], [0], [1], [0, 0, 1, 1], [], []>} : vector<16x9xbf16>, vector<9x144xbf16>, vector<16x144xf32> -> vector<16x144xf32>
    %298 = arith.truncf %297 : vector<16x144xf32> to vector<16x144xbf16>
    %c30 = arith.constant 30 : index
    %c0_241 = arith.constant 0 : index
    %c0_242 = arith.constant 0 : index
    %299 = vector.load %arg13[%c30, %c0_241, %c0_242] : memref<36x9x144xbf16, #tpu.memory_space<vmem>>, vector<1x9x144xbf16>
    %300 = vector.shape_cast %299 : vector<1x9x144xbf16> to vector<9x144xbf16>
    %cst_243 = arith.constant dense<0.000000e+00> : vector<16x144xf32>
    %301 = tpu.matmul %178, %300, %cst_243 {dimension_numbers = #tpu.dot_dimension_numbers<[1], [0], [0], [1], [0, 0, 1, 1], [], []>} : vector<16x9xbf16>, vector<9x144xbf16>, vector<16x144xf32> -> vector<16x144xf32>
    %302 = arith.truncf %301 : vector<16x144xf32> to vector<16x144xbf16>
    %c31 = arith.constant 31 : index
    %c0_244 = arith.constant 0 : index
    %c0_245 = arith.constant 0 : index
    %303 = vector.load %arg13[%c31, %c0_244, %c0_245] : memref<36x9x144xbf16, #tpu.memory_space<vmem>>, vector<1x9x144xbf16>
    %304 = vector.shape_cast %303 : vector<1x9x144xbf16> to vector<9x144xbf16>
    %cst_246 = arith.constant dense<0.000000e+00> : vector<16x144xf32>
    %305 = tpu.matmul %178, %304, %cst_246 {dimension_numbers = #tpu.dot_dimension_numbers<[1], [0], [0], [1], [0, 0, 1, 1], [], []>} : vector<16x9xbf16>, vector<9x144xbf16>, vector<16x144xf32> -> vector<16x144xf32>
    %306 = arith.truncf %305 : vector<16x144xf32> to vector<16x144xbf16>
    %c32 = arith.constant 32 : index
    %c0_247 = arith.constant 0 : index
    %c0_248 = arith.constant 0 : index
    %307 = vector.load %arg13[%c32, %c0_247, %c0_248] : memref<36x9x144xbf16, #tpu.memory_space<vmem>>, vector<1x9x144xbf16>
    %308 = vector.shape_cast %307 : vector<1x9x144xbf16> to vector<9x144xbf16>
    %cst_249 = arith.constant dense<0.000000e+00> : vector<16x144xf32>
    %309 = tpu.matmul %178, %308, %cst_249 {dimension_numbers = #tpu.dot_dimension_numbers<[1], [0], [0], [1], [0, 0, 1, 1], [], []>} : vector<16x9xbf16>, vector<9x144xbf16>, vector<16x144xf32> -> vector<16x144xf32>
    %310 = arith.truncf %309 : vector<16x144xf32> to vector<16x144xbf16>
    %c33 = arith.constant 33 : index
    %c0_250 = arith.constant 0 : index
    %c0_251 = arith.constant 0 : index
    %311 = vector.load %arg13[%c33, %c0_250, %c0_251] : memref<36x9x144xbf16, #tpu.memory_space<vmem>>, vector<1x9x144xbf16>
    %312 = vector.shape_cast %311 : vector<1x9x144xbf16> to vector<9x144xbf16>
    %cst_252 = arith.constant dense<0.000000e+00> : vector<16x144xf32>
    %313 = tpu.matmul %178, %312, %cst_252 {dimension_numbers = #tpu.dot_dimension_numbers<[1], [0], [0], [1], [0, 0, 1, 1], [], []>} : vector<16x9xbf16>, vector<9x144xbf16>, vector<16x144xf32> -> vector<16x144xf32>
    %314 = arith.truncf %313 : vector<16x144xf32> to vector<16x144xbf16>
    %c34 = arith.constant 34 : index
    %c0_253 = arith.constant 0 : index
    %c0_254 = arith.constant 0 : index
    %315 = vector.load %arg13[%c34, %c0_253, %c0_254] : memref<36x9x144xbf16, #tpu.memory_space<vmem>>, vector<1x9x144xbf16>
    %316 = vector.shape_cast %315 : vector<1x9x144xbf16> to vector<9x144xbf16>
    %cst_255 = arith.constant dense<0.000000e+00> : vector<16x144xf32>
    %317 = tpu.matmul %178, %316, %cst_255 {dimension_numbers = #tpu.dot_dimension_numbers<[1], [0], [0], [1], [0, 0, 1, 1], [], []>} : vector<16x9xbf16>, vector<9x144xbf16>, vector<16x144xf32> -> vector<16x144xf32>
    %318 = arith.truncf %317 : vector<16x144xf32> to vector<16x144xbf16>
    %c35 = arith.constant 35 : index
    %c0_256 = arith.constant 0 : index
    %c0_257 = arith.constant 0 : index
    %319 = vector.load %arg13[%c35, %c0_256, %c0_257] : memref<36x9x144xbf16, #tpu.memory_space<vmem>>, vector<1x9x144xbf16>
    %320 = vector.shape_cast %319 : vector<1x9x144xbf16> to vector<9x144xbf16>
    %cst_258 = arith.constant dense<0.000000e+00> : vector<16x144xf32>
    %321 = tpu.matmul %178, %320, %cst_258 {dimension_numbers = #tpu.dot_dimension_numbers<[1], [0], [0], [1], [0, 0, 1, 1], [], []>} : vector<16x9xbf16>, vector<9x144xbf16>, vector<16x144xf32> -> vector<16x144xf32>
    %322 = arith.truncf %321 : vector<16x144xf32> to vector<16x144xbf16>
    %323 = tpu.concatenate %182, %186, %190, %194, %198, %202, %206, %210, %214, %218, %222, %226, %230, %234, %238, %242 in 0 : vector<16x144xbf16>, vector<16x144xbf16>, vector<16x144xbf16>, vector<16x144xbf16>, vector<16x144xbf16>, vector<16x144xbf16>, vector<16x144xbf16>, vector<16x144xbf16>, vector<16x144xbf16>, vector<16x144xbf16>, vector<16x144xbf16>, vector<16x144xbf16>, vector<16x144xbf16>, vector<16x144xbf16>, vector<16x144xbf16>, vector<16x144xbf16> -> vector<256x144xbf16>
    %324 = tpu.concatenate %246, %250, %254, %258, %262, %266, %270, %274, %278, %282, %286, %290, %294, %298, %302, %306 in 0 : vector<16x144xbf16>, vector<16x144xbf16>, vector<16x144xbf16>, vector<16x144xbf16>, vector<16x144xbf16>, vector<16x144xbf16>, vector<16x144xbf16>, vector<16x144xbf16>, vector<16x144xbf16>, vector<16x144xbf16>, vector<16x144xbf16>, vector<16x144xbf16>, vector<16x144xbf16>, vector<16x144xbf16>, vector<16x144xbf16>, vector<16x144xbf16> -> vector<256x144xbf16>
    %325 = tpu.concatenate %310, %314, %318, %322 in 0 : vector<16x144xbf16>, vector<16x144xbf16>, vector<16x144xbf16>, vector<16x144xbf16> -> vector<64x144xbf16>
    %326 = tpu.concatenate %323, %324, %325 in 0 : vector<256x144xbf16>, vector<256x144xbf16>, vector<64x144xbf16> -> vector<576x144xbf16>
    %c0_259 = arith.constant 0 : index
    %c0_260 = arith.constant 0 : index
    %327 = vector.load %arg14[%c0_259, %c0_260] : memref<8x576xbf16, #tpu.memory_space<vmem>>, vector<8x576xbf16>
    %cst_261 = arith.constant dense<0.000000e+00> : vector<8x144xf32>
    %328 = tpu.matmul %327, %326, %cst_261 {dimension_numbers = #tpu.dot_dimension_numbers<[1], [0], [0], [1], [0, 0, 1, 1], [], []>} : vector<8x576xbf16>, vector<576x144xbf16>, vector<8x144xf32> -> vector<8x144xf32>
    %c0_262 = arith.constant 0 : index
    %c0_263 = arith.constant 0 : index
    %329 = vector.load %arg15[%c0_262, %c0_263] : memref<8x1xf32, #tpu.memory_space<vmem>>, vector<8x1xf32>
    %330 = vector.broadcast %329 : vector<8x1xf32> to vector<8x144xf32>
    %331 = arith.addf %328, %330 : vector<8x144xf32>
    %cst_264 = arith.constant 0.000000e+00 : f32
    %332 = vector.broadcast %cst_264 : f32 to vector<8x144xf32>
    %333 = arith.maximumf %331, %332 : vector<8x144xf32>
    %334 = arith.truncf %333 : vector<8x144xf32> to vector<8x144xbf16>
    %c0_265 = arith.constant 0 : index
    %c0_266 = arith.constant 0 : index
    %c0_267 = arith.constant 0 : index
    %335 = vector.load %arg16[%c0_265, %c0_266, %c0_267] : memref<4x144x576xbf16, #tpu.memory_space<vmem>>, vector<1x144x576xbf16>
    %336 = vector.shape_cast %335 : vector<1x144x576xbf16> to vector<144x576xbf16>
    %cst_268 = arith.constant dense<0.000000e+00> : vector<8x576xf32>
    %337 = tpu.matmul %334, %336, %cst_268 {dimension_numbers = #tpu.dot_dimension_numbers<[1], [0], [0], [1], [0, 0, 1, 1], [], []>} : vector<8x144xbf16>, vector<144x576xbf16>, vector<8x576xf32> -> vector<8x576xf32>
    %338 = arith.truncf %337 : vector<8x576xf32> to vector<8x576xbf16>
    %c1_269 = arith.constant 1 : index
    %c0_270 = arith.constant 0 : index
    %c0_271 = arith.constant 0 : index
    %339 = vector.load %arg16[%c1_269, %c0_270, %c0_271] : memref<4x144x576xbf16, #tpu.memory_space<vmem>>, vector<1x144x576xbf16>
    %340 = vector.shape_cast %339 : vector<1x144x576xbf16> to vector<144x576xbf16>
    %cst_272 = arith.constant dense<0.000000e+00> : vector<8x576xf32>
    %341 = tpu.matmul %334, %340, %cst_272 {dimension_numbers = #tpu.dot_dimension_numbers<[1], [0], [0], [1], [0, 0, 1, 1], [], []>} : vector<8x144xbf16>, vector<144x576xbf16>, vector<8x576xf32> -> vector<8x576xf32>
    %342 = arith.truncf %341 : vector<8x576xf32> to vector<8x576xbf16>
    %c2_273 = arith.constant 2 : index
    %c0_274 = arith.constant 0 : index
    %c0_275 = arith.constant 0 : index
    %343 = vector.load %arg16[%c2_273, %c0_274, %c0_275] : memref<4x144x576xbf16, #tpu.memory_space<vmem>>, vector<1x144x576xbf16>
    %344 = vector.shape_cast %343 : vector<1x144x576xbf16> to vector<144x576xbf16>
    %cst_276 = arith.constant dense<0.000000e+00> : vector<8x576xf32>
    %345 = tpu.matmul %334, %344, %cst_276 {dimension_numbers = #tpu.dot_dimension_numbers<[1], [0], [0], [1], [0, 0, 1, 1], [], []>} : vector<8x144xbf16>, vector<144x576xbf16>, vector<8x576xf32> -> vector<8x576xf32>
    %346 = arith.truncf %345 : vector<8x576xf32> to vector<8x576xbf16>
    %c3_277 = arith.constant 3 : index
    %c0_278 = arith.constant 0 : index
    %c0_279 = arith.constant 0 : index
    %347 = vector.load %arg16[%c3_277, %c0_278, %c0_279] : memref<4x144x576xbf16, #tpu.memory_space<vmem>>, vector<1x144x576xbf16>
    %348 = vector.shape_cast %347 : vector<1x144x576xbf16> to vector<144x576xbf16>
    %cst_280 = arith.constant dense<0.000000e+00> : vector<8x576xf32>
    %349 = tpu.matmul %334, %348, %cst_280 {dimension_numbers = #tpu.dot_dimension_numbers<[1], [0], [0], [1], [0, 0, 1, 1], [], []>} : vector<8x144xbf16>, vector<144x576xbf16>, vector<8x576xf32> -> vector<8x576xf32>
    %350 = arith.truncf %349 : vector<8x576xf32> to vector<8x576xbf16>
    %351 = tpu.concatenate %338, %342, %346, %350 in 0 : vector<8x576xbf16>, vector<8x576xbf16>, vector<8x576xbf16>, vector<8x576xbf16> -> vector<32x576xbf16>
    %c0_281 = arith.constant 0 : index
    %c0_282 = arith.constant 0 : index
    %352 = vector.load %arg17[%c0_281, %c0_282] : memref<3x32xbf16, #tpu.memory_space<vmem>>, vector<3x32xbf16>
    %cst_283 = arith.constant dense<0.000000e+00> : vector<3x576xf32>
    %353 = tpu.matmul %352, %351, %cst_283 {dimension_numbers = #tpu.dot_dimension_numbers<[1], [0], [0], [1], [0, 0, 1, 1], [], []>} : vector<3x32xbf16>, vector<32x576xbf16>, vector<3x576xf32> -> vector<3x576xf32>
    %c0_284 = arith.constant 0 : index
    %c0_285 = arith.constant 0 : index
    %354 = vector.load %arg18[%c0_284, %c0_285] : memref<3x1xf32, #tpu.memory_space<vmem>>, vector<3x1xf32>
    %355 = vector.broadcast %354 : vector<3x1xf32> to vector<3x576xf32>
    %356 = arith.addf %353, %355 : vector<3x576xf32>
    %357 = math.tanh %356 : vector<3x576xf32>
    %c0_286 = arith.constant 0 : index
    %c0_287 = arith.constant 0 : index
    %c0_288 = arith.constant 0 : index
    %358 = vector.load %arg19[%c0_286, %c0_287, %c0_288] : memref<1x3x576xf32, #tpu.memory_space<vmem>>, vector<1x3x576xf32>
    %359 = vector.shape_cast %358 : vector<1x3x576xf32> to vector<3x576xf32>
    %360 = vector.shape_cast %357 : vector<3x576xf32> to vector<1x3x576xf32>
    tpu.vector_store %arg19[%c0_286, %c0_287, %c0_288], %360 {strides = array<i32>} : memref<1x3x576xf32, #tpu.memory_space<vmem>>, vector<1x3x576xf32>,
    return
  }
  func.func @transform_0(%arg0: i32) -> (i32, i32, i32) {
    %c0_i32 = arith.constant 0 : i32
    %c0_i32_0 = arith.constant 0 : i32
    %c0_i32_1 = arith.constant 0 : i32
    return %arg0, %c0_i32, %c0_i32_0 : i32, i32, i32
  }
  func.func @transform_1(%arg0: i32) -> (i32, i32, i32) {
    %c0_i32 = arith.constant 0 : i32
    %c0_i32_0 = arith.constant 0 : i32
    %c0_i32_1 = arith.constant 0 : i32
    %c0_i32_2 = arith.constant 0 : i32
    return %c0_i32, %c0_i32_0, %c0_i32_1 : i32, i32, i32
  }
  func.func @transform_2(%arg0: i32) -> (i32, i32) {
    %c0_i32 = arith.constant 0 : i32
    %c0_i32_0 = arith.constant 0 : i32
    %c0_i32_1 = arith.constant 0 : i32
    return %c0_i32, %c0_i32_0 : i32, i32
  }
  func.func @transform_3(%arg0: i32) -> (i32, i32) {
    %c0_i32 = arith.constant 0 : i32
    %c0_i32_0 = arith.constant 0 : i32
    %c0_i32_1 = arith.constant 0 : i32
    return %c0_i32, %c0_i32_0 : i32, i32
  }
  func.func @transform_4(%arg0: i32) -> (i32, i32, i32) {
    %c0_i32 = arith.constant 0 : i32
    %c0_i32_0 = arith.constant 0 : i32
    %c0_i32_1 = arith.constant 0 : i32
    %c0_i32_2 = arith.constant 0 : i32
    return %c0_i32, %c0_i32_0, %c0_i32_1 : i32, i32, i32
  }
  func.func @transform_5(%arg0: i32) -> (i32, i32, i32) {
    %c0_i32 = arith.constant 0 : i32
    %c0_i32_0 = arith.constant 0 : i32
    %c0_i32_1 = arith.constant 0 : i32
    %c0_i32_2 = arith.constant 0 : i32
    return %c0_i32, %c0_i32_0, %c0_i32_1 : i32, i32, i32
  }
  func.func @transform_6(%arg0: i32) -> (i32, i32) {
    %c0_i32 = arith.constant 0 : i32
    %c0_i32_0 = arith.constant 0 : i32
    %c0_i32_1 = arith.constant 0 : i32
    return %c0_i32, %c0_i32_0 : i32, i32
  }
  func.func @transform_7(%arg0: i32) -> (i32, i32) {
    %c0_i32 = arith.constant 0 : i32
    %c0_i32_0 = arith.constant 0 : i32
    %c0_i32_1 = arith.constant 0 : i32
    return %c0_i32, %c0_i32_0 : i32, i32
  }
  func.func @transform_8(%arg0: i32) -> (i32, i32, i32) {
    %c0_i32 = arith.constant 0 : i32
    %c0_i32_0 = arith.constant 0 : i32
    %c0_i32_1 = arith.constant 0 : i32
    %c0_i32_2 = arith.constant 0 : i32
    return %c0_i32, %c0_i32_0, %c0_i32_1 : i32, i32, i32
  }
  func.func @transform_9(%arg0: i32) -> (i32, i32, i32) {
    %c0_i32 = arith.constant 0 : i32
    %c0_i32_0 = arith.constant 0 : i32
    %c0_i32_1 = arith.constant 0 : i32
    %c0_i32_2 = arith.constant 0 : i32
    return %c0_i32, %c0_i32_0, %c0_i32_1 : i32, i32, i32
  }
  func.func @transform_10(%arg0: i32) -> (i32, i32) {
    %c0_i32 = arith.constant 0 : i32
    %c0_i32_0 = arith.constant 0 : i32
    %c0_i32_1 = arith.constant 0 : i32
    return %c0_i32, %c0_i32_0 : i32, i32
  }
  func.func @transform_11(%arg0: i32) -> (i32, i32) {
    %c0_i32 = arith.constant 0 : i32
    %c0_i32_0 = arith.constant 0 : i32
    %c0_i32_1 = arith.constant 0 : i32
    return %c0_i32, %c0_i32_0 : i32, i32
  }
  func.func @transform_12(%arg0: i32) -> (i32, i32, i32) {
    %c0_i32 = arith.constant 0 : i32
    %c0_i32_0 = arith.constant 0 : i32
    %c0_i32_1 = arith.constant 0 : i32
    %c0_i32_2 = arith.constant 0 : i32
    return %c0_i32, %c0_i32_0, %c0_i32_1 : i32, i32, i32
  }
  func.func @transform_13(%arg0: i32) -> (i32, i32) {
    %c0_i32 = arith.constant 0 : i32
    %c0_i32_0 = arith.constant 0 : i32
    %c0_i32_1 = arith.constant 0 : i32
    return %c0_i32, %c0_i32_0 : i32, i32
  }
  func.func @transform_14(%arg0: i32) -> (i32, i32) {
    %c0_i32 = arith.constant 0 : i32
    %c0_i32_0 = arith.constant 0 : i32
    %c0_i32_1 = arith.constant 0 : i32
    return %c0_i32, %c0_i32_0 : i32, i32
  }
  func.func @transform_15(%arg0: i32) -> (i32, i32, i32) {
    %c0_i32 = arith.constant 0 : i32
    %c0_i32_0 = arith.constant 0 : i32
    %c0_i32_1 = arith.constant 0 : i32
    %c0_i32_2 = arith.constant 0 : i32
    return %c0_i32, %c0_i32_0, %c0_i32_1 : i32, i32, i32
  }
  func.func @transform_16(%arg0: i32) -> (i32, i32) {
    %c0_i32 = arith.constant 0 : i32
    %c0_i32_0 = arith.constant 0 : i32
    %c0_i32_1 = arith.constant 0 : i32
    return %c0_i32, %c0_i32_0 : i32, i32
  }
  func.func @transform_17(%arg0: i32) -> (i32, i32) {
    %c0_i32 = arith.constant 0 : i32
    %c0_i32_0 = arith.constant 0 : i32
    %c0_i32_1 = arith.constant 0 : i32
    return %c0_i32, %c0_i32_0 : i32, i32
  }
  func.func @transform_18(%arg0: i32) -> (i32, i32, i32) {
    %c0_i32 = arith.constant 0 : i32
    %c0_i32_0 = arith.constant 0 : i32
    %c0_i32_1 = arith.constant 0 : i32
    return %arg0, %c0_i32, %c0_i32_0 : i32, i32, i32
  }
}

</mosaic_0001>

<llo_original>
// kernel: forward.1
$region0: #{forward.1}
  #allocation0 [shape = 'u32[]', space=smem, size = 0x4, offset = 0x4, fixed_abs, tag = 'smem constant byte address 0x4 - core index']
  #allocation1 [shape = 'u32[144,128]{1,0:T(1,128)}', space=vmem, size = 0x12000, scoped, tag = 'internal scratch']
  %s0 = inlined_call_operand.vmem [shape: f32[2,3,256], index: 0, kind: input, shape index: {}]
  %s1 = inlined_call_operand.vmem [shape: bf16[9,256,36], index: 1, kind: input, shape index: {}]
  %s2 = inlined_call_operand.vmem [shape: bf16[16,27], index: 2, kind: input, shape index: {}]
  %s3 = inlined_call_operand.vmem [shape: f32[16,1], index: 3, kind: input, shape index: {}]
  %s4 = inlined_call_operand.vmem [shape: bf16[4,36,9], index: 4, kind: input, shape index: {}]
  %s5 = inlined_call_operand.vmem [shape: bf16[9,9,4], index: 5, kind: input, shape index: {}]
  %s6 = inlined_call_operand.vmem [shape: bf16[8,144], index: 6, kind: input, shape index: {}]
  %s7 = inlined_call_operand.vmem [shape: f32[8,1], index: 7, kind: input, shape index: {}]
  %s8 = inlined_call_operand.vmem [shape: bf16[4,4,1], index: 8, kind: input, shape index: {}]
  %s9 = inlined_call_operand.vmem [shape: bf16[9,1,9], index: 9, kind: input, shape index: {}]
  %s10 = inlined_call_operand.vmem [shape: bf16[16,72], index: 10, kind: input, shape index: {}]
  %s11 = inlined_call_operand.vmem [shape: f32[16,1], index: 11, kind: input, shape index: {}]
  %s12 = inlined_call_operand.vmem [shape: bf16[36,9,144], index: 12, kind: input, shape index: {}]
  %s13 = inlined_call_operand.vmem [shape: bf16[8,576], index: 13, kind: input, shape index: {}]
  %s14 = inlined_call_operand.vmem [shape: f32[8,1], index: 14, kind: input, shape index: {}]
  %s15 = inlined_call_operand.vmem [shape: bf16[4,144,576], index: 15, kind: input, shape index: {}]
  %s16 = inlined_call_operand.vmem [shape: bf16[3,32], index: 16, kind: input, shape index: {}]
  %s17 = inlined_call_operand.vmem [shape: f32[3,1], index: 17, kind: input, shape index: {}]
  %s18 = inlined_call_operand.vmem [shape: f32[2,3,576], index: 18, kind: output, shape index: {}]
  %s19 = sld [smem:[#allocation0]]
  $region105: #{forward.1} parent=0
    _
  %s21 = ssub.s32 1, %s19
  %s22 = scalar_select 0, %s21, %s19
  loop: start=0, step=1, limit=4
  $region2: #{forward.1} parent=0 // loop_pre_header
    _
  $region3: #{forward.1} parent=0 // loop_header
    %s24 = sphi 0, %s28
    %p25 = scmp.ge.s32.totalorder %s24, 4
    %s34 = sphi 0, %s36
    %s37 = sphi 0, %s34
    %s38 = sphi 0, %s37
    %s54 = sphi 0, %s38
    %s58 = sphi 0, %s58
    %s60 = sphi 0, %s58
    %s61 = sphi 0, %s60
    %s75 = sphi 0, %s61
    %s79 = sphi 0, %s79
    %s81 = sphi 0, %s79
    %s82 = sphi 0, %s81
    %s96 = sphi 0, %s82
    %s100 = sphi 0, %s100
    %s102 = sphi 0, %s100
    %s103 = sphi 0, %s102
    %s117 = sphi 0, %s103
    %s121 = sphi 0, %s121
    %s123 = sphi 0, %s121
    %s124 = sphi 0, %s123
    %s138 = sphi 0, %s124
    %s142 = sphi 0, %s142
    %s144 = sphi 0, %s142
    %s145 = sphi 0, %s144
    %s159 = sphi 0, %s145
    %s163 = sphi 0, %s163
    %s165 = sphi 0, %s163
    %s166 = sphi 0, %s165
    %s180 = sphi 0, %s166
    %s184 = sphi 0, %s184
    %s186 = sphi 0, %s184
    %s187 = sphi 0, %s186
    %s201 = sphi 0, %s187
    %s205 = sphi 0, %s205
    %s207 = sphi 0, %s205
    %s208 = sphi 0, %s207
    %s222 = sphi 0, %s208
    %s226 = sphi 0, %s226
    %s228 = sphi 0, %s226
    %s229 = sphi 0, %s228
    %s243 = sphi 0, %s229
    %s247 = sphi 0, %s247
    %s249 = sphi 0, %s247
    %s250 = sphi 0, %s249
    %s264 = sphi 0, %s250
    %s268 = sphi 0, %s268
    %s270 = sphi 0, %s268
    %s271 = sphi 0, %s270
    %s285 = sphi 0, %s271
    %s289 = sphi 0, %s289
    %s291 = sphi 0, %s289
    %s292 = sphi 0, %s291
    %s306 = sphi 0, %s292
    %s310 = sphi 0, %s310
    %s312 = sphi 0, %s310
    %s313 = sphi 0, %s312
    %s327 = sphi 0, %s313
    %s331 = sphi 0, %s331
    %s333 = sphi 0, %s331
    %s334 = sphi 0, %s333
    %s348 = sphi 0, %s334
    %s352 = sphi 0, %s352
    %s354 = sphi 0, %s352
    %s355 = sphi 0, %s354
    %s369 = sphi 0, %s355
    %s373 = sphi 0, %s373
    %s375 = sphi 0, %s373
    %s376 = sphi 0, %s375
    %s390 = sphi 0, %s376
    %s394 = sphi 0, %s394
    %s396 = sphi 0, %s394
    %s397 = sphi 0, %s396
    %s411 = sphi 0, %s397
    %s417 = sphi 0, %s419
    %s420 = sphi 0, %s417
    %s421 = sphi 0, %s420
    %s437 = sphi 0, %s421
  $region4: #{forward.1} parent=0 // loop_header_branch
    %27 = sbr.rel (%p25) target = $region8
  $region5: #{forward.1} parent=0 // loop_body
    %s29 = ssub.s32 %s24, 1
    %s30 = ssub.s32 %s24, 2
    %s31 = sadd.s32 %s24, 1
    %s32 = ssub.s32 %s24, %s31
    %p33 = scmp.eq.s32.totalorder %s32, 0
    %s35 = sadd.s32 %s34, 1
    %s36 = scalar_select %p33, %s34, %s35
    %p39 = pneg %p33
    %p40 = scmp.eq.s32.totalorder %s24, 1
    %p41 = por %p39, %p40
    %p42 = scmp.ne.s32.totalorder %s34, %s37
    %p43 = scmp.eq.s32.totalorder %s24, 0
    %p44 = por %p42, %p43
    %p45 = scmp.ne.s32.totalorder %s34, %s37
    %p46 = scmp.eq.s32.totalorder %s29, 1
    %p47 = por %p45, %p46
    %p48 = scmp.ne.s32.totalorder %s37, %s38
    %p49 = scmp.eq.s32.totalorder %s29, 0
    %p50 = por %p48, %p49
    %p51 = scmp.ne.s32.totalorder %s37, %s38
    %p52 = scmp.eq.s32.totalorder %s30, 1
    %p53 = por %p51, %p52
    %p55 = scmp.ne.s32.totalorder %s38, %s54
    %p56 = scmp.eq.s32.totalorder %s30, 0
    %p57 = por %p55, %p56
    %s59 = sadd.s32 %s58, 1
    %p62 = scmp.eq.s32.totalorder %s24, 1
    %p63 = scmp.ne.s32.totalorder %s58, %s60
    %p64 = scmp.eq.s32.totalorder %s24, 0
    %p65 = por %p63, %p64
    %p66 = scmp.ne.s32.totalorder %s58, %s60
    %p67 = scmp.eq.s32.totalorder %s29, 1
    %p68 = por %p66, %p67
    %p69 = scmp.ne.s32.totalorder %s60, %s61
    %p70 = scmp.eq.s32.totalorder %s29, 0
    %p71 = por %p69, %p70
    %p72 = scmp.ne.s32.totalorder %s60, %s61
    %p73 = scmp.eq.s32.totalorder %s30, 1
    %p74 = por %p72, %p73
    %p76 = scmp.ne.s32.totalorder %s61, %s75
    %p77 = scmp.eq.s32.totalorder %s30, 0
    %p78 = por %p76, %p77
    %s80 = sadd.s32 %s79, 1
    %p83 = scmp.eq.s32.totalorder %s24, 1
    %p84 = scmp.ne.s32.totalorder %s79, %s81
    %p85 = scmp.eq.s32.totalorder %s24, 0
    %p86 = por %p84, %p85
    %p87 = scmp.ne.s32.totalorder %s79, %s81
    %p88 = scmp.eq.s32.totalorder %s29, 1
    %p89 = por %p87, %p88
    %p90 = scmp.ne.s32.totalorder %s81, %s82
    %p91 = scmp.eq.s32.totalorder %s29, 0
    %p92 = por %p90, %p91
    %p93 = scmp.ne.s32.totalorder %s81, %s82
    %p94 = scmp.eq.s32.totalorder %s30, 1
    %p95 = por %p93, %p94
    %p97 = scmp.ne.s32.totalorder %s82, %s96
    %p98 = scmp.eq.s32.totalorder %s30, 0
    %p99 = por %p97, %p98
    %s101 = sadd.s32 %s100, 1
    %p104 = scmp.eq.s32.totalorder %s24, 1
    %p105 = scmp.ne.s32.totalorder %s100, %s102
    %p106 = scmp.eq.s32.totalorder %s24, 0
    %p107 = por %p105, %p106
    %p108 = scmp.ne.s32.totalorder %s100, %s102
    %p109 = scmp.eq.s32.totalorder %s29, 1
    %p110 = por %p108, %p109
    %p111 = scmp.ne.s32.totalorder %s102, %s103
    %p112 = scmp.eq.s32.totalorder %s29, 0
    %p113 = por %p111, %p112
    %p114 = scmp.ne.s32.totalorder %s102, %s103
    %p115 = scmp.eq.s32.totalorder %s30, 1
    %p116 = por %p114, %p115
    %p118 = scmp.ne.s32.totalorder %s103, %s117
    %p119 = scmp.eq.s32.totalorder %s30, 0
    %p120 = por %p118, %p119
    %s122 = sadd.s32 %s121, 1
    %p125 = scmp.eq.s32.totalorder %s24, 1
    %p126 = scmp.ne.s32.totalorder %s121, %s123
    %p127 = scmp.eq.s32.totalorder %s24, 0
    %p128 = por %p126, %p127
    %p129 = scmp.ne.s32.totalorder %s121, %s123
    %p130 = scmp.eq.s32.totalorder %s29, 1
    %p131 = por %p129, %p130
    %p132 = scmp.ne.s32.totalorder %s123, %s124
    %p133 = scmp.eq.s32.totalorder %s29, 0
    %p134 = por %p132, %p133
    %p135 = scmp.ne.s32.totalorder %s123, %s124
    %p136 = scmp.eq.s32.totalorder %s30, 1
    %p137 = por %p135, %p136
    %p139 = scmp.ne.s32.totalorder %s124, %s138
    %p140 = scmp.eq.s32.totalorder %s30, 0
    %p141 = por %p139, %p140
    %s143 = sadd.s32 %s142, 1
    %p146 = scmp.eq.s32.totalorder %s24, 1
    %p147 = scmp.ne.s32.totalorder %s142, %s144
    %p148 = scmp.eq.s32.totalorder %s24, 0
    %p149 = por %p147, %p148
    %p150 = scmp.ne.s32.totalorder %s142, %s144
    %p151 = scmp.eq.s32.totalorder %s29, 1
    %p152 = por %p150, %p151
    %p153 = scmp.ne.s32.totalorder %s144, %s145
    %p154 = scmp.eq.s32.totalorder %s29, 0
    %p155 = por %p153, %p154
    %p156 = scmp.ne.s32.totalorder %s144, %s145
    %p157 = scmp.eq.s32.totalorder %s30, 1
    %p158 = por %p156, %p157
    %p160 = scmp.ne.s32.totalorder %s145, %s159
    %p161 = scmp.eq.s32.totalorder %s30, 0
    %p162 = por %p160, %p161
    %s164 = sadd.s32 %s163, 1
    %p167 = scmp.eq.s32.totalorder %s24, 1
    %p168 = scmp.ne.s32.totalorder %s163, %s165
    %p169 = scmp.eq.s32.totalorder %s24, 0
    %p170 = por %p168, %p169
    %p171 = scmp.ne.s32.totalorder %s163, %s165
    %p172 = scmp.eq.s32.totalorder %s29, 1
    %p173 = por %p171, %p172
    %p174 = scmp.ne.s32.totalorder %s165, %s166
    %p175 = scmp.eq.s32.totalorder %s29, 0
    %p176 = por %p174, %p175
    %p177 = scmp.ne.s32.totalorder %s165, %s166
    %p178 = scmp.eq.s32.totalorder %s30, 1
    %p179 = por %p177, %p178
    %p181 = scmp.ne.s32.totalorder %s166, %s180
    %p182 = scmp.eq.s32.totalorder %s30, 0
    %p183 = por %p181, %p182
    %s185 = sadd.s32 %s184, 1
    %p188 = scmp.eq.s32.totalorder %s24, 1
    %p189 = scmp.ne.s32.totalorder %s184, %s186
    %p190 = scmp.eq.s32.totalorder %s24, 0
    %p191 = por %p189, %p190
    %p192 = scmp.ne.s32.totalorder %s184, %s186
    %p193 = scmp.eq.s32.totalorder %s29, 1
    %p194 = por %p192, %p193
    %p195 = scmp.ne.s32.totalorder %s186, %s187
    %p196 = scmp.eq.s32.totalorder %s29, 0
    %p197 = por %p195, %p196
    %p198 = scmp.ne.s32.totalorder %s186, %s187
    %p199 = scmp.eq.s32.totalorder %s30, 1
    %p200 = por %p198, %p199
    %p202 = scmp.ne.s32.totalorder %s187, %s201
    %p203 = scmp.eq.s32.totalorder %s30, 0
    %p204 = por %p202, %p203
    %s206 = sadd.s32 %s205, 1
    %p209 = scmp.eq.s32.totalorder %s24, 1
    %p210 = scmp.ne.s32.totalorder %s205, %s207
    %p211 = scmp.eq.s32.totalorder %s24, 0
    %p212 = por %p210, %p211
    %p213 = scmp.ne.s32.totalorder %s205, %s207
    %p214 = scmp.eq.s32.totalorder %s29, 1
    %p215 = por %p213, %p214
    %p216 = scmp.ne.s32.totalorder %s207, %s208
    %p217 = scmp.eq.s32.totalorder %s29, 0
    %p218 = por %p216, %p217
    %p219 = scmp.ne.s32.totalorder %s207, %s208
    %p220 = scmp.eq.s32.totalorder %s30, 1
    %p221 = por %p219, %p220
    %p223 = scmp.ne.s32.totalorder %s208, %s222
    %p224 = scmp.eq.s32.totalorder %s30, 0
    %p225 = por %p223, %p224
    %s227 = sadd.s32 %s226, 1
    %p230 = scmp.eq.s32.totalorder %s24, 1
    %p231 = scmp.ne.s32.totalorder %s226, %s228
    %p232 = scmp.eq.s32.totalorder %s24, 0
    %p233 = por %p231, %p232
    %p234 = scmp.ne.s32.totalorder %s226, %s228
    %p235 = scmp.eq.s32.totalorder %s29, 1
    %p236 = por %p234, %p235
    %p237 = scmp.ne.s32.totalorder %s228, %s229
    %p238 = scmp.eq.s32.totalorder %s29, 0
    %p239 = por %p237, %p238
    %p240 = scmp.ne.s32.totalorder %s228, %s229
    %p241 = scmp.eq.s32.totalorder %s30, 1
    %p242 = por %p240, %p241
    %p244 = scmp.ne.s32.totalorder %s229, %s243
    %p245 = scmp.eq.s32.totalorder %s30, 0
    %p246 = por %p244, %p245
    %s248 = sadd.s32 %s247, 1
    %p251 = scmp.eq.s32.totalorder %s24, 1
    %p252 = scmp.ne.s32.totalorder %s247, %s249
    %p253 = scmp.eq.s32.totalorder %s24, 0
    %p254 = por %p252, %p253
    %p255 = scmp.ne.s32.totalorder %s247, %s249
    %p256 = scmp.eq.s32.totalorder %s29, 1
    %p257 = por %p255, %p256
    %p258 = scmp.ne.s32.totalorder %s249, %s250
    %p259 = scmp.eq.s32.totalorder %s29, 0
    %p260 = por %p258, %p259
    %p261 = scmp.ne.s32.totalorder %s249, %s250
    %p262 = scmp.eq.s32.totalorder %s30, 1
    %p263 = por %p261, %p262
    %p265 = scmp.ne.s32.totalorder %s250, %s264
    %p266 = scmp.eq.s32.totalorder %s30, 0
    %p267 = por %p265, %p266
    %s269 = sadd.s32 %s268, 1
    %p272 = scmp.eq.s32.totalorder %s24, 1
    %p273 = scmp.ne.s32.totalorder %s268, %s270
    %p274 = scmp.eq.s32.totalorder %s24, 0
    %p275 = por %p273, %p274
    %p276 = scmp.ne.s32.totalorder %s268, %s270
    %p277 = scmp.eq.s32.totalorder %s29, 1
    %p278 = por %p276, %p277
    %p279 = scmp.ne.s32.totalorder %s270, %s271
    %p280 = scmp.eq.s32.totalorder %s29, 0
    %p281 = por %p279, %p280
    %p282 = scmp.ne.s32.totalorder %s270, %s271
    %p283 = scmp.eq.s32.totalorder %s30, 1
    %p284 = por %p282, %p283
    %p286 = scmp.ne.s32.totalorder %s271, %s285
    %p287 = scmp.eq.s32.totalorder %s30, 0
    %p288 = por %p286, %p287
    %s290 = sadd.s32 %s289, 1
    %p293 = scmp.eq.s32.totalorder %s24, 1
    %p294 = scmp.ne.s32.totalorder %s289, %s291
    %p295 = scmp.eq.s32.totalorder %s24, 0
    %p296 = por %p294, %p295
    %p297 = scmp.ne.s32.totalorder %s289, %s291
    %p298 = scmp.eq.s32.totalorder %s29, 1
    %p299 = por %p297, %p298
    %p300 = scmp.ne.s32.totalorder %s291, %s292
    %p301 = scmp.eq.s32.totalorder %s29, 0
    %p302 = por %p300, %p301
    %p303 = scmp.ne.s32.totalorder %s291, %s292
    %p304 = scmp.eq.s32.totalorder %s30, 1
    %p305 = por %p303, %p304
    %p307 = scmp.ne.s32.totalorder %s292, %s306
    %p308 = scmp.eq.s32.totalorder %s30, 0
    %p309 = por %p307, %p308
    %s311 = sadd.s32 %s310, 1
    %p314 = scmp.eq.s32.totalorder %s24, 1
    %p315 = scmp.ne.s32.totalorder %s310, %s312
    %p316 = scmp.eq.s32.totalorder %s24, 0
    %p317 = por %p315, %p316
    %p318 = scmp.ne.s32.totalorder %s310, %s312
    %p319 = scmp.eq.s32.totalorder %s29, 1
    %p320 = por %p318, %p319
    %p321 = scmp.ne.s32.totalorder %s312, %s313
    %p322 = scmp.eq.s32.totalorder %s29, 0
    %p323 = por %p321, %p322
    %p324 = scmp.ne.s32.totalorder %s312, %s313
    %p325 = scmp.eq.s32.totalorder %s30, 1
    %p326 = por %p324, %p325
    %p328 = scmp.ne.s32.totalorder %s313, %s327
    %p329 = scmp.eq.s32.totalorder %s30, 0
    %p330 = por %p328, %p329
    %s332 = sadd.s32 %s331, 1
    %p335 = scmp.eq.s32.totalorder %s24, 1
    %p336 = scmp.ne.s32.totalorder %s331, %s333
    %p337 = scmp.eq.s32.totalorder %s24, 0
    %p338 = por %p336, %p337
    %p339 = scmp.ne.s32.totalorder %s331, %s333
    %p340 = scmp.eq.s32.totalorder %s29, 1
    %p341 = por %p339, %p340
    %p342 = scmp.ne.s32.totalorder %s333, %s334
    %p343 = scmp.eq.s32.totalorder %s29, 0
    %p344 = por %p342, %p343
    %p345 = scmp.ne.s32.totalorder %s333, %s334
    %p346 = scmp.eq.s32.totalorder %s30, 1
    %p347 = por %p345, %p346
    %p349 = scmp.ne.s32.totalorder %s334, %s348
    %p350 = scmp.eq.s32.totalorder %s30, 0
    %p351 = por %p349, %p350
    %s353 = sadd.s32 %s352, 1
    %p356 = scmp.eq.s32.totalorder %s24, 1
    %p357 = scmp.ne.s32.totalorder %s352, %s354
    %p358 = scmp.eq.s32.totalorder %s24, 0
    %p359 = por %p357, %p358
    %p360 = scmp.ne.s32.totalorder %s352, %s354
    %p361 = scmp.eq.s32.totalorder %s29, 1
    %p362 = por %p360, %p361
    %p363 = scmp.ne.s32.totalorder %s354, %s355
    %p364 = scmp.eq.s32.totalorder %s29, 0
    %p365 = por %p363, %p364
    %p366 = scmp.ne.s32.totalorder %s354, %s355
    %p367 = scmp.eq.s32.totalorder %s30, 1
    %p368 = por %p366, %p367
    %p370 = scmp.ne.s32.totalorder %s355, %s369
    %p371 = scmp.eq.s32.totalorder %s30, 0
    %p372 = por %p370, %p371
    %s374 = sadd.s32 %s373, 1
    %p377 = scmp.eq.s32.totalorder %s24, 1
    %p378 = scmp.ne.s32.totalorder %s373, %s375
    %p379 = scmp.eq.s32.totalorder %s24, 0
    %p380 = por %p378, %p379
    %p381 = scmp.ne.s32.totalorder %s373, %s375
    %p382 = scmp.eq.s32.totalorder %s29, 1
    %p383 = por %p381, %p382
    %p384 = scmp.ne.s32.totalorder %s375, %s376
    %p385 = scmp.eq.s32.totalorder %s29, 0
    %p386 = por %p384, %p385
    %p387 = scmp.ne.s32.totalorder %s375, %s376
    %p388 = scmp.eq.s32.totalorder %s30, 1
    %p389 = por %p387, %p388
    %p391 = scmp.ne.s32.totalorder %s376, %s390
    %p392 = scmp.eq.s32.totalorder %s30, 0
    %p393 = por %p391, %p392
    %s395 = sadd.s32 %s394, 1
    %p398 = scmp.eq.s32.totalorder %s24, 1
    %p399 = scmp.ne.s32.totalorder %s394, %s396
    %p400 = scmp.eq.s32.totalorder %s24, 0
    %p401 = por %p399, %p400
    %p402 = scmp.ne.s32.totalorder %s394, %s396
    %p403 = scmp.eq.s32.totalorder %s29, 1
    %p404 = por %p402, %p403
    %p405 = scmp.ne.s32.totalorder %s396, %s397
    %p406 = scmp.eq.s32.totalorder %s29, 0
    %p407 = por %p405, %p406
    %p408 = scmp.ne.s32.totalorder %s396, %s397
    %p409 = scmp.eq.s32.totalorder %s30, 1
    %p410 = por %p408, %p409
    %p412 = scmp.ne.s32.totalorder %s397, %s411
    %p413 = scmp.eq.s32.totalorder %s30, 0
    %p414 = por %p412, %p413
    %s415 = ssub.s32 %s24, %s31
    %p416 = scmp.eq.s32.totalorder %s415, 0
    %s418 = sadd.s32 %s417, 1
    %s419 = scalar_select %p416, %s417, %s418
    %p422 = pneg %p416
    %p423 = scmp.eq.s32.totalorder %s24, 1
    %p424 = por %p422, %p423
    %p425 = scmp.ne.s32.totalorder %s417, %s420
    %p426 = scmp.eq.s32.totalorder %s24, 0
    %p427 = por %p425, %p426
    %p428 = scmp.ne.s32.totalorder %s417, %s420
    %p429 = scmp.eq.s32.totalorder %s29, 1
    %p430 = por %p428, %p429
    %p431 = scmp.ne.s32.totalorder %s420, %s421
    %p432 = scmp.eq.s32.totalorder %s29, 0
    %p433 = por %p431, %p432
    %p434 = scmp.ne.s32.totalorder %s420, %s421
    %p435 = scmp.eq.s32.totalorder %s30, 1
    %p436 = por %p434, %p435
    %p438 = scmp.ne.s32.totalorder %s421, %s437
    %p439 = scmp.eq.s32.totalorder %s30, 0
    %p440 = por %p438, %p439
    %p441 = scmp.le.s32.totalorder 1, %s24
    %p442 = scmp.lt.s32.totalorder %s24, 3
    %p443 = pnand %p441, %p442
    %p444 = pneg %p443
    // Predicated region
    $region9: #{forward.1} parent=5 // pred_check
      _
    $region10: #{forward.1} parent=5 // pred_check_branch
      %446 = sbr.rel (%p443) target = $region12
    $region11: #{forward.1} parent=5 // pred_region
      %s447 = ssub.s32 %s24, 1
      // Predicated region
      $region13: #{forward.1} parent=11 // pred_check
        %p448 = pneg %p71
      $region14: #{forward.1} parent=11 // pred_check_branch
        %450 = sbr.rel (%p448) target = $region16
      $region15: #{forward.1} parent=11 // pred_region
        _
      $region16: #{forward.1} parent=11 // pred_fallthru
        _
      // Predicated region
      $region17: #{forward.1} parent=11 // pred_check
        %p451 = pneg %p92
      $region18: #{forward.1} parent=11 // pred_check_branch
        %453 = sbr.rel (%p451) target = $region20
      $region19: #{forward.1} parent=11 // pred_region
        _
      $region20: #{forward.1} parent=11 // pred_fallthru
        _
      // Predicated region
      $region21: #{forward.1} parent=11 // pred_check
        %p454 = pneg %p113
      $region22: #{forward.1} parent=11 // pred_check_branch
        %456 = sbr.rel (%p454) target = $region24
      $region23: #{forward.1} parent=11 // pred_region
        _
      $region24: #{forward.1} parent=11 // pred_fallthru
        _
      // Predicated region
      $region25: #{forward.1} parent=11 // pred_check
        %p457 = pneg %p134
      $region26: #{forward.1} parent=11 // pred_check_branch
        %459 = sbr.rel (%p457) target = $region28
      $region27: #{forward.1} parent=11 // pred_region
        _
      $region28: #{forward.1} parent=11 // pred_fallthru
        _
      // Predicated region
      $region29: #{forward.1} parent=11 // pred_check
        %p460 = pneg %p155
      $region30: #{forward.1} parent=11 // pred_check_branch
        %462 = sbr.rel (%p460) target = $region32
      $region31: #{forward.1} parent=11 // pred_region
        _
      $region32: #{forward.1} parent=11 // pred_fallthru
        _
      // Predicated region
      $region33: #{forward.1} parent=11 // pred_check
        %p463 = pneg %p176
      $region34: #{forward.1} parent=11 // pred_check_branch
        %465 = sbr.rel (%p463) target = $region36
      $region35: #{forward.1} parent=11 // pred_region
        _
      $region36: #{forward.1} parent=11 // pred_fallthru
        _
      // Predicated region
      $region37: #{forward.1} parent=11 // pred_check
        %p466 = pneg %p197
      $region38: #{forward.1} parent=11 // pred_check_branch
        %468 = sbr.rel (%p466) target = $region40
      $region39: #{forward.1} parent=11 // pred_region
        _
      $region40: #{forward.1} parent=11 // pred_fallthru
        _
      // Predicated region
      $region41: #{forward.1} parent=11 // pred_check
        %p469 = pneg %p218
      $region42: #{forward.1} parent=11 // pred_check_branch
        %471 = sbr.rel (%p469) target = $region44
      $region43: #{forward.1} parent=11 // pred_region
        _
      $region44: #{forward.1} parent=11 // pred_fallthru
        _
      // Predicated region
      $region45: #{forward.1} parent=11 // pred_check
        %p472 = pneg %p239
      $region46: #{forward.1} parent=11 // pred_check_branch
        %474 = sbr.rel (%p472) target = $region48
      $region47: #{forward.1} parent=11 // pred_region
        _
      $region48: #{forward.1} parent=11 // pred_fallthru
        _
      // Predicated region
      $region49: #{forward.1} parent=11 // pred_check
        %p475 = pneg %p260
      $region50: #{forward.1} parent=11 // pred_check_branch
        %477 = sbr.rel (%p475) target = $region52
      $region51: #{forward.1} parent=11 // pred_region
        _
      $region52: #{forward.1} parent=11 // pred_fallthru
        _
      // Predicated region
      $region53: #{forward.1} parent=11 // pred_check
        %p478 = pneg %p281
      $region54: #{forward.1} parent=11 // pred_check_branch
        %480 = sbr.rel (%p478) target = $region56
      $region55: #{forward.1} parent=11 // pred_region
        _
      $region56: #{forward.1} parent=11 // pred_fallthru
        _
      // Predicated region
      $region57: #{forward.1} parent=11 // pred_check
        %p481 = pneg %p302
      $region58: #{forward.1} parent=11 // pred_check_branch
        %483 = sbr.rel (%p481) target = $region60
      $region59: #{forward.1} parent=11 // pred_region
        _
      $region60: #{forward.1} parent=11 // pred_fallthru
        _
      // Predicated region
      $region61: #{forward.1} parent=11 // pred_check
        %p484 = pneg %p323
      $region62: #{forward.1} parent=11 // pred_check_branch
        %486 = sbr.rel (%p484) target = $region64
      $region63: #{forward.1} parent=11 // pred_region
        _
      $region64: #{forward.1} parent=11 // pred_fallthru
        _
      // Predicated region
      $region65: #{forward.1} parent=11 // pred_check
        %p487 = pneg %p344
      $region66: #{forward.1} parent=11 // pred_check_branch
        %489 = sbr.rel (%p487) target = $region68
      $region67: #{forward.1} parent=11 // pred_region
        _
      $region68: #{forward.1} parent=11 // pred_fallthru
        _
      // Predicated region
      $region69: #{forward.1} parent=11 // pred_check
        %p490 = pneg %p365
      $region70: #{forward.1} parent=11 // pred_check_branch
        %492 = sbr.rel (%p490) target = $region72
      $region71: #{forward.1} parent=11 // pred_region
        _
      $region72: #{forward.1} parent=11 // pred_fallthru
        _
      // Predicated region
      $region73: #{forward.1} parent=11 // pred_check
        %p493 = pneg %p386
      $region74: #{forward.1} parent=11 // pred_check_branch
        %495 = sbr.rel (%p493) target = $region76
      $region75: #{forward.1} parent=11 // pred_region
        _
      $region76: #{forward.1} parent=11 // pred_fallthru
        _
      // Predicated region
      $region77: #{forward.1} parent=11 // pred_check
        %p496 = pneg %p407
      $region78: #{forward.1} parent=11 // pred_check_branch
        %498 = sbr.rel (%p496) target = $region80
      $region79: #{forward.1} parent=11 // pred_region
        _
      $region80: #{forward.1} parent=11 // pred_fallthru
        _
    $region12: #{forward.1} parent=5 // pred_fallthru
      _
    %p499 = scmp.lt.s32.totalorder %s24, 2
    // Predicated region
    $region81: #{forward.1} parent=5 // pred_check
      %p500 = pneg %p499
    $region82: #{forward.1} parent=5 // pred_check_branch
      %502 = sbr.rel (%p500) target = $region84
    $region83: #{forward.1} parent=5 // pred_region
      // Predicated region
      $region85: #{forward.1} parent=83 // pred_check
        %p503 = pneg %p44
      $region86: #{forward.1} parent=83 // pred_check_branch
        %505 = sbr.rel (%p503) target = $region88
      $region87: #{forward.1} parent=83 // pred_region
        %p506 = scmp.lt.s32.totalorder %s24, 1
        %s507 = scalar_select %p506, %s24, 1
        %s508 = smul.addr %s507, 2
        %s509 = smul.addr %s508, 4
        %s510 = scalar_lea.vmem %s0, %s509
      $region88: #{forward.1} parent=83 // pred_fallthru
        _
    $region84: #{forward.1} parent=5 // pred_fallthru
      _
    %p511 = scmp.le.s32.totalorder 1, %s24
    %p512 = scmp.lt.s32.totalorder %s24, 3
    %p513 = pnand %p511, %p512
    %p514 = pneg %p513
    // Predicated region
    $region89: #{forward.1} parent=5 // pred_check
      _
    $region90: #{forward.1} parent=5 // pred_check_branch
      %516 = sbr.rel (%p513) target = $region92
    $region91: #{forward.1} parent=5 // pred_region
      %s517 = ssub.s32 %s24, 1
      %p518 = scmp.lt.s32.totalorder %s29, 1
      %s519 = scalar_select %p518, %s29, 1
      %s520 = smul.addr %s519, 2
      %s521 = smul.addr %s520, 4
      %s522 = scalar_lea.vmem %s0, %s521
      %p523 = pneg %p50
      %p524 = pneg %p47
      %p525 = pneg %p71
      %p526 = pneg %p68
      %p527 = pneg %p92
      %p528 = pneg %p89
      %p529 = pneg %p113
      %p530 = pneg %p110
      %p531 = pneg %p134
      %p532 = pneg %p131
      %p533 = pneg %p155
      %p534 = pneg %p152
      %p535 = pneg %p176
      %p536 = pneg %p173
      %p537 = pneg %p197
      %p538 = pneg %p194
      %p539 = pneg %p218
      %p540 = pneg %p215
      %p541 = pneg %p239
      %p542 = pneg %p236
      %p543 = pneg %p260
      %p544 = pneg %p257
      %p545 = pneg %p281
      %p546 = pneg %p278
      %p547 = pneg %p302
      %p548 = pneg %p299
      %p549 = pneg %p323
      %p550 = pneg %p320
      %p551 = pneg %p344
      %p552 = pneg %p341
      %p553 = pneg %p365
      %p554 = pneg %p362
      %p555 = pneg %p386
      %p556 = pneg %p383
      %p557 = pneg %p407
      %p558 = pneg %p404
      %p559 = pneg %p433
      %p560 = pneg %p430
      %p561 = scmp.lt.s32.totalorder %s29, 1
      %s562 = scalar_select %p561, %s29, 1
      %s563 = smul.addr %s562, 5
      %s564 = smul.addr %s563, 4
      %s565 = scalar_lea.vmem %s18, %s564
      %p566 = scmp.lt.s32.totalorder %s29, 1
      %s567 = scalar_select %p566, %s29, 1
      %s568 = smul.addr %s567, 2
      %s569 = smul.addr %s568, 4
      %s570 = scalar_lea.vmem %s0, %s569
      %p571 = scmp.lt.s32.totalorder %s29, 1
      %s572 = scalar_select %p571, %s29, 1
      %s573 = smul.addr %s572, 5
      %s574 = smul.addr %s573, 4
      %s575 = scalar_lea.vmem %s18, %s574
      %v577 = vld [vmem:[%s570] sm:$0x77]
      %v579 = vcombine.high %v577, %v577
      %v581 = vpack.c.bf16 %v577, %v577
      %v582 = vpack.c.bf16 %v579, %v579
      %v583 = vld [vmem:[%s1] sm:$0xf]
      %v584 = vld [vmem:[%s1 + $0x4] sm:$0xf]
      %v585 = vld [vmem:[%s1 + $0x8] sm:$0xf]
      %v586 = vld [vmem:[%s1 + $0xc] sm:$0xf]
      %v587 = vld [vmem:[%s1 + $0x10] sm:$0xf]
      %v588 = vld [vmem:[%s1 + $0x14] sm:$0xf]
      %v589 = vld [vmem:[%s1 + $0x18] sm:$0xf]
      %v590 = vld [vmem:[%s1 + $0x1c] sm:$0xf]
      %v591 = vld [vmem:[%s1 + $0x20] sm:$0xf]
      %v592 = vld [vmem:[%s1 + $0x24] sm:$0xf]
      %v593 = vld [vmem:[%s1 + $0x28] sm:$0xf]
      %v594 = vld [vmem:[%s1 + $0x2c] sm:$0xf]
      %v595 = vld [vmem:[%s1 + $0x30] sm:$0xf]
      %v596 = vld [vmem:[%s1 + $0x34] sm:$0xf]
      %v597 = vld [vmem:[%s1 + $0x38] sm:$0xf]
      %v598 = vld [vmem:[%s1 + $0x3c] sm:$0xf]
      %v599 = vld [vmem:[%s1 + $0x40] sm:$0xf]
      %v600 = vld [vmem:[%s1 + $0x44] sm:$0xf]
      %v601 = vld [vmem:[%s1 + $0x48] sm:$0xf]
      %v602 = vld [vmem:[%s1 + $0x4c] sm:$0xf]
      %v603 = vld [vmem:[%s1 + $0x50] sm:$0xf]
      %v604 = vld [vmem:[%s1 + $0x54] sm:$0xf]
      %v605 = vld [vmem:[%s1 + $0x58] sm:$0xf]
      %v606 = vld [vmem:[%s1 + $0x5c] sm:$0xf]
      %v607 = vld [vmem:[%s1 + $0x60] sm:$0xf]
      %v608 = vld [vmem:[%s1 + $0x64] sm:$0xf]
      %v609 = vld [vmem:[%s1 + $0x68] sm:$0xf]
      %v610 = vld [vmem:[%s1 + $0x6c] sm:$0xf]
      %v611 = vld [vmem:[%s1 + $0x70] sm:$0xf]
      %v612 = vld [vmem:[%s1 + $0x74] sm:$0xf]
      %v613 = vld [vmem:[%s1 + $0x78] sm:$0xf]
      %v614 = vld [vmem:[%s1 + $0x7c] sm:$0xf]
      %v647 = vunpack.c.l.b16 %v583
      %v648 = vunpack.c.l.b16 %v584
      %v649 = vunpack.c.l.b16 %v585
      %v650 = vunpack.c.l.b16 %v586
      %v651 = vunpack.c.l.b16 %v587
      %v652 = vunpack.c.l.b16 %v588
      %v653 = vunpack.c.l.b16 %v589
      %v654 = vunpack.c.l.b16 %v590
      %v655 = vunpack.c.l.b16 %v591
      %v656 = vunpack.c.l.b16 %v592
      %v657 = vunpack.c.l.b16 %v593
      %v658 = vunpack.c.l.b16 %v594
      %v659 = vunpack.c.l.b16 %v595
      %v660 = vunpack.c.l.b16 %v596
      %v661 = vunpack.c.l.b16 %v597
      %v662 = vunpack.c.l.b16 %v598
      %v663 = vunpack.c.l.b16 %v599
      %v664 = vunpack.c.l.b16 %v600
      %v665 = vunpack.c.l.b16 %v601
      %v666 = vunpack.c.l.b16 %v602
      %v667 = vunpack.c.l.b16 %v603
      %v668 = vunpack.c.l.b16 %v604
      %v669 = vunpack.c.l.b16 %v605
      %v670 = vunpack.c.l.b16 %v606
      %v671 = vunpack.c.l.b16 %v607
      %v672 = vunpack.c.l.b16 %v608
      %v673 = vunpack.c.l.b16 %v609
      %v674 = vunpack.c.l.b16 %v610
      %v675 = vunpack.c.l.b16 %v611
      %v676 = vunpack.c.l.b16 %v612
      %v677 = vunpack.c.l.b16 %v613
      %v678 = vunpack.c.l.b16 %v614
      %v679 = vpack.c.b16 %v648, %v647
      %v680 = vpack.c.b16 %v650, %v649
      %v681 = vpack.c.b16 %v652, %v651
      %v682 = vpack.c.b16 %v654, %v653
      %v683 = vpack.c.b16 %v656, %v655
      %v684 = vpack.c.b16 %v658, %v657
      %v685 = vpack.c.b16 %v660, %v659
      %v686 = vpack.c.b16 %v662, %v661
      %v687 = vpack.c.b16 %v664, %v663
      %v688 = vpack.c.b16 %v666, %v665
      %v689 = vpack.c.b16 %v668, %v667
      %v690 = vpack.c.b16 %v670, %v669
      %v691 = vpack.c.b16 %v672, %v671
      %v692 = vpack.c.b16 %v674, %v673
      %v693 = vpack.c.b16 %v676, %v675
      %v694 = vpack.c.b16 %v678, %v677
      %711 = vmatprep.subr.bf16.mxu0 0
      %712 = vmatpush1.bf16.msra.mxu0 %v686
      %713 = vmatprep.subr.bf16.mxu0 0
      %714 = vmatpush1.bf16.msra.mxu0 %v685
      %715 = vmatprep.subr.bf16.mxu0 0
      %716 = vmatpush1.bf16.msra.mxu0 %v684
      %717 = vmatprep.subr.bf16.mxu0 0
      %718 = vmatpush1.bf16.msra.mxu0 %v683
      %719 = vmatprep.subr.bf16.mxu0 0
      %720 = vmatpush1.bf16.msra.mxu0 %v682
      %721 = vmatprep.subr.bf16.mxu0 0
      %722 = vmatpush1.bf16.msra.mxu0 %v681
      %723 = vmatprep.subr.bf16.mxu0 0
      %724 = vmatpush1.bf16.msra.mxu0 %v680
      %725 = vmatprep.subr.bf16.mxu0 0
      %726 = vmatpush1.bf16.msra.mxu0 %v679
      %727 = vmatprep.subr.bf16.mxu0 0
      %728 = vmatpush2.bf16.msra.mxu0 %v694
      %729 = vmatprep.subr.bf16.mxu0 0
      %730 = vmatpush2.bf16.msra.mxu0 %v693
      %731 = vmatprep.subr.bf16.mxu0 0
      %732 = vmatpush2.bf16.msra.mxu0 %v692
      %733 = vmatprep.subr.bf16.mxu0 0
      %734 = vmatpush2.bf16.msra.mxu0 %v691
      %735 = vmatprep.subr.bf16.mxu0 0
      %736 = vmatpush2.bf16.msra.mxu0 %v690
      %737 = vmatprep.subr.bf16.mxu0 0
      %738 = vmatpush2.bf16.msra.mxu0 %v689
      %739 = vmatprep.subr.bf16.mxu0 0
      %740 = vmatpush2.bf16.msra.mxu0 %v688
      %741 = vmatprep.subr.bf16.mxu0 0
      %742 = vmatpush2.bf16.msra.mxu0 %v687
      %743 = vmatprep.mubr.bf16.mxu0 %v582
      %744 = vmatmul.mubr.bf16.gmra.mxu0 %v581
      %v745 = vpop.f32.mrf.mxu0
      %v746 = vadd.f32 0.0, %v745
      %v747 = vpop.f32.mrf.mxu0
      %v748 = vpop.f32.mrf.mxu0
      %v749 = vpop.f32.mrf.mxu0
      %750 = vdwg.mxu0
      %v751 = vpack.c.bf16 %v746, %v746
      %s752 = scalar_lea.vmem %s1, 128
      %v753 = vld [vmem:[%s752] sm:$0xf]
      %v754 = vld [vmem:[%s752 + $0x4] sm:$0xf]
      %v755 = vld [vmem:[%s752 + $0x8] sm:$0xf]
      %v756 = vld [vmem:[%s752 + $0xc] sm:$0xf]
      %v757 = vld [vmem:[%s752 + $0x10] sm:$0xf]
      %v758 = vld [vmem:[%s752 + $0x14] sm:$0xf]
      %v759 = vld [vmem:[%s752 + $0x18] sm:$0xf]
      %v760 = vld [vmem:[%s752 + $0x1c] sm:$0xf]
      %v761 = vld [vmem:[%s752 + $0x20] sm:$0xf]
      %v762 = vld [vmem:[%s752 + $0x24] sm:$0xf]
      %v763 = vld [vmem:[%s752 + $0x28] sm:$0xf]
      %v764 = vld [vmem:[%s752 + $0x2c] sm:$0xf]
      %v765 = vld [vmem:[%s752 + $0x30] sm:$0xf]
      %v766 = vld [vmem:[%s752 + $0x34] sm:$0xf]
      %v767 = vld [vmem:[%s752 + $0x38] sm:$0xf]
      %v768 = vld [vmem:[%s752 + $0x3c] sm:$0xf]
      %v769 = vld [vmem:[%s752 + $0x40] sm:$0xf]
      %v770 = vld [vmem:[%s752 + $0x44] sm:$0xf]
      %v771 = vld [vmem:[%s752 + $0x48] sm:$0xf]
      %v772 = vld [vmem:[%s752 + $0x4c] sm:$0xf]
      %v773 = vld [vmem:[%s752 + $0x50] sm:$0xf]
      %v774 = vld [vmem:[%s752 + $0x54] sm:$0xf]
      %v775 = vld [vmem:[%s752 + $0x58] sm:$0xf]
      %v776 = vld [vmem:[%s752 + $0x5c] sm:$0xf]
      %v777 = vld [vmem:[%s752 + $0x60] sm:$0xf]
      %v778 = vld [vmem:[%s752 + $0x64] sm:$0xf]
      %v779 = vld [vmem:[%s752 + $0x68] sm:$0xf]
      %v780 = vld [vmem:[%s752 + $0x6c] sm:$0xf]
      %v781 = vld [vmem:[%s752 + $0x70] sm:$0xf]
      %v782 = vld [vmem:[%s752 + $0x74] sm:$0xf]
      %v783 = vld [vmem:[%s752 + $0x78] sm:$0xf]
      %v784 = vld [vmem:[%s752 + $0x7c] sm:$0xf]
      %v817 = vunpack.c.l.b16 %v753
      %v818 = vunpack.c.l.b16 %v754
      %v819 = vunpack.c.l.b16 %v755
      %v820 = vunpack.c.l.b16 %v756
      %v821 = vunpack.c.l.b16 %v757
      %v822 = vunpack.c.l.b16 %v758
      %v823 = vunpack.c.l.b16 %v759
      %v824 = vunpack.c.l.b16 %v760
      %v825 = vunpack.c.l.b16 %v761
      %v826 = vunpack.c.l.b16 %v762
      %v827 = vunpack.c.l.b16 %v763
      %v828 = vunpack.c.l.b16 %v764
      %v829 = vunpack.c.l.b16 %v765
      %v830 = vunpack.c.l.b16 %v766
      %v831 = vunpack.c.l.b16 %v767
      %v832 = vunpack.c.l.b16 %v768
      %v833 = vunpack.c.l.b16 %v769
      %v834 = vunpack.c.l.b16 %v770
      %v835 = vunpack.c.l.b16 %v771
      %v836 = vunpack.c.l.b16 %v772
      %v837 = vunpack.c.l.b16 %v773
      %v838 = vunpack.c.l.b16 %v774
      %v839 = vunpack.c.l.b16 %v775
      %v840 = vunpack.c.l.b16 %v776
      %v841 = vunpack.c.l.b16 %v777
      %v842 = vunpack.c.l.b16 %v778
      %v843 = vunpack.c.l.b16 %v779
      %v844 = vunpack.c.l.b16 %v780
      %v845 = vunpack.c.l.b16 %v781
      %v846 = vunpack.c.l.b16 %v782
      %v847 = vunpack.c.l.b16 %v783
      %v848 = vunpack.c.l.b16 %v784
      %v849 = vpack.c.b16 %v818, %v817
      %v850 = vpack.c.b16 %v820, %v819
      %v851 = vpack.c.b16 %v822, %v821
      %v852 = vpack.c.b16 %v824, %v823
      %v853 = vpack.c.b16 %v826, %v825
      %v854 = vpack.c.b16 %v828, %v827
      %v855 = vpack.c.b16 %v830, %v829
      %v856 = vpack.c.b16 %v832, %v831
      %v857 = vpack.c.b16 %v834, %v833
      %v858 = vpack.c.b16 %v836, %v835
      %v859 = vpack.c.b16 %v838, %v837
      %v860 = vpack.c.b16 %v840, %v839
      %v861 = vpack.c.b16 %v842, %v841
      %v862 = vpack.c.b16 %v844, %v843
      %v863 = vpack.c.b16 %v846, %v845
      %v864 = vpack.c.b16 %v848, %v847
      %881 = vmatprep.subr.bf16.mxu0 0
      %882 = vmatpush1.bf16.msra.mxu0 %v856
      %883 = vmatprep.subr.bf16.mxu0 0
      %884 = vmatpush1.bf16.msra.mxu0 %v855
      %885 = vmatprep.subr.bf16.mxu0 0
      %886 = vmatpush1.bf16.msra.mxu0 %v854
      %887 = vmatprep.subr.bf16.mxu0 0
      %888 = vmatpush1.bf16.msra.mxu0 %v853
      %889 = vmatprep.subr.bf16.mxu0 0
      %890 = vmatpush1.bf16.msra.mxu0 %v852
      %891 = vmatprep.subr.bf16.mxu0 0
      %892 = vmatpush1.bf16.msra.mxu0 %v851
      %893 = vmatprep.subr.bf16.mxu0 0
      %894 = vmatpush1.bf16.msra.mxu0 %v850
      %895 = vmatprep.subr.bf16.mxu0 0
      %896 = vmatpush1.bf16.msra.mxu0 %v849
      %897 = vmatprep.subr.bf16.mxu0 0
      %898 = vmatpush2.bf16.msra.mxu0 %v864
      %899 = vmatprep.subr.bf16.mxu0 0
      %900 = vmatpush2.bf16.msra.mxu0 %v863
      %901 = vmatprep.subr.bf16.mxu0 0
      %902 = vmatpush2.bf16.msra.mxu0 %v862
      %903 = vmatprep.subr.bf16.mxu0 0
      %904 = vmatpush2.bf16.msra.mxu0 %v861
      %905 = vmatprep.subr.bf16.mxu0 0
      %906 = vmatpush2.bf16.msra.mxu0 %v860
      %907 = vmatprep.subr.bf16.mxu0 0
      %908 = vmatpush2.bf16.msra.mxu0 %v859
      %909 = vmatprep.subr.bf16.mxu0 0
      %910 = vmatpush2.bf16.msra.mxu0 %v858
      %911 = vmatprep.subr.bf16.mxu0 0
      %912 = vmatpush2.bf16.msra.mxu0 %v857
      %913 = vmatprep.mubr.bf16.mxu0 %v582
      %914 = vmatmul.mubr.bf16.gmra.mxu0 %v581
      %v915 = vpop.f32.mrf.mxu0
      %v916 = vadd.f32 0.0, %v915
      %v917 = vpop.f32.mrf.mxu0
      %v918 = vpop.f32.mrf.mxu0
      %v919 = vpop.f32.mrf.mxu0
      %920 = vdwg.mxu0
      %v921 = vpack.c.bf16 %v916, %v916
      %s922 = scalar_lea.vmem %s1, 256
      %v923 = vld [vmem:[%s922] sm:$0xf]
      %v924 = vld [vmem:[%s922 + $0x4] sm:$0xf]
      %v925 = vld [vmem:[%s922 + $0x8] sm:$0xf]
      %v926 = vld [vmem:[%s922 + $0xc] sm:$0xf]
      %v927 = vld [vmem:[%s922 + $0x10] sm:$0xf]
      %v928 = vld [vmem:[%s922 + $0x14] sm:$0xf]
      %v929 = vld [vmem:[%s922 + $0x18] sm:$0xf]
      %v930 = vld [vmem:[%s922 + $0x1c] sm:$0xf]
      %v931 = vld [vmem:[%s922 + $0x20] sm:$0xf]
      %v932 = vld [vmem:[%s922 + $0x24] sm:$0xf]
      %v933 = vld [vmem:[%s922 + $0x28] sm:$0xf]
      %v934 = vld [vmem:[%s922 + $0x2c] sm:$0xf]
      %v935 = vld [vmem:[%s922 + $0x30] sm:$0xf]
      %v936 = vld [vmem:[%s922 + $0x34] sm:$0xf]
      %v937 = vld [vmem:[%s922 + $0x38] sm:$0xf]
      %v938 = vld [vmem:[%s922 + $0x3c] sm:$0xf]
      %v939 = vld [vmem:[%s922 + $0x40] sm:$0xf]
      %v940 = vld [vmem:[%s922 + $0x44] sm:$0xf]
      %v941 = vld [vmem:[%s922 + $0x48] sm:$0xf]
      %v942 = vld [vmem:[%s922 + $0x4c] sm:$0xf]
      %v943 = vld [vmem:[%s922 + $0x50] sm:$0xf]
      %v944 = vld [vmem:[%s922 + $0x54] sm:$0xf]
      %v945 = vld [vmem:[%s922 + $0x58] sm:$0xf]
      %v946 = vld [vmem:[%s922 + $0x5c] sm:$0xf]
      %v947 = vld [vmem:[%s922 + $0x60] sm:$0xf]
      %v948 = vld [vmem:[%s922 + $0x64] sm:$0xf]
      %v949 = vld [vmem:[%s922 + $0x68] sm:$0xf]
      %v950 = vld [vmem:[%s922 + $0x6c] sm:$0xf]
      %v951 = vld [vmem:[%s922 + $0x70] sm:$0xf]
      %v952 = vld [vmem:[%s922 + $0x74] sm:$0xf]
      %v953 = vld [vmem:[%s922 + $0x78] sm:$0xf]
      %v954 = vld [vmem:[%s922 + $0x7c] sm:$0xf]
      %v987 = vunpack.c.l.b16 %v923
      %v988 = vunpack.c.l.b16 %v924
      %v989 = vunpack.c.l.b16 %v925
      %v990 = vunpack.c.l.b16 %v926
      %v991 = vunpack.c.l.b16 %v927
      %v992 = vunpack.c.l.b16 %v928
      %v993 = vunpack.c.l.b16 %v929
      %v994 = vunpack.c.l.b16 %v930
      %v995 = vunpack.c.l.b16 %v931
      %v996 = vunpack.c.l.b16 %v932
      %v997 = vunpack.c.l.b16 %v933
      %v998 = vunpack.c.l.b16 %v934
      %v999 = vunpack.c.l.b16 %v935
      %v1000 = vunpack.c.l.b16 %v936
      %v1001 = vunpack.c.l.b16 %v937
      %v1002 = vunpack.c.l.b16 %v938
      %v1003 = vunpack.c.l.b16 %v939
      %v1004 = vunpack.c.l.b16 %v940
      %v1005 = vunpack.c.l.b16 %v941
      %v1006 = vunpack.c.l.b16 %v942
      %v1007 = vunpack.c.l.b16 %v943
      %v1008 = vunpack.c.l.b16 %v944
      %v1009 = vunpack.c.l.b16 %v945
      %v1010 = vunpack.c.l.b16 %v946
      %v1011 = vunpack.c.l.b16 %v947
      %v1012 = vunpack.c.l.b16 %v948
      %v1013 = vunpack.c.l.b16 %v949
      %v1014 = vunpack.c.l.b16 %v950
      %v1015 = vunpack.c.l.b16 %v951
      %v1016 = vunpack.c.l.b16 %v952
      %v1017 = vunpack.c.l.b16 %v953
      %v1018 = vunpack.c.l.b16 %v954
      %v1019 = vpack.c.b16 %v988, %v987
      %v1020 = vpack.c.b16 %v990, %v989
      %v1021 = vpack.c.b16 %v992, %v991
      %v1022 = vpack.c.b16 %v994, %v993
      %v1023 = vpack.c.b16 %v996, %v995
      %v1024 = vpack.c.b16 %v998, %v997
      %v1025 = vpack.c.b16 %v1000, %v999
      %v1026 = vpack.c.b16 %v1002, %v1001
      %v1027 = vpack.c.b16 %v1004, %v1003
      %v1028 = vpack.c.b16 %v1006, %v1005
      %v1029 = vpack.c.b16 %v1008, %v1007
      %v1030 = vpack.c.b16 %v1010, %v1009
      %v1031 = vpack.c.b16 %v1012, %v1011
      %v1032 = vpack.c.b16 %v1014, %v1013
      %v1033 = vpack.c.b16 %v1016, %v1015
      %v1034 = vpack.c.b16 %v1018, %v1017
      %1051 = vmatprep.subr.bf16.mxu0 0
      %1052 = vmatpush1.bf16.msra.mxu0 %v1026
      %1053 = vmatprep.subr.bf16.mxu0 0
      %1054 = vmatpush1.bf16.msra.mxu0 %v1025
      %1055 = vmatprep.subr.bf16.mxu0 0
      %1056 = vmatpush1.bf16.msra.mxu0 %v1024
      %1057 = vmatprep.subr.bf16.mxu0 0
      %1058 = vmatpush1.bf16.msra.mxu0 %v1023
      %1059 = vmatprep.subr.bf16.mxu0 0
      %1060 = vmatpush1.bf16.msra.mxu0 %v1022
      %1061 = vmatprep.subr.bf16.mxu0 0
      %1062 = vmatpush1.bf16.msra.mxu0 %v1021
      %1063 = vmatprep.subr.bf16.mxu0 0
      %1064 = vmatpush1.bf16.msra.mxu0 %v1020
      %1065 = vmatprep.subr.bf16.mxu0 0
      %1066 = vmatpush1.bf16.msra.mxu0 %v1019
      %1067 = vmatprep.subr.bf16.mxu0 0
      %1068 = vmatpush2.bf16.msra.mxu0 %v1034
      %1069 = vmatprep.subr.bf16.mxu0 0
      %1070 = vmatpush2.bf16.msra.mxu0 %v1033
      %1071 = vmatprep.subr.bf16.mxu0 0
      %1072 = vmatpush2.bf16.msra.mxu0 %v1032
      %1073 = vmatprep.subr.bf16.mxu0 0
      %1074 = vmatpush2.bf16.msra.mxu0 %v1031
      %1075 = vmatprep.subr.bf16.mxu0 0
      %1076 = vmatpush2.bf16.msra.mxu0 %v1030
      %1077 = vmatprep.subr.bf16.mxu0 0
      %1078 = vmatpush2.bf16.msra.mxu0 %v1029
      %1079 = vmatprep.subr.bf16.mxu0 0
      %1080 = vmatpush2.bf16.msra.mxu0 %v1028
      %1081 = vmatprep.subr.bf16.mxu0 0
      %1082 = vmatpush2.bf16.msra.mxu0 %v1027
      %1083 = vmatprep.mubr.bf16.mxu0 %v582
      %1084 = vmatmul.mubr.bf16.gmra.mxu0 %v581
      %v1085 = vpop.f32.mrf.mxu0
      %v1086 = vadd.f32 0.0, %v1085
      %v1087 = vpop.f32.mrf.mxu0
      %v1088 = vpop.f32.mrf.mxu0
      %v1089 = vpop.f32.mrf.mxu0
      %1090 = vdwg.mxu0
      %v1091 = vpack.c.bf16 %v1086, %v1086
      %s1092 = scalar_lea.vmem %s1, 384
      %v1093 = vld [vmem:[%s1092] sm:$0xf]
      %v1094 = vld [vmem:[%s1092 + $0x4] sm:$0xf]
      %v1095 = vld [vmem:[%s1092 + $0x8] sm:$0xf]
      %v1096 = vld [vmem:[%s1092 + $0xc] sm:$0xf]
      %v1097 = vld [vmem:[%s1092 + $0x10] sm:$0xf]
      %v1098 = vld [vmem:[%s1092 + $0x14] sm:$0xf]
      %v1099 = vld [vmem:[%s1092 + $0x18] sm:$0xf]
      %v1100 = vld [vmem:[%s1092 + $0x1c] sm:$0xf]
      %v1101 = vld [vmem:[%s1092 + $0x20] sm:$0xf]
      %v1102 = vld [vmem:[%s1092 + $0x24] sm:$0xf]
      %v1103 = vld [vmem:[%s1092 + $0x28] sm:$0xf]
      %v1104 = vld [vmem:[%s1092 + $0x2c] sm:$0xf]
      %v1105 = vld [vmem:[%s1092 + $0x30] sm:$0xf]
      %v1106 = vld [vmem:[%s1092 + $0x34] sm:$0xf]
      %v1107 = vld [vmem:[%s1092 + $0x38] sm:$0xf]
      %v1108 = vld [vmem:[%s1092 + $0x3c] sm:$0xf]
      %v1109 = vld [vmem:[%s1092 + $0x40] sm:$0xf]
      %v1110 = vld [vmem:[%s1092 + $0x44] sm:$0xf]
      %v1111 = vld [vmem:[%s1092 + $0x48] sm:$0xf]
      %v1112 = vld [vmem:[%s1092 + $0x4c] sm:$0xf]
      %v1113 = vld [vmem:[%s1092 + $0x50] sm:$0xf]
      %v1114 = vld [vmem:[%s1092 + $0x54] sm:$0xf]
      %v1115 = vld [vmem:[%s1092 + $0x58] sm:$0xf]
      %v1116 = vld [vmem:[%s1092 + $0x5c] sm:$0xf]
      %v1117 = vld [vmem:[%s1092 + $0x60] sm:$0xf]
      %v1118 = vld [vmem:[%s1092 + $0x64] sm:$0xf]
      %v1119 = vld [vmem:[%s1092 + $0x68] sm:$0xf]
      %v1120 = vld [vmem:[%s1092 + $0x6c] sm:$0xf]
      %v1121 = vld [vmem:[%s1092 + $0x70] sm:$0xf]
      %v1122 = vld [vmem:[%s1092 + $0x74] sm:$0xf]
      %v1123 = vld [vmem:[%s1092 + $0x78] sm:$0xf]
      %v1124 = vld [vmem:[%s1092 + $0x7c] sm:$0xf]
      %v1157 = vunpack.c.l.b16 %v1093
      %v1158 = vunpack.c.l.b16 %v1094
      %v1159 = vunpack.c.l.b16 %v1095
      %v1160 = vunpack.c.l.b16 %v1096
      %v1161 = vunpack.c.l.b16 %v1097
      %v1162 = vunpack.c.l.b16 %v1098
      %v1163 = vunpack.c.l.b16 %v1099
      %v1164 = vunpack.c.l.b16 %v1100
      %v1165 = vunpack.c.l.b16 %v1101
      %v1166 = vunpack.c.l.b16 %v1102
      %v1167 = vunpack.c.l.b16 %v1103
      %v1168 = vunpack.c.l.b16 %v1104
      %v1169 = vunpack.c.l.b16 %v1105
      %v1170 = vunpack.c.l.b16 %v1106
      %v1171 = vunpack.c.l.b16 %v1107
      %v1172 = vunpack.c.l.b16 %v1108
      %v1173 = vunpack.c.l.b16 %v1109
      %v1174 = vunpack.c.l.b16 %v1110
      %v1175 = vunpack.c.l.b16 %v1111
      %v1176 = vunpack.c.l.b16 %v1112
      %v1177 = vunpack.c.l.b16 %v1113
      %v1178 = vunpack.c.l.b16 %v1114
      %v1179 = vunpack.c.l.b16 %v1115
      %v1180 = vunpack.c.l.b16 %v1116
      %v1181 = vunpack.c.l.b16 %v1117
      %v1182 = vunpack.c.l.b16 %v1118
      %v1183 = vunpack.c.l.b16 %v1119
      %v1184 = vunpack.c.l.b16 %v1120
      %v1185 = vunpack.c.l.b16 %v1121
      %v1186 = vunpack.c.l.b16 %v1122
      %v1187 = vunpack.c.l.b16 %v1123
      %v1188 = vunpack.c.l.b16 %v1124
      %v1189 = vpack.c.b16 %v1158, %v1157
      %v1190 = vpack.c.b16 %v1160, %v1159
      %v1191 = vpack.c.b16 %v1162, %v1161
      %v1192 = vpack.c.b16 %v1164, %v1163
      %v1193 = vpack.c.b16 %v1166, %v1165
      %v1194 = vpack.c.b16 %v1168, %v1167
      %v1195 = vpack.c.b16 %v1170, %v1169
      %v1196 = vpack.c.b16 %v1172, %v1171
      %v1197 = vpack.c.b16 %v1174, %v1173
      %v1198 = vpack.c.b16 %v1176, %v1175
      %v1199 = vpack.c.b16 %v1178, %v1177
      %v1200 = vpack.c.b16 %v1180, %v1179
      %v1201 = vpack.c.b16 %v1182, %v1181
      %v1202 = vpack.c.b16 %v1184, %v1183
      %v1203 = vpack.c.b16 %v1186, %v1185
      %v1204 = vpack.c.b16 %v1188, %v1187
      %1221 = vmatprep.subr.bf16.mxu0 0
      %1222 = vmatpush1.bf16.msra.mxu0 %v1196
      %1223 = vmatprep.subr.bf16.mxu0 0
      %1224 = vmatpush1.bf16.msra.mxu0 %v1195
      %1225 = vmatprep.subr.bf16.mxu0 0
      %1226 = vmatpush1.bf16.msra.mxu0 %v1194
      %1227 = vmatprep.subr.bf16.mxu0 0
      %1228 = vmatpush1.bf16.msra.mxu0 %v1193
      %1229 = vmatprep.subr.bf16.mxu0 0
      %1230 = vmatpush1.bf16.msra.mxu0 %v1192
      %1231 = vmatprep.subr.bf16.mxu0 0
      %1232 = vmatpush1.bf16.msra.mxu0 %v1191
      %1233 = vmatprep.subr.bf16.mxu0 0
      %1234 = vmatpush1.bf16.msra.mxu0 %v1190
      %1235 = vmatprep.subr.bf16.mxu0 0
      %1236 = vmatpush1.bf16.msra.mxu0 %v1189
      %1237 = vmatprep.subr.bf16.mxu0 0
      %1238 = vmatpush2.bf16.msra.mxu0 %v1204
      %1239 = vmatprep.subr.bf16.mxu0 0
      %1240 = vmatpush2.bf16.msra.mxu0 %v1203
      %1241 = vmatprep.subr.bf16.mxu0 0
      %1242 = vmatpush2.bf16.msra.mxu0 %v1202
      %1243 = vmatprep.subr.bf16.mxu0 0
      %1244 = vmatpush2.bf16.msra.mxu0 %v1201
      %1245 = vmatprep.subr.bf16.mxu0 0
      %1246 = vmatpush2.bf16.msra.mxu0 %v1200
      %1247 = vmatprep.subr.bf16.mxu0 0
      %1248 = vmatpush2.bf16.msra.mxu0 %v1199
      %1249 = vmatprep.subr.bf16.mxu0 0
      %1250 = vmatpush2.bf16.msra.mxu0 %v1198
      %1251 = vmatprep.subr.bf16.mxu0 0
      %1252 = vmatpush2.bf16.msra.mxu0 %v1197
      %1253 = vmatprep.mubr.bf16.mxu0 %v582
      %1254 = vmatmul.mubr.bf16.gmra.mxu0 %v581
      %v1255 = vpop.f32.mrf.mxu0
      %v1256 = vadd.f32 0.0, %v1255
      %v1257 = vpop.f32.mrf.mxu0
      %v1258 = vpop.f32.mrf.mxu0
      %v1259 = vpop.f32.mrf.mxu0
      %1260 = vdwg.mxu0
      %v1261 = vpack.c.bf16 %v1256, %v1256
      %s1262 = scalar_lea.vmem %s1, 512
      %v1263 = vld [vmem:[%s1262] sm:$0xf]
      %v1264 = vld [vmem:[%s1262 + $0x4] sm:$0xf]
      %v1265 = vld [vmem:[%s1262 + $0x8] sm:$0xf]
      %v1266 = vld [vmem:[%s1262 + $0xc] sm:$0xf]
      %v1267 = vld [vmem:[%s1262 + $0x10] sm:$0xf]
      %v1268 = vld [vmem:[%s1262 + $0x14] sm:$0xf]
      %v1269 = vld [vmem:[%s1262 + $0x18] sm:$0xf]
      %v1270 = vld [vmem:[%s1262 + $0x1c] sm:$0xf]
      %v1271 = vld [vmem:[%s1262 + $0x20] sm:$0xf]
      %v1272 = vld [vmem:[%s1262 + $0x24] sm:$0xf]
      %v1273 = vld [vmem:[%s1262 + $0x28] sm:$0xf]
      %v1274 = vld [vmem:[%s1262 + $0x2c] sm:$0xf]
      %v1275 = vld [vmem:[%s1262 + $0x30] sm:$0xf]
      %v1276 = vld [vmem:[%s1262 + $0x34] sm:$0xf]
      %v1277 = vld [vmem:[%s1262 + $0x38] sm:$0xf]
      %v1278 = vld [vmem:[%s1262 + $0x3c] sm:$0xf]
      %v1279 = vld [vmem:[%s1262 + $0x40] sm:$0xf]
      %v1280 = vld [vmem:[%s1262 + $0x44] sm:$0xf]
      %v1281 = vld [vmem:[%s1262 + $0x48] sm:$0xf]
      %v1282 = vld [vmem:[%s1262 + $0x4c] sm:$0xf]
      %v1283 = vld [vmem:[%s1262 + $0x50] sm:$0xf]
      %v1284 = vld [vmem:[%s1262 + $0x54] sm:$0xf]
      %v1285 = vld [vmem:[%s1262 + $0x58] sm:$0xf]
      %v1286 = vld [vmem:[%s1262 + $0x5c] sm:$0xf]
      %v1287 = vld [vmem:[%s1262 + $0x60] sm:$0xf]
      %v1288 = vld [vmem:[%s1262 + $0x64] sm:$0xf]
      %v1289 = vld [vmem:[%s1262 + $0x68] sm:$0xf]
      %v1290 = vld [vmem:[%s1262 + $0x6c] sm:$0xf]
      %v1291 = vld [vmem:[%s1262 + $0x70] sm:$0xf]
      %v1292 = vld [vmem:[%s1262 + $0x74] sm:$0xf]
      %v1293 = vld [vmem:[%s1262 + $0x78] sm:$0xf]
      %v1294 = vld [vmem:[%s1262 + $0x7c] sm:$0xf]
      %v1327 = vunpack.c.l.b16 %v1263
      %v1328 = vunpack.c.l.b16 %v1264
      %v1329 = vunpack.c.l.b16 %v1265
      %v1330 = vunpack.c.l.b16 %v1266
      %v1331 = vunpack.c.l.b16 %v1267
      %v1332 = vunpack.c.l.b16 %v1268
      %v1333 = vunpack.c.l.b16 %v1269
      %v1334 = vunpack.c.l.b16 %v1270
      %v1335 = vunpack.c.l.b16 %v1271
      %v1336 = vunpack.c.l.b16 %v1272
      %v1337 = vunpack.c.l.b16 %v1273
      %v1338 = vunpack.c.l.b16 %v1274
      %v1339 = vunpack.c.l.b16 %v1275
      %v1340 = vunpack.c.l.b16 %v1276
      %v1341 = vunpack.c.l.b16 %v1277
      %v1342 = vunpack.c.l.b16 %v1278
      %v1343 = vunpack.c.l.b16 %v1279
      %v1344 = vunpack.c.l.b16 %v1280
      %v1345 = vunpack.c.l.b16 %v1281
      %v1346 = vunpack.c.l.b16 %v1282
      %v1347 = vunpack.c.l.b16 %v1283
      %v1348 = vunpack.c.l.b16 %v1284
      %v1349 = vunpack.c.l.b16 %v1285
      %v1350 = vunpack.c.l.b16 %v1286
      %v1351 = vunpack.c.l.b16 %v1287
      %v1352 = vunpack.c.l.b16 %v1288
      %v1353 = vunpack.c.l.b16 %v1289
      %v1354 = vunpack.c.l.b16 %v1290
      %v1355 = vunpack.c.l.b16 %v1291
      %v1356 = vunpack.c.l.b16 %v1292
      %v1357 = vunpack.c.l.b16 %v1293
      %v1358 = vunpack.c.l.b16 %v1294
      %v1359 = vpack.c.b16 %v1328, %v1327
      %v1360 = vpack.c.b16 %v1330, %v1329
      %v1361 = vpack.c.b16 %v1332, %v1331
      %v1362 = vpack.c.b16 %v1334, %v1333
      %v1363 = vpack.c.b16 %v1336, %v1335
      %v1364 = vpack.c.b16 %v1338, %v1337
      %v1365 = vpack.c.b16 %v1340, %v1339
      %v1366 = vpack.c.b16 %v1342, %v1341
      %v1367 = vpack.c.b16 %v1344, %v1343
      %v1368 = vpack.c.b16 %v1346, %v1345
      %v1369 = vpack.c.b16 %v1348, %v1347
      %v1370 = vpack.c.b16 %v1350, %v1349
      %v1371 = vpack.c.b16 %v1352, %v1351
      %v1372 = vpack.c.b16 %v1354, %v1353
      %v1373 = vpack.c.b16 %v1356, %v1355
      %v1374 = vpack.c.b16 %v1358, %v1357
      %1391 = vmatprep.subr.bf16.mxu0 0
      %1392 = vmatpush1.bf16.msra.mxu0 %v1366
      %1393 = vmatprep.subr.bf16.mxu0 0
      %1394 = vmatpush1.bf16.msra.mxu0 %v1365
      %1395 = vmatprep.subr.bf16.mxu0 0
      %1396 = vmatpush1.bf16.msra.mxu0 %v1364
      %1397 = vmatprep.subr.bf16.mxu0 0
      %1398 = vmatpush1.bf16.msra.mxu0 %v1363
      %1399 = vmatprep.subr.bf16.mxu0 0
      %1400 = vmatpush1.bf16.msra.mxu0 %v1362
      %1401 = vmatprep.subr.bf16.mxu0 0
      %1402 = vmatpush1.bf16.msra.mxu0 %v1361
      %1403 = vmatprep.subr.bf16.mxu0 0
      %1404 = vmatpush1.bf16.msra.mxu0 %v1360
      %1405 = vmatprep.subr.bf16.mxu0 0
      %1406 = vmatpush1.bf16.msra.mxu0 %v1359
      %1407 = vmatprep.subr.bf16.mxu0 0
      %1408 = vmatpush2.bf16.msra.mxu0 %v1374
      %1409 = vmatprep.subr.bf16.mxu0 0
      %1410 = vmatpush2.bf16.msra.mxu0 %v1373
      %1411 = vmatprep.subr.bf16.mxu0 0
      %1412 = vmatpush2.bf16.msra.mxu0 %v1372
      %1413 = vmatprep.subr.bf16.mxu0 0
      %1414 = vmatpush2.bf16.msra.mxu0 %v1371
      %1415 = vmatprep.subr.bf16.mxu0 0
      %1416 = vmatpush2.bf16.msra.mxu0 %v1370
      %1417 = vmatprep.subr.bf16.mxu0 0
      %1418 = vmatpush2.bf16.msra.mxu0 %v1369
      %1419 = vmatprep.subr.bf16.mxu0 0
      %1420 = vmatpush2.bf16.msra.mxu0 %v1368
      %1421 = vmatprep.subr.bf16.mxu0 0
      %1422 = vmatpush2.bf16.msra.mxu0 %v1367
      %1423 = vmatprep.mubr.bf16.mxu0 %v582
      %1424 = vmatmul.mubr.bf16.gmra.mxu0 %v581
      %v1425 = vpop.f32.mrf.mxu0
      %v1426 = vadd.f32 0.0, %v1425
      %v1427 = vpop.f32.mrf.mxu0
      %v1428 = vpop.f32.mrf.mxu0
      %v1429 = vpop.f32.mrf.mxu0
      %1430 = vdwg.mxu0
      %v1431 = vpack.c.bf16 %v1426, %v1426
      %s1432 = scalar_lea.vmem %s1, 640
      %v1433 = vld [vmem:[%s1432] sm:$0xf]
      %v1434 = vld [vmem:[%s1432 + $0x4] sm:$0xf]
      %v1435 = vld [vmem:[%s1432 + $0x8] sm:$0xf]
      %v1436 = vld [vmem:[%s1432 + $0xc] sm:$0xf]
      %v1437 = vld [vmem:[%s1432 + $0x10] sm:$0xf]
      %v1438 = vld [vmem:[%s1432 + $0x14] sm:$0xf]
      %v1439 = vld [vmem:[%s1432 + $0x18] sm:$0xf]
      %v1440 = vld [vmem:[%s1432 + $0x1c] sm:$0xf]
      %v1441 = vld [vmem:[%s1432 + $0x20] sm:$0xf]
      %v1442 = vld [vmem:[%s1432 + $0x24] sm:$0xf]
      %v1443 = vld [vmem:[%s1432 + $0x28] sm:$0xf]
      %v1444 = vld [vmem:[%s1432 + $0x2c] sm:$0xf]
      %v1445 = vld [vmem:[%s1432 + $0x30] sm:$0xf]
      %v1446 = vld [vmem:[%s1432 + $0x34] sm:$0xf]
      %v1447 = vld [vmem:[%s1432 + $0x38] sm:$0xf]
      %v1448 = vld [vmem:[%s1432 + $0x3c] sm:$0xf]
      %v1449 = vld [vmem:[%s1432 + $0x40] sm:$0xf]
      %v1450 = vld [vmem:[%s1432 + $0x44] sm:$0xf]
      %v1451 = vld [vmem:[%s1432 + $0x48] sm:$0xf]
      %v1452 = vld [vmem:[%s1432 + $0x4c] sm:$0xf]
      %v1453 = vld [vmem:[%s1432 + $0x50] sm:$0xf]
      %v1454 = vld [vmem:[%s1432 + $0x54] sm:$0xf]
      %v1455 = vld [vmem:[%s1432 + $0x58] sm:$0xf]
      %v1456 = vld [vmem:[%s1432 + $0x5c] sm:$0xf]
      %v1457 = vld [vmem:[%s1432 + $0x60] sm:$0xf]
      %v1458 = vld [vmem:[%s1432 + $0x64] sm:$0xf]
      %v1459 = vld [vmem:[%s1432 + $0x68] sm:$0xf]
      %v1460 = vld [vmem:[%s1432 + $0x6c] sm:$0xf]
      %v1461 = vld [vmem:[%s1432 + $0x70] sm:$0xf]
      %v1462 = vld [vmem:[%s1432 + $0x74] sm:$0xf]
      %v1463 = vld [vmem:[%s1432 + $0x78] sm:$0xf]
      %v1464 = vld [vmem:[%s1432 + $0x7c] sm:$0xf]
      %v1497 = vunpack.c.l.b16 %v1433
      %v1498 = vunpack.c.l.b16 %v1434
      %v1499 = vunpack.c.l.b16 %v1435
      %v1500 = vunpack.c.l.b16 %v1436
      %v1501 = vunpack.c.l.b16 %v1437
      %v1502 = vunpack.c.l.b16 %v1438
      %v1503 = vunpack.c.l.b16 %v1439
      %v1504 = vunpack.c.l.b16 %v1440
      %v1505 = vunpack.c.l.b16 %v1441
      %v1506 = vunpack.c.l.b16 %v1442
      %v1507 = vunpack.c.l.b16 %v1443
      %v1508 = vunpack.c.l.b16 %v1444
      %v1509 = vunpack.c.l.b16 %v1445
      %v1510 = vunpack.c.l.b16 %v1446
      %v1511 = vunpack.c.l.b16 %v1447
      %v1512 = vunpack.c.l.b16 %v1448
      %v1513 = vunpack.c.l.b16 %v1449
      %v1514 = vunpack.c.l.b16 %v1450
      %v1515 = vunpack.c.l.b16 %v1451
      %v1516 = vunpack.c.l.b16 %v1452
      %v1517 = vunpack.c.l.b16 %v1453
      %v1518 = vunpack.c.l.b16 %v1454
      %v1519 = vunpack.c.l.b16 %v1455
      %v1520 = vunpack.c.l.b16 %v1456
      %v1521 = vunpack.c.l.b16 %v1457
      %v1522 = vunpack.c.l.b16 %v1458
      %v1523 = vunpack.c.l.b16 %v1459
      %v1524 = vunpack.c.l.b16 %v1460
      %v1525 = vunpack.c.l.b16 %v1461
      %v1526 = vunpack.c.l.b16 %v1462
      %v1527 = vunpack.c.l.b16 %v1463
      %v1528 = vunpack.c.l.b16 %v1464
      %v1529 = vpack.c.b16 %v1498, %v1497
      %v1530 = vpack.c.b16 %v1500, %v1499
      %v1531 = vpack.c.b16 %v1502, %v1501
      %v1532 = vpack.c.b16 %v1504, %v1503
      %v1533 = vpack.c.b16 %v1506, %v1505
      %v1534 = vpack.c.b16 %v1508, %v1507
      %v1535 = vpack.c.b16 %v1510, %v1509
      %v1536 = vpack.c.b16 %v1512, %v1511
      %v1537 = vpack.c.b16 %v1514, %v1513
      %v1538 = vpack.c.b16 %v1516, %v1515
      %v1539 = vpack.c.b16 %v1518, %v1517
      %v1540 = vpack.c.b16 %v1520, %v1519
      %v1541 = vpack.c.b16 %v1522, %v1521
      %v1542 = vpack.c.b16 %v1524, %v1523
      %v1543 = vpack.c.b16 %v1526, %v1525
      %v1544 = vpack.c.b16 %v1528, %v1527
      %1561 = vmatprep.subr.bf16.mxu0 0
      %1562 = vmatpush1.bf16.msra.mxu0 %v1536
      %1563 = vmatprep.subr.bf16.mxu0 0
      %1564 = vmatpush1.bf16.msra.mxu0 %v1535
      %1565 = vmatprep.subr.bf16.mxu0 0
      %1566 = vmatpush1.bf16.msra.mxu0 %v1534
      %1567 = vmatprep.subr.bf16.mxu0 0
      %1568 = vmatpush1.bf16.msra.mxu0 %v1533
      %1569 = vmatprep.subr.bf16.mxu0 0
      %1570 = vmatpush1.bf16.msra.mxu0 %v1532
      %1571 = vmatprep.subr.bf16.mxu0 0
      %1572 = vmatpush1.bf16.msra.mxu0 %v1531
      %1573 = vmatprep.subr.bf16.mxu0 0
      %1574 = vmatpush1.bf16.msra.mxu0 %v1530
      %1575 = vmatprep.subr.bf16.mxu0 0
      %1576 = vmatpush1.bf16.msra.mxu0 %v1529
      %1577 = vmatprep.subr.bf16.mxu0 0
      %1578 = vmatpush2.bf16.msra.mxu0 %v1544
      %1579 = vmatprep.subr.bf16.mxu0 0
      %1580 = vmatpush2.bf16.msra.mxu0 %v1543
      %1581 = vmatprep.subr.bf16.mxu0 0
      %1582 = vmatpush2.bf16.msra.mxu0 %v1542
      %1583 = vmatprep.subr.bf16.mxu0 0
      %1584 = vmatpush2.bf16.msra.mxu0 %v1541
      %1585 = vmatprep.subr.bf16.mxu0 0
      %1586 = vmatpush2.bf16.msra.mxu0 %v1540
      %1587 = vmatprep.subr.bf16.mxu0 0
      %1588 = vmatpush2.bf16.msra.mxu0 %v1539
      %1589 = vmatprep.subr.bf16.mxu0 0
      %1590 = vmatpush2.bf16.msra.mxu0 %v1538
      %1591 = vmatprep.subr.bf16.mxu0 0
      %1592 = vmatpush2.bf16.msra.mxu0 %v1537
      %1593 = vmatprep.mubr.bf16.mxu0 %v582
      %1594 = vmatmul.mubr.bf16.gmra.mxu0 %v581
      %v1595 = vpop.f32.mrf.mxu0
      %v1596 = vadd.f32 0.0, %v1595
      %v1597 = vpop.f32.mrf.mxu0
      %v1598 = vpop.f32.mrf.mxu0
      %v1599 = vpop.f32.mrf.mxu0
      %1600 = vdwg.mxu0
      %v1601 = vpack.c.bf16 %v1596, %v1596
      %s1602 = scalar_lea.vmem %s1, 768
      %v1603 = vld [vmem:[%s1602] sm:$0xf]
      %v1604 = vld [vmem:[%s1602 + $0x4] sm:$0xf]
      %v1605 = vld [vmem:[%s1602 + $0x8] sm:$0xf]
      %v1606 = vld [vmem:[%s1602 + $0xc] sm:$0xf]
      %v1607 = vld [vmem:[%s1602 + $0x10] sm:$0xf]
      %v1608 = vld [vmem:[%s1602 + $0x14] sm:$0xf]
      %v1609 = vld [vmem:[%s1602 + $0x18] sm:$0xf]
      %v1610 = vld [vmem:[%s1602 + $0x1c] sm:$0xf]
      %v1611 = vld [vmem:[%s1602 + $0x20] sm:$0xf]
      %v1612 = vld [vmem:[%s1602 + $0x24] sm:$0xf]
      %v1613 = vld [vmem:[%s1602 + $0x28] sm:$0xf]
      %v1614 = vld [vmem:[%s1602 + $0x2c] sm:$0xf]
      %v1615 = vld [vmem:[%s1602 + $0x30] sm:$0xf]
      %v1616 = vld [vmem:[%s1602 + $0x34] sm:$0xf]
      %v1617 = vld [vmem:[%s1602 + $0x38] sm:$0xf]
      %v1618 = vld [vmem:[%s1602 + $0x3c] sm:$0xf]
      %v1619 = vld [vmem:[%s1602 + $0x40] sm:$0xf]
      %v1620 = vld [vmem:[%s1602 + $0x44] sm:$0xf]
      %v1621 = vld [vmem:[%s1602 + $0x48] sm:$0xf]
      %v1622 = vld [vmem:[%s1602 + $0x4c] sm:$0xf]
      %v1623 = vld [vmem:[%s1602 + $0x50] sm:$0xf]
      %v1624 = vld [vmem:[%s1602 + $0x54] sm:$0xf]
      %v1625 = vld [vmem:[%s1602 + $0x58] sm:$0xf]
      %v1626 = vld [vmem:[%s1602 + $0x5c] sm:$0xf]
      %v1627 = vld [vmem:[%s1602 + $0x60] sm:$0xf]
      %v1628 = vld [vmem:[%s1602 + $0x64] sm:$0xf]
      %v1629 = vld [vmem:[%s1602 + $0x68] sm:$0xf]
      %v1630 = vld [vmem:[%s1602 + $0x6c] sm:$0xf]
      %v1631 = vld [vmem:[%s1602 + $0x70] sm:$0xf]
      %v1632 = vld [vmem:[%s1602 + $0x74] sm:$0xf]
      %v1633 = vld [vmem:[%s1602 + $0x78] sm:$0xf]
      %v1634 = vld [vmem:[%s1602 + $0x7c] sm:$0xf]
      %v1667 = vunpack.c.l.b16 %v1603
      %v1668 = vunpack.c.l.b16 %v1604
      %v1669 = vunpack.c.l.b16 %v1605
      %v1670 = vunpack.c.l.b16 %v1606
      %v1671 = vunpack.c.l.b16 %v1607
      %v1672 = vunpack.c.l.b16 %v1608
      %v1673 = vunpack.c.l.b16 %v1609
      %v1674 = vunpack.c.l.b16 %v1610
      %v1675 = vunpack.c.l.b16 %v1611
      %v1676 = vunpack.c.l.b16 %v1612
      %v1677 = vunpack.c.l.b16 %v1613
      %v1678 = vunpack.c.l.b16 %v1614
      %v1679 = vunpack.c.l.b16 %v1615
      %v1680 = vunpack.c.l.b16 %v1616
      %v1681 = vunpack.c.l.b16 %v1617
      %v1682 = vunpack.c.l.b16 %v1618
      %v1683 = vunpack.c.l.b16 %v1619
      %v1684 = vunpack.c.l.b16 %v1620
      %v1685 = vunpack.c.l.b16 %v1621
      %v1686 = vunpack.c.l.b16 %v1622
      %v1687 = vunpack.c.l.b16 %v1623
      %v1688 = vunpack.c.l.b16 %v1624
      %v1689 = vunpack.c.l.b16 %v1625
      %v1690 = vunpack.c.l.b16 %v1626
      %v1691 = vunpack.c.l.b16 %v1627
      %v1692 = vunpack.c.l.b16 %v1628
      %v1693 = vunpack.c.l.b16 %v1629
      %v1694 = vunpack.c.l.b16 %v1630
      %v1695 = vunpack.c.l.b16 %v1631
      %v1696 = vunpack.c.l.b16 %v1632
      %v1697 = vunpack.c.l.b16 %v1633
      %v1698 = vunpack.c.l.b16 %v1634
      %v1699 = vpack.c.b16 %v1668, %v1667
      %v1700 = vpack.c.b16 %v1670, %v1669
      %v1701 = vpack.c.b16 %v1672, %v1671
      %v1702 = vpack.c.b16 %v1674, %v1673
      %v1703 = vpack.c.b16 %v1676, %v1675
      %v1704 = vpack.c.b16 %v1678, %v1677
      %v1705 = vpack.c.b16 %v1680, %v1679
      %v1706 = vpack.c.b16 %v1682, %v1681
      %v1707 = vpack.c.b16 %v1684, %v1683
      %v1708 = vpack.c.b16 %v1686, %v1685
      %v1709 = vpack.c.b16 %v1688, %v1687
      %v1710 = vpack.c.b16 %v1690, %v1689
      %v1711 = vpack.c.b16 %v1692, %v1691
      %v1712 = vpack.c.b16 %v1694, %v1693
      %v1713 = vpack.c.b16 %v1696, %v1695
      %v1714 = vpack.c.b16 %v1698, %v1697
      %1731 = vmatprep.subr.bf16.mxu0 0
      %1732 = vmatpush1.bf16.msra.mxu0 %v1706
      %1733 = vmatprep.subr.bf16.mxu0 0
      %1734 = vmatpush1.bf16.msra.mxu0 %v1705
      %1735 = vmatprep.subr.bf16.mxu0 0
      %1736 = vmatpush1.bf16.msra.mxu0 %v1704
      %1737 = vmatprep.subr.bf16.mxu0 0
      %1738 = vmatpush1.bf16.msra.mxu0 %v1703
      %1739 = vmatprep.subr.bf16.mxu0 0
      %1740 = vmatpush1.bf16.msra.mxu0 %v1702
      %1741 = vmatprep.subr.bf16.mxu0 0
      %1742 = vmatpush1.bf16.msra.mxu0 %v1701
      %1743 = vmatprep.subr.bf16.mxu0 0
      %1744 = vmatpush1.bf16.msra.mxu0 %v1700
      %1745 = vmatprep.subr.bf16.mxu0 0
      %1746 = vmatpush1.bf16.msra.mxu0 %v1699
      %1747 = vmatprep.subr.bf16.mxu0 0
      %1748 = vmatpush2.bf16.msra.mxu0 %v1714
      %1749 = vmatprep.subr.bf16.mxu0 0
      %1750 = vmatpush2.bf16.msra.mxu0 %v1713
      %1751 = vmatprep.subr.bf16.mxu0 0
      %1752 = vmatpush2.bf16.msra.mxu0 %v1712
      %1753 = vmatprep.subr.bf16.mxu0 0
      %1754 = vmatpush2.bf16.msra.mxu0 %v1711
      %1755 = vmatprep.subr.bf16.mxu0 0
      %1756 = vmatpush2.bf16.msra.mxu0 %v1710
      %1757 = vmatprep.subr.bf16.mxu0 0
      %1758 = vmatpush2.bf16.msra.mxu0 %v1709
      %1759 = vmatprep.subr.bf16.mxu0 0
      %1760 = vmatpush2.bf16.msra.mxu0 %v1708
      %1761 = vmatprep.subr.bf16.mxu0 0
      %1762 = vmatpush2.bf16.msra.mxu0 %v1707
      %1763 = vmatprep.mubr.bf16.mxu0 %v582
      %1764 = vmatmul.mubr.bf16.gmra.mxu0 %v581
      %v1765 = vpop.f32.mrf.mxu0
      %v1766 = vadd.f32 0.0, %v1765
      %v1767 = vpop.f32.mrf.mxu0
      %v1768 = vpop.f32.mrf.mxu0
      %v1769 = vpop.f32.mrf.mxu0
      %1770 = vdwg.mxu0
      %v1771 = vpack.c.bf16 %v1766, %v1766
      %s1772 = scalar_lea.vmem %s1, 896
      %v1773 = vld [vmem:[%s1772] sm:$0xf]
      %v1774 = vld [vmem:[%s1772 + $0x4] sm:$0xf]
      %v1775 = vld [vmem:[%s1772 + $0x8] sm:$0xf]
      %v1776 = vld [vmem:[%s1772 + $0xc] sm:$0xf]
      %v1777 = vld [vmem:[%s1772 + $0x10] sm:$0xf]
      %v1778 = vld [vmem:[%s1772 + $0x14] sm:$0xf]
      %v1779 = vld [vmem:[%s1772 + $0x18] sm:$0xf]
      %v1780 = vld [vmem:[%s1772 + $0x1c] sm:$0xf]
      %v1781 = vld [vmem:[%s1772 + $0x20] sm:$0xf]
      %v1782 = vld [vmem:[%s1772 + $0x24] sm:$0xf]
      %v1783 = vld [vmem:[%s1772 + $0x28] sm:$0xf]
      %v1784 = vld [vmem:[%s1772 + $0x2c] sm:$0xf]
      %v1785 = vld [vmem:[%s1772 + $0x30] sm:$0xf]
      %v1786 = vld [vmem:[%s1772 + $0x34] sm:$0xf]
      %v1787 = vld [vmem:[%s1772 + $0x38] sm:$0xf]
      %v1788 = vld [vmem:[%s1772 + $0x3c] sm:$0xf]
      %v1789 = vld [vmem:[%s1772 + $0x40] sm:$0xf]
      %v1790 = vld [vmem:[%s1772 + $0x44] sm:$0xf]
      %v1791 = vld [vmem:[%s1772 + $0x48] sm:$0xf]
      %v1792 = vld [vmem:[%s1772 + $0x4c] sm:$0xf]
      %v1793 = vld [vmem:[%s1772 + $0x50] sm:$0xf]
      %v1794 = vld [vmem:[%s1772 + $0x54] sm:$0xf]
      %v1795 = vld [vmem:[%s1772 + $0x58] sm:$0xf]
      %v1796 = vld [vmem:[%s1772 + $0x5c] sm:$0xf]
      %v1797 = vld [vmem:[%s1772 + $0x60] sm:$0xf]
      %v1798 = vld [vmem:[%s1772 + $0x64] sm:$0xf]
      %v1799 = vld [vmem:[%s1772 + $0x68] sm:$0xf]
      %v1800 = vld [vmem:[%s1772 + $0x6c] sm:$0xf]
      %v1801 = vld [vmem:[%s1772 + $0x70] sm:$0xf]
      %v1802 = vld [vmem:[%s1772 + $0x74] sm:$0xf]
      %v1803 = vld [vmem:[%s1772 + $0x78] sm:$0xf]
      %v1804 = vld [vmem:[%s1772 + $0x7c] sm:$0xf]
      %v1837 = vunpack.c.l.b16 %v1773
      %v1838 = vunpack.c.l.b16 %v1774
      %v1839 = vunpack.c.l.b16 %v1775
      %v1840 = vunpack.c.l.b16 %v1776
      %v1841 = vunpack.c.l.b16 %v1777
      %v1842 = vunpack.c.l.b16 %v1778
      %v1843 = vunpack.c.l.b16 %v1779
      %v1844 = vunpack.c.l.b16 %v1780
      %v1845 = vunpack.c.l.b16 %v1781
      %v1846 = vunpack.c.l.b16 %v1782
      %v1847 = vunpack.c.l.b16 %v1783
      %v1848 = vunpack.c.l.b16 %v1784
      %v1849 = vunpack.c.l.b16 %v1785
      %v1850 = vunpack.c.l.b16 %v1786
      %v1851 = vunpack.c.l.b16 %v1787
      %v1852 = vunpack.c.l.b16 %v1788
      %v1853 = vunpack.c.l.b16 %v1789
      %v1854 = vunpack.c.l.b16 %v1790
      %v1855 = vunpack.c.l.b16 %v1791
      %v1856 = vunpack.c.l.b16 %v1792
      %v1857 = vunpack.c.l.b16 %v1793
      %v1858 = vunpack.c.l.b16 %v1794
      %v1859 = vunpack.c.l.b16 %v1795
      %v1860 = vunpack.c.l.b16 %v1796
      %v1861 = vunpack.c.l.b16 %v1797
      %v1862 = vunpack.c.l.b16 %v1798
      %v1863 = vunpack.c.l.b16 %v1799
      %v1864 = vunpack.c.l.b16 %v1800
      %v1865 = vunpack.c.l.b16 %v1801
      %v1866 = vunpack.c.l.b16 %v1802
      %v1867 = vunpack.c.l.b16 %v1803
      %v1868 = vunpack.c.l.b16 %v1804
      %v1869 = vpack.c.b16 %v1838, %v1837
      %v1870 = vpack.c.b16 %v1840, %v1839
      %v1871 = vpack.c.b16 %v1842, %v1841
      %v1872 = vpack.c.b16 %v1844, %v1843
      %v1873 = vpack.c.b16 %v1846, %v1845
      %v1874 = vpack.c.b16 %v1848, %v1847
      %v1875 = vpack.c.b16 %v1850, %v1849
      %v1876 = vpack.c.b16 %v1852, %v1851
      %v1877 = vpack.c.b16 %v1854, %v1853
      %v1878 = vpack.c.b16 %v1856, %v1855
      %v1879 = vpack.c.b16 %v1858, %v1857
      %v1880 = vpack.c.b16 %v1860, %v1859
      %v1881 = vpack.c.b16 %v1862, %v1861
      %v1882 = vpack.c.b16 %v1864, %v1863
      %v1883 = vpack.c.b16 %v1866, %v1865
      %v1884 = vpack.c.b16 %v1868, %v1867
      %1901 = vmatprep.subr.bf16.mxu0 0
      %1902 = vmatpush1.bf16.msra.mxu0 %v1876
      %1903 = vmatprep.subr.bf16.mxu0 0
      %1904 = vmatpush1.bf16.msra.mxu0 %v1875
      %1905 = vmatprep.subr.bf16.mxu0 0
      %1906 = vmatpush1.bf16.msra.mxu0 %v1874
      %1907 = vmatprep.subr.bf16.mxu0 0
      %1908 = vmatpush1.bf16.msra.mxu0 %v1873
      %1909 = vmatprep.subr.bf16.mxu0 0
      %1910 = vmatpush1.bf16.msra.mxu0 %v1872
      %1911 = vmatprep.subr.bf16.mxu0 0
      %1912 = vmatpush1.bf16.msra.mxu0 %v1871
      %1913 = vmatprep.subr.bf16.mxu0 0
      %1914 = vmatpush1.bf16.msra.mxu0 %v1870
      %1915 = vmatprep.subr.bf16.mxu0 0
      %1916 = vmatpush1.bf16.msra.mxu0 %v1869
      %1917 = vmatprep.subr.bf16.mxu0 0
      %1918 = vmatpush2.bf16.msra.mxu0 %v1884
      %1919 = vmatprep.subr.bf16.mxu0 0
      %1920 = vmatpush2.bf16.msra.mxu0 %v1883
      %1921 = vmatprep.subr.bf16.mxu0 0
      %1922 = vmatpush2.bf16.msra.mxu0 %v1882
      %1923 = vmatprep.subr.bf16.mxu0 0
      %1924 = vmatpush2.bf16.msra.mxu0 %v1881
      %1925 = vmatprep.subr.bf16.mxu0 0
      %1926 = vmatpush2.bf16.msra.mxu0 %v1880
      %1927 = vmatprep.subr.bf16.mxu0 0
      %1928 = vmatpush2.bf16.msra.mxu0 %v1879
      %1929 = vmatprep.subr.bf16.mxu0 0
      %1930 = vmatpush2.bf16.msra.mxu0 %v1878
      %1931 = vmatprep.subr.bf16.mxu0 0
      %1932 = vmatpush2.bf16.msra.mxu0 %v1877
      %1933 = vmatprep.mubr.bf16.mxu0 %v582
      %1934 = vmatmul.mubr.bf16.gmra.mxu0 %v581
      %v1935 = vpop.f32.mrf.mxu0
      %v1936 = vadd.f32 0.0, %v1935
      %v1937 = vpop.f32.mrf.mxu0
      %v1938 = vpop.f32.mrf.mxu0
      %v1939 = vpop.f32.mrf.mxu0
      %1940 = vdwg.mxu0
      %v1941 = vpack.c.bf16 %v1936, %v1936
      %s1942 = scalar_lea.vmem %s1, 1024
      %v1943 = vld [vmem:[%s1942] sm:$0xf]
      %v1944 = vld [vmem:[%s1942 + $0x4] sm:$0xf]
      %v1945 = vld [vmem:[%s1942 + $0x8] sm:$0xf]
      %v1946 = vld [vmem:[%s1942 + $0xc] sm:$0xf]
      %v1947 = vld [vmem:[%s1942 + $0x10] sm:$0xf]
      %v1948 = vld [vmem:[%s1942 + $0x14] sm:$0xf]
      %v1949 = vld [vmem:[%s1942 + $0x18] sm:$0xf]
      %v1950 = vld [vmem:[%s1942 + $0x1c] sm:$0xf]
      %v1951 = vld [vmem:[%s1942 + $0x20] sm:$0xf]
      %v1952 = vld [vmem:[%s1942 + $0x24] sm:$0xf]
      %v1953 = vld [vmem:[%s1942 + $0x28] sm:$0xf]
      %v1954 = vld [vmem:[%s1942 + $0x2c] sm:$0xf]
      %v1955 = vld [vmem:[%s1942 + $0x30] sm:$0xf]
      %v1956 = vld [vmem:[%s1942 + $0x34] sm:$0xf]
      %v1957 = vld [vmem:[%s1942 + $0x38] sm:$0xf]
      %v1958 = vld [vmem:[%s1942 + $0x3c] sm:$0xf]
      %v1959 = vld [vmem:[%s1942 + $0x40] sm:$0xf]
      %v1960 = vld [vmem:[%s1942 + $0x44] sm:$0xf]
      %v1961 = vld [vmem:[%s1942 + $0x48] sm:$0xf]
      %v1962 = vld [vmem:[%s1942 + $0x4c] sm:$0xf]
      %v1963 = vld [vmem:[%s1942 + $0x50] sm:$0xf]
      %v1964 = vld [vmem:[%s1942 + $0x54] sm:$0xf]
      %v1965 = vld [vmem:[%s1942 + $0x58] sm:$0xf]
      %v1966 = vld [vmem:[%s1942 + $0x5c] sm:$0xf]
      %v1967 = vld [vmem:[%s1942 + $0x60] sm:$0xf]
      %v1968 = vld [vmem:[%s1942 + $0x64] sm:$0xf]
      %v1969 = vld [vmem:[%s1942 + $0x68] sm:$0xf]
      %v1970 = vld [vmem:[%s1942 + $0x6c] sm:$0xf]
      %v1971 = vld [vmem:[%s1942 + $0x70] sm:$0xf]
      %v1972 = vld [vmem:[%s1942 + $0x74] sm:$0xf]
      %v1973 = vld [vmem:[%s1942 + $0x78] sm:$0xf]
      %v1974 = vld [vmem:[%s1942 + $0x7c] sm:$0xf]
      %v2007 = vunpack.c.l.b16 %v1943
      %v2008 = vunpack.c.l.b16 %v1944
      %v2009 = vunpack.c.l.b16 %v1945
      %v2010 = vunpack.c.l.b16 %v1946
      %v2011 = vunpack.c.l.b16 %v1947
      %v2012 = vunpack.c.l.b16 %v1948
      %v2013 = vunpack.c.l.b16 %v1949
      %v2014 = vunpack.c.l.b16 %v1950
      %v2015 = vunpack.c.l.b16 %v1951
      %v2016 = vunpack.c.l.b16 %v1952
      %v2017 = vunpack.c.l.b16 %v1953
      %v2018 = vunpack.c.l.b16 %v1954
      %v2019 = vunpack.c.l.b16 %v1955
      %v2020 = vunpack.c.l.b16 %v1956
      %v2021 = vunpack.c.l.b16 %v1957
      %v2022 = vunpack.c.l.b16 %v1958
      %v2023 = vunpack.c.l.b16 %v1959
      %v2024 = vunpack.c.l.b16 %v1960
      %v2025 = vunpack.c.l.b16 %v1961
      %v2026 = vunpack.c.l.b16 %v1962
      %v2027 = vunpack.c.l.b16 %v1963
      %v2028 = vunpack.c.l.b16 %v1964
      %v2029 = vunpack.c.l.b16 %v1965
      %v2030 = vunpack.c.l.b16 %v1966
      %v2031 = vunpack.c.l.b16 %v1967
      %v2032 = vunpack.c.l.b16 %v1968
      %v2033 = vunpack.c.l.b16 %v1969
      %v2034 = vunpack.c.l.b16 %v1970
      %v2035 = vunpack.c.l.b16 %v1971
      %v2036 = vunpack.c.l.b16 %v1972
      %v2037 = vunpack.c.l.b16 %v1973
      %v2038 = vunpack.c.l.b16 %v1974
      %v2039 = vpack.c.b16 %v2008, %v2007
      %v2040 = vpack.c.b16 %v2010, %v2009
      %v2041 = vpack.c.b16 %v2012, %v2011
      %v2042 = vpack.c.b16 %v2014, %v2013
      %v2043 = vpack.c.b16 %v2016, %v2015
      %v2044 = vpack.c.b16 %v2018, %v2017
      %v2045 = vpack.c.b16 %v2020, %v2019
      %v2046 = vpack.c.b16 %v2022, %v2021
      %v2047 = vpack.c.b16 %v2024, %v2023
      %v2048 = vpack.c.b16 %v2026, %v2025
      %v2049 = vpack.c.b16 %v2028, %v2027
      %v2050 = vpack.c.b16 %v2030, %v2029
      %v2051 = vpack.c.b16 %v2032, %v2031
      %v2052 = vpack.c.b16 %v2034, %v2033
      %v2053 = vpack.c.b16 %v2036, %v2035
      %v2054 = vpack.c.b16 %v2038, %v2037
      %2071 = vmatprep.subr.bf16.mxu0 0
      %2072 = vmatpush1.bf16.msra.mxu0 %v2046
      %2073 = vmatprep.subr.bf16.mxu0 0
      %2074 = vmatpush1.bf16.msra.mxu0 %v2045
      %2075 = vmatprep.subr.bf16.mxu0 0
      %2076 = vmatpush1.bf16.msra.mxu0 %v2044
      %2077 = vmatprep.subr.bf16.mxu0 0
      %2078 = vmatpush1.bf16.msra.mxu0 %v2043
      %2079 = vmatprep.subr.bf16.mxu0 0
      %2080 = vmatpush1.bf16.msra.mxu0 %v2042
      %2081 = vmatprep.subr.bf16.mxu0 0
      %2082 = vmatpush1.bf16.msra.mxu0 %v2041
      %2083 = vmatprep.subr.bf16.mxu0 0
      %2084 = vmatpush1.bf16.msra.mxu0 %v2040
      %2085 = vmatprep.subr.bf16.mxu0 0
      %2086 = vmatpush1.bf16.msra.mxu0 %v2039
      %2087 = vmatprep.subr.bf16.mxu0 0
      %2088 = vmatpush2.bf16.msra.mxu0 %v2054
      %2089 = vmatprep.subr.bf16.mxu0 0
      %2090 = vmatpush2.bf16.msra.mxu0 %v2053
      %2091 = vmatprep.subr.bf16.mxu0 0
      %2092 = vmatpush2.bf16.msra.mxu0 %v2052
      %2093 = vmatprep.subr.bf16.mxu0 0
      %2094 = vmatpush2.bf16.msra.mxu0 %v2051
      %2095 = vmatprep.subr.bf16.mxu0 0
      %2096 = vmatpush2.bf16.msra.mxu0 %v2050
      %2097 = vmatprep.subr.bf16.mxu0 0
      %2098 = vmatpush2.bf16.msra.mxu0 %v2049
      %2099 = vmatprep.subr.bf16.mxu0 0
      %2100 = vmatpush2.bf16.msra.mxu0 %v2048
      %2101 = vmatprep.subr.bf16.mxu0 0
      %2102 = vmatpush2.bf16.msra.mxu0 %v2047
      %2103 = vmatprep.mubr.bf16.mxu0 %v582
      %2104 = vmatmul.mubr.bf16.gmra.mxu0 %v581
      %v2105 = vpop.f32.mrf.mxu0
      %v2106 = vadd.f32 0.0, %v2105
      %v2107 = vpop.f32.mrf.mxu0
      %v2108 = vpop.f32.mrf.mxu0
      %v2109 = vpop.f32.mrf.mxu0
      %2110 = vdwg.mxu0
      %v2111 = vpack.c.bf16 %v2106, %v2106
      %v2113 = vshrl.u32 %v921, 16
      %v2115 = vrot.slane %v2113, 6
      %v2116 = vshll.u32 %v921, 16
      %v2118 = vrot.slane %v2116, 7
      %v2119 = vor.u32 %v2115, %v2118
      %v2122 = vrot.slane %v1091, 5
      %v2124 = vshrl.u32 %v1261, 16
      %v2126 = vrot.slane %v2124, 3
      %v2127 = vshll.u32 %v1261, 16
      %v2129 = vrot.slane %v2127, 4
      %v2130 = vor.u32 %v2126, %v2129
      %v2133 = vrot.slane %v1431, 2
      %v2135 = vshll.u32 %v1601, 16
      %v2137 = vrot.slane %v2135, 1
      %v2138 = vshrl.u32 %v1601, 16
      %v2140 = vor.u32 %v2138, %v2137
      %v2143 = vrot.slane %v1771, 7
      %v2145 = vshrl.u32 %v1941, 16
      %v2147 = vrot.slane %v2145, 5
      %v2148 = vshll.u32 %v1941, 16
      %v2150 = vrot.slane %v2148, 6
      %v2151 = vor.u32 %v2147, %v2150
      %v2154 = vrot.slane %v2111, 4
      %vm2155 = vcmask 1041408
      %vm2156 = vsmask.f32 1280
      %vm2157 = vmand %vm2155, %vm2156
      %v2158 = vsel %vm2157, %v751, %v2119
      %vm2159 = vcmask 1042432
      %v2162 = vsel %vm2159, %v2158, %v2122
      %vm2164 = vcmask 1044480
      %vm2165 = vsmask.f32 4352
      %vm2166 = vmand %vm2164, %vm2165
      %v2167 = vsel %vm2166, %v2162, %v2130
      %vm2168 = vcmask 1045504
      %v2171 = vsel %vm2168, %v2167, %v2133
      %vm2173 = vcmask 1047552
      %vm2174 = vsmask.f32 7424
      %vm2175 = vmand %vm2173, %vm2174
      %v2176 = vsel %vm2175, %v2171, %v2137
      %vm2177 = vcmask 1040384
      %v2180 = vsel %vm2177, %v2140, %v2143
      %vm2182 = vcmask 1042432
      %vm2183 = vsmask.f32 2304
      %vm2184 = vmand %vm2182, %vm2183
      %v2185 = vsel %vm2184, %v2180, %v2151
      %vm2186 = vcmask 1043456
      %v2189 = vsel %vm2186, %v2185, %v2154
      %v2190 = vld [vmem:[%s2] sm:$0xf]
      %v2191 = vld [vmem:[%s2 + $0x4] sm:$0xf]
      %v2192 = vld [vmem:[%s3] sm:$0xff]
      %v2193 = vld [vmem:[%s3 + $0x8] sm:$0xff]
      %2195 = vset.pattern.permute.xlu0 0
      %2196 = vperm.xlu0 %2195, %v2192
      %v2197 = vpop.permute.xlu0 %2196
      %2200 = vset.pattern.permute.xlu0 0
      %2201 = vperm.xlu0 %2200, %v2193
      %v2202 = vpop.permute.xlu0 %2201
      %v2206 = vunpack.c.l.b16 %v2190
      %v2207 = vunpack.c.l.b16 %v2191
      %v2208 = vpack.c.b16 %v2207, %v2206
      %vm2209 = vcmask 220160
      %v2211 = vsel %vm2209, %v2208, 0
      %vm2213 = vcmask 1044480
      %v2214 = vsel %vm2213, 4294967295, 65535
      %v2215 = vsel %vm2168, %v2214, 0
      %v2216 = vand.u32 %v2189, %v2215
      %2218 = vmatprep.subr.bf16.mxu0 0
      %2219 = vmatpush1.bf16.msra.mxu0 0
      %2220 = vmatprep.subr.bf16.mxu0 0
      %2221 = vmatpush1.bf16.msra.mxu0 0
      %2222 = vmatprep.subr.bf16.mxu0 0
      %2223 = vmatpush1.bf16.msra.mxu0 0
      %2224 = vmatprep.subr.bf16.mxu0 0
      %2225 = vmatpush1.bf16.msra.mxu0 0
      %2226 = vmatprep.subr.bf16.mxu0 0
      %2227 = vmatpush1.bf16.msra.mxu0 0
      %2228 = vmatprep.subr.bf16.mxu0 0
      %2229 = vmatpush1.bf16.msra.mxu0 0
      %2230 = vmatprep.subr.bf16.mxu0 0
      %2231 = vmatpush1.bf16.msra.mxu0 %v2216
      %2232 = vmatprep.subr.bf16.mxu0 0
      %2233 = vmatpush1.bf16.msra.mxu0 %v2176
      %2234 = vmatprep.subr.bf16.mxu0 0
      %2235 = vmatpush2.bf16.msra.mxu0 0
      %2236 = vmatprep.subr.bf16.mxu0 0
      %2237 = vmatpush2.bf16.msra.mxu0 0
      %2238 = vmatprep.subr.bf16.mxu0 0
      %2239 = vmatpush2.bf16.msra.mxu0 0
      %2240 = vmatprep.subr.bf16.mxu0 0
      %2241 = vmatpush2.bf16.msra.mxu0 0
      %2242 = vmatprep.subr.bf16.mxu0 0
      %2243 = vmatpush2.bf16.msra.mxu0 0
      %2244 = vmatprep.subr.bf16.mxu0 0
      %2245 = vmatpush2.bf16.msra.mxu0 0
      %2246 = vmatprep.subr.bf16.mxu0 0
      %2247 = vmatpush2.bf16.msra.mxu0 0
      %2248 = vmatprep.subr.bf16.mxu0 0
      %2249 = vmatpush2.bf16.msra.mxu0 0
      %2250 = vmatprep.mubr.bf16.mxu0 0
      %2251 = vmatmul.mubr.bf16.gmra.mxu0 %v2211
      %v2252 = vpop.f32.mrf.mxu0
      %v2253 = vadd.f32 %v2197, %v2252
      %v2254 = vpop.f32.mrf.mxu0
      %v2255 = vpop.f32.mrf.mxu0
      %v2256 = vadd.f32 %v2202, %v2255
      %v2257 = vpop.f32.mrf.mxu0
      %2258 = vdwg.mxu0
      %v2259 = vmax.f32 %v2253, 0.0
      %v2260 = vmax.f32 %v2256, 0.0
      %v2261 = vpack.c.bf16 %v2260, %v2259
      %v2262 = vld [vmem:[%s4] sm:$0xf]
      %v2263 = vld [vmem:[%s4 + $0x4] sm:$0xf]
      %v2264 = vld [vmem:[%s4 + $0x8] sm:$0xf]
      %v2265 = vld [vmem:[%s4 + $0xc] sm:$0xf]
      %v2266 = vld [vmem:[%s4 + $0x10] sm:$0x3]
      %v2272 = vunpack.c.l.b16 %v2262
      %v2273 = vunpack.c.l.b16 %v2263
      %v2274 = vunpack.c.l.b16 %v2264
      %v2275 = vunpack.c.l.b16 %v2265
      %v2276 = vunpack.c.l.b16 %v2266
      %v2277 = vpack.c.b16 %v2273, %v2272
      %v2278 = vpack.c.b16 %v2275, %v2274
      %v2279 = vpack.c.b16 %v2276, %v2276
      %vm2282 = vcmask 293888
      %v2284 = vsel %vm2282, %v2261, 0
      %vm2286 = vcmask 1041408
      %v2288 = vsel %vm2286, %v2279, 0
      %2290 = vmatprep.subr.bf16.mxu0 0
      %2291 = vmatpush1.bf16.msra.mxu0 0
      %2292 = vmatprep.subr.bf16.mxu0 0
      %2293 = vmatpush1.bf16.msra.mxu0 0
      %2294 = vmatprep.subr.bf16.mxu0 0
      %2295 = vmatpush1.bf16.msra.mxu0 0
      %2296 = vmatprep.subr.bf16.mxu0 0
      %2297 = vmatpush1.bf16.msra.mxu0 0
      %2298 = vmatprep.subr.bf16.mxu0 0
      %2299 = vmatpush1.bf16.msra.mxu0 0
      %2300 = vmatprep.subr.bf16.mxu0 0
      %2301 = vmatpush1.bf16.msra.mxu0 %v2288
      %2302 = vmatprep.subr.bf16.mxu0 0
      %2303 = vmatpush1.bf16.msra.mxu0 %v2278
      %2304 = vmatprep.subr.bf16.mxu0 0
      %2305 = vmatpush1.bf16.msra.mxu0 %v2277
      %2306 = vmatprep.subr.bf16.mxu0 0
      %2307 = vmatpush2.bf16.msra.mxu0 0
      %2308 = vmatprep.subr.bf16.mxu0 0
      %2309 = vmatpush2.bf16.msra.mxu0 0
      %2310 = vmatprep.subr.bf16.mxu0 0
      %2311 = vmatpush2.bf16.msra.mxu0 0
      %2312 = vmatprep.subr.bf16.mxu0 0
      %2313 = vmatpush2.bf16.msra.mxu0 0
      %2314 = vmatprep.subr.bf16.mxu0 0
      %2315 = vmatpush2.bf16.msra.mxu0 0
      %2316 = vmatprep.subr.bf16.mxu0 0
      %2317 = vmatpush2.bf16.msra.mxu0 0
      %2318 = vmatprep.subr.bf16.mxu0 0
      %2319 = vmatpush2.bf16.msra.mxu0 0
      %2320 = vmatprep.subr.bf16.mxu0 0
      %2321 = vmatpush2.bf16.msra.mxu0 0
      %2322 = vmatprep.mubr.bf16.mxu0 0
      %2323 = vmatmul.mubr.bf16.gmra.mxu0 %v2284
      %v2324 = vpop.f32.mrf.mxu0
      %v2325 = vadd.f32 0.0, %v2324
      %v2326 = vpop.f32.mrf.mxu0
      %v2327 = vpop.f32.mrf.mxu0
      %v2328 = vadd.f32 0.0, %v2327
      %v2329 = vpop.f32.mrf.mxu0
      %2330 = vdwg.mxu0
      %s2331 = scalar_lea.vmem %s4, 20
      %v2332 = vld [vmem:[%s2331] sm:$0xf]
      %v2333 = vld [vmem:[%s2331 + $0x4] sm:$0xf]
      %v2334 = vld [vmem:[%s2331 + $0x8] sm:$0xf]
      %v2335 = vld [vmem:[%s2331 + $0xc] sm:$0xf]
      %v2336 = vld [vmem:[%s2331 + $0x10] sm:$0x3]
      %v2342 = vunpack.c.l.b16 %v2332
      %v2343 = vunpack.c.l.b16 %v2333
      %v2344 = vunpack.c.l.b16 %v2334
      %v2345 = vunpack.c.l.b16 %v2335
      %v2346 = vunpack.c.l.b16 %v2336
      %v2347 = vpack.c.b16 %v2343, %v2342
      %v2348 = vpack.c.b16 %v2345, %v2344
      %v2349 = vpack.c.b16 %v2346, %v2346
      %v2353 = vsel %vm2286, %v2349, 0
      %2355 = vmatprep.subr.bf16.mxu0 0
      %2356 = vmatpush1.bf16.msra.mxu0 0
      %2357 = vmatprep.subr.bf16.mxu0 0
      %2358 = vmatpush1.bf16.msra.mxu0 0
      %2359 = vmatprep.subr.bf16.mxu0 0
      %2360 = vmatpush1.bf16.msra.mxu0 0
      %2361 = vmatprep.subr.bf16.mxu0 0
      %2362 = vmatpush1.bf16.msra.mxu0 0
      %2363 = vmatprep.subr.bf16.mxu0 0
      %2364 = vmatpush1.bf16.msra.mxu0 0
      %2365 = vmatprep.subr.bf16.mxu0 0
      %2366 = vmatpush1.bf16.msra.mxu0 %v2353
      %2367 = vmatprep.subr.bf16.mxu0 0
      %2368 = vmatpush1.bf16.msra.mxu0 %v2348
      %2369 = vmatprep.subr.bf16.mxu0 0
      %2370 = vmatpush1.bf16.msra.mxu0 %v2347
      %2371 = vmatprep.subr.bf16.mxu0 0
      %2372 = vmatpush2.bf16.msra.mxu0 0
      %2373 = vmatprep.subr.bf16.mxu0 0
      %2374 = vmatpush2.bf16.msra.mxu0 0
      %2375 = vmatprep.subr.bf16.mxu0 0
      %2376 = vmatpush2.bf16.msra.mxu0 0
      %2377 = vmatprep.subr.bf16.mxu0 0
      %2378 = vmatpush2.bf16.msra.mxu0 0
      %2379 = vmatprep.subr.bf16.mxu0 0
      %2380 = vmatpush2.bf16.msra.mxu0 0
      %2381 = vmatprep.subr.bf16.mxu0 0
      %2382 = vmatpush2.bf16.msra.mxu0 0
      %2383 = vmatprep.subr.bf16.mxu0 0
      %2384 = vmatpush2.bf16.msra.mxu0 0
      %2385 = vmatprep.subr.bf16.mxu0 0
      %2386 = vmatpush2.bf16.msra.mxu0 0
      %2387 = vmatprep.mubr.bf16.mxu0 0
      %2388 = vmatmul.mubr.bf16.gmra.mxu0 %v2284
      %v2389 = vpop.f32.mrf.mxu0
      %v2390 = vadd.f32 0.0, %v2389
      %v2391 = vpop.f32.mrf.mxu0
      %v2392 = vpop.f32.mrf.mxu0
      %v2393 = vadd.f32 0.0, %v2392
      %v2394 = vpop.f32.mrf.mxu0
      %2395 = vdwg.mxu0
      %v2396 = vmax.f32 %v2325, %v2390
      %v2397 = vmax.f32 %v2328, %v2393
      %s2398 = scalar_lea.vmem %s4, 40
      %v2399 = vld [vmem:[%s2398] sm:$0xf]
      %v2400 = vld [vmem:[%s2398 + $0x4] sm:$0xf]
      %v2401 = vld [vmem:[%s2398 + $0x8] sm:$0xf]
      %v2402 = vld [vmem:[%s2398 + $0xc] sm:$0xf]
      %v2403 = vld [vmem:[%s2398 + $0x10] sm:$0x3]
      %v2409 = vunpack.c.l.b16 %v2399
      %v2410 = vunpack.c.l.b16 %v2400
      %v2411 = vunpack.c.l.b16 %v2401
      %v2412 = vunpack.c.l.b16 %v2402
      %v2413 = vunpack.c.l.b16 %v2403
      %v2414 = vpack.c.b16 %v2410, %v2409
      %v2415 = vpack.c.b16 %v2412, %v2411
      %v2416 = vpack.c.b16 %v2413, %v2413
      %v2420 = vsel %vm2286, %v2416, 0
      %2422 = vmatprep.subr.bf16.mxu0 0
      %2423 = vmatpush1.bf16.msra.mxu0 0
      %2424 = vmatprep.subr.bf16.mxu0 0
      %2425 = vmatpush1.bf16.msra.mxu0 0
      %2426 = vmatprep.subr.bf16.mxu0 0
      %2427 = vmatpush1.bf16.msra.mxu0 0
      %2428 = vmatprep.subr.bf16.mxu0 0
      %2429 = vmatpush1.bf16.msra.mxu0 0
      %2430 = vmatprep.subr.bf16.mxu0 0
      %2431 = vmatpush1.bf16.msra.mxu0 0
      %2432 = vmatprep.subr.bf16.mxu0 0
      %2433 = vmatpush1.bf16.msra.mxu0 %v2420
      %2434 = vmatprep.subr.bf16.mxu0 0
      %2435 = vmatpush1.bf16.msra.mxu0 %v2415
      %2436 = vmatprep.subr.bf16.mxu0 0
      %2437 = vmatpush1.bf16.msra.mxu0 %v2414
      %2438 = vmatprep.subr.bf16.mxu0 0
      %2439 = vmatpush2.bf16.msra.mxu0 0
      %2440 = vmatprep.subr.bf16.mxu0 0
      %2441 = vmatpush2.bf16.msra.mxu0 0
      %2442 = vmatprep.subr.bf16.mxu0 0
      %2443 = vmatpush2.bf16.msra.mxu0 0
      %2444 = vmatprep.subr.bf16.mxu0 0
      %2445 = vmatpush2.bf16.msra.mxu0 0
      %2446 = vmatprep.subr.bf16.mxu0 0
      %2447 = vmatpush2.bf16.msra.mxu0 0
      %2448 = vmatprep.subr.bf16.mxu0 0
      %2449 = vmatpush2.bf16.msra.mxu0 0
      %2450 = vmatprep.subr.bf16.mxu0 0
      %2451 = vmatpush2.bf16.msra.mxu0 0
      %2452 = vmatprep.subr.bf16.mxu0 0
      %2453 = vmatpush2.bf16.msra.mxu0 0
      %2454 = vmatprep.mubr.bf16.mxu0 0
      %2455 = vmatmul.mubr.bf16.gmra.mxu0 %v2284
      %v2456 = vpop.f32.mrf.mxu0
      %v2457 = vadd.f32 0.0, %v2456
      %v2458 = vpop.f32.mrf.mxu0
      %v2459 = vpop.f32.mrf.mxu0
      %v2460 = vadd.f32 0.0, %v2459
      %v2461 = vpop.f32.mrf.mxu0
      %2462 = vdwg.mxu0
      %v2463 = vmax.f32 %v2396, %v2457
      %v2464 = vmax.f32 %v2397, %v2460
      %s2465 = scalar_lea.vmem %s4, 60
      %v2466 = vld [vmem:[%s2465] sm:$0xf]
      %v2467 = vld [vmem:[%s2465 + $0x4] sm:$0xf]
      %v2468 = vld [vmem:[%s2465 + $0x8] sm:$0xf]
      %v2469 = vld [vmem:[%s2465 + $0xc] sm:$0xf]
      %v2470 = vld [vmem:[%s2465 + $0x10] sm:$0x3]
      %v2476 = vunpack.c.l.b16 %v2466
      %v2477 = vunpack.c.l.b16 %v2467
      %v2478 = vunpack.c.l.b16 %v2468
      %v2479 = vunpack.c.l.b16 %v2469
      %v2480 = vunpack.c.l.b16 %v2470
      %v2481 = vpack.c.b16 %v2477, %v2476
      %v2482 = vpack.c.b16 %v2479, %v2478
      %v2483 = vpack.c.b16 %v2480, %v2480
      %v2487 = vsel %vm2286, %v2483, 0
      %2489 = vmatprep.subr.bf16.mxu0 0
      %2490 = vmatpush1.bf16.msra.mxu0 0
      %2491 = vmatprep.subr.bf16.mxu0 0
      %2492 = vmatpush1.bf16.msra.mxu0 0
      %2493 = vmatprep.subr.bf16.mxu0 0
      %2494 = vmatpush1.bf16.msra.mxu0 0
      %2495 = vmatprep.subr.bf16.mxu0 0
      %2496 = vmatpush1.bf16.msra.mxu0 0
      %2497 = vmatprep.subr.bf16.mxu0 0
      %2498 = vmatpush1.bf16.msra.mxu0 0
      %2499 = vmatprep.subr.bf16.mxu0 0
      %2500 = vmatpush1.bf16.msra.mxu0 %v2487
      %2501 = vmatprep.subr.bf16.mxu0 0
      %2502 = vmatpush1.bf16.msra.mxu0 %v2482
      %2503 = vmatprep.subr.bf16.mxu0 0
      %2504 = vmatpush1.bf16.msra.mxu0 %v2481
      %2505 = vmatprep.subr.bf16.mxu0 0
      %2506 = vmatpush2.bf16.msra.mxu0 0
      %2507 = vmatprep.subr.bf16.mxu0 0
      %2508 = vmatpush2.bf16.msra.mxu0 0
      %2509 = vmatprep.subr.bf16.mxu0 0
      %2510 = vmatpush2.bf16.msra.mxu0 0
      %2511 = vmatprep.subr.bf16.mxu0 0
      %2512 = vmatpush2.bf16.msra.mxu0 0
      %2513 = vmatprep.subr.bf16.mxu0 0
      %2514 = vmatpush2.bf16.msra.mxu0 0
      %2515 = vmatprep.subr.bf16.mxu0 0
      %2516 = vmatpush2.bf16.msra.mxu0 0
      %2517 = vmatprep.subr.bf16.mxu0 0
      %2518 = vmatpush2.bf16.msra.mxu0 0
      %2519 = vmatprep.subr.bf16.mxu0 0
      %2520 = vmatpush2.bf16.msra.mxu0 0
      %2521 = vmatprep.mubr.bf16.mxu0 0
      %2522 = vmatmul.mubr.bf16.gmra.mxu0 %v2284
      %v2523 = vpop.f32.mrf.mxu0
      %v2524 = vadd.f32 0.0, %v2523
      %v2525 = vpop.f32.mrf.mxu0
      %v2526 = vpop.f32.mrf.mxu0
      %v2527 = vadd.f32 0.0, %v2526
      %v2528 = vpop.f32.mrf.mxu0
      %2529 = vdwg.mxu0
      %v2530 = vmax.f32 %v2463, %v2524
      %v2531 = vmax.f32 %v2464, %v2527
      %v2532 = vpack.c.bf16 %v2531, %v2530
      %v2533 = vld [vmem:[%s5] sm:$0xf]
      %v2534 = vld [vmem:[%s5 + $0x4] sm:$0x1]
      %v2537 = vunpack.c.l.b16 %v2533
      %v2538 = vunpack.c.l.b16 %v2534
      %v2539 = vpack.c.b16 %v2538, %v2537
      %vm2540 = vcmask 72704
      %v2542 = vsel %vm2540, %v2532, 0
      %v2544 = vsel %vm2186, 4294967295, 65535
      %v2545 = vsel %vm2213, %v2544, 0
      %v2547 = vand.u32 %v2539, %v2545
      %2549 = vmatprep.subr.bf16.mxu0 0
      %2550 = vmatpush1.bf16.msra.mxu0 0
      %2551 = vmatprep.subr.bf16.mxu0 0
      %2552 = vmatpush1.bf16.msra.mxu0 0
      %2553 = vmatprep.subr.bf16.mxu0 0
      %2554 = vmatpush1.bf16.msra.mxu0 0
      %2555 = vmatprep.subr.bf16.mxu0 0
      %2556 = vmatpush1.bf16.msra.mxu0 0
      %2557 = vmatprep.subr.bf16.mxu0 0
      %2558 = vmatpush1.bf16.msra.mxu0 0
      %2559 = vmatprep.subr.bf16.mxu0 0
      %2560 = vmatpush1.bf16.msra.mxu0 0
      %2561 = vmatprep.subr.bf16.mxu0 0
      %2562 = vmatpush1.bf16.msra.mxu0 0
      %2563 = vmatprep.subr.bf16.mxu0 0
      %2564 = vmatpush1.bf16.msra.mxu0 %v2547
      %2565 = vmatprep.subr.bf16.mxu0 0
      %2566 = vmatpush2.bf16.msra.mxu0 0
      %2567 = vmatprep.subr.bf16.mxu0 0
      %2568 = vmatpush2.bf16.msra.mxu0 0
      %2569 = vmatprep.subr.bf16.mxu0 0
      %2570 = vmatpush2.bf16.msra.mxu0 0
      %2571 = vmatprep.subr.bf16.mxu0 0
      %2572 = vmatpush2.bf16.msra.mxu0 0
      %2573 = vmatprep.subr.bf16.mxu0 0
      %2574 = vmatpush2.bf16.msra.mxu0 0
      %2575 = vmatprep.subr.bf16.mxu0 0
      %2576 = vmatpush2.bf16.msra.mxu0 0
      %2577 = vmatprep.subr.bf16.mxu0 0
      %2578 = vmatpush2.bf16.msra.mxu0 0
      %2579 = vmatprep.subr.bf16.mxu0 0
      %2580 = vmatpush2.bf16.msra.mxu0 0
      %2581 = vmatprep.mubr.bf16.mxu0 0
      %2582 = vmatmul.mubr.bf16.gmra.mxu0 %v2542
      %v2583 = vpop.f32.mrf.mxu0
      %v2584 = vadd.f32 0.0, %v2583
      %v2585 = vpop.f32.mrf.mxu0
      %v2586 = vpop.f32.mrf.mxu0
      %v2587 = vadd.f32 0.0, %v2586
      %v2588 = vpop.f32.mrf.mxu0
      %2589 = vdwg.mxu0
      %v2590 = vpack.c.bf16 %v2587, %v2584
      %s2591 = scalar_lea.vmem %s5, 8
      %v2592 = vld [vmem:[%s2591] sm:$0xf]
      %v2593 = vld [vmem:[%s2591 + $0x4] sm:$0x1]
      %v2596 = vunpack.c.l.b16 %v2592
      %v2597 = vunpack.c.l.b16 %v2593
      %v2598 = vpack.c.b16 %v2597, %v2596
      %v2600 = vand.u32 %v2598, %v2545
      %2602 = vmatprep.subr.bf16.mxu0 0
      %2603 = vmatpush1.bf16.msra.mxu0 0
      %2604 = vmatprep.subr.bf16.mxu0 0
      %2605 = vmatpush1.bf16.msra.mxu0 0
      %2606 = vmatprep.subr.bf16.mxu0 0
      %2607 = vmatpush1.bf16.msra.mxu0 0
      %2608 = vmatprep.subr.bf16.mxu0 0
      %2609 = vmatpush1.bf16.msra.mxu0 0
      %2610 = vmatprep.subr.bf16.mxu0 0
      %2611 = vmatpush1.bf16.msra.mxu0 0
      %2612 = vmatprep.subr.bf16.mxu0 0
      %2613 = vmatpush1.bf16.msra.mxu0 0
      %2614 = vmatprep.subr.bf16.mxu0 0
      %2615 = vmatpush1.bf16.msra.mxu0 0
      %2616 = vmatprep.subr.bf16.mxu0 0
      %2617 = vmatpush1.bf16.msra.mxu0 %v2600
      %2618 = vmatprep.subr.bf16.mxu0 0
      %2619 = vmatpush2.bf16.msra.mxu0 0
      %2620 = vmatprep.subr.bf16.mxu0 0
      %2621 = vmatpush2.bf16.msra.mxu0 0
      %2622 = vmatprep.subr.bf16.mxu0 0
      %2623 = vmatpush2.bf16.msra.mxu0 0
      %2624 = vmatprep.subr.bf16.mxu0 0
      %2625 = vmatpush2.bf16.msra.mxu0 0
      %2626 = vmatprep.subr.bf16.mxu0 0
      %2627 = vmatpush2.bf16.msra.mxu0 0
      %2628 = vmatprep.subr.bf16.mxu0 0
      %2629 = vmatpush2.bf16.msra.mxu0 0
      %2630 = vmatprep.subr.bf16.mxu0 0
      %2631 = vmatpush2.bf16.msra.mxu0 0
      %2632 = vmatprep.subr.bf16.mxu0 0
      %2633 = vmatpush2.bf16.msra.mxu0 0
      %2634 = vmatprep.mubr.bf16.mxu0 0
      %2635 = vmatmul.mubr.bf16.gmra.mxu0 %v2542
      %v2636 = vpop.f32.mrf.mxu0
      %v2637 = vadd.f32 0.0, %v2636
      %v2638 = vpop.f32.mrf.mxu0
      %v2639 = vpop.f32.mrf.mxu0
      %v2640 = vadd.f32 0.0, %v2639
      %v2641 = vpop.f32.mrf.mxu0
      %2642 = vdwg.mxu0
      %v2643 = vpack.c.bf16 %v2640, %v2637
      %s2644 = scalar_lea.vmem %s5, 16
      %v2645 = vld [vmem:[%s2644] sm:$0xf]
      %v2646 = vld [vmem:[%s2644 + $0x4] sm:$0x1]
      %v2649 = vunpack.c.l.b16 %v2645
      %v2650 = vunpack.c.l.b16 %v2646
      %v2651 = vpack.c.b16 %v2650, %v2649
      %v2653 = vand.u32 %v2651, %v2545
      %2655 = vmatprep.subr.bf16.mxu0 0
      %2656 = vmatpush1.bf16.msra.mxu0 0
      %2657 = vmatprep.subr.bf16.mxu0 0
      %2658 = vmatpush1.bf16.msra.mxu0 0
      %2659 = vmatprep.subr.bf16.mxu0 0
      %2660 = vmatpush1.bf16.msra.mxu0 0
      %2661 = vmatprep.subr.bf16.mxu0 0
      %2662 = vmatpush1.bf16.msra.mxu0 0
      %2663 = vmatprep.subr.bf16.mxu0 0
      %2664 = vmatpush1.bf16.msra.mxu0 0
      %2665 = vmatprep.subr.bf16.mxu0 0
      %2666 = vmatpush1.bf16.msra.mxu0 0
      %2667 = vmatprep.subr.bf16.mxu0 0
      %2668 = vmatpush1.bf16.msra.mxu0 0
      %2669 = vmatprep.subr.bf16.mxu0 0
      %2670 = vmatpush1.bf16.msra.mxu0 %v2653
      %2671 = vmatprep.subr.bf16.mxu0 0
      %2672 = vmatpush2.bf16.msra.mxu0 0
      %2673 = vmatprep.subr.bf16.mxu0 0
      %2674 = vmatpush2.bf16.msra.mxu0 0
      %2675 = vmatprep.subr.bf16.mxu0 0
      %2676 = vmatpush2.bf16.msra.mxu0 0
      %2677 = vmatprep.subr.bf16.mxu0 0
      %2678 = vmatpush2.bf16.msra.mxu0 0
      %2679 = vmatprep.subr.bf16.mxu0 0
      %2680 = vmatpush2.bf16.msra.mxu0 0
      %2681 = vmatprep.subr.bf16.mxu0 0
      %2682 = vmatpush2.bf16.msra.mxu0 0
      %2683 = vmatprep.subr.bf16.mxu0 0
      %2684 = vmatpush2.bf16.msra.mxu0 0
      %2685 = vmatprep.subr.bf16.mxu0 0
      %2686 = vmatpush2.bf16.msra.mxu0 0
      %2687 = vmatprep.mubr.bf16.mxu0 0
      %2688 = vmatmul.mubr.bf16.gmra.mxu0 %v2542
      %v2689 = vpop.f32.mrf.mxu0
      %v2690 = vadd.f32 0.0, %v2689
      %v2691 = vpop.f32.mrf.mxu0
      %v2692 = vpop.f32.mrf.mxu0
      %v2693 = vadd.f32 0.0, %v2692
      %v2694 = vpop.f32.mrf.mxu0
      %2695 = vdwg.mxu0
      %v2696 = vpack.c.bf16 %v2693, %v2690
      %s2697 = scalar_lea.vmem %s5, 24
      %v2698 = vld [vmem:[%s2697] sm:$0xf]
      %v2699 = vld [vmem:[%s2697 + $0x4] sm:$0x1]
      %v2702 = vunpack.c.l.b16 %v2698
      %v2703 = vunpack.c.l.b16 %v2699
      %v2704 = vpack.c.b16 %v2703, %v2702
      %v2706 = vand.u32 %v2704, %v2545
      %2708 = vmatprep.subr.bf16.mxu0 0
      %2709 = vmatpush1.bf16.msra.mxu0 0
      %2710 = vmatprep.subr.bf16.mxu0 0
      %2711 = vmatpush1.bf16.msra.mxu0 0
      %2712 = vmatprep.subr.bf16.mxu0 0
      %2713 = vmatpush1.bf16.msra.mxu0 0
      %2714 = vmatprep.subr.bf16.mxu0 0
      %2715 = vmatpush1.bf16.msra.mxu0 0
      %2716 = vmatprep.subr.bf16.mxu0 0
      %2717 = vmatpush1.bf16.msra.mxu0 0
      %2718 = vmatprep.subr.bf16.mxu0 0
      %2719 = vmatpush1.bf16.msra.mxu0 0
      %2720 = vmatprep.subr.bf16.mxu0 0
      %2721 = vmatpush1.bf16.msra.mxu0 0
      %2722 = vmatprep.subr.bf16.mxu0 0
      %2723 = vmatpush1.bf16.msra.mxu0 %v2706
      %2724 = vmatprep.subr.bf16.mxu0 0
      %2725 = vmatpush2.bf16.msra.mxu0 0
      %2726 = vmatprep.subr.bf16.mxu0 0
      %2727 = vmatpush2.bf16.msra.mxu0 0
      %2728 = vmatprep.subr.bf16.mxu0 0
      %2729 = vmatpush2.bf16.msra.mxu0 0
      %2730 = vmatprep.subr.bf16.mxu0 0
      %2731 = vmatpush2.bf16.msra.mxu0 0
      %2732 = vmatprep.subr.bf16.mxu0 0
      %2733 = vmatpush2.bf16.msra.mxu0 0
      %2734 = vmatprep.subr.bf16.mxu0 0
      %2735 = vmatpush2.bf16.msra.mxu0 0
      %2736 = vmatprep.subr.bf16.mxu0 0
      %2737 = vmatpush2.bf16.msra.mxu0 0
      %2738 = vmatprep.subr.bf16.mxu0 0
      %2739 = vmatpush2.bf16.msra.mxu0 0
      %2740 = vmatprep.mubr.bf16.mxu0 0
      %2741 = vmatmul.mubr.bf16.gmra.mxu0 %v2542
      %v2742 = vpop.f32.mrf.mxu0
      %v2743 = vadd.f32 0.0, %v2742
      %v2744 = vpop.f32.mrf.mxu0
      %v2745 = vpop.f32.mrf.mxu0
      %v2746 = vadd.f32 0.0, %v2745
      %v2747 = vpop.f32.mrf.mxu0
      %2748 = vdwg.mxu0
      %v2749 = vpack.c.bf16 %v2746, %v2743
      %s2750 = scalar_lea.vmem %s5, 32
      %v2751 = vld [vmem:[%s2750] sm:$0xf]
      %v2752 = vld [vmem:[%s2750 + $0x4] sm:$0x1]
      %v2755 = vunpack.c.l.b16 %v2751
      %v2756 = vunpack.c.l.b16 %v2752
      %v2757 = vpack.c.b16 %v2756, %v2755
      %v2759 = vand.u32 %v2757, %v2545
      %2761 = vmatprep.subr.bf16.mxu0 0
      %2762 = vmatpush1.bf16.msra.mxu0 0
      %2763 = vmatprep.subr.bf16.mxu0 0
      %2764 = vmatpush1.bf16.msra.mxu0 0
      %2765 = vmatprep.subr.bf16.mxu0 0
      %2766 = vmatpush1.bf16.msra.mxu0 0
      %2767 = vmatprep.subr.bf16.mxu0 0
      %2768 = vmatpush1.bf16.msra.mxu0 0
      %2769 = vmatprep.subr.bf16.mxu0 0
      %2770 = vmatpush1.bf16.msra.mxu0 0
      %2771 = vmatprep.subr.bf16.mxu0 0
      %2772 = vmatpush1.bf16.msra.mxu0 0
      %2773 = vmatprep.subr.bf16.mxu0 0
      %2774 = vmatpush1.bf16.msra.mxu0 0
      %2775 = vmatprep.subr.bf16.mxu0 0
      %2776 = vmatpush1.bf16.msra.mxu0 %v2759
      %2777 = vmatprep.subr.bf16.mxu0 0
      %2778 = vmatpush2.bf16.msra.mxu0 0
      %2779 = vmatprep.subr.bf16.mxu0 0
      %2780 = vmatpush2.bf16.msra.mxu0 0
      %2781 = vmatprep.subr.bf16.mxu0 0
      %2782 = vmatpush2.bf16.msra.mxu0 0
      %2783 = vmatprep.subr.bf16.mxu0 0
      %2784 = vmatpush2.bf16.msra.mxu0 0
      %2785 = vmatprep.subr.bf16.mxu0 0
      %2786 = vmatpush2.bf16.msra.mxu0 0
      %2787 = vmatprep.subr.bf16.mxu0 0
      %2788 = vmatpush2.bf16.msra.mxu0 0
      %2789 = vmatprep.subr.bf16.mxu0 0
      %2790 = vmatpush2.bf16.msra.mxu0 0
      %2791 = vmatprep.subr.bf16.mxu0 0
      %2792 = vmatpush2.bf16.msra.mxu0 0
      %2793 = vmatprep.mubr.bf16.mxu0 0
      %2794 = vmatmul.mubr.bf16.gmra.mxu0 %v2542
      %v2795 = vpop.f32.mrf.mxu0
      %v2796 = vadd.f32 0.0, %v2795
      %v2797 = vpop.f32.mrf.mxu0
      %v2798 = vpop.f32.mrf.mxu0
      %v2799 = vadd.f32 0.0, %v2798
      %v2800 = vpop.f32.mrf.mxu0
      %2801 = vdwg.mxu0
      %v2802 = vpack.c.bf16 %v2799, %v2796
      %s2803 = scalar_lea.vmem %s5, 40
      %v2804 = vld [vmem:[%s2803] sm:$0xf]
      %v2805 = vld [vmem:[%s2803 + $0x4] sm:$0x1]
      %v2808 = vunpack.c.l.b16 %v2804
      %v2809 = vunpack.c.l.b16 %v2805
      %v2810 = vpack.c.b16 %v2809, %v2808
      %v2812 = vand.u32 %v2810, %v2545
      %2814 = vmatprep.subr.bf16.mxu0 0
      %2815 = vmatpush1.bf16.msra.mxu0 0
      %2816 = vmatprep.subr.bf16.mxu0 0
      %2817 = vmatpush1.bf16.msra.mxu0 0
      %2818 = vmatprep.subr.bf16.mxu0 0
      %2819 = vmatpush1.bf16.msra.mxu0 0
      %2820 = vmatprep.subr.bf16.mxu0 0
      %2821 = vmatpush1.bf16.msra.mxu0 0
      %2822 = vmatprep.subr.bf16.mxu0 0
      %2823 = vmatpush1.bf16.msra.mxu0 0
      %2824 = vmatprep.subr.bf16.mxu0 0
      %2825 = vmatpush1.bf16.msra.mxu0 0
      %2826 = vmatprep.subr.bf16.mxu0 0
      %2827 = vmatpush1.bf16.msra.mxu0 0
      %2828 = vmatprep.subr.bf16.mxu0 0
      %2829 = vmatpush1.bf16.msra.mxu0 %v2812
      %2830 = vmatprep.subr.bf16.mxu0 0
      %2831 = vmatpush2.bf16.msra.mxu0 0
      %2832 = vmatprep.subr.bf16.mxu0 0
      %2833 = vmatpush2.bf16.msra.mxu0 0
      %2834 = vmatprep.subr.bf16.mxu0 0
      %2835 = vmatpush2.bf16.msra.mxu0 0
      %2836 = vmatprep.subr.bf16.mxu0 0
      %2837 = vmatpush2.bf16.msra.mxu0 0
      %2838 = vmatprep.subr.bf16.mxu0 0
      %2839 = vmatpush2.bf16.msra.mxu0 0
      %2840 = vmatprep.subr.bf16.mxu0 0
      %2841 = vmatpush2.bf16.msra.mxu0 0
      %2842 = vmatprep.subr.bf16.mxu0 0
      %2843 = vmatpush2.bf16.msra.mxu0 0
      %2844 = vmatprep.subr.bf16.mxu0 0
      %2845 = vmatpush2.bf16.msra.mxu0 0
      %2846 = vmatprep.mubr.bf16.mxu0 0
      %2847 = vmatmul.mubr.bf16.gmra.mxu0 %v2542
      %v2848 = vpop.f32.mrf.mxu0
      %v2849 = vadd.f32 0.0, %v2848
      %v2850 = vpop.f32.mrf.mxu0
      %v2851 = vpop.f32.mrf.mxu0
      %v2852 = vadd.f32 0.0, %v2851
      %v2853 = vpop.f32.mrf.mxu0
      %2854 = vdwg.mxu0
      %v2855 = vpack.c.bf16 %v2852, %v2849
      %s2856 = scalar_lea.vmem %s5, 48
      %v2857 = vld [vmem:[%s2856] sm:$0xf]
      %v2858 = vld [vmem:[%s2856 + $0x4] sm:$0x1]
      %v2861 = vunpack.c.l.b16 %v2857
      %v2862 = vunpack.c.l.b16 %v2858
      %v2863 = vpack.c.b16 %v2862, %v2861
      %v2865 = vand.u32 %v2863, %v2545
      %2867 = vmatprep.subr.bf16.mxu0 0
      %2868 = vmatpush1.bf16.msra.mxu0 0
      %2869 = vmatprep.subr.bf16.mxu0 0
      %2870 = vmatpush1.bf16.msra.mxu0 0
      %2871 = vmatprep.subr.bf16.mxu0 0
      %2872 = vmatpush1.bf16.msra.mxu0 0
      %2873 = vmatprep.subr.bf16.mxu0 0
      %2874 = vmatpush1.bf16.msra.mxu0 0
      %2875 = vmatprep.subr.bf16.mxu0 0
      %2876 = vmatpush1.bf16.msra.mxu0 0
      %2877 = vmatprep.subr.bf16.mxu0 0
      %2878 = vmatpush1.bf16.msra.mxu0 0
      %2879 = vmatprep.subr.bf16.mxu0 0
      %2880 = vmatpush1.bf16.msra.mxu0 0
      %2881 = vmatprep.subr.bf16.mxu0 0
      %2882 = vmatpush1.bf16.msra.mxu0 %v2865
      %2883 = vmatprep.subr.bf16.mxu0 0
      %2884 = vmatpush2.bf16.msra.mxu0 0
      %2885 = vmatprep.subr.bf16.mxu0 0
      %2886 = vmatpush2.bf16.msra.mxu0 0
      %2887 = vmatprep.subr.bf16.mxu0 0
      %2888 = vmatpush2.bf16.msra.mxu0 0
      %2889 = vmatprep.subr.bf16.mxu0 0
      %2890 = vmatpush2.bf16.msra.mxu0 0
      %2891 = vmatprep.subr.bf16.mxu0 0
      %2892 = vmatpush2.bf16.msra.mxu0 0
      %2893 = vmatprep.subr.bf16.mxu0 0
      %2894 = vmatpush2.bf16.msra.mxu0 0
      %2895 = vmatprep.subr.bf16.mxu0 0
      %2896 = vmatpush2.bf16.msra.mxu0 0
      %2897 = vmatprep.subr.bf16.mxu0 0
      %2898 = vmatpush2.bf16.msra.mxu0 0
      %2899 = vmatprep.mubr.bf16.mxu0 0
      %2900 = vmatmul.mubr.bf16.gmra.mxu0 %v2542
      %v2901 = vpop.f32.mrf.mxu0
      %v2902 = vadd.f32 0.0, %v2901
      %v2903 = vpop.f32.mrf.mxu0
      %v2904 = vpop.f32.mrf.mxu0
      %v2905 = vadd.f32 0.0, %v2904
      %v2906 = vpop.f32.mrf.mxu0
      %2907 = vdwg.mxu0
      %v2908 = vpack.c.bf16 %v2905, %v2902
      %s2909 = scalar_lea.vmem %s5, 56
      %v2910 = vld [vmem:[%s2909] sm:$0xf]
      %v2911 = vld [vmem:[%s2909 + $0x4] sm:$0x1]
      %v2914 = vunpack.c.l.b16 %v2910
      %v2915 = vunpack.c.l.b16 %v2911
      %v2916 = vpack.c.b16 %v2915, %v2914
      %v2918 = vand.u32 %v2916, %v2545
      %2920 = vmatprep.subr.bf16.mxu0 0
      %2921 = vmatpush1.bf16.msra.mxu0 0
      %2922 = vmatprep.subr.bf16.mxu0 0
      %2923 = vmatpush1.bf16.msra.mxu0 0
      %2924 = vmatprep.subr.bf16.mxu0 0
      %2925 = vmatpush1.bf16.msra.mxu0 0
      %2926 = vmatprep.subr.bf16.mxu0 0
      %2927 = vmatpush1.bf16.msra.mxu0 0
      %2928 = vmatprep.subr.bf16.mxu0 0
      %2929 = vmatpush1.bf16.msra.mxu0 0
      %2930 = vmatprep.subr.bf16.mxu0 0
      %2931 = vmatpush1.bf16.msra.mxu0 0
      %2932 = vmatprep.subr.bf16.mxu0 0
      %2933 = vmatpush1.bf16.msra.mxu0 0
      %2934 = vmatprep.subr.bf16.mxu0 0
      %2935 = vmatpush1.bf16.msra.mxu0 %v2918
      %2936 = vmatprep.subr.bf16.mxu0 0
      %2937 = vmatpush2.bf16.msra.mxu0 0
      %2938 = vmatprep.subr.bf16.mxu0 0
      %2939 = vmatpush2.bf16.msra.mxu0 0
      %2940 = vmatprep.subr.bf16.mxu0 0
      %2941 = vmatpush2.bf16.msra.mxu0 0
      %2942 = vmatprep.subr.bf16.mxu0 0
      %2943 = vmatpush2.bf16.msra.mxu0 0
      %2944 = vmatprep.subr.bf16.mxu0 0
      %2945 = vmatpush2.bf16.msra.mxu0 0
      %2946 = vmatprep.subr.bf16.mxu0 0
      %2947 = vmatpush2.bf16.msra.mxu0 0
      %2948 = vmatprep.subr.bf16.mxu0 0
      %2949 = vmatpush2.bf16.msra.mxu0 0
      %2950 = vmatprep.subr.bf16.mxu0 0
      %2951 = vmatpush2.bf16.msra.mxu0 0
      %2952 = vmatprep.mubr.bf16.mxu0 0
      %2953 = vmatmul.mubr.bf16.gmra.mxu0 %v2542
      %v2954 = vpop.f32.mrf.mxu0
      %v2955 = vadd.f32 0.0, %v2954
      %v2956 = vpop.f32.mrf.mxu0
      %v2957 = vpop.f32.mrf.mxu0
      %v2958 = vadd.f32 0.0, %v2957
      %v2959 = vpop.f32.mrf.mxu0
      %2960 = vdwg.mxu0
      %v2961 = vpack.c.bf16 %v2958, %v2955
      %s2962 = scalar_lea.vmem %s5, 64
      %v2963 = vld [vmem:[%s2962] sm:$0xf]
      %v2964 = vld [vmem:[%s2962 + $0x4] sm:$0x1]
      %v2967 = vunpack.c.l.b16 %v2963
      %v2968 = vunpack.c.l.b16 %v2964
      %v2969 = vpack.c.b16 %v2968, %v2967
      %v2971 = vand.u32 %v2969, %v2545
      %2973 = vmatprep.subr.bf16.mxu0 0
      %2974 = vmatpush1.bf16.msra.mxu0 0
      %2975 = vmatprep.subr.bf16.mxu0 0
      %2976 = vmatpush1.bf16.msra.mxu0 0
      %2977 = vmatprep.subr.bf16.mxu0 0
      %2978 = vmatpush1.bf16.msra.mxu0 0
      %2979 = vmatprep.subr.bf16.mxu0 0
      %2980 = vmatpush1.bf16.msra.mxu0 0
      %2981 = vmatprep.subr.bf16.mxu0 0
      %2982 = vmatpush1.bf16.msra.mxu0 0
      %2983 = vmatprep.subr.bf16.mxu0 0
      %2984 = vmatpush1.bf16.msra.mxu0 0
      %2985 = vmatprep.subr.bf16.mxu0 0
      %2986 = vmatpush1.bf16.msra.mxu0 0
      %2987 = vmatprep.subr.bf16.mxu0 0
      %2988 = vmatpush1.bf16.msra.mxu0 %v2971
      %2989 = vmatprep.subr.bf16.mxu0 0
      %2990 = vmatpush2.bf16.msra.mxu0 0
      %2991 = vmatprep.subr.bf16.mxu0 0
      %2992 = vmatpush2.bf16.msra.mxu0 0
      %2993 = vmatprep.subr.bf16.mxu0 0
      %2994 = vmatpush2.bf16.msra.mxu0 0
      %2995 = vmatprep.subr.bf16.mxu0 0
      %2996 = vmatpush2.bf16.msra.mxu0 0
      %2997 = vmatprep.subr.bf16.mxu0 0
      %2998 = vmatpush2.bf16.msra.mxu0 0
      %2999 = vmatprep.subr.bf16.mxu0 0
      %3000 = vmatpush2.bf16.msra.mxu0 0
      %3001 = vmatprep.subr.bf16.mxu0 0
      %3002 = vmatpush2.bf16.msra.mxu0 0
      %3003 = vmatprep.subr.bf16.mxu0 0
      %3004 = vmatpush2.bf16.msra.mxu0 0
      %3005 = vmatprep.mubr.bf16.mxu0 0
      %3006 = vmatmul.mubr.bf16.gmra.mxu0 %v2542
      %v3007 = vpop.f32.mrf.mxu0
      %v3008 = vadd.f32 0.0, %v3007
      %v3009 = vpop.f32.mrf.mxu0
      %v3010 = vpop.f32.mrf.mxu0
      %v3011 = vadd.f32 0.0, %v3010
      %v3012 = vpop.f32.mrf.mxu0
      %3013 = vdwg.mxu0
      %v3014 = vpack.c.bf16 %v3011, %v3008
      %v3015 = vld [vmem:[%s6] sm:$0xff]
      %v3016 = vld [vmem:[%s7] sm:$0xff]
      %3018 = vset.pattern.permute.xlu0 0
      %3019 = vperm.xlu0 %3018, %v3016
      %v3020 = vpop.permute.xlu0 %3019
      %v3023 = vunpack.c.l.b16 %v3015
      %v3024 = vunpack.c.h.b16 %v3015
      %v3025 = vpack.c.b16 %v3023, %v3023
      %v3026 = vpack.c.b16 %v3024, %v3024
      %vm3028 = vcmask 130048
      %v3030 = vsel %vm3028, %v3026, 0
      %3032 = vmatprep.subr.bf16.mxu0 0
      %3033 = vmatpush1.bf16.msra.mxu0 %v2961
      %3034 = vmatprep.subr.bf16.mxu0 0
      %3035 = vmatpush1.bf16.msra.mxu0 %v2908
      %3036 = vmatprep.subr.bf16.mxu0 0
      %3037 = vmatpush1.bf16.msra.mxu0 %v2855
      %3038 = vmatprep.subr.bf16.mxu0 0
      %3039 = vmatpush1.bf16.msra.mxu0 %v2802
      %3040 = vmatprep.subr.bf16.mxu0 0
      %3041 = vmatpush1.bf16.msra.mxu0 %v2749
      %3042 = vmatprep.subr.bf16.mxu0 0
      %3043 = vmatpush1.bf16.msra.mxu0 %v2696
      %3044 = vmatprep.subr.bf16.mxu0 0
      %3045 = vmatpush1.bf16.msra.mxu0 %v2643
      %3046 = vmatprep.subr.bf16.mxu0 0
      %3047 = vmatpush1.bf16.msra.mxu0 %v2590
      %3048 = vmatprep.subr.bf16.mxu0 0
      %3049 = vmatpush2.bf16.msra.mxu0 0
      %3050 = vmatprep.subr.bf16.mxu0 0
      %3051 = vmatpush2.bf16.msra.mxu0 0
      %3052 = vmatprep.subr.bf16.mxu0 0
      %3053 = vmatpush2.bf16.msra.mxu0 0
      %3054 = vmatprep.subr.bf16.mxu0 0
      %3055 = vmatpush2.bf16.msra.mxu0 0
      %3056 = vmatprep.subr.bf16.mxu0 0
      %3057 = vmatpush2.bf16.msra.mxu0 0
      %3058 = vmatprep.subr.bf16.mxu0 0
      %3059 = vmatpush2.bf16.msra.mxu0 0
      %3060 = vmatprep.subr.bf16.mxu0 0
      %3061 = vmatpush2.bf16.msra.mxu0 0
      %3062 = vmatprep.subr.bf16.mxu0 0
      %3063 = vmatpush2.bf16.msra.mxu0 %v3014
      %3064 = vmatprep.mubr.bf16.mxu0 %v3030
      %3065 = vmatmul.mubr.bf16.gmra.mxu0 %v3025
      %v3066 = vpop.f32.mrf.mxu0
      %v3067 = vadd.f32 %v3020, %v3066
      %v3068 = vpop.f32.mrf.mxu0
      %v3069 = vpop.f32.mrf.mxu0
      %v3070 = vpop.f32.mrf.mxu0
      %3071 = vdwg.mxu0
      %v3072 = vmax.f32 %v3067, 0.0
      %v3073 = vpack.c.bf16 %v3072, %v3072
      %v3074 = vld [vmem:[%s8] sm:$0x3]
      %vm3075 = vcmask 31744
      %v3077 = vsel %vm3075, %v3073, 0
      %v3080 = vsel %vm2286, %v3074, 0
      %3082 = vmatprep.subr.bf16.mxu0 0
      %3083 = vmatpush1.bf16.msra.mxu0 0
      %3084 = vmatprep.subr.bf16.mxu0 0
      %3085 = vmatpush1.bf16.msra.mxu0 0
      %3086 = vmatprep.subr.bf16.mxu0 0
      %3087 = vmatpush1.bf16.msra.mxu0 0
      %3088 = vmatprep.subr.bf16.mxu0 0
      %3089 = vmatpush1.bf16.msra.mxu0 0
      %3090 = vmatprep.subr.bf16.mxu0 0
      %3091 = vmatpush1.bf16.msra.mxu0 0
      %3092 = vmatprep.subr.bf16.mxu0 0
      %3093 = vmatpush1.bf16.msra.mxu0 0
      %3094 = vmatprep.subr.bf16.mxu0 0
      %3095 = vmatpush1.bf16.msra.mxu0 0
      %3096 = vmatprep.subr.bf16.mxu0 0
      %3097 = vmatpush1.bf16.msra.mxu0 %v3080
      %3098 = vmatprep.subr.bf16.mxu0 0
      %3099 = vmatpush2.bf16.msra.mxu0 0
      %3100 = vmatprep.subr.bf16.mxu0 0
      %3101 = vmatpush2.bf16.msra.mxu0 0
      %3102 = vmatprep.subr.bf16.mxu0 0
      %3103 = vmatpush2.bf16.msra.mxu0 0
      %3104 = vmatprep.subr.bf16.mxu0 0
      %3105 = vmatpush2.bf16.msra.mxu0 0
      %3106 = vmatprep.subr.bf16.mxu0 0
      %3107 = vmatpush2.bf16.msra.mxu0 0
      %3108 = vmatprep.subr.bf16.mxu0 0
      %3109 = vmatpush2.bf16.msra.mxu0 0
      %3110 = vmatprep.subr.bf16.mxu0 0
      %3111 = vmatpush2.bf16.msra.mxu0 0
      %3112 = vmatprep.subr.bf16.mxu0 0
      %3113 = vmatpush2.bf16.msra.mxu0 0
      %3114 = vmatprep.mubr.bf16.mxu0 0
      %3115 = vmatmul.mubr.bf16.gmra.mxu0 %v3077
      %v3116 = vpop.f32.mrf.mxu0
      %v3117 = vadd.f32 0.0, %v3116
      %v3118 = vpop.f32.mrf.mxu0
      %v3119 = vpop.f32.mrf.mxu0
      %v3120 = vpop.f32.mrf.mxu0
      %3121 = vdwg.mxu0
      %s3122 = scalar_lea.vmem %s8, 2
      %v3123 = vld [vmem:[%s3122] sm:$0x3]
      %v3125 = vsel %vm2286, %v3123, 0
      %3127 = vmatprep.subr.bf16.mxu0 0
      %3128 = vmatpush1.bf16.msra.mxu0 0
      %3129 = vmatprep.subr.bf16.mxu0 0
      %3130 = vmatpush1.bf16.msra.mxu0 0
      %3131 = vmatprep.subr.bf16.mxu0 0
      %3132 = vmatpush1.bf16.msra.mxu0 0
      %3133 = vmatprep.subr.bf16.mxu0 0
      %3134 = vmatpush1.bf16.msra.mxu0 0
      %3135 = vmatprep.subr.bf16.mxu0 0
      %3136 = vmatpush1.bf16.msra.mxu0 0
      %3137 = vmatprep.subr.bf16.mxu0 0
      %3138 = vmatpush1.bf16.msra.mxu0 0
      %3139 = vmatprep.subr.bf16.mxu0 0
      %3140 = vmatpush1.bf16.msra.mxu0 0
      %3141 = vmatprep.subr.bf16.mxu0 0
      %3142 = vmatpush1.bf16.msra.mxu0 %v3125
      %3143 = vmatprep.subr.bf16.mxu0 0
      %3144 = vmatpush2.bf16.msra.mxu0 0
      %3145 = vmatprep.subr.bf16.mxu0 0
      %3146 = vmatpush2.bf16.msra.mxu0 0
      %3147 = vmatprep.subr.bf16.mxu0 0
      %3148 = vmatpush2.bf16.msra.mxu0 0
      %3149 = vmatprep.subr.bf16.mxu0 0
      %3150 = vmatpush2.bf16.msra.mxu0 0
      %3151 = vmatprep.subr.bf16.mxu0 0
      %3152 = vmatpush2.bf16.msra.mxu0 0
      %3153 = vmatprep.subr.bf16.mxu0 0
      %3154 = vmatpush2.bf16.msra.mxu0 0
      %3155 = vmatprep.subr.bf16.mxu0 0
      %3156 = vmatpush2.bf16.msra.mxu0 0
      %3157 = vmatprep.subr.bf16.mxu0 0
      %3158 = vmatpush2.bf16.msra.mxu0 0
      %3159 = vmatprep.mubr.bf16.mxu0 0
      %3160 = vmatmul.mubr.bf16.gmra.mxu0 %v3077
      %v3161 = vpop.f32.mrf.mxu0
      %v3162 = vadd.f32 0.0, %v3161
      %v3163 = vpop.f32.mrf.mxu0
      %v3164 = vpop.f32.mrf.mxu0
      %v3165 = vpop.f32.mrf.mxu0
      %3166 = vdwg.mxu0
      %v3167 = vmax.f32 %v3117, %v3162
      %s3168 = scalar_lea.vmem %s8, 4
      %v3169 = vld [vmem:[%s3168] sm:$0x3]
      %v3171 = vsel %vm2286, %v3169, 0
      %3173 = vmatprep.subr.bf16.mxu0 0
      %3174 = vmatpush1.bf16.msra.mxu0 0
      %3175 = vmatprep.subr.bf16.mxu0 0
      %3176 = vmatpush1.bf16.msra.mxu0 0
      %3177 = vmatprep.subr.bf16.mxu0 0
      %3178 = vmatpush1.bf16.msra.mxu0 0
      %3179 = vmatprep.subr.bf16.mxu0 0
      %3180 = vmatpush1.bf16.msra.mxu0 0
      %3181 = vmatprep.subr.bf16.mxu0 0
      %3182 = vmatpush1.bf16.msra.mxu0 0
      %3183 = vmatprep.subr.bf16.mxu0 0
      %3184 = vmatpush1.bf16.msra.mxu0 0
      %3185 = vmatprep.subr.bf16.mxu0 0
      %3186 = vmatpush1.bf16.msra.mxu0 0
      %3187 = vmatprep.subr.bf16.mxu0 0
      %3188 = vmatpush1.bf16.msra.mxu0 %v3171
      %3189 = vmatprep.subr.bf16.mxu0 0
      %3190 = vmatpush2.bf16.msra.mxu0 0
      %3191 = vmatprep.subr.bf16.mxu0 0
      %3192 = vmatpush2.bf16.msra.mxu0 0
      %3193 = vmatprep.subr.bf16.mxu0 0
      %3194 = vmatpush2.bf16.msra.mxu0 0
      %3195 = vmatprep.subr.bf16.mxu0 0
      %3196 = vmatpush2.bf16.msra.mxu0 0
      %3197 = vmatprep.subr.bf16.mxu0 0
      %3198 = vmatpush2.bf16.msra.mxu0 0
      %3199 = vmatprep.subr.bf16.mxu0 0
      %3200 = vmatpush2.bf16.msra.mxu0 0
      %3201 = vmatprep.subr.bf16.mxu0 0
      %3202 = vmatpush2.bf16.msra.mxu0 0
      %3203 = vmatprep.subr.bf16.mxu0 0
      %3204 = vmatpush2.bf16.msra.mxu0 0
      %3205 = vmatprep.mubr.bf16.mxu0 0
      %3206 = vmatmul.mubr.bf16.gmra.mxu0 %v3077
      %v3207 = vpop.f32.mrf.mxu0
      %v3208 = vadd.f32 0.0, %v3207
      %v3209 = vpop.f32.mrf.mxu0
      %v3210 = vpop.f32.mrf.mxu0
      %v3211 = vpop.f32.mrf.mxu0
      %3212 = vdwg.mxu0
      %v3213 = vmax.f32 %v3167, %v3208
      %s3214 = scalar_lea.vmem %s8, 6
      %v3215 = vld [vmem:[%s3214] sm:$0x3]
      %v3217 = vsel %vm2286, %v3215, 0
      %3219 = vmatprep.subr.bf16.mxu0 0
      %3220 = vmatpush1.bf16.msra.mxu0 0
      %3221 = vmatprep.subr.bf16.mxu0 0
      %3222 = vmatpush1.bf16.msra.mxu0 0
      %3223 = vmatprep.subr.bf16.mxu0 0
      %3224 = vmatpush1.bf16.msra.mxu0 0
      %3225 = vmatprep.subr.bf16.mxu0 0
      %3226 = vmatpush1.bf16.msra.mxu0 0
      %3227 = vmatprep.subr.bf16.mxu0 0
      %3228 = vmatpush1.bf16.msra.mxu0 0
      %3229 = vmatprep.subr.bf16.mxu0 0
      %3230 = vmatpush1.bf16.msra.mxu0 0
      %3231 = vmatprep.subr.bf16.mxu0 0
      %3232 = vmatpush1.bf16.msra.mxu0 0
      %3233 = vmatprep.subr.bf16.mxu0 0
      %3234 = vmatpush1.bf16.msra.mxu0 %v3217
      %3235 = vmatprep.subr.bf16.mxu0 0
      %3236 = vmatpush2.bf16.msra.mxu0 0
      %3237 = vmatprep.subr.bf16.mxu0 0
      %3238 = vmatpush2.bf16.msra.mxu0 0
      %3239 = vmatprep.subr.bf16.mxu0 0
      %3240 = vmatpush2.bf16.msra.mxu0 0
      %3241 = vmatprep.subr.bf16.mxu0 0
      %3242 = vmatpush2.bf16.msra.mxu0 0
      %3243 = vmatprep.subr.bf16.mxu0 0
      %3244 = vmatpush2.bf16.msra.mxu0 0
      %3245 = vmatprep.subr.bf16.mxu0 0
      %3246 = vmatpush2.bf16.msra.mxu0 0
      %3247 = vmatprep.subr.bf16.mxu0 0
      %3248 = vmatpush2.bf16.msra.mxu0 0
      %3249 = vmatprep.subr.bf16.mxu0 0
      %3250 = vmatpush2.bf16.msra.mxu0 0
      %3251 = vmatprep.mubr.bf16.mxu0 0
      %3252 = vmatmul.mubr.bf16.gmra.mxu0 %v3077
      %v3253 = vpop.f32.mrf.mxu0
      %v3254 = vadd.f32 0.0, %v3253
      %v3255 = vpop.f32.mrf.mxu0
      %v3256 = vpop.f32.mrf.mxu0
      %v3257 = vpop.f32.mrf.mxu0
      %3258 = vdwg.mxu0
      %v3259 = vmax.f32 %v3213, %v3254
      %v3260 = vpack.c.bf16 %v3259, %v3259
      %v3261 = vld [vmem:[%s9] sm:$0x1]
      %3263 = vset.pattern.permute.xlu0 0
      %3264 = vperm.xlu0 %3263, %v3260
      %v3265 = vpop.permute.xlu0 %3264
      %v3268 = vpack.i.b16 %v3261, %v3261
      %v3270 = vlaneseq
      %v3271 = vshrl.u32 %v3270, 7
      %v3272 = vsub.s32 0, %v3271
      %v3273 = vrot.slane %v3268, %v3272
      %v3274 = vmul.bf16 %v3265, %v3273
      %s3275 = scalar_lea.vmem %s9, 1
      %v3276 = vld [vmem:[%s3275] sm:$0x1]
      %v3278 = vpack.i.b16 %v3276, %v3276
      %v3280 = vlaneseq
      %v3281 = vshrl.u32 %v3280, 7
      %v3282 = vsub.s32 0, %v3281
      %v3283 = vrot.slane %v3278, %v3282
      %v3284 = vmul.bf16 %v3265, %v3283
      %s3285 = scalar_lea.vmem %s9, 2
      %v3286 = vld [vmem:[%s3285] sm:$0x1]
      %v3288 = vpack.i.b16 %v3286, %v3286
      %v3290 = vlaneseq
      %v3291 = vshrl.u32 %v3290, 7
      %v3292 = vsub.s32 0, %v3291
      %v3293 = vrot.slane %v3288, %v3292
      %v3294 = vmul.bf16 %v3265, %v3293
      %s3295 = scalar_lea.vmem %s9, 3
      %v3296 = vld [vmem:[%s3295] sm:$0x1]
      %v3298 = vpack.i.b16 %v3296, %v3296
      %v3300 = vlaneseq
      %v3301 = vshrl.u32 %v3300, 7
      %v3302 = vsub.s32 0, %v3301
      %v3303 = vrot.slane %v3298, %v3302
      %v3304 = vmul.bf16 %v3265, %v3303
      %s3305 = scalar_lea.vmem %s9, 4
      %v3306 = vld [vmem:[%s3305] sm:$0x1]
      %v3308 = vpack.i.b16 %v3306, %v3306
      %v3310 = vlaneseq
      %v3311 = vshrl.u32 %v3310, 7
      %v3312 = vsub.s32 0, %v3311
      %v3313 = vrot.slane %v3308, %v3312
      %v3314 = vmul.bf16 %v3265, %v3313
      %s3315 = scalar_lea.vmem %s9, 5
      %v3316 = vld [vmem:[%s3315] sm:$0x1]
      %v3318 = vpack.i.b16 %v3316, %v3316
      %v3320 = vlaneseq
      %v3321 = vshrl.u32 %v3320, 7
      %v3322 = vsub.s32 0, %v3321
      %v3323 = vrot.slane %v3318, %v3322
      %v3324 = vmul.bf16 %v3265, %v3323
      %s3325 = scalar_lea.vmem %s9, 6
      %v3326 = vld [vmem:[%s3325] sm:$0x1]
      %v3328 = vpack.i.b16 %v3326, %v3326
      %v3330 = vlaneseq
      %v3331 = vshrl.u32 %v3330, 7
      %v3332 = vsub.s32 0, %v3331
      %v3333 = vrot.slane %v3328, %v3332
      %v3334 = vmul.bf16 %v3265, %v3333
      %s3335 = scalar_lea.vmem %s9, 7
      %v3336 = vld [vmem:[%s3335] sm:$0x1]
      %v3338 = vpack.i.b16 %v3336, %v3336
      %v3340 = vlaneseq
      %v3341 = vshrl.u32 %v3340, 7
      %v3342 = vsub.s32 0, %v3341
      %v3343 = vrot.slane %v3338, %v3342
      %v3344 = vmul.bf16 %v3265, %v3343
      %s3345 = scalar_lea.vmem %s9, 8
      %v3346 = vld [vmem:[%s3345] sm:$0x1]
      %v3348 = vpack.i.b16 %v3346, %v3346
      %v3350 = vlaneseq
      %v3351 = vshrl.u32 %v3350, 7
      %v3352 = vsub.s32 0, %v3351
      %v3353 = vrot.slane %v3348, %v3352
      %v3354 = vmul.bf16 %v3265, %v3353
      %v3356 = vrot.slane %v3284, 4
      %v3358 = vrot.slane %v3304, 4
      %v3360 = vrot.slane %v3324, 4
      %v3362 = vrot.slane %v3344, 4
      %v3365 = vsel %vm2186, %v3274, %v3356
      %v3369 = vsel %vm2186, %v3294, %v3358
      %v3373 = vsel %vm2186, %v3314, %v3360
      %v3377 = vsel %vm2186, %v3334, %v3362
      %v3379 = vld [vmem:[%s10] sm:$0xf]
      %v3380 = vld [vmem:[%s10 + $0x4] sm:$0xf]
      %v3381 = vld [vmem:[%s11] sm:$0xff]
      %v3382 = vld [vmem:[%s11 + $0x8] sm:$0xff]
      %3384 = vset.pattern.permute.xlu0 0
      %3385 = vperm.xlu0 %3384, %v3381
      %v3386 = vpop.permute.xlu0 %3385
      %3389 = vset.pattern.permute.xlu0 0
      %3390 = vperm.xlu0 %3389, %v3382
      %v3391 = vpop.permute.xlu0 %3390
      %v3395 = vunpack.c.l.b16 %v3379
      %v3396 = vunpack.c.l.b16 %v3380
      %v3397 = vpack.c.b16 %v3396, %v3395
      %vm3398 = vcmask 588800
      %v3400 = vsel %vm3398, %v3397, 0
      %v3403 = vsel %vm2186, %v3354, 0
      %3405 = vmatprep.subr.bf16.mxu0 0
      %3406 = vmatpush1.bf16.msra.mxu0 0
      %3407 = vmatprep.subr.bf16.mxu0 0
      %3408 = vmatpush1.bf16.msra.mxu0 0
      %3409 = vmatprep.subr.bf16.mxu0 0
      %3410 = vmatpush1.bf16.msra.mxu0 0
      %3411 = vmatprep.subr.bf16.mxu0 0
      %3412 = vmatpush1.bf16.msra.mxu0 %v3403
      %3413 = vmatprep.subr.bf16.mxu0 0
      %3414 = vmatpush1.bf16.msra.mxu0 %v3377
      %3415 = vmatprep.subr.bf16.mxu0 0
      %3416 = vmatpush1.bf16.msra.mxu0 %v3373
      %3417 = vmatprep.subr.bf16.mxu0 0
      %3418 = vmatpush1.bf16.msra.mxu0 %v3369
      %3419 = vmatprep.subr.bf16.mxu0 0
      %3420 = vmatpush1.bf16.msra.mxu0 %v3365
      %3421 = vmatprep.subr.bf16.mxu0 0
      %3422 = vmatpush2.bf16.msra.mxu0 0
      %3423 = vmatprep.subr.bf16.mxu0 0
      %3424 = vmatpush2.bf16.msra.mxu0 0
      %3425 = vmatprep.subr.bf16.mxu0 0
      %3426 = vmatpush2.bf16.msra.mxu0 0
      %3427 = vmatprep.subr.bf16.mxu0 0
      %3428 = vmatpush2.bf16.msra.mxu0 0
      %3429 = vmatprep.subr.bf16.mxu0 0
      %3430 = vmatpush2.bf16.msra.mxu0 0
      %3431 = vmatprep.subr.bf16.mxu0 0
      %3432 = vmatpush2.bf16.msra.mxu0 0
      %3433 = vmatprep.subr.bf16.mxu0 0
      %3434 = vmatpush2.bf16.msra.mxu0 0
      %3435 = vmatprep.subr.bf16.mxu0 0
      %3436 = vmatpush2.bf16.msra.mxu0 0
      %3437 = vmatprep.mubr.bf16.mxu0 0
      %3438 = vmatmul.mubr.bf16.gmra.mxu0 %v3400
      %v3439 = vpop.f32.mrf.mxu0
      %v3440 = vadd.f32 %v3386, %v3439
      %v3441 = vpop.f32.mrf.mxu0
      %v3442 = vpop.f32.mrf.mxu0
      %v3443 = vadd.f32 %v3391, %v3442
      %v3444 = vpop.f32.mrf.mxu0
      %3445 = vdwg.mxu0
      %v3446 = vmax.f32 %v3440, 0.0
      %v3447 = vmax.f32 %v3443, 0.0
      %v3448 = vpack.c.bf16 %v3447, %v3446
      %v3449 = vld [vmem:[%s12] sm:$0xff]
      %v3450 = vld [vmem:[%s12 + $0x8] sm:$0x11]
      %v3453 = vunpack.c.l.b16 %v3449
      %v3454 = vunpack.c.h.b16 %v3449
      %v3455 = vunpack.c.l.b16 %v3450
      %v3456 = vunpack.c.h.b16 %v3450
      %v3457 = vpack.c.b16 %v3455, %v3453
      %v3458 = vpack.c.b16 %v3456, %v3454
      %v3460 = vsel %vm2540, %v3448, 0
      %v3463 = vand.u32 %v3457, %v2545
      %v3466 = vand.u32 %v3458, %v2545
      %3468 = vmatprep.subr.bf16.mxu0 0
      %3469 = vmatpush1.bf16.msra.mxu0 0
      %3470 = vmatprep.subr.bf16.mxu0 0
      %3471 = vmatpush1.bf16.msra.mxu0 0
      %3472 = vmatprep.subr.bf16.mxu0 0
      %3473 = vmatpush1.bf16.msra.mxu0 0
      %3474 = vmatprep.subr.bf16.mxu0 0
      %3475 = vmatpush1.bf16.msra.mxu0 0
      %3476 = vmatprep.subr.bf16.mxu0 0
      %3477 = vmatpush1.bf16.msra.mxu0 0
      %3478 = vmatprep.subr.bf16.mxu0 0
      %3479 = vmatpush1.bf16.msra.mxu0 0
      %3480 = vmatprep.subr.bf16.mxu0 0
      %3481 = vmatpush1.bf16.msra.mxu0 0
      %3482 = vmatprep.subr.bf16.mxu0 %v3466
      %3483 = vmatpush1.bf16.msra.mxu0 %v3463
      %3484 = vmatprep.subr.bf16.mxu0 0
      %3485 = vmatpush2.bf16.msra.mxu0 0
      %3486 = vmatprep.subr.bf16.mxu0 0
      %3487 = vmatpush2.bf16.msra.mxu0 0
      %3488 = vmatprep.subr.bf16.mxu0 0
      %3489 = vmatpush2.bf16.msra.mxu0 0
      %3490 = vmatprep.subr.bf16.mxu0 0
      %3491 = vmatpush2.bf16.msra.mxu0 0
      %3492 = vmatprep.subr.bf16.mxu0 0
      %3493 = vmatpush2.bf16.msra.mxu0 0
      %3494 = vmatprep.subr.bf16.mxu0 0
      %3495 = vmatpush2.bf16.msra.mxu0 0
      %3496 = vmatprep.subr.bf16.mxu0 0
      %3497 = vmatpush2.bf16.msra.mxu0 0
      %3498 = vmatprep.subr.bf16.mxu0 0
      %3499 = vmatpush2.bf16.msra.mxu0 0
      %3500 = vmatprep.mubr.bf16.mxu0 0
      %3501 = vmatmul.mubr.bf16.gmra.mxu0 %v3460
      %v3502 = vpop.f32.mrf.mxu0
      %v3503 = vadd.f32 0.0, %v3502
      %v3504 = vpop.f32.mrf.mxu0
      %v3505 = vadd.f32 0.0, %v3504
      %v3506 = vpop.f32.mrf.mxu0
      %v3507 = vadd.f32 0.0, %v3506
      %v3508 = vpop.f32.mrf.mxu0
      %v3509 = vadd.f32 0.0, %v3508
      %3510 = vdwg.mxu0
      %v3511 = vpack.c.bf16 %v3507, %v3503
      %v3512 = vpack.c.bf16 %v3509, %v3505
      %s3513 = scalar_lea.vmem %s12, 16
      %v3514 = vld [vmem:[%s3513] sm:$0xff]
      %v3515 = vld [vmem:[%s3513 + $0x8] sm:$0x11]
      %v3518 = vunpack.c.l.b16 %v3514
      %v3519 = vunpack.c.h.b16 %v3514
      %v3520 = vunpack.c.l.b16 %v3515
      %v3521 = vunpack.c.h.b16 %v3515
      %v3522 = vpack.c.b16 %v3520, %v3518
      %v3523 = vpack.c.b16 %v3521, %v3519
      %v3525 = vand.u32 %v3522, %v2545
      %v3528 = vand.u32 %v3523, %v2545
      %3530 = vmatprep.subr.bf16.mxu0 0
      %3531 = vmatpush1.bf16.msra.mxu0 0
      %3532 = vmatprep.subr.bf16.mxu0 0
      %3533 = vmatpush1.bf16.msra.mxu0 0
      %3534 = vmatprep.subr.bf16.mxu0 0
      %3535 = vmatpush1.bf16.msra.mxu0 0
      %3536 = vmatprep.subr.bf16.mxu0 0
      %3537 = vmatpush1.bf16.msra.mxu0 0
      %3538 = vmatprep.subr.bf16.mxu0 0
      %3539 = vmatpush1.bf16.msra.mxu0 0
      %3540 = vmatprep.subr.bf16.mxu0 0
      %3541 = vmatpush1.bf16.msra.mxu0 0
      %3542 = vmatprep.subr.bf16.mxu0 0
      %3543 = vmatpush1.bf16.msra.mxu0 0
      %3544 = vmatprep.subr.bf16.mxu0 %v3528
      %3545 = vmatpush1.bf16.msra.mxu0 %v3525
      %3546 = vmatprep.subr.bf16.mxu0 0
      %3547 = vmatpush2.bf16.msra.mxu0 0
      %3548 = vmatprep.subr.bf16.mxu0 0
      %3549 = vmatpush2.bf16.msra.mxu0 0
      %3550 = vmatprep.subr.bf16.mxu0 0
      %3551 = vmatpush2.bf16.msra.mxu0 0
      %3552 = vmatprep.subr.bf16.mxu0 0
      %3553 = vmatpush2.bf16.msra.mxu0 0
      %3554 = vmatprep.subr.bf16.mxu0 0
      %3555 = vmatpush2.bf16.msra.mxu0 0
      %3556 = vmatprep.subr.bf16.mxu0 0
      %3557 = vmatpush2.bf16.msra.mxu0 0
      %3558 = vmatprep.subr.bf16.mxu0 0
      %3559 = vmatpush2.bf16.msra.mxu0 0
      %3560 = vmatprep.subr.bf16.mxu0 0
      %3561 = vmatpush2.bf16.msra.mxu0 0
      %3562 = vmatprep.mubr.bf16.mxu0 0
      %3563 = vmatmul.mubr.bf16.gmra.mxu0 %v3460
      %v3564 = vpop.f32.mrf.mxu0
      %v3565 = vadd.f32 0.0, %v3564
      %v3566 = vpop.f32.mrf.mxu0
      %v3567 = vadd.f32 0.0, %v3566
      %v3568 = vpop.f32.mrf.mxu0
      %v3569 = vadd.f32 0.0, %v3568
      %v3570 = vpop.f32.mrf.mxu0
      %v3571 = vadd.f32 0.0, %v3570
      %3572 = vdwg.mxu0
      %v3573 = vpack.c.bf16 %v3569, %v3565
      %v3574 = vpack.c.bf16 %v3571, %v3567
      %s3575 = scalar_lea.vmem %s12, 32
      %v3576 = vld [vmem:[%s3575] sm:$0xff]
      %v3577 = vld [vmem:[%s3575 + $0x8] sm:$0x11]
      %v3580 = vunpack.c.l.b16 %v3576
      %v3581 = vunpack.c.h.b16 %v3576
      %v3582 = vunpack.c.l.b16 %v3577
      %v3583 = vunpack.c.h.b16 %v3577
      %v3584 = vpack.c.b16 %v3582, %v3580
      %v3585 = vpack.c.b16 %v3583, %v3581
      %v3587 = vand.u32 %v3584, %v2545
      %v3590 = vand.u32 %v3585, %v2545
      %3592 = vmatprep.subr.bf16.mxu0 0
      %3593 = vmatpush1.bf16.msra.mxu0 0
      %3594 = vmatprep.subr.bf16.mxu0 0
      %3595 = vmatpush1.bf16.msra.mxu0 0
      %3596 = vmatprep.subr.bf16.mxu0 0
      %3597 = vmatpush1.bf16.msra.mxu0 0
      %3598 = vmatprep.subr.bf16.mxu0 0
      %3599 = vmatpush1.bf16.msra.mxu0 0
      %3600 = vmatprep.subr.bf16.mxu0 0
      %3601 = vmatpush1.bf16.msra.mxu0 0
      %3602 = vmatprep.subr.bf16.mxu0 0
      %3603 = vmatpush1.bf16.msra.mxu0 0
      %3604 = vmatprep.subr.bf16.mxu0 0
      %3605 = vmatpush1.bf16.msra.mxu0 0
      %3606 = vmatprep.subr.bf16.mxu0 %v3590
      %3607 = vmatpush1.bf16.msra.mxu0 %v3587
      %3608 = vmatprep.subr.bf16.mxu0 0
      %3609 = vmatpush2.bf16.msra.mxu0 0
      %3610 = vmatprep.subr.bf16.mxu0 0
      %3611 = vmatpush2.bf16.msra.mxu0 0
      %3612 = vmatprep.subr.bf16.mxu0 0
      %3613 = vmatpush2.bf16.msra.mxu0 0
      %3614 = vmatprep.subr.bf16.mxu0 0
      %3615 = vmatpush2.bf16.msra.mxu0 0
      %3616 = vmatprep.subr.bf16.mxu0 0
      %3617 = vmatpush2.bf16.msra.mxu0 0
      %3618 = vmatprep.subr.bf16.mxu0 0
      %3619 = vmatpush2.bf16.msra.mxu0 0
      %3620 = vmatprep.subr.bf16.mxu0 0
      %3621 = vmatpush2.bf16.msra.mxu0 0
      %3622 = vmatprep.subr.bf16.mxu0 0
      %3623 = vmatpush2.bf16.msra.mxu0 0
      %3624 = vmatprep.mubr.bf16.mxu0 0
      %3625 = vmatmul.mubr.bf16.gmra.mxu0 %v3460
      %v3626 = vpop.f32.mrf.mxu0
      %v3627 = vadd.f32 0.0, %v3626
      %v3628 = vpop.f32.mrf.mxu0
      %v3629 = vadd.f32 0.0, %v3628
      %v3630 = vpop.f32.mrf.mxu0
      %v3631 = vadd.f32 0.0, %v3630
      %v3632 = vpop.f32.mrf.mxu0
      %v3633 = vadd.f32 0.0, %v3632
      %3634 = vdwg.mxu0
      %v3635 = vpack.c.bf16 %v3631, %v3627
      %v3636 = vpack.c.bf16 %v3633, %v3629
      %s3637 = scalar_lea.vmem %s12, 48
      %v3638 = vld [vmem:[%s3637] sm:$0xff]
      %v3639 = vld [vmem:[%s3637 + $0x8] sm:$0x11]
      %v3642 = vunpack.c.l.b16 %v3638
      %v3643 = vunpack.c.h.b16 %v3638
      %v3644 = vunpack.c.l.b16 %v3639
      %v3645 = vunpack.c.h.b16 %v3639
      %v3646 = vpack.c.b16 %v3644, %v3642
      %v3647 = vpack.c.b16 %v3645, %v3643
      %v3649 = vand.u32 %v3646, %v2545
      %v3652 = vand.u32 %v3647, %v2545
      %3654 = vmatprep.subr.bf16.mxu0 0
      %3655 = vmatpush1.bf16.msra.mxu0 0
      %3656 = vmatprep.subr.bf16.mxu0 0
      %3657 = vmatpush1.bf16.msra.mxu0 0
      %3658 = vmatprep.subr.bf16.mxu0 0
      %3659 = vmatpush1.bf16.msra.mxu0 0
      %3660 = vmatprep.subr.bf16.mxu0 0
      %3661 = vmatpush1.bf16.msra.mxu0 0
      %3662 = vmatprep.subr.bf16.mxu0 0
      %3663 = vmatpush1.bf16.msra.mxu0 0
      %3664 = vmatprep.subr.bf16.mxu0 0
      %3665 = vmatpush1.bf16.msra.mxu0 0
      %3666 = vmatprep.subr.bf16.mxu0 0
      %3667 = vmatpush1.bf16.msra.mxu0 0
      %3668 = vmatprep.subr.bf16.mxu0 %v3652
      %3669 = vmatpush1.bf16.msra.mxu0 %v3649
      %3670 = vmatprep.subr.bf16.mxu0 0
      %3671 = vmatpush2.bf16.msra.mxu0 0
      %3672 = vmatprep.subr.bf16.mxu0 0
      %3673 = vmatpush2.bf16.msra.mxu0 0
      %3674 = vmatprep.subr.bf16.mxu0 0
      %3675 = vmatpush2.bf16.msra.mxu0 0
      %3676 = vmatprep.subr.bf16.mxu0 0
      %3677 = vmatpush2.bf16.msra.mxu0 0
      %3678 = vmatprep.subr.bf16.mxu0 0
      %3679 = vmatpush2.bf16.msra.mxu0 0
      %3680 = vmatprep.subr.bf16.mxu0 0
      %3681 = vmatpush2.bf16.msra.mxu0 0
      %3682 = vmatprep.subr.bf16.mxu0 0
      %3683 = vmatpush2.bf16.msra.mxu0 0
      %3684 = vmatprep.subr.bf16.mxu0 0
      %3685 = vmatpush2.bf16.msra.mxu0 0
      %3686 = vmatprep.mubr.bf16.mxu0 0
      %3687 = vmatmul.mubr.bf16.gmra.mxu0 %v3460
      %v3688 = vpop.f32.mrf.mxu0
      %v3689 = vadd.f32 0.0, %v3688
      %v3690 = vpop.f32.mrf.mxu0
      %v3691 = vadd.f32 0.0, %v3690
      %v3692 = vpop.f32.mrf.mxu0
      %v3693 = vadd.f32 0.0, %v3692
      %v3694 = vpop.f32.mrf.mxu0
      %v3695 = vadd.f32 0.0, %v3694
      %3696 = vdwg.mxu0
      %v3697 = vpack.c.bf16 %v3693, %v3689
      %v3698 = vpack.c.bf16 %v3695, %v3691
      %s3699 = scalar_lea.vmem %s12, 64
      %v3700 = vld [vmem:[%s3699] sm:$0xff]
      %v3701 = vld [vmem:[%s3699 + $0x8] sm:$0x11]
      %v3704 = vunpack.c.l.b16 %v3700
      %v3705 = vunpack.c.h.b16 %v3700
      %v3706 = vunpack.c.l.b16 %v3701
      %v3707 = vunpack.c.h.b16 %v3701
      %v3708 = vpack.c.b16 %v3706, %v3704
      %v3709 = vpack.c.b16 %v3707, %v3705
      %v3711 = vand.u32 %v3708, %v2545
      %v3714 = vand.u32 %v3709, %v2545
      %3716 = vmatprep.subr.bf16.mxu0 0
      %3717 = vmatpush1.bf16.msra.mxu0 0
      %3718 = vmatprep.subr.bf16.mxu0 0
      %3719 = vmatpush1.bf16.msra.mxu0 0
      %3720 = vmatprep.subr.bf16.mxu0 0
      %3721 = vmatpush1.bf16.msra.mxu0 0
      %3722 = vmatprep.subr.bf16.mxu0 0
      %3723 = vmatpush1.bf16.msra.mxu0 0
      %3724 = vmatprep.subr.bf16.mxu0 0
      %3725 = vmatpush1.bf16.msra.mxu0 0
      %3726 = vmatprep.subr.bf16.mxu0 0
      %3727 = vmatpush1.bf16.msra.mxu0 0
      %3728 = vmatprep.subr.bf16.mxu0 0
      %3729 = vmatpush1.bf16.msra.mxu0 0
      %3730 = vmatprep.subr.bf16.mxu0 %v3714
      %3731 = vmatpush1.bf16.msra.mxu0 %v3711
      %3732 = vmatprep.subr.bf16.mxu0 0
      %3733 = vmatpush2.bf16.msra.mxu0 0
      %3734 = vmatprep.subr.bf16.mxu0 0
      %3735 = vmatpush2.bf16.msra.mxu0 0
      %3736 = vmatprep.subr.bf16.mxu0 0
      %3737 = vmatpush2.bf16.msra.mxu0 0
      %3738 = vmatprep.subr.bf16.mxu0 0
      %3739 = vmatpush2.bf16.msra.mxu0 0
      %3740 = vmatprep.subr.bf16.mxu0 0
      %3741 = vmatpush2.bf16.msra.mxu0 0
      %3742 = vmatprep.subr.bf16.mxu0 0
      %3743 = vmatpush2.bf16.msra.mxu0 0
      %3744 = vmatprep.subr.bf16.mxu0 0
      %3745 = vmatpush2.bf16.msra.mxu0 0
      %3746 = vmatprep.subr.bf16.mxu0 0
      %3747 = vmatpush2.bf16.msra.mxu0 0
      %3748 = vmatprep.mubr.bf16.mxu0 0
      %3749 = vmatmul.mubr.bf16.gmra.mxu0 %v3460
      %v3750 = vpop.f32.mrf.mxu0
      %v3751 = vadd.f32 0.0, %v3750
      %v3752 = vpop.f32.mrf.mxu0
      %v3753 = vadd.f32 0.0, %v3752
      %v3754 = vpop.f32.mrf.mxu0
      %v3755 = vadd.f32 0.0, %v3754
      %v3756 = vpop.f32.mrf.mxu0
      %v3757 = vadd.f32 0.0, %v3756
      %3758 = vdwg.mxu0
      %v3759 = vpack.c.bf16 %v3755, %v3751
      %v3760 = vpack.c.bf16 %v3757, %v3753
      %s3761 = scalar_lea.vmem %s12, 80
      %v3762 = vld [vmem:[%s3761] sm:$0xff]
      %v3763 = vld [vmem:[%s3761 + $0x8] sm:$0x11]
      %v3766 = vunpack.c.l.b16 %v3762
      %v3767 = vunpack.c.h.b16 %v3762
      %v3768 = vunpack.c.l.b16 %v3763
      %v3769 = vunpack.c.h.b16 %v3763
      %v3770 = vpack.c.b16 %v3768, %v3766
      %v3771 = vpack.c.b16 %v3769, %v3767
      %v3773 = vand.u32 %v3770, %v2545
      %v3776 = vand.u32 %v3771, %v2545
      %3778 = vmatprep.subr.bf16.mxu0 0
      %3779 = vmatpush1.bf16.msra.mxu0 0
      %3780 = vmatprep.subr.bf16.mxu0 0
      %3781 = vmatpush1.bf16.msra.mxu0 0
      %3782 = vmatprep.subr.bf16.mxu0 0
      %3783 = vmatpush1.bf16.msra.mxu0 0
      %3784 = vmatprep.subr.bf16.mxu0 0
      %3785 = vmatpush1.bf16.msra.mxu0 0
      %3786 = vmatprep.subr.bf16.mxu0 0
      %3787 = vmatpush1.bf16.msra.mxu0 0
      %3788 = vmatprep.subr.bf16.mxu0 0
      %3789 = vmatpush1.bf16.msra.mxu0 0
      %3790 = vmatprep.subr.bf16.mxu0 0
      %3791 = vmatpush1.bf16.msra.mxu0 0
      %3792 = vmatprep.subr.bf16.mxu0 %v3776
      %3793 = vmatpush1.bf16.msra.mxu0 %v3773
      %3794 = vmatprep.subr.bf16.mxu0 0
      %3795 = vmatpush2.bf16.msra.mxu0 0
      %3796 = vmatprep.subr.bf16.mxu0 0
      %3797 = vmatpush2.bf16.msra.mxu0 0
      %3798 = vmatprep.subr.bf16.mxu0 0
      %3799 = vmatpush2.bf16.msra.mxu0 0
      %3800 = vmatprep.subr.bf16.mxu0 0
      %3801 = vmatpush2.bf16.msra.mxu0 0
      %3802 = vmatprep.subr.bf16.mxu0 0
      %3803 = vmatpush2.bf16.msra.mxu0 0
      %3804 = vmatprep.subr.bf16.mxu0 0
      %3805 = vmatpush2.bf16.msra.mxu0 0
      %3806 = vmatprep.subr.bf16.mxu0 0
      %3807 = vmatpush2.bf16.msra.mxu0 0
      %3808 = vmatprep.subr.bf16.mxu0 0
      %3809 = vmatpush2.bf16.msra.mxu0 0
      %3810 = vmatprep.mubr.bf16.mxu0 0
      %3811 = vmatmul.mubr.bf16.gmra.mxu0 %v3460
      %v3812 = vpop.f32.mrf.mxu0
      %v3813 = vadd.f32 0.0, %v3812
      %v3814 = vpop.f32.mrf.mxu0
      %v3815 = vadd.f32 0.0, %v3814
      %v3816 = vpop.f32.mrf.mxu0
      %v3817 = vadd.f32 0.0, %v3816
      %v3818 = vpop.f32.mrf.mxu0
      %v3819 = vadd.f32 0.0, %v3818
      %3820 = vdwg.mxu0
      %v3821 = vpack.c.bf16 %v3817, %v3813
      %v3822 = vpack.c.bf16 %v3819, %v3815
      %s3823 = scalar_lea.vmem %s12, 96
      %v3824 = vld [vmem:[%s3823] sm:$0xff]
      %v3825 = vld [vmem:[%s3823 + $0x8] sm:$0x11]
      %v3828 = vunpack.c.l.b16 %v3824
      %v3829 = vunpack.c.h.b16 %v3824
      %v3830 = vunpack.c.l.b16 %v3825
      %v3831 = vunpack.c.h.b16 %v3825
      %v3832 = vpack.c.b16 %v3830, %v3828
      %v3833 = vpack.c.b16 %v3831, %v3829
      %v3835 = vand.u32 %v3832, %v2545
      %v3838 = vand.u32 %v3833, %v2545
      %3840 = vmatprep.subr.bf16.mxu0 0
      %3841 = vmatpush1.bf16.msra.mxu0 0
      %3842 = vmatprep.subr.bf16.mxu0 0
      %3843 = vmatpush1.bf16.msra.mxu0 0
      %3844 = vmatprep.subr.bf16.mxu0 0
      %3845 = vmatpush1.bf16.msra.mxu0 0
      %3846 = vmatprep.subr.bf16.mxu0 0
      %3847 = vmatpush1.bf16.msra.mxu0 0
      %3848 = vmatprep.subr.bf16.mxu0 0
      %3849 = vmatpush1.bf16.msra.mxu0 0
      %3850 = vmatprep.subr.bf16.mxu0 0
      %3851 = vmatpush1.bf16.msra.mxu0 0
      %3852 = vmatprep.subr.bf16.mxu0 0
      %3853 = vmatpush1.bf16.msra.mxu0 0
      %3854 = vmatprep.subr.bf16.mxu0 %v3838
      %3855 = vmatpush1.bf16.msra.mxu0 %v3835
      %3856 = vmatprep.subr.bf16.mxu0 0
      %3857 = vmatpush2.bf16.msra.mxu0 0
      %3858 = vmatprep.subr.bf16.mxu0 0
      %3859 = vmatpush2.bf16.msra.mxu0 0
      %3860 = vmatprep.subr.bf16.mxu0 0
      %3861 = vmatpush2.bf16.msra.mxu0 0
      %3862 = vmatprep.subr.bf16.mxu0 0
      %3863 = vmatpush2.bf16.msra.mxu0 0
      %3864 = vmatprep.subr.bf16.mxu0 0
      %3865 = vmatpush2.bf16.msra.mxu0 0
      %3866 = vmatprep.subr.bf16.mxu0 0
      %3867 = vmatpush2.bf16.msra.mxu0 0
      %3868 = vmatprep.subr.bf16.mxu0 0
      %3869 = vmatpush2.bf16.msra.mxu0 0
      %3870 = vmatprep.subr.bf16.mxu0 0
      %3871 = vmatpush2.bf16.msra.mxu0 0
      %3872 = vmatprep.mubr.bf16.mxu0 0
      %3873 = vmatmul.mubr.bf16.gmra.mxu0 %v3460
      %v3874 = vpop.f32.mrf.mxu0
      %v3875 = vadd.f32 0.0, %v3874
      %v3876 = vpop.f32.mrf.mxu0
      %v3877 = vadd.f32 0.0, %v3876
      %v3878 = vpop.f32.mrf.mxu0
      %v3879 = vadd.f32 0.0, %v3878
      %v3880 = vpop.f32.mrf.mxu0
      %v3881 = vadd.f32 0.0, %v3880
      %3882 = vdwg.mxu0
      %v3883 = vpack.c.bf16 %v3879, %v3875
      %v3884 = vpack.c.bf16 %v3881, %v3877
      %s3885 = scalar_lea.vmem %s12, 112
      %v3886 = vld [vmem:[%s3885] sm:$0xff]
      %v3887 = vld [vmem:[%s3885 + $0x8] sm:$0x11]
      %v3890 = vunpack.c.l.b16 %v3886
      %v3891 = vunpack.c.h.b16 %v3886
      %v3892 = vunpack.c.l.b16 %v3887
      %v3893 = vunpack.c.h.b16 %v3887
      %v3894 = vpack.c.b16 %v3892, %v3890
      %v3895 = vpack.c.b16 %v3893, %v3891
      %v3897 = vand.u32 %v3894, %v2545
      %v3900 = vand.u32 %v3895, %v2545
      %3902 = vmatprep.subr.bf16.mxu0 0
      %3903 = vmatpush1.bf16.msra.mxu0 0
      %3904 = vmatprep.subr.bf16.mxu0 0
      %3905 = vmatpush1.bf16.msra.mxu0 0
      %3906 = vmatprep.subr.bf16.mxu0 0
      %3907 = vmatpush1.bf16.msra.mxu0 0
      %3908 = vmatprep.subr.bf16.mxu0 0
      %3909 = vmatpush1.bf16.msra.mxu0 0
      %3910 = vmatprep.subr.bf16.mxu0 0
      %3911 = vmatpush1.bf16.msra.mxu0 0
      %3912 = vmatprep.subr.bf16.mxu0 0
      %3913 = vmatpush1.bf16.msra.mxu0 0
      %3914 = vmatprep.subr.bf16.mxu0 0
      %3915 = vmatpush1.bf16.msra.mxu0 0
      %3916 = vmatprep.subr.bf16.mxu0 %v3900
      %3917 = vmatpush1.bf16.msra.mxu0 %v3897
      %3918 = vmatprep.subr.bf16.mxu0 0
      %3919 = vmatpush2.bf16.msra.mxu0 0
      %3920 = vmatprep.subr.bf16.mxu0 0
      %3921 = vmatpush2.bf16.msra.mxu0 0
      %3922 = vmatprep.subr.bf16.mxu0 0
      %3923 = vmatpush2.bf16.msra.mxu0 0
      %3924 = vmatprep.subr.bf16.mxu0 0
      %3925 = vmatpush2.bf16.msra.mxu0 0
      %3926 = vmatprep.subr.bf16.mxu0 0
      %3927 = vmatpush2.bf16.msra.mxu0 0
      %3928 = vmatprep.subr.bf16.mxu0 0
      %3929 = vmatpush2.bf16.msra.mxu0 0
      %3930 = vmatprep.subr.bf16.mxu0 0
      %3931 = vmatpush2.bf16.msra.mxu0 0
      %3932 = vmatprep.subr.bf16.mxu0 0
      %3933 = vmatpush2.bf16.msra.mxu0 0
      %3934 = vmatprep.mubr.bf16.mxu0 0
      %3935 = vmatmul.mubr.bf16.gmra.mxu0 %v3460
      %v3936 = vpop.f32.mrf.mxu0
      %v3937 = vadd.f32 0.0, %v3936
      %v3938 = vpop.f32.mrf.mxu0
      %v3939 = vadd.f32 0.0, %v3938
      %v3940 = vpop.f32.mrf.mxu0
      %v3941 = vadd.f32 0.0, %v3940
      %v3942 = vpop.f32.mrf.mxu0
      %v3943 = vadd.f32 0.0, %v3942
      %3944 = vdwg.mxu0
      %v3945 = vpack.c.bf16 %v3941, %v3937
      %v3946 = vpack.c.bf16 %v3943, %v3939
      %s3947 = scalar_lea.vmem %s12, 128
      %v3948 = vld [vmem:[%s3947] sm:$0xff]
      %v3949 = vld [vmem:[%s3947 + $0x8] sm:$0x11]
      %v3952 = vunpack.c.l.b16 %v3948
      %v3953 = vunpack.c.h.b16 %v3948
      %v3954 = vunpack.c.l.b16 %v3949
      %v3955 = vunpack.c.h.b16 %v3949
      %v3956 = vpack.c.b16 %v3954, %v3952
      %v3957 = vpack.c.b16 %v3955, %v3953
      %v3959 = vand.u32 %v3956, %v2545
      %v3962 = vand.u32 %v3957, %v2545
      %3964 = vmatprep.subr.bf16.mxu0 0
      %3965 = vmatpush1.bf16.msra.mxu0 0
      %3966 = vmatprep.subr.bf16.mxu0 0
      %3967 = vmatpush1.bf16.msra.mxu0 0
      %3968 = vmatprep.subr.bf16.mxu0 0
      %3969 = vmatpush1.bf16.msra.mxu0 0
      %3970 = vmatprep.subr.bf16.mxu0 0
      %3971 = vmatpush1.bf16.msra.mxu0 0
      %3972 = vmatprep.subr.bf16.mxu0 0
      %3973 = vmatpush1.bf16.msra.mxu0 0
      %3974 = vmatprep.subr.bf16.mxu0 0
      %3975 = vmatpush1.bf16.msra.mxu0 0
      %3976 = vmatprep.subr.bf16.mxu0 0
      %3977 = vmatpush1.bf16.msra.mxu0 0
      %3978 = vmatprep.subr.bf16.mxu0 %v3962
      %3979 = vmatpush1.bf16.msra.mxu0 %v3959
      %3980 = vmatprep.subr.bf16.mxu0 0
      %3981 = vmatpush2.bf16.msra.mxu0 0
      %3982 = vmatprep.subr.bf16.mxu0 0
      %3983 = vmatpush2.bf16.msra.mxu0 0
      %3984 = vmatprep.subr.bf16.mxu0 0
      %3985 = vmatpush2.bf16.msra.mxu0 0
      %3986 = vmatprep.subr.bf16.mxu0 0
      %3987 = vmatpush2.bf16.msra.mxu0 0
      %3988 = vmatprep.subr.bf16.mxu0 0
      %3989 = vmatpush2.bf16.msra.mxu0 0
      %3990 = vmatprep.subr.bf16.mxu0 0
      %3991 = vmatpush2.bf16.msra.mxu0 0
      %3992 = vmatprep.subr.bf16.mxu0 0
      %3993 = vmatpush2.bf16.msra.mxu0 0
      %3994 = vmatprep.subr.bf16.mxu0 0
      %3995 = vmatpush2.bf16.msra.mxu0 0
      %3996 = vmatprep.mubr.bf16.mxu0 0
      %3997 = vmatmul.mubr.bf16.gmra.mxu0 %v3460
      %v3998 = vpop.f32.mrf.mxu0
      %v3999 = vadd.f32 0.0, %v3998
      %v4000 = vpop.f32.mrf.mxu0
      %v4001 = vadd.f32 0.0, %v4000
      %v4002 = vpop.f32.mrf.mxu0
      %v4003 = vadd.f32 0.0, %v4002
      %v4004 = vpop.f32.mrf.mxu0
      %v4005 = vadd.f32 0.0, %v4004
      %4006 = vdwg.mxu0
      %v4007 = vpack.c.bf16 %v4003, %v3999
      %v4008 = vpack.c.bf16 %v4005, %v4001
      %s4009 = scalar_lea.vmem %s12, 144
      %v4010 = vld [vmem:[%s4009] sm:$0xff]
      %v4011 = vld [vmem:[%s4009 + $0x8] sm:$0x11]
      %v4014 = vunpack.c.l.b16 %v4010
      %v4015 = vunpack.c.h.b16 %v4010
      %v4016 = vunpack.c.l.b16 %v4011
      %v4017 = vunpack.c.h.b16 %v4011
      %v4018 = vpack.c.b16 %v4016, %v4014
      %v4019 = vpack.c.b16 %v4017, %v4015
      %v4021 = vand.u32 %v4018, %v2545
      %v4024 = vand.u32 %v4019, %v2545
      %4026 = vmatprep.subr.bf16.mxu0 0
      %4027 = vmatpush1.bf16.msra.mxu0 0
      %4028 = vmatprep.subr.bf16.mxu0 0
      %4029 = vmatpush1.bf16.msra.mxu0 0
      %4030 = vmatprep.subr.bf16.mxu0 0
      %4031 = vmatpush1.bf16.msra.mxu0 0
      %4032 = vmatprep.subr.bf16.mxu0 0
      %4033 = vmatpush1.bf16.msra.mxu0 0
      %4034 = vmatprep.subr.bf16.mxu0 0
      %4035 = vmatpush1.bf16.msra.mxu0 0
      %4036 = vmatprep.subr.bf16.mxu0 0
      %4037 = vmatpush1.bf16.msra.mxu0 0
      %4038 = vmatprep.subr.bf16.mxu0 0
      %4039 = vmatpush1.bf16.msra.mxu0 0
      %4040 = vmatprep.subr.bf16.mxu0 %v4024
      %4041 = vmatpush1.bf16.msra.mxu0 %v4021
      %4042 = vmatprep.subr.bf16.mxu0 0
      %4043 = vmatpush2.bf16.msra.mxu0 0
      %4044 = vmatprep.subr.bf16.mxu0 0
      %4045 = vmatpush2.bf16.msra.mxu0 0
      %4046 = vmatprep.subr.bf16.mxu0 0
      %4047 = vmatpush2.bf16.msra.mxu0 0
      %4048 = vmatprep.subr.bf16.mxu0 0
      %4049 = vmatpush2.bf16.msra.mxu0 0
      %4050 = vmatprep.subr.bf16.mxu0 0
      %4051 = vmatpush2.bf16.msra.mxu0 0
      %4052 = vmatprep.subr.bf16.mxu0 0
      %4053 = vmatpush2.bf16.msra.mxu0 0
      %4054 = vmatprep.subr.bf16.mxu0 0
      %4055 = vmatpush2.bf16.msra.mxu0 0
      %4056 = vmatprep.subr.bf16.mxu0 0
      %4057 = vmatpush2.bf16.msra.mxu0 0
      %4058 = vmatprep.mubr.bf16.mxu0 0
      %4059 = vmatmul.mubr.bf16.gmra.mxu0 %v3460
      %v4060 = vpop.f32.mrf.mxu0
      %v4061 = vadd.f32 0.0, %v4060
      %v4062 = vpop.f32.mrf.mxu0
      %v4063 = vadd.f32 0.0, %v4062
      %v4064 = vpop.f32.mrf.mxu0
      %v4065 = vadd.f32 0.0, %v4064
      %v4066 = vpop.f32.mrf.mxu0
      %v4067 = vadd.f32 0.0, %v4066
      %4068 = vdwg.mxu0
      %v4069 = vpack.c.bf16 %v4065, %v4061
      %v4070 = vpack.c.bf16 %v4067, %v4063
      %s4071 = scalar_lea.vmem %s12, 160
      %v4072 = vld [vmem:[%s4071] sm:$0xff]
      %v4073 = vld [vmem:[%s4071 + $0x8] sm:$0x11]
      %v4076 = vunpack.c.l.b16 %v4072
      %v4077 = vunpack.c.h.b16 %v4072
      %v4078 = vunpack.c.l.b16 %v4073
      %v4079 = vunpack.c.h.b16 %v4073
      %v4080 = vpack.c.b16 %v4078, %v4076
      %v4081 = vpack.c.b16 %v4079, %v4077
      %v4083 = vand.u32 %v4080, %v2545
      %v4086 = vand.u32 %v4081, %v2545
      %4088 = vmatprep.subr.bf16.mxu0 0
      %4089 = vmatpush1.bf16.msra.mxu0 0
      %4090 = vmatprep.subr.bf16.mxu0 0
      %4091 = vmatpush1.bf16.msra.mxu0 0
      %4092 = vmatprep.subr.bf16.mxu0 0
      %4093 = vmatpush1.bf16.msra.mxu0 0
      %4094 = vmatprep.subr.bf16.mxu0 0
      %4095 = vmatpush1.bf16.msra.mxu0 0
      %4096 = vmatprep.subr.bf16.mxu0 0
      %4097 = vmatpush1.bf16.msra.mxu0 0
      %4098 = vmatprep.subr.bf16.mxu0 0
      %4099 = vmatpush1.bf16.msra.mxu0 0
      %4100 = vmatprep.subr.bf16.mxu0 0
      %4101 = vmatpush1.bf16.msra.mxu0 0
      %4102 = vmatprep.subr.bf16.mxu0 %v4086
      %4103 = vmatpush1.bf16.msra.mxu0 %v4083
      %4104 = vmatprep.subr.bf16.mxu0 0
      %4105 = vmatpush2.bf16.msra.mxu0 0
      %4106 = vmatprep.subr.bf16.mxu0 0
      %4107 = vmatpush2.bf16.msra.mxu0 0
      %4108 = vmatprep.subr.bf16.mxu0 0
      %4109 = vmatpush2.bf16.msra.mxu0 0
      %4110 = vmatprep.subr.bf16.mxu0 0
      %4111 = vmatpush2.bf16.msra.mxu0 0
      %4112 = vmatprep.subr.bf16.mxu0 0
      %4113 = vmatpush2.bf16.msra.mxu0 0
      %4114 = vmatprep.subr.bf16.mxu0 0
      %4115 = vmatpush2.bf16.msra.mxu0 0
      %4116 = vmatprep.subr.bf16.mxu0 0
      %4117 = vmatpush2.bf16.msra.mxu0 0
      %4118 = vmatprep.subr.bf16.mxu0 0
      %4119 = vmatpush2.bf16.msra.mxu0 0
      %4120 = vmatprep.mubr.bf16.mxu0 0
      %4121 = vmatmul.mubr.bf16.gmra.mxu0 %v3460
      %v4122 = vpop.f32.mrf.mxu0
      %v4123 = vadd.f32 0.0, %v4122
      %v4124 = vpop.f32.mrf.mxu0
      %v4125 = vadd.f32 0.0, %v4124
      %v4126 = vpop.f32.mrf.mxu0
      %v4127 = vadd.f32 0.0, %v4126
      %v4128 = vpop.f32.mrf.mxu0
      %v4129 = vadd.f32 0.0, %v4128
      %4130 = vdwg.mxu0
      %v4131 = vpack.c.bf16 %v4127, %v4123
      %v4132 = vpack.c.bf16 %v4129, %v4125
      %s4133 = scalar_lea.vmem %s12, 176
      %v4134 = vld [vmem:[%s4133] sm:$0xff]
      %v4135 = vld [vmem:[%s4133 + $0x8] sm:$0x11]
      %v4138 = vunpack.c.l.b16 %v4134
      %v4139 = vunpack.c.h.b16 %v4134
      %v4140 = vunpack.c.l.b16 %v4135
      %v4141 = vunpack.c.h.b16 %v4135
      %v4142 = vpack.c.b16 %v4140, %v4138
      %v4143 = vpack.c.b16 %v4141, %v4139
      %v4145 = vand.u32 %v4142, %v2545
      %v4148 = vand.u32 %v4143, %v2545
      %4150 = vmatprep.subr.bf16.mxu0 0
      %4151 = vmatpush1.bf16.msra.mxu0 0
      %4152 = vmatprep.subr.bf16.mxu0 0
      %4153 = vmatpush1.bf16.msra.mxu0 0
      %4154 = vmatprep.subr.bf16.mxu0 0
      %4155 = vmatpush1.bf16.msra.mxu0 0
      %4156 = vmatprep.subr.bf16.mxu0 0
      %4157 = vmatpush1.bf16.msra.mxu0 0
      %4158 = vmatprep.subr.bf16.mxu0 0
      %4159 = vmatpush1.bf16.msra.mxu0 0
      %4160 = vmatprep.subr.bf16.mxu0 0
      %4161 = vmatpush1.bf16.msra.mxu0 0
      %4162 = vmatprep.subr.bf16.mxu0 0
      %4163 = vmatpush1.bf16.msra.mxu0 0
      %4164 = vmatprep.subr.bf16.mxu0 %v4148
      %4165 = vmatpush1.bf16.msra.mxu0 %v4145
      %4166 = vmatprep.subr.bf16.mxu0 0
      %4167 = vmatpush2.bf16.msra.mxu0 0
      %4168 = vmatprep.subr.bf16.mxu0 0
      %4169 = vmatpush2.bf16.msra.mxu0 0
      %4170 = vmatprep.subr.bf16.mxu0 0
      %4171 = vmatpush2.bf16.msra.mxu0 0
      %4172 = vmatprep.subr.bf16.mxu0 0
      %4173 = vmatpush2.bf16.msra.mxu0 0
      %4174 = vmatprep.subr.bf16.mxu0 0
      %4175 = vmatpush2.bf16.msra.mxu0 0
      %4176 = vmatprep.subr.bf16.mxu0 0
      %4177 = vmatpush2.bf16.msra.mxu0 0
      %4178 = vmatprep.subr.bf16.mxu0 0
      %4179 = vmatpush2.bf16.msra.mxu0 0
      %4180 = vmatprep.subr.bf16.mxu0 0
      %4181 = vmatpush2.bf16.msra.mxu0 0
      %4182 = vmatprep.mubr.bf16.mxu0 0
      %4183 = vmatmul.mubr.bf16.gmra.mxu0 %v3460
      %v4184 = vpop.f32.mrf.mxu0
      %v4185 = vadd.f32 0.0, %v4184
      %v4186 = vpop.f32.mrf.mxu0
      %v4187 = vadd.f32 0.0, %v4186
      %v4188 = vpop.f32.mrf.mxu0
      %v4189 = vadd.f32 0.0, %v4188
      %v4190 = vpop.f32.mrf.mxu0
      %v4191 = vadd.f32 0.0, %v4190
      %4192 = vdwg.mxu0
      %v4193 = vpack.c.bf16 %v4189, %v4185
      %v4194 = vpack.c.bf16 %v4191, %v4187
      %s4195 = scalar_lea.vmem %s12, 192
      %v4196 = vld [vmem:[%s4195] sm:$0xff]
      %v4197 = vld [vmem:[%s4195 + $0x8] sm:$0x11]
      %v4200 = vunpack.c.l.b16 %v4196
      %v4201 = vunpack.c.h.b16 %v4196
      %v4202 = vunpack.c.l.b16 %v4197
      %v4203 = vunpack.c.h.b16 %v4197
      %v4204 = vpack.c.b16 %v4202, %v4200
      %v4205 = vpack.c.b16 %v4203, %v4201
      %v4207 = vand.u32 %v4204, %v2545
      %v4210 = vand.u32 %v4205, %v2545
      %4212 = vmatprep.subr.bf16.mxu0 0
      %4213 = vmatpush1.bf16.msra.mxu0 0
      %4214 = vmatprep.subr.bf16.mxu0 0
      %4215 = vmatpush1.bf16.msra.mxu0 0
      %4216 = vmatprep.subr.bf16.mxu0 0
      %4217 = vmatpush1.bf16.msra.mxu0 0
      %4218 = vmatprep.subr.bf16.mxu0 0
      %4219 = vmatpush1.bf16.msra.mxu0 0
      %4220 = vmatprep.subr.bf16.mxu0 0
      %4221 = vmatpush1.bf16.msra.mxu0 0
      %4222 = vmatprep.subr.bf16.mxu0 0
      %4223 = vmatpush1.bf16.msra.mxu0 0
      %4224 = vmatprep.subr.bf16.mxu0 0
      %4225 = vmatpush1.bf16.msra.mxu0 0
      %4226 = vmatprep.subr.bf16.mxu0 %v4210
      %4227 = vmatpush1.bf16.msra.mxu0 %v4207
      %4228 = vmatprep.subr.bf16.mxu0 0
      %4229 = vmatpush2.bf16.msra.mxu0 0
      %4230 = vmatprep.subr.bf16.mxu0 0
      %4231 = vmatpush2.bf16.msra.mxu0 0
      %4232 = vmatprep.subr.bf16.mxu0 0
      %4233 = vmatpush2.bf16.msra.mxu0 0
      %4234 = vmatprep.subr.bf16.mxu0 0
      %4235 = vmatpush2.bf16.msra.mxu0 0
      %4236 = vmatprep.subr.bf16.mxu0 0
      %4237 = vmatpush2.bf16.msra.mxu0 0
      %4238 = vmatprep.subr.bf16.mxu0 0
      %4239 = vmatpush2.bf16.msra.mxu0 0
      %4240 = vmatprep.subr.bf16.mxu0 0
      %4241 = vmatpush2.bf16.msra.mxu0 0
      %4242 = vmatprep.subr.bf16.mxu0 0
      %4243 = vmatpush2.bf16.msra.mxu0 0
      %4244 = vmatprep.mubr.bf16.mxu0 0
      %4245 = vmatmul.mubr.bf16.gmra.mxu0 %v3460
      %v4246 = vpop.f32.mrf.mxu0
      %v4247 = vadd.f32 0.0, %v4246
      %v4248 = vpop.f32.mrf.mxu0
      %v4249 = vadd.f32 0.0, %v4248
      %v4250 = vpop.f32.mrf.mxu0
      %v4251 = vadd.f32 0.0, %v4250
      %v4252 = vpop.f32.mrf.mxu0
      %v4253 = vadd.f32 0.0, %v4252
      %4254 = vdwg.mxu0
      %v4255 = vpack.c.bf16 %v4251, %v4247
      %v4256 = vpack.c.bf16 %v4253, %v4249
      %s4257 = scalar_lea.vmem %s12, 208
      %v4258 = vld [vmem:[%s4257] sm:$0xff]
      %v4259 = vld [vmem:[%s4257 + $0x8] sm:$0x11]
      %v4262 = vunpack.c.l.b16 %v4258
      %v4263 = vunpack.c.h.b16 %v4258
      %v4264 = vunpack.c.l.b16 %v4259
      %v4265 = vunpack.c.h.b16 %v4259
      %v4266 = vpack.c.b16 %v4264, %v4262
      %v4267 = vpack.c.b16 %v4265, %v4263
      %v4269 = vand.u32 %v4266, %v2545
      %v4272 = vand.u32 %v4267, %v2545
      %4274 = vmatprep.subr.bf16.mxu0 0
      %4275 = vmatpush1.bf16.msra.mxu0 0
      %4276 = vmatprep.subr.bf16.mxu0 0
      %4277 = vmatpush1.bf16.msra.mxu0 0
      %4278 = vmatprep.subr.bf16.mxu0 0
      %4279 = vmatpush1.bf16.msra.mxu0 0
      %4280 = vmatprep.subr.bf16.mxu0 0
      %4281 = vmatpush1.bf16.msra.mxu0 0
      %4282 = vmatprep.subr.bf16.mxu0 0
      %4283 = vmatpush1.bf16.msra.mxu0 0
      %4284 = vmatprep.subr.bf16.mxu0 0
      %4285 = vmatpush1.bf16.msra.mxu0 0
      %4286 = vmatprep.subr.bf16.mxu0 0
      %4287 = vmatpush1.bf16.msra.mxu0 0
      %4288 = vmatprep.subr.bf16.mxu0 %v4272
      %4289 = vmatpush1.bf16.msra.mxu0 %v4269
      %4290 = vmatprep.subr.bf16.mxu0 0
      %4291 = vmatpush2.bf16.msra.mxu0 0
      %4292 = vmatprep.subr.bf16.mxu0 0
      %4293 = vmatpush2.bf16.msra.mxu0 0
      %4294 = vmatprep.subr.bf16.mxu0 0
      %4295 = vmatpush2.bf16.msra.mxu0 0
      %4296 = vmatprep.subr.bf16.mxu0 0
      %4297 = vmatpush2.bf16.msra.mxu0 0
      %4298 = vmatprep.subr.bf16.mxu0 0
      %4299 = vmatpush2.bf16.msra.mxu0 0
      %4300 = vmatprep.subr.bf16.mxu0 0
      %4301 = vmatpush2.bf16.msra.mxu0 0
      %4302 = vmatprep.subr.bf16.mxu0 0
      %4303 = vmatpush2.bf16.msra.mxu0 0
      %4304 = vmatprep.subr.bf16.mxu0 0
      %4305 = vmatpush2.bf16.msra.mxu0 0
      %4306 = vmatprep.mubr.bf16.mxu0 0
      %4307 = vmatmul.mubr.bf16.gmra.mxu0 %v3460
      %v4308 = vpop.f32.mrf.mxu0
      %v4309 = vadd.f32 0.0, %v4308
      %v4310 = vpop.f32.mrf.mxu0
      %v4311 = vadd.f32 0.0, %v4310
      %v4312 = vpop.f32.mrf.mxu0
      %v4313 = vadd.f32 0.0, %v4312
      %v4314 = vpop.f32.mrf.mxu0
      %v4315 = vadd.f32 0.0, %v4314
      %4316 = vdwg.mxu0
      %v4317 = vpack.c.bf16 %v4313, %v4309
      %v4318 = vpack.c.bf16 %v4315, %v4311
      %s4319 = scalar_lea.vmem %s12, 224
      %v4320 = vld [vmem:[%s4319] sm:$0xff]
      %v4321 = vld [vmem:[%s4319 + $0x8] sm:$0x11]
      %v4324 = vunpack.c.l.b16 %v4320
      %v4325 = vunpack.c.h.b16 %v4320
      %v4326 = vunpack.c.l.b16 %v4321
      %v4327 = vunpack.c.h.b16 %v4321
      %v4328 = vpack.c.b16 %v4326, %v4324
      %v4329 = vpack.c.b16 %v4327, %v4325
      %v4331 = vand.u32 %v4328, %v2545
      %v4334 = vand.u32 %v4329, %v2545
      %4336 = vmatprep.subr.bf16.mxu0 0
      %4337 = vmatpush1.bf16.msra.mxu0 0
      %4338 = vmatprep.subr.bf16.mxu0 0
      %4339 = vmatpush1.bf16.msra.mxu0 0
      %4340 = vmatprep.subr.bf16.mxu0 0
      %4341 = vmatpush1.bf16.msra.mxu0 0
      %4342 = vmatprep.subr.bf16.mxu0 0
      %4343 = vmatpush1.bf16.msra.mxu0 0
      %4344 = vmatprep.subr.bf16.mxu0 0
      %4345 = vmatpush1.bf16.msra.mxu0 0
      %4346 = vmatprep.subr.bf16.mxu0 0
      %4347 = vmatpush1.bf16.msra.mxu0 0
      %4348 = vmatprep.subr.bf16.mxu0 0
      %4349 = vmatpush1.bf16.msra.mxu0 0
      %4350 = vmatprep.subr.bf16.mxu0 %v4334
      %4351 = vmatpush1.bf16.msra.mxu0 %v4331
      %4352 = vmatprep.subr.bf16.mxu0 0
      %4353 = vmatpush2.bf16.msra.mxu0 0
      %4354 = vmatprep.subr.bf16.mxu0 0
      %4355 = vmatpush2.bf16.msra.mxu0 0
      %4356 = vmatprep.subr.bf16.mxu0 0
      %4357 = vmatpush2.bf16.msra.mxu0 0
      %4358 = vmatprep.subr.bf16.mxu0 0
      %4359 = vmatpush2.bf16.msra.mxu0 0
      %4360 = vmatprep.subr.bf16.mxu0 0
      %4361 = vmatpush2.bf16.msra.mxu0 0
      %4362 = vmatprep.subr.bf16.mxu0 0
      %4363 = vmatpush2.bf16.msra.mxu0 0
      %4364 = vmatprep.subr.bf16.mxu0 0
      %4365 = vmatpush2.bf16.msra.mxu0 0
      %4366 = vmatprep.subr.bf16.mxu0 0
      %4367 = vmatpush2.bf16.msra.mxu0 0
      %4368 = vmatprep.mubr.bf16.mxu0 0
      %4369 = vmatmul.mubr.bf16.gmra.mxu0 %v3460
      %v4370 = vpop.f32.mrf.mxu0
      %v4371 = vadd.f32 0.0, %v4370
      %v4372 = vpop.f32.mrf.mxu0
      %v4373 = vadd.f32 0.0, %v4372
      %v4374 = vpop.f32.mrf.mxu0
      %v4375 = vadd.f32 0.0, %v4374
      %v4376 = vpop.f32.mrf.mxu0
      %v4377 = vadd.f32 0.0, %v4376
      %4378 = vdwg.mxu0
      %v4379 = vpack.c.bf16 %v4375, %v4371
      %v4380 = vpack.c.bf16 %v4377, %v4373
      %s4381 = scalar_lea.vmem %s12, 240
      %v4382 = vld [vmem:[%s4381] sm:$0xff]
      %v4383 = vld [vmem:[%s4381 + $0x8] sm:$0x11]
      %v4386 = vunpack.c.l.b16 %v4382
      %v4387 = vunpack.c.h.b16 %v4382
      %v4388 = vunpack.c.l.b16 %v4383
      %v4389 = vunpack.c.h.b16 %v4383
      %v4390 = vpack.c.b16 %v4388, %v4386
      %v4391 = vpack.c.b16 %v4389, %v4387
      %v4393 = vand.u32 %v4390, %v2545
      %v4396 = vand.u32 %v4391, %v2545
      %4398 = vmatprep.subr.bf16.mxu0 0
      %4399 = vmatpush1.bf16.msra.mxu0 0
      %4400 = vmatprep.subr.bf16.mxu0 0
      %4401 = vmatpush1.bf16.msra.mxu0 0
      %4402 = vmatprep.subr.bf16.mxu0 0
      %4403 = vmatpush1.bf16.msra.mxu0 0
      %4404 = vmatprep.subr.bf16.mxu0 0
      %4405 = vmatpush1.bf16.msra.mxu0 0
      %4406 = vmatprep.subr.bf16.mxu0 0
      %4407 = vmatpush1.bf16.msra.mxu0 0
      %4408 = vmatprep.subr.bf16.mxu0 0
      %4409 = vmatpush1.bf16.msra.mxu0 0
      %4410 = vmatprep.subr.bf16.mxu0 0
      %4411 = vmatpush1.bf16.msra.mxu0 0
      %4412 = vmatprep.subr.bf16.mxu0 %v4396
      %4413 = vmatpush1.bf16.msra.mxu0 %v4393
      %4414 = vmatprep.subr.bf16.mxu0 0
      %4415 = vmatpush2.bf16.msra.mxu0 0
      %4416 = vmatprep.subr.bf16.mxu0 0
      %4417 = vmatpush2.bf16.msra.mxu0 0
      %4418 = vmatprep.subr.bf16.mxu0 0
      %4419 = vmatpush2.bf16.msra.mxu0 0
      %4420 = vmatprep.subr.bf16.mxu0 0
      %4421 = vmatpush2.bf16.msra.mxu0 0
      %4422 = vmatprep.subr.bf16.mxu0 0
      %4423 = vmatpush2.bf16.msra.mxu0 0
      %4424 = vmatprep.subr.bf16.mxu0 0
      %4425 = vmatpush2.bf16.msra.mxu0 0
      %4426 = vmatprep.subr.bf16.mxu0 0
      %4427 = vmatpush2.bf16.msra.mxu0 0
      %4428 = vmatprep.subr.bf16.mxu0 0
      %4429 = vmatpush2.bf16.msra.mxu0 0
      %4430 = vmatprep.mubr.bf16.mxu0 0
      %4431 = vmatmul.mubr.bf16.gmra.mxu0 %v3460
      %v4432 = vpop.f32.mrf.mxu0
      %v4433 = vadd.f32 0.0, %v4432
      %v4434 = vpop.f32.mrf.mxu0
      %v4435 = vadd.f32 0.0, %v4434
      %v4436 = vpop.f32.mrf.mxu0
      %v4437 = vadd.f32 0.0, %v4436
      %v4438 = vpop.f32.mrf.mxu0
      %v4439 = vadd.f32 0.0, %v4438
      %4440 = vdwg.mxu0
      %v4441 = vpack.c.bf16 %v4437, %v4433
      %v4442 = vpack.c.bf16 %v4439, %v4435
      %s4443 = scalar_lea.vmem %s12, 256
      %v4444 = vld [vmem:[%s4443] sm:$0xff]
      %v4445 = vld [vmem:[%s4443 + $0x8] sm:$0x11]
      %v4448 = vunpack.c.l.b16 %v4444
      %v4449 = vunpack.c.h.b16 %v4444
      %v4450 = vunpack.c.l.b16 %v4445
      %v4451 = vunpack.c.h.b16 %v4445
      %v4452 = vpack.c.b16 %v4450, %v4448
      %v4453 = vpack.c.b16 %v4451, %v4449
      %v4455 = vand.u32 %v4452, %v2545
      %v4458 = vand.u32 %v4453, %v2545
      %4460 = vmatprep.subr.bf16.mxu0 0
      %4461 = vmatpush1.bf16.msra.mxu0 0
      %4462 = vmatprep.subr.bf16.mxu0 0
      %4463 = vmatpush1.bf16.msra.mxu0 0
      %4464 = vmatprep.subr.bf16.mxu0 0
      %4465 = vmatpush1.bf16.msra.mxu0 0
      %4466 = vmatprep.subr.bf16.mxu0 0
      %4467 = vmatpush1.bf16.msra.mxu0 0
      %4468 = vmatprep.subr.bf16.mxu0 0
      %4469 = vmatpush1.bf16.msra.mxu0 0
      %4470 = vmatprep.subr.bf16.mxu0 0
      %4471 = vmatpush1.bf16.msra.mxu0 0
      %4472 = vmatprep.subr.bf16.mxu0 0
      %4473 = vmatpush1.bf16.msra.mxu0 0
      %4474 = vmatprep.subr.bf16.mxu0 %v4458
      %4475 = vmatpush1.bf16.msra.mxu0 %v4455
      %4476 = vmatprep.subr.bf16.mxu0 0
      %4477 = vmatpush2.bf16.msra.mxu0 0
      %4478 = vmatprep.subr.bf16.mxu0 0
      %4479 = vmatpush2.bf16.msra.mxu0 0
      %4480 = vmatprep.subr.bf16.mxu0 0
      %4481 = vmatpush2.bf16.msra.mxu0 0
      %4482 = vmatprep.subr.bf16.mxu0 0
      %4483 = vmatpush2.bf16.msra.mxu0 0
      %4484 = vmatprep.subr.bf16.mxu0 0
      %4485 = vmatpush2.bf16.msra.mxu0 0
      %4486 = vmatprep.subr.bf16.mxu0 0
      %4487 = vmatpush2.bf16.msra.mxu0 0
      %4488 = vmatprep.subr.bf16.mxu0 0
      %4489 = vmatpush2.bf16.msra.mxu0 0
      %4490 = vmatprep.subr.bf16.mxu0 0
      %4491 = vmatpush2.bf16.msra.mxu0 0
      %4492 = vmatprep.mubr.bf16.mxu0 0
      %4493 = vmatmul.mubr.bf16.gmra.mxu0 %v3460
      %v4494 = vpop.f32.mrf.mxu0
      %v4495 = vadd.f32 0.0, %v4494
      %v4496 = vpop.f32.mrf.mxu0
      %v4497 = vadd.f32 0.0, %v4496
      %v4498 = vpop.f32.mrf.mxu0
      %v4499 = vadd.f32 0.0, %v4498
      %v4500 = vpop.f32.mrf.mxu0
      %v4501 = vadd.f32 0.0, %v4500
      %4502 = vdwg.mxu0
      %v4503 = vpack.c.bf16 %v4499, %v4495
      %v4504 = vpack.c.bf16 %v4501, %v4497
      %s4505 = scalar_lea.vmem %s12, 272
      %v4506 = vld [vmem:[%s4505] sm:$0xff]
      %v4507 = vld [vmem:[%s4505 + $0x8] sm:$0x11]
      %v4510 = vunpack.c.l.b16 %v4506
      %v4511 = vunpack.c.h.b16 %v4506
      %v4512 = vunpack.c.l.b16 %v4507
      %v4513 = vunpack.c.h.b16 %v4507
      %v4514 = vpack.c.b16 %v4512, %v4510
      %v4515 = vpack.c.b16 %v4513, %v4511
      %v4517 = vand.u32 %v4514, %v2545
      %v4520 = vand.u32 %v4515, %v2545
      %4522 = vmatprep.subr.bf16.mxu0 0
      %4523 = vmatpush1.bf16.msra.mxu0 0
      %4524 = vmatprep.subr.bf16.mxu0 0
      %4525 = vmatpush1.bf16.msra.mxu0 0
      %4526 = vmatprep.subr.bf16.mxu0 0
      %4527 = vmatpush1.bf16.msra.mxu0 0
      %4528 = vmatprep.subr.bf16.mxu0 0
      %4529 = vmatpush1.bf16.msra.mxu0 0
      %4530 = vmatprep.subr.bf16.mxu0 0
      %4531 = vmatpush1.bf16.msra.mxu0 0
      %4532 = vmatprep.subr.bf16.mxu0 0
      %4533 = vmatpush1.bf16.msra.mxu0 0
      %4534 = vmatprep.subr.bf16.mxu0 0
      %4535 = vmatpush1.bf16.msra.mxu0 0
      %4536 = vmatprep.subr.bf16.mxu0 %v4520
      %4537 = vmatpush1.bf16.msra.mxu0 %v4517
      %4538 = vmatprep.subr.bf16.mxu0 0
      %4539 = vmatpush2.bf16.msra.mxu0 0
      %4540 = vmatprep.subr.bf16.mxu0 0
      %4541 = vmatpush2.bf16.msra.mxu0 0
      %4542 = vmatprep.subr.bf16.mxu0 0
      %4543 = vmatpush2.bf16.msra.mxu0 0
      %4544 = vmatprep.subr.bf16.mxu0 0
      %4545 = vmatpush2.bf16.msra.mxu0 0
      %4546 = vmatprep.subr.bf16.mxu0 0
      %4547 = vmatpush2.bf16.msra.mxu0 0
      %4548 = vmatprep.subr.bf16.mxu0 0
      %4549 = vmatpush2.bf16.msra.mxu0 0
      %4550 = vmatprep.subr.bf16.mxu0 0
      %4551 = vmatpush2.bf16.msra.mxu0 0
      %4552 = vmatprep.subr.bf16.mxu0 0
      %4553 = vmatpush2.bf16.msra.mxu0 0
      %4554 = vmatprep.mubr.bf16.mxu0 0
      %4555 = vmatmul.mubr.bf16.gmra.mxu0 %v3460
      %v4556 = vpop.f32.mrf.mxu0
      %v4557 = vadd.f32 0.0, %v4556
      %v4558 = vpop.f32.mrf.mxu0
      %v4559 = vadd.f32 0.0, %v4558
      %v4560 = vpop.f32.mrf.mxu0
      %v4561 = vadd.f32 0.0, %v4560
      %v4562 = vpop.f32.mrf.mxu0
      %v4563 = vadd.f32 0.0, %v4562
      %4564 = vdwg.mxu0
      %v4565 = vpack.c.bf16 %v4561, %v4557
      %v4566 = vpack.c.bf16 %v4563, %v4559
      %s4567 = scalar_lea.vmem %s12, 288
      %v4568 = vld [vmem:[%s4567] sm:$0xff]
      %v4569 = vld [vmem:[%s4567 + $0x8] sm:$0x11]
      %v4572 = vunpack.c.l.b16 %v4568
      %v4573 = vunpack.c.h.b16 %v4568
      %v4574 = vunpack.c.l.b16 %v4569
      %v4575 = vunpack.c.h.b16 %v4569
      %v4576 = vpack.c.b16 %v4574, %v4572
      %v4577 = vpack.c.b16 %v4575, %v4573
      %v4579 = vand.u32 %v4576, %v2545
      %v4582 = vand.u32 %v4577, %v2545
      %4584 = vmatprep.subr.bf16.mxu0 0
      %4585 = vmatpush1.bf16.msra.mxu0 0
      %4586 = vmatprep.subr.bf16.mxu0 0
      %4587 = vmatpush1.bf16.msra.mxu0 0
      %4588 = vmatprep.subr.bf16.mxu0 0
      %4589 = vmatpush1.bf16.msra.mxu0 0
      %4590 = vmatprep.subr.bf16.mxu0 0
      %4591 = vmatpush1.bf16.msra.mxu0 0
      %4592 = vmatprep.subr.bf16.mxu0 0
      %4593 = vmatpush1.bf16.msra.mxu0 0
      %4594 = vmatprep.subr.bf16.mxu0 0
      %4595 = vmatpush1.bf16.msra.mxu0 0
      %4596 = vmatprep.subr.bf16.mxu0 0
      %4597 = vmatpush1.bf16.msra.mxu0 0
      %4598 = vmatprep.subr.bf16.mxu0 %v4582
      %4599 = vmatpush1.bf16.msra.mxu0 %v4579
      %4600 = vmatprep.subr.bf16.mxu0 0
      %4601 = vmatpush2.bf16.msra.mxu0 0
      %4602 = vmatprep.subr.bf16.mxu0 0
      %4603 = vmatpush2.bf16.msra.mxu0 0
      %4604 = vmatprep.subr.bf16.mxu0 0
      %4605 = vmatpush2.bf16.msra.mxu0 0
      %4606 = vmatprep.subr.bf16.mxu0 0
      %4607 = vmatpush2.bf16.msra.mxu0 0
      %4608 = vmatprep.subr.bf16.mxu0 0
      %4609 = vmatpush2.bf16.msra.mxu0 0
      %4610 = vmatprep.subr.bf16.mxu0 0
      %4611 = vmatpush2.bf16.msra.mxu0 0
      %4612 = vmatprep.subr.bf16.mxu0 0
      %4613 = vmatpush2.bf16.msra.mxu0 0
      %4614 = vmatprep.subr.bf16.mxu0 0
      %4615 = vmatpush2.bf16.msra.mxu0 0
      %4616 = vmatprep.mubr.bf16.mxu0 0
      %4617 = vmatmul.mubr.bf16.gmra.mxu0 %v3460
      %v4618 = vpop.f32.mrf.mxu0
      %v4619 = vadd.f32 0.0, %v4618
      %v4620 = vpop.f32.mrf.mxu0
      %v4621 = vadd.f32 0.0, %v4620
      %v4622 = vpop.f32.mrf.mxu0
      %v4623 = vadd.f32 0.0, %v4622
      %v4624 = vpop.f32.mrf.mxu0
      %v4625 = vadd.f32 0.0, %v4624
      %4626 = vdwg.mxu0
      %v4627 = vpack.c.bf16 %v4623, %v4619
      %v4628 = vpack.c.bf16 %v4625, %v4621
      %s4629 = scalar_lea.vmem %s12, 304
      %v4630 = vld [vmem:[%s4629] sm:$0xff]
      %v4631 = vld [vmem:[%s4629 + $0x8] sm:$0x11]
      %v4634 = vunpack.c.l.b16 %v4630
      %v4635 = vunpack.c.h.b16 %v4630
      %v4636 = vunpack.c.l.b16 %v4631
      %v4637 = vunpack.c.h.b16 %v4631
      %v4638 = vpack.c.b16 %v4636, %v4634
      %v4639 = vpack.c.b16 %v4637, %v4635
      %v4641 = vand.u32 %v4638, %v2545
      %v4644 = vand.u32 %v4639, %v2545
      %4646 = vmatprep.subr.bf16.mxu0 0
      %4647 = vmatpush1.bf16.msra.mxu0 0
      %4648 = vmatprep.subr.bf16.mxu0 0
      %4649 = vmatpush1.bf16.msra.mxu0 0
      %4650 = vmatprep.subr.bf16.mxu0 0
      %4651 = vmatpush1.bf16.msra.mxu0 0
      %4652 = vmatprep.subr.bf16.mxu0 0
      %4653 = vmatpush1.bf16.msra.mxu0 0
      %4654 = vmatprep.subr.bf16.mxu0 0
      %4655 = vmatpush1.bf16.msra.mxu0 0
      %4656 = vmatprep.subr.bf16.mxu0 0
      %4657 = vmatpush1.bf16.msra.mxu0 0
      %4658 = vmatprep.subr.bf16.mxu0 0
      %4659 = vmatpush1.bf16.msra.mxu0 0
      %4660 = vmatprep.subr.bf16.mxu0 %v4644
      %4661 = vmatpush1.bf16.msra.mxu0 %v4641
      %4662 = vmatprep.subr.bf16.mxu0 0
      %4663 = vmatpush2.bf16.msra.mxu0 0
      %4664 = vmatprep.subr.bf16.mxu0 0
      %4665 = vmatpush2.bf16.msra.mxu0 0
      %4666 = vmatprep.subr.bf16.mxu0 0
      %4667 = vmatpush2.bf16.msra.mxu0 0
      %4668 = vmatprep.subr.bf16.mxu0 0
      %4669 = vmatpush2.bf16.msra.mxu0 0
      %4670 = vmatprep.subr.bf16.mxu0 0
      %4671 = vmatpush2.bf16.msra.mxu0 0
      %4672 = vmatprep.subr.bf16.mxu0 0
      %4673 = vmatpush2.bf16.msra.mxu0 0
      %4674 = vmatprep.subr.bf16.mxu0 0
      %4675 = vmatpush2.bf16.msra.mxu0 0
      %4676 = vmatprep.subr.bf16.mxu0 0
      %4677 = vmatpush2.bf16.msra.mxu0 0
      %4678 = vmatprep.mubr.bf16.mxu0 0
      %4679 = vmatmul.mubr.bf16.gmra.mxu0 %v3460
      %v4680 = vpop.f32.mrf.mxu0
      %v4681 = vadd.f32 0.0, %v4680
      %v4682 = vpop.f32.mrf.mxu0
      %v4683 = vadd.f32 0.0, %v4682
      %v4684 = vpop.f32.mrf.mxu0
      %v4685 = vadd.f32 0.0, %v4684
      %v4686 = vpop.f32.mrf.mxu0
      %v4687 = vadd.f32 0.0, %v4686
      %4688 = vdwg.mxu0
      %v4689 = vpack.c.bf16 %v4685, %v4681
      %v4690 = vpack.c.bf16 %v4687, %v4683
      %s4691 = scalar_lea.vmem %s12, 320
      %v4692 = vld [vmem:[%s4691] sm:$0xff]
      %v4693 = vld [vmem:[%s4691 + $0x8] sm:$0x11]
      %v4696 = vunpack.c.l.b16 %v4692
      %v4697 = vunpack.c.h.b16 %v4692
      %v4698 = vunpack.c.l.b16 %v4693
      %v4699 = vunpack.c.h.b16 %v4693
      %v4700 = vpack.c.b16 %v4698, %v4696
      %v4701 = vpack.c.b16 %v4699, %v4697
      %v4703 = vand.u32 %v4700, %v2545
      %v4706 = vand.u32 %v4701, %v2545
      %4708 = vmatprep.subr.bf16.mxu0 0
      %4709 = vmatpush1.bf16.msra.mxu0 0
      %4710 = vmatprep.subr.bf16.mxu0 0
      %4711 = vmatpush1.bf16.msra.mxu0 0
      %4712 = vmatprep.subr.bf16.mxu0 0
      %4713 = vmatpush1.bf16.msra.mxu0 0
      %4714 = vmatprep.subr.bf16.mxu0 0
      %4715 = vmatpush1.bf16.msra.mxu0 0
      %4716 = vmatprep.subr.bf16.mxu0 0
      %4717 = vmatpush1.bf16.msra.mxu0 0
      %4718 = vmatprep.subr.bf16.mxu0 0
      %4719 = vmatpush1.bf16.msra.mxu0 0
      %4720 = vmatprep.subr.bf16.mxu0 0
      %4721 = vmatpush1.bf16.msra.mxu0 0
      %4722 = vmatprep.subr.bf16.mxu0 %v4706
      %4723 = vmatpush1.bf16.msra.mxu0 %v4703
      %4724 = vmatprep.subr.bf16.mxu0 0
      %4725 = vmatpush2.bf16.msra.mxu0 0
      %4726 = vmatprep.subr.bf16.mxu0 0
      %4727 = vmatpush2.bf16.msra.mxu0 0
      %4728 = vmatprep.subr.bf16.mxu0 0
      %4729 = vmatpush2.bf16.msra.mxu0 0
      %4730 = vmatprep.subr.bf16.mxu0 0
      %4731 = vmatpush2.bf16.msra.mxu0 0
      %4732 = vmatprep.subr.bf16.mxu0 0
      %4733 = vmatpush2.bf16.msra.mxu0 0
      %4734 = vmatprep.subr.bf16.mxu0 0
      %4735 = vmatpush2.bf16.msra.mxu0 0
      %4736 = vmatprep.subr.bf16.mxu0 0
      %4737 = vmatpush2.bf16.msra.mxu0 0
      %4738 = vmatprep.subr.bf16.mxu0 0
      %4739 = vmatpush2.bf16.msra.mxu0 0
      %4740 = vmatprep.mubr.bf16.mxu0 0
      %4741 = vmatmul.mubr.bf16.gmra.mxu0 %v3460
      %v4742 = vpop.f32.mrf.mxu0
      %v4743 = vadd.f32 0.0, %v4742
      %v4744 = vpop.f32.mrf.mxu0
      %v4745 = vadd.f32 0.0, %v4744
      %v4746 = vpop.f32.mrf.mxu0
      %v4747 = vadd.f32 0.0, %v4746
      %v4748 = vpop.f32.mrf.mxu0
      %v4749 = vadd.f32 0.0, %v4748
      %4750 = vdwg.mxu0
      %v4751 = vpack.c.bf16 %v4747, %v4743
      %v4752 = vpack.c.bf16 %v4749, %v4745
      %s4753 = scalar_lea.vmem %s12, 336
      %v4754 = vld [vmem:[%s4753] sm:$0xff]
      %v4755 = vld [vmem:[%s4753 + $0x8] sm:$0x11]
      %v4758 = vunpack.c.l.b16 %v4754
      %v4759 = vunpack.c.h.b16 %v4754
      %v4760 = vunpack.c.l.b16 %v4755
      %v4761 = vunpack.c.h.b16 %v4755
      %v4762 = vpack.c.b16 %v4760, %v4758
      %v4763 = vpack.c.b16 %v4761, %v4759
      %v4765 = vand.u32 %v4762, %v2545
      %v4768 = vand.u32 %v4763, %v2545
      %4770 = vmatprep.subr.bf16.mxu0 0
      %4771 = vmatpush1.bf16.msra.mxu0 0
      %4772 = vmatprep.subr.bf16.mxu0 0
      %4773 = vmatpush1.bf16.msra.mxu0 0
      %4774 = vmatprep.subr.bf16.mxu0 0
      %4775 = vmatpush1.bf16.msra.mxu0 0
      %4776 = vmatprep.subr.bf16.mxu0 0
      %4777 = vmatpush1.bf16.msra.mxu0 0
      %4778 = vmatprep.subr.bf16.mxu0 0
      %4779 = vmatpush1.bf16.msra.mxu0 0
      %4780 = vmatprep.subr.bf16.mxu0 0
      %4781 = vmatpush1.bf16.msra.mxu0 0
      %4782 = vmatprep.subr.bf16.mxu0 0
      %4783 = vmatpush1.bf16.msra.mxu0 0
      %4784 = vmatprep.subr.bf16.mxu0 %v4768
      %4785 = vmatpush1.bf16.msra.mxu0 %v4765
      %4786 = vmatprep.subr.bf16.mxu0 0
      %4787 = vmatpush2.bf16.msra.mxu0 0
      %4788 = vmatprep.subr.bf16.mxu0 0
      %4789 = vmatpush2.bf16.msra.mxu0 0
      %4790 = vmatprep.subr.bf16.mxu0 0
      %4791 = vmatpush2.bf16.msra.mxu0 0
      %4792 = vmatprep.subr.bf16.mxu0 0
      %4793 = vmatpush2.bf16.msra.mxu0 0
      %4794 = vmatprep.subr.bf16.mxu0 0
      %4795 = vmatpush2.bf16.msra.mxu0 0
      %4796 = vmatprep.subr.bf16.mxu0 0
      %4797 = vmatpush2.bf16.msra.mxu0 0
      %4798 = vmatprep.subr.bf16.mxu0 0
      %4799 = vmatpush2.bf16.msra.mxu0 0
      %4800 = vmatprep.subr.bf16.mxu0 0
      %4801 = vmatpush2.bf16.msra.mxu0 0
      %4802 = vmatprep.mubr.bf16.mxu0 0
      %4803 = vmatmul.mubr.bf16.gmra.mxu0 %v3460
      %v4804 = vpop.f32.mrf.mxu0
      %v4805 = vadd.f32 0.0, %v4804
      %v4806 = vpop.f32.mrf.mxu0
      %v4807 = vadd.f32 0.0, %v4806
      %v4808 = vpop.f32.mrf.mxu0
      %v4809 = vadd.f32 0.0, %v4808
      %v4810 = vpop.f32.mrf.mxu0
      %v4811 = vadd.f32 0.0, %v4810
      %4812 = vdwg.mxu0
      %v4813 = vpack.c.bf16 %v4809, %v4805
      %v4814 = vpack.c.bf16 %v4811, %v4807
      %s4815 = scalar_lea.vmem %s12, 352
      %v4816 = vld [vmem:[%s4815] sm:$0xff]
      %v4817 = vld [vmem:[%s4815 + $0x8] sm:$0x11]
      %v4820 = vunpack.c.l.b16 %v4816
      %v4821 = vunpack.c.h.b16 %v4816
      %v4822 = vunpack.c.l.b16 %v4817
      %v4823 = vunpack.c.h.b16 %v4817
      %v4824 = vpack.c.b16 %v4822, %v4820
      %v4825 = vpack.c.b16 %v4823, %v4821
      %v4827 = vand.u32 %v4824, %v2545
      %v4830 = vand.u32 %v4825, %v2545
      %4832 = vmatprep.subr.bf16.mxu0 0
      %4833 = vmatpush1.bf16.msra.mxu0 0
      %4834 = vmatprep.subr.bf16.mxu0 0
      %4835 = vmatpush1.bf16.msra.mxu0 0
      %4836 = vmatprep.subr.bf16.mxu0 0
      %4837 = vmatpush1.bf16.msra.mxu0 0
      %4838 = vmatprep.subr.bf16.mxu0 0
      %4839 = vmatpush1.bf16.msra.mxu0 0
      %4840 = vmatprep.subr.bf16.mxu0 0
      %4841 = vmatpush1.bf16.msra.mxu0 0
      %4842 = vmatprep.subr.bf16.mxu0 0
      %4843 = vmatpush1.bf16.msra.mxu0 0
      %4844 = vmatprep.subr.bf16.mxu0 0
      %4845 = vmatpush1.bf16.msra.mxu0 0
      %4846 = vmatprep.subr.bf16.mxu0 %v4830
      %4847 = vmatpush1.bf16.msra.mxu0 %v4827
      %4848 = vmatprep.subr.bf16.mxu0 0
      %4849 = vmatpush2.bf16.msra.mxu0 0
      %4850 = vmatprep.subr.bf16.mxu0 0
      %4851 = vmatpush2.bf16.msra.mxu0 0
      %4852 = vmatprep.subr.bf16.mxu0 0
      %4853 = vmatpush2.bf16.msra.mxu0 0
      %4854 = vmatprep.subr.bf16.mxu0 0
      %4855 = vmatpush2.bf16.msra.mxu0 0
      %4856 = vmatprep.subr.bf16.mxu0 0
      %4857 = vmatpush2.bf16.msra.mxu0 0
      %4858 = vmatprep.subr.bf16.mxu0 0
      %4859 = vmatpush2.bf16.msra.mxu0 0
      %4860 = vmatprep.subr.bf16.mxu0 0
      %4861 = vmatpush2.bf16.msra.mxu0 0
      %4862 = vmatprep.subr.bf16.mxu0 0
      %4863 = vmatpush2.bf16.msra.mxu0 0
      %4864 = vmatprep.mubr.bf16.mxu0 0
      %4865 = vmatmul.mubr.bf16.gmra.mxu0 %v3460
      %v4866 = vpop.f32.mrf.mxu0
      %v4867 = vadd.f32 0.0, %v4866
      %v4868 = vpop.f32.mrf.mxu0
      %v4869 = vadd.f32 0.0, %v4868
      %v4870 = vpop.f32.mrf.mxu0
      %v4871 = vadd.f32 0.0, %v4870
      %v4872 = vpop.f32.mrf.mxu0
      %v4873 = vadd.f32 0.0, %v4872
      %4874 = vdwg.mxu0
      %v4875 = vpack.c.bf16 %v4871, %v4867
      %v4876 = vpack.c.bf16 %v4873, %v4869
      %s4877 = scalar_lea.vmem %s12, 368
      %v4878 = vld [vmem:[%s4877] sm:$0xff]
      %v4879 = vld [vmem:[%s4877 + $0x8] sm:$0x11]
      %v4882 = vunpack.c.l.b16 %v4878
      %v4883 = vunpack.c.h.b16 %v4878
      %v4884 = vunpack.c.l.b16 %v4879
      %v4885 = vunpack.c.h.b16 %v4879
      %v4886 = vpack.c.b16 %v4884, %v4882
      %v4887 = vpack.c.b16 %v4885, %v4883
      %v4889 = vand.u32 %v4886, %v2545
      %v4892 = vand.u32 %v4887, %v2545
      %4894 = vmatprep.subr.bf16.mxu0 0
      %4895 = vmatpush1.bf16.msra.mxu0 0
      %4896 = vmatprep.subr.bf16.mxu0 0
      %4897 = vmatpush1.bf16.msra.mxu0 0
      %4898 = vmatprep.subr.bf16.mxu0 0
      %4899 = vmatpush1.bf16.msra.mxu0 0
      %4900 = vmatprep.subr.bf16.mxu0 0
      %4901 = vmatpush1.bf16.msra.mxu0 0
      %4902 = vmatprep.subr.bf16.mxu0 0
      %4903 = vmatpush1.bf16.msra.mxu0 0
      %4904 = vmatprep.subr.bf16.mxu0 0
      %4905 = vmatpush1.bf16.msra.mxu0 0
      %4906 = vmatprep.subr.bf16.mxu0 0
      %4907 = vmatpush1.bf16.msra.mxu0 0
      %4908 = vmatprep.subr.bf16.mxu0 %v4892
      %4909 = vmatpush1.bf16.msra.mxu0 %v4889
      %4910 = vmatprep.subr.bf16.mxu0 0
      %4911 = vmatpush2.bf16.msra.mxu0 0
      %4912 = vmatprep.subr.bf16.mxu0 0
      %4913 = vmatpush2.bf16.msra.mxu0 0
      %4914 = vmatprep.subr.bf16.mxu0 0
      %4915 = vmatpush2.bf16.msra.mxu0 0
      %4916 = vmatprep.subr.bf16.mxu0 0
      %4917 = vmatpush2.bf16.msra.mxu0 0
      %4918 = vmatprep.subr.bf16.mxu0 0
      %4919 = vmatpush2.bf16.msra.mxu0 0
      %4920 = vmatprep.subr.bf16.mxu0 0
      %4921 = vmatpush2.bf16.msra.mxu0 0
      %4922 = vmatprep.subr.bf16.mxu0 0
      %4923 = vmatpush2.bf16.msra.mxu0 0
      %4924 = vmatprep.subr.bf16.mxu0 0
      %4925 = vmatpush2.bf16.msra.mxu0 0
      %4926 = vmatprep.mubr.bf16.mxu0 0
      %4927 = vmatmul.mubr.bf16.gmra.mxu0 %v3460
      %v4928 = vpop.f32.mrf.mxu0
      %v4929 = vadd.f32 0.0, %v4928
      %v4930 = vpop.f32.mrf.mxu0
      %v4931 = vadd.f32 0.0, %v4930
      %v4932 = vpop.f32.mrf.mxu0
      %v4933 = vadd.f32 0.0, %v4932
      %v4934 = vpop.f32.mrf.mxu0
      %v4935 = vadd.f32 0.0, %v4934
      %4936 = vdwg.mxu0
      %v4937 = vpack.c.bf16 %v4933, %v4929
      %v4938 = vpack.c.bf16 %v4935, %v4931
      %s4939 = scalar_lea.vmem %s12, 384
      %v4940 = vld [vmem:[%s4939] sm:$0xff]
      %v4941 = vld [vmem:[%s4939 + $0x8] sm:$0x11]
      %v4944 = vunpack.c.l.b16 %v4940
      %v4945 = vunpack.c.h.b16 %v4940
      %v4946 = vunpack.c.l.b16 %v4941
      %v4947 = vunpack.c.h.b16 %v4941
      %v4948 = vpack.c.b16 %v4946, %v4944
      %v4949 = vpack.c.b16 %v4947, %v4945
      %v4951 = vand.u32 %v4948, %v2545
      %v4954 = vand.u32 %v4949, %v2545
      %4956 = vmatprep.subr.bf16.mxu0 0
      %4957 = vmatpush1.bf16.msra.mxu0 0
      %4958 = vmatprep.subr.bf16.mxu0 0
      %4959 = vmatpush1.bf16.msra.mxu0 0
      %4960 = vmatprep.subr.bf16.mxu0 0
      %4961 = vmatpush1.bf16.msra.mxu0 0
      %4962 = vmatprep.subr.bf16.mxu0 0
      %4963 = vmatpush1.bf16.msra.mxu0 0
      %4964 = vmatprep.subr.bf16.mxu0 0
      %4965 = vmatpush1.bf16.msra.mxu0 0
      %4966 = vmatprep.subr.bf16.mxu0 0
      %4967 = vmatpush1.bf16.msra.mxu0 0
      %4968 = vmatprep.subr.bf16.mxu0 0
      %4969 = vmatpush1.bf16.msra.mxu0 0
      %4970 = vmatprep.subr.bf16.mxu0 %v4954
      %4971 = vmatpush1.bf16.msra.mxu0 %v4951
      %4972 = vmatprep.subr.bf16.mxu0 0
      %4973 = vmatpush2.bf16.msra.mxu0 0
      %4974 = vmatprep.subr.bf16.mxu0 0
      %4975 = vmatpush2.bf16.msra.mxu0 0
      %4976 = vmatprep.subr.bf16.mxu0 0
      %4977 = vmatpush2.bf16.msra.mxu0 0
      %4978 = vmatprep.subr.bf16.mxu0 0
      %4979 = vmatpush2.bf16.msra.mxu0 0
      %4980 = vmatprep.subr.bf16.mxu0 0
      %4981 = vmatpush2.bf16.msra.mxu0 0
      %4982 = vmatprep.subr.bf16.mxu0 0
      %4983 = vmatpush2.bf16.msra.mxu0 0
      %4984 = vmatprep.subr.bf16.mxu0 0
      %4985 = vmatpush2.bf16.msra.mxu0 0
      %4986 = vmatprep.subr.bf16.mxu0 0
      %4987 = vmatpush2.bf16.msra.mxu0 0
      %4988 = vmatprep.mubr.bf16.mxu0 0
      %4989 = vmatmul.mubr.bf16.gmra.mxu0 %v3460
      %v4990 = vpop.f32.mrf.mxu0
      %v4991 = vadd.f32 0.0, %v4990
      %v4992 = vpop.f32.mrf.mxu0
      %v4993 = vadd.f32 0.0, %v4992
      %v4994 = vpop.f32.mrf.mxu0
      %v4995 = vadd.f32 0.0, %v4994
      %v4996 = vpop.f32.mrf.mxu0
      %v4997 = vadd.f32 0.0, %v4996
      %4998 = vdwg.mxu0
      %v4999 = vpack.c.bf16 %v4995, %v4991
      %v5000 = vpack.c.bf16 %v4997, %v4993
      %s5001 = scalar_lea.vmem %s12, 400
      %v5002 = vld [vmem:[%s5001] sm:$0xff]
      %v5003 = vld [vmem:[%s5001 + $0x8] sm:$0x11]
      %v5006 = vunpack.c.l.b16 %v5002
      %v5007 = vunpack.c.h.b16 %v5002
      %v5008 = vunpack.c.l.b16 %v5003
      %v5009 = vunpack.c.h.b16 %v5003
      %v5010 = vpack.c.b16 %v5008, %v5006
      %v5011 = vpack.c.b16 %v5009, %v5007
      %v5013 = vand.u32 %v5010, %v2545
      %v5016 = vand.u32 %v5011, %v2545
      %5018 = vmatprep.subr.bf16.mxu0 0
      %5019 = vmatpush1.bf16.msra.mxu0 0
      %5020 = vmatprep.subr.bf16.mxu0 0
      %5021 = vmatpush1.bf16.msra.mxu0 0
      %5022 = vmatprep.subr.bf16.mxu0 0
      %5023 = vmatpush1.bf16.msra.mxu0 0
      %5024 = vmatprep.subr.bf16.mxu0 0
      %5025 = vmatpush1.bf16.msra.mxu0 0
      %5026 = vmatprep.subr.bf16.mxu0 0
      %5027 = vmatpush1.bf16.msra.mxu0 0
      %5028 = vmatprep.subr.bf16.mxu0 0
      %5029 = vmatpush1.bf16.msra.mxu0 0
      %5030 = vmatprep.subr.bf16.mxu0 0
      %5031 = vmatpush1.bf16.msra.mxu0 0
      %5032 = vmatprep.subr.bf16.mxu0 %v5016
      %5033 = vmatpush1.bf16.msra.mxu0 %v5013
      %5034 = vmatprep.subr.bf16.mxu0 0
      %5035 = vmatpush2.bf16.msra.mxu0 0
      %5036 = vmatprep.subr.bf16.mxu0 0
      %5037 = vmatpush2.bf16.msra.mxu0 0
      %5038 = vmatprep.subr.bf16.mxu0 0
      %5039 = vmatpush2.bf16.msra.mxu0 0
      %5040 = vmatprep.subr.bf16.mxu0 0
      %5041 = vmatpush2.bf16.msra.mxu0 0
      %5042 = vmatprep.subr.bf16.mxu0 0
      %5043 = vmatpush2.bf16.msra.mxu0 0
      %5044 = vmatprep.subr.bf16.mxu0 0
      %5045 = vmatpush2.bf16.msra.mxu0 0
      %5046 = vmatprep.subr.bf16.mxu0 0
      %5047 = vmatpush2.bf16.msra.mxu0 0
      %5048 = vmatprep.subr.bf16.mxu0 0
      %5049 = vmatpush2.bf16.msra.mxu0 0
      %5050 = vmatprep.mubr.bf16.mxu0 0
      %5051 = vmatmul.mubr.bf16.gmra.mxu0 %v3460
      %v5052 = vpop.f32.mrf.mxu0
      %v5053 = vadd.f32 0.0, %v5052
      %v5054 = vpop.f32.mrf.mxu0
      %v5055 = vadd.f32 0.0, %v5054
      %v5056 = vpop.f32.mrf.mxu0
      %v5057 = vadd.f32 0.0, %v5056
      %v5058 = vpop.f32.mrf.mxu0
      %v5059 = vadd.f32 0.0, %v5058
      %5060 = vdwg.mxu0
      %v5061 = vpack.c.bf16 %v5057, %v5053
      %v5062 = vpack.c.bf16 %v5059, %v5055
      %s5063 = scalar_lea.vmem %s12, 416
      %v5064 = vld [vmem:[%s5063] sm:$0xff]
      %v5065 = vld [vmem:[%s5063 + $0x8] sm:$0x11]
      %v5068 = vunpack.c.l.b16 %v5064
      %v5069 = vunpack.c.h.b16 %v5064
      %v5070 = vunpack.c.l.b16 %v5065
      %v5071 = vunpack.c.h.b16 %v5065
      %v5072 = vpack.c.b16 %v5070, %v5068
      %v5073 = vpack.c.b16 %v5071, %v5069
      %v5075 = vand.u32 %v5072, %v2545
      %v5078 = vand.u32 %v5073, %v2545
      %5080 = vmatprep.subr.bf16.mxu0 0
      %5081 = vmatpush1.bf16.msra.mxu0 0
      %5082 = vmatprep.subr.bf16.mxu0 0
      %5083 = vmatpush1.bf16.msra.mxu0 0
      %5084 = vmatprep.subr.bf16.mxu0 0
      %5085 = vmatpush1.bf16.msra.mxu0 0
      %5086 = vmatprep.subr.bf16.mxu0 0
      %5087 = vmatpush1.bf16.msra.mxu0 0
      %5088 = vmatprep.subr.bf16.mxu0 0
      %5089 = vmatpush1.bf16.msra.mxu0 0
      %5090 = vmatprep.subr.bf16.mxu0 0
      %5091 = vmatpush1.bf16.msra.mxu0 0
      %5092 = vmatprep.subr.bf16.mxu0 0
      %5093 = vmatpush1.bf16.msra.mxu0 0
      %5094 = vmatprep.subr.bf16.mxu0 %v5078
      %5095 = vmatpush1.bf16.msra.mxu0 %v5075
      %5096 = vmatprep.subr.bf16.mxu0 0
      %5097 = vmatpush2.bf16.msra.mxu0 0
      %5098 = vmatprep.subr.bf16.mxu0 0
      %5099 = vmatpush2.bf16.msra.mxu0 0
      %5100 = vmatprep.subr.bf16.mxu0 0
      %5101 = vmatpush2.bf16.msra.mxu0 0
      %5102 = vmatprep.subr.bf16.mxu0 0
      %5103 = vmatpush2.bf16.msra.mxu0 0
      %5104 = vmatprep.subr.bf16.mxu0 0
      %5105 = vmatpush2.bf16.msra.mxu0 0
      %5106 = vmatprep.subr.bf16.mxu0 0
      %5107 = vmatpush2.bf16.msra.mxu0 0
      %5108 = vmatprep.subr.bf16.mxu0 0
      %5109 = vmatpush2.bf16.msra.mxu0 0
      %5110 = vmatprep.subr.bf16.mxu0 0
      %5111 = vmatpush2.bf16.msra.mxu0 0
      %5112 = vmatprep.mubr.bf16.mxu0 0
      %5113 = vmatmul.mubr.bf16.gmra.mxu0 %v3460
      %v5114 = vpop.f32.mrf.mxu0
      %v5115 = vadd.f32 0.0, %v5114
      %v5116 = vpop.f32.mrf.mxu0
      %v5117 = vadd.f32 0.0, %v5116
      %v5118 = vpop.f32.mrf.mxu0
      %v5119 = vadd.f32 0.0, %v5118
      %v5120 = vpop.f32.mrf.mxu0
      %v5121 = vadd.f32 0.0, %v5120
      %5122 = vdwg.mxu0
      %v5123 = vpack.c.bf16 %v5119, %v5115
      %v5124 = vpack.c.bf16 %v5121, %v5117
      %s5125 = scalar_lea.vmem %s12, 432
      %v5126 = vld [vmem:[%s5125] sm:$0xff]
      %v5127 = vld [vmem:[%s5125 + $0x8] sm:$0x11]
      %v5130 = vunpack.c.l.b16 %v5126
      %v5131 = vunpack.c.h.b16 %v5126
      %v5132 = vunpack.c.l.b16 %v5127
      %v5133 = vunpack.c.h.b16 %v5127
      %v5134 = vpack.c.b16 %v5132, %v5130
      %v5135 = vpack.c.b16 %v5133, %v5131
      %v5137 = vand.u32 %v5134, %v2545
      %v5140 = vand.u32 %v5135, %v2545
      %5142 = vmatprep.subr.bf16.mxu0 0
      %5143 = vmatpush1.bf16.msra.mxu0 0
      %5144 = vmatprep.subr.bf16.mxu0 0
      %5145 = vmatpush1.bf16.msra.mxu0 0
      %5146 = vmatprep.subr.bf16.mxu0 0
      %5147 = vmatpush1.bf16.msra.mxu0 0
      %5148 = vmatprep.subr.bf16.mxu0 0
      %5149 = vmatpush1.bf16.msra.mxu0 0
      %5150 = vmatprep.subr.bf16.mxu0 0
      %5151 = vmatpush1.bf16.msra.mxu0 0
      %5152 = vmatprep.subr.bf16.mxu0 0
      %5153 = vmatpush1.bf16.msra.mxu0 0
      %5154 = vmatprep.subr.bf16.mxu0 0
      %5155 = vmatpush1.bf16.msra.mxu0 0
      %5156 = vmatprep.subr.bf16.mxu0 %v5140
      %5157 = vmatpush1.bf16.msra.mxu0 %v5137
      %5158 = vmatprep.subr.bf16.mxu0 0
      %5159 = vmatpush2.bf16.msra.mxu0 0
      %5160 = vmatprep.subr.bf16.mxu0 0
      %5161 = vmatpush2.bf16.msra.mxu0 0
      %5162 = vmatprep.subr.bf16.mxu0 0
      %5163 = vmatpush2.bf16.msra.mxu0 0
      %5164 = vmatprep.subr.bf16.mxu0 0
      %5165 = vmatpush2.bf16.msra.mxu0 0
      %5166 = vmatprep.subr.bf16.mxu0 0
      %5167 = vmatpush2.bf16.msra.mxu0 0
      %5168 = vmatprep.subr.bf16.mxu0 0
      %5169 = vmatpush2.bf16.msra.mxu0 0
      %5170 = vmatprep.subr.bf16.mxu0 0
      %5171 = vmatpush2.bf16.msra.mxu0 0
      %5172 = vmatprep.subr.bf16.mxu0 0
      %5173 = vmatpush2.bf16.msra.mxu0 0
      %5174 = vmatprep.mubr.bf16.mxu0 0
      %5175 = vmatmul.mubr.bf16.gmra.mxu0 %v3460
      %v5176 = vpop.f32.mrf.mxu0
      %v5177 = vadd.f32 0.0, %v5176
      %v5178 = vpop.f32.mrf.mxu0
      %v5179 = vadd.f32 0.0, %v5178
      %v5180 = vpop.f32.mrf.mxu0
      %v5181 = vadd.f32 0.0, %v5180
      %v5182 = vpop.f32.mrf.mxu0
      %v5183 = vadd.f32 0.0, %v5182
      %5184 = vdwg.mxu0
      %v5185 = vpack.c.bf16 %v5181, %v5177
      %v5186 = vpack.c.bf16 %v5183, %v5179
      %s5187 = scalar_lea.vmem %s12, 448
      %v5188 = vld [vmem:[%s5187] sm:$0xff]
      %v5189 = vld [vmem:[%s5187 + $0x8] sm:$0x11]
      %v5192 = vunpack.c.l.b16 %v5188
      %v5193 = vunpack.c.h.b16 %v5188
      %v5194 = vunpack.c.l.b16 %v5189
      %v5195 = vunpack.c.h.b16 %v5189
      %v5196 = vpack.c.b16 %v5194, %v5192
      %v5197 = vpack.c.b16 %v5195, %v5193
      %v5199 = vand.u32 %v5196, %v2545
      %v5202 = vand.u32 %v5197, %v2545
      %5204 = vmatprep.subr.bf16.mxu0 0
      %5205 = vmatpush1.bf16.msra.mxu0 0
      %5206 = vmatprep.subr.bf16.mxu0 0
      %5207 = vmatpush1.bf16.msra.mxu0 0
      %5208 = vmatprep.subr.bf16.mxu0 0
      %5209 = vmatpush1.bf16.msra.mxu0 0
      %5210 = vmatprep.subr.bf16.mxu0 0
      %5211 = vmatpush1.bf16.msra.mxu0 0
      %5212 = vmatprep.subr.bf16.mxu0 0
      %5213 = vmatpush1.bf16.msra.mxu0 0
      %5214 = vmatprep.subr.bf16.mxu0 0
      %5215 = vmatpush1.bf16.msra.mxu0 0
      %5216 = vmatprep.subr.bf16.mxu0 0
      %5217 = vmatpush1.bf16.msra.mxu0 0
      %5218 = vmatprep.subr.bf16.mxu0 %v5202
      %5219 = vmatpush1.bf16.msra.mxu0 %v5199
      %5220 = vmatprep.subr.bf16.mxu0 0
      %5221 = vmatpush2.bf16.msra.mxu0 0
      %5222 = vmatprep.subr.bf16.mxu0 0
      %5223 = vmatpush2.bf16.msra.mxu0 0
      %5224 = vmatprep.subr.bf16.mxu0 0
      %5225 = vmatpush2.bf16.msra.mxu0 0
      %5226 = vmatprep.subr.bf16.mxu0 0
      %5227 = vmatpush2.bf16.msra.mxu0 0
      %5228 = vmatprep.subr.bf16.mxu0 0
      %5229 = vmatpush2.bf16.msra.mxu0 0
      %5230 = vmatprep.subr.bf16.mxu0 0
      %5231 = vmatpush2.bf16.msra.mxu0 0
      %5232 = vmatprep.subr.bf16.mxu0 0
      %5233 = vmatpush2.bf16.msra.mxu0 0
      %5234 = vmatprep.subr.bf16.mxu0 0
      %5235 = vmatpush2.bf16.msra.mxu0 0
      %5236 = vmatprep.mubr.bf16.mxu0 0
      %5237 = vmatmul.mubr.bf16.gmra.mxu0 %v3460
      %v5238 = vpop.f32.mrf.mxu0
      %v5239 = vadd.f32 0.0, %v5238
      %v5240 = vpop.f32.mrf.mxu0
      %v5241 = vadd.f32 0.0, %v5240
      %v5242 = vpop.f32.mrf.mxu0
      %v5243 = vadd.f32 0.0, %v5242
      %v5244 = vpop.f32.mrf.mxu0
      %v5245 = vadd.f32 0.0, %v5244
      %5246 = vdwg.mxu0
      %v5247 = vpack.c.bf16 %v5243, %v5239
      %v5248 = vpack.c.bf16 %v5245, %v5241
      %s5249 = scalar_lea.vmem %s12, 464
      %v5250 = vld [vmem:[%s5249] sm:$0xff]
      %v5251 = vld [vmem:[%s5249 + $0x8] sm:$0x11]
      %v5254 = vunpack.c.l.b16 %v5250
      %v5255 = vunpack.c.h.b16 %v5250
      %v5256 = vunpack.c.l.b16 %v5251
      %v5257 = vunpack.c.h.b16 %v5251
      %v5258 = vpack.c.b16 %v5256, %v5254
      %v5259 = vpack.c.b16 %v5257, %v5255
      %v5261 = vand.u32 %v5258, %v2545
      %v5264 = vand.u32 %v5259, %v2545
      %5266 = vmatprep.subr.bf16.mxu0 0
      %5267 = vmatpush1.bf16.msra.mxu0 0
      %5268 = vmatprep.subr.bf16.mxu0 0
      %5269 = vmatpush1.bf16.msra.mxu0 0
      %5270 = vmatprep.subr.bf16.mxu0 0
      %5271 = vmatpush1.bf16.msra.mxu0 0
      %5272 = vmatprep.subr.bf16.mxu0 0
      %5273 = vmatpush1.bf16.msra.mxu0 0
      %5274 = vmatprep.subr.bf16.mxu0 0
      %5275 = vmatpush1.bf16.msra.mxu0 0
      %5276 = vmatprep.subr.bf16.mxu0 0
      %5277 = vmatpush1.bf16.msra.mxu0 0
      %5278 = vmatprep.subr.bf16.mxu0 0
      %5279 = vmatpush1.bf16.msra.mxu0 0
      %5280 = vmatprep.subr.bf16.mxu0 %v5264
      %5281 = vmatpush1.bf16.msra.mxu0 %v5261
      %5282 = vmatprep.subr.bf16.mxu0 0
      %5283 = vmatpush2.bf16.msra.mxu0 0
      %5284 = vmatprep.subr.bf16.mxu0 0
      %5285 = vmatpush2.bf16.msra.mxu0 0
      %5286 = vmatprep.subr.bf16.mxu0 0
      %5287 = vmatpush2.bf16.msra.mxu0 0
      %5288 = vmatprep.subr.bf16.mxu0 0
      %5289 = vmatpush2.bf16.msra.mxu0 0
      %5290 = vmatprep.subr.bf16.mxu0 0
      %5291 = vmatpush2.bf16.msra.mxu0 0
      %5292 = vmatprep.subr.bf16.mxu0 0
      %5293 = vmatpush2.bf16.msra.mxu0 0
      %5294 = vmatprep.subr.bf16.mxu0 0
      %5295 = vmatpush2.bf16.msra.mxu0 0
      %5296 = vmatprep.subr.bf16.mxu0 0
      %5297 = vmatpush2.bf16.msra.mxu0 0
      %5298 = vmatprep.mubr.bf16.mxu0 0
      %5299 = vmatmul.mubr.bf16.gmra.mxu0 %v3460
      %v5300 = vpop.f32.mrf.mxu0
      %v5301 = vadd.f32 0.0, %v5300
      %v5302 = vpop.f32.mrf.mxu0
      %v5303 = vadd.f32 0.0, %v5302
      %v5304 = vpop.f32.mrf.mxu0
      %v5305 = vadd.f32 0.0, %v5304
      %v5306 = vpop.f32.mrf.mxu0
      %v5307 = vadd.f32 0.0, %v5306
      %5308 = vdwg.mxu0
      %v5309 = vpack.c.bf16 %v5305, %v5301
      %v5310 = vpack.c.bf16 %v5307, %v5303
      %s5311 = scalar_lea.vmem %s12, 480
      %v5312 = vld [vmem:[%s5311] sm:$0xff]
      %v5313 = vld [vmem:[%s5311 + $0x8] sm:$0x11]
      %v5316 = vunpack.c.l.b16 %v5312
      %v5317 = vunpack.c.h.b16 %v5312
      %v5318 = vunpack.c.l.b16 %v5313
      %v5319 = vunpack.c.h.b16 %v5313
      %v5320 = vpack.c.b16 %v5318, %v5316
      %v5321 = vpack.c.b16 %v5319, %v5317
      %v5323 = vand.u32 %v5320, %v2545
      %v5326 = vand.u32 %v5321, %v2545
      %5328 = vmatprep.subr.bf16.mxu0 0
      %5329 = vmatpush1.bf16.msra.mxu0 0
      %5330 = vmatprep.subr.bf16.mxu0 0
      %5331 = vmatpush1.bf16.msra.mxu0 0
      %5332 = vmatprep.subr.bf16.mxu0 0
      %5333 = vmatpush1.bf16.msra.mxu0 0
      %5334 = vmatprep.subr.bf16.mxu0 0
      %5335 = vmatpush1.bf16.msra.mxu0 0
      %5336 = vmatprep.subr.bf16.mxu0 0
      %5337 = vmatpush1.bf16.msra.mxu0 0
      %5338 = vmatprep.subr.bf16.mxu0 0
      %5339 = vmatpush1.bf16.msra.mxu0 0
      %5340 = vmatprep.subr.bf16.mxu0 0
      %5341 = vmatpush1.bf16.msra.mxu0 0
      %5342 = vmatprep.subr.bf16.mxu0 %v5326
      %5343 = vmatpush1.bf16.msra.mxu0 %v5323
      %5344 = vmatprep.subr.bf16.mxu0 0
      %5345 = vmatpush2.bf16.msra.mxu0 0
      %5346 = vmatprep.subr.bf16.mxu0 0
      %5347 = vmatpush2.bf16.msra.mxu0 0
      %5348 = vmatprep.subr.bf16.mxu0 0
      %5349 = vmatpush2.bf16.msra.mxu0 0
      %5350 = vmatprep.subr.bf16.mxu0 0
      %5351 = vmatpush2.bf16.msra.mxu0 0
      %5352 = vmatprep.subr.bf16.mxu0 0
      %5353 = vmatpush2.bf16.msra.mxu0 0
      %5354 = vmatprep.subr.bf16.mxu0 0
      %5355 = vmatpush2.bf16.msra.mxu0 0
      %5356 = vmatprep.subr.bf16.mxu0 0
      %5357 = vmatpush2.bf16.msra.mxu0 0
      %5358 = vmatprep.subr.bf16.mxu0 0
      %5359 = vmatpush2.bf16.msra.mxu0 0
      %5360 = vmatprep.mubr.bf16.mxu0 0
      %5361 = vmatmul.mubr.bf16.gmra.mxu0 %v3460
      %v5362 = vpop.f32.mrf.mxu0
      %v5363 = vadd.f32 0.0, %v5362
      %v5364 = vpop.f32.mrf.mxu0
      %v5365 = vadd.f32 0.0, %v5364
      %v5366 = vpop.f32.mrf.mxu0
      %v5367 = vadd.f32 0.0, %v5366
      %v5368 = vpop.f32.mrf.mxu0
      %v5369 = vadd.f32 0.0, %v5368
      %5370 = vdwg.mxu0
      %v5371 = vpack.c.bf16 %v5367, %v5363
      %v5372 = vpack.c.bf16 %v5369, %v5365
      %s5373 = scalar_lea.vmem %s12, 496
      %v5374 = vld [vmem:[%s5373] sm:$0xff]
      %v5375 = vld [vmem:[%s5373 + $0x8] sm:$0x11]
      %v5378 = vunpack.c.l.b16 %v5374
      %v5379 = vunpack.c.h.b16 %v5374
      %v5380 = vunpack.c.l.b16 %v5375
      %v5381 = vunpack.c.h.b16 %v5375
      %v5382 = vpack.c.b16 %v5380, %v5378
      %v5383 = vpack.c.b16 %v5381, %v5379
      %v5385 = vand.u32 %v5382, %v2545
      %v5388 = vand.u32 %v5383, %v2545
      %5390 = vmatprep.subr.bf16.mxu0 0
      %5391 = vmatpush1.bf16.msra.mxu0 0
      %5392 = vmatprep.subr.bf16.mxu0 0
      %5393 = vmatpush1.bf16.msra.mxu0 0
      %5394 = vmatprep.subr.bf16.mxu0 0
      %5395 = vmatpush1.bf16.msra.mxu0 0
      %5396 = vmatprep.subr.bf16.mxu0 0
      %5397 = vmatpush1.bf16.msra.mxu0 0
      %5398 = vmatprep.subr.bf16.mxu0 0
      %5399 = vmatpush1.bf16.msra.mxu0 0
      %5400 = vmatprep.subr.bf16.mxu0 0
      %5401 = vmatpush1.bf16.msra.mxu0 0
      %5402 = vmatprep.subr.bf16.mxu0 0
      %5403 = vmatpush1.bf16.msra.mxu0 0
      %5404 = vmatprep.subr.bf16.mxu0 %v5388
      %5405 = vmatpush1.bf16.msra.mxu0 %v5385
      %5406 = vmatprep.subr.bf16.mxu0 0
      %5407 = vmatpush2.bf16.msra.mxu0 0
      %5408 = vmatprep.subr.bf16.mxu0 0
      %5409 = vmatpush2.bf16.msra.mxu0 0
      %5410 = vmatprep.subr.bf16.mxu0 0
      %5411 = vmatpush2.bf16.msra.mxu0 0
      %5412 = vmatprep.subr.bf16.mxu0 0
      %5413 = vmatpush2.bf16.msra.mxu0 0
      %5414 = vmatprep.subr.bf16.mxu0 0
      %5415 = vmatpush2.bf16.msra.mxu0 0
      %5416 = vmatprep.subr.bf16.mxu0 0
      %5417 = vmatpush2.bf16.msra.mxu0 0
      %5418 = vmatprep.subr.bf16.mxu0 0
      %5419 = vmatpush2.bf16.msra.mxu0 0
      %5420 = vmatprep.subr.bf16.mxu0 0
      %5421 = vmatpush2.bf16.msra.mxu0 0
      %5422 = vmatprep.mubr.bf16.mxu0 0
      %5423 = vmatmul.mubr.bf16.gmra.mxu0 %v3460
      %v5424 = vpop.f32.mrf.mxu0
      %v5425 = vadd.f32 0.0, %v5424
      %v5426 = vpop.f32.mrf.mxu0
      %v5427 = vadd.f32 0.0, %v5426
      %v5428 = vpop.f32.mrf.mxu0
      %v5429 = vadd.f32 0.0, %v5428
      %v5430 = vpop.f32.mrf.mxu0
      %v5431 = vadd.f32 0.0, %v5430
      %5432 = vdwg.mxu0
      %v5433 = vpack.c.bf16 %v5429, %v5425
      %v5434 = vpack.c.bf16 %v5431, %v5427
      %s5435 = scalar_lea.vmem %s12, 512
      %v5436 = vld [vmem:[%s5435] sm:$0xff]
      %v5437 = vld [vmem:[%s5435 + $0x8] sm:$0x11]
      %v5440 = vunpack.c.l.b16 %v5436
      %v5441 = vunpack.c.h.b16 %v5436
      %v5442 = vunpack.c.l.b16 %v5437
      %v5443 = vunpack.c.h.b16 %v5437
      %v5444 = vpack.c.b16 %v5442, %v5440
      %v5445 = vpack.c.b16 %v5443, %v5441
      %v5447 = vand.u32 %v5444, %v2545
      %v5450 = vand.u32 %v5445, %v2545
      %5452 = vmatprep.subr.bf16.mxu0 0
      %5453 = vmatpush1.bf16.msra.mxu0 0
      %5454 = vmatprep.subr.bf16.mxu0 0
      %5455 = vmatpush1.bf16.msra.mxu0 0
      %5456 = vmatprep.subr.bf16.mxu0 0
      %5457 = vmatpush1.bf16.msra.mxu0 0
      %5458 = vmatprep.subr.bf16.mxu0 0
      %5459 = vmatpush1.bf16.msra.mxu0 0
      %5460 = vmatprep.subr.bf16.mxu0 0
      %5461 = vmatpush1.bf16.msra.mxu0 0
      %5462 = vmatprep.subr.bf16.mxu0 0
      %5463 = vmatpush1.bf16.msra.mxu0 0
      %5464 = vmatprep.subr.bf16.mxu0 0
      %5465 = vmatpush1.bf16.msra.mxu0 0
      %5466 = vmatprep.subr.bf16.mxu0 %v5450
      %5467 = vmatpush1.bf16.msra.mxu0 %v5447
      %5468 = vmatprep.subr.bf16.mxu0 0
      %5469 = vmatpush2.bf16.msra.mxu0 0
      %5470 = vmatprep.subr.bf16.mxu0 0
      %5471 = vmatpush2.bf16.msra.mxu0 0
      %5472 = vmatprep.subr.bf16.mxu0 0
      %5473 = vmatpush2.bf16.msra.mxu0 0
      %5474 = vmatprep.subr.bf16.mxu0 0
      %5475 = vmatpush2.bf16.msra.mxu0 0
      %5476 = vmatprep.subr.bf16.mxu0 0
      %5477 = vmatpush2.bf16.msra.mxu0 0
      %5478 = vmatprep.subr.bf16.mxu0 0
      %5479 = vmatpush2.bf16.msra.mxu0 0
      %5480 = vmatprep.subr.bf16.mxu0 0
      %5481 = vmatpush2.bf16.msra.mxu0 0
      %5482 = vmatprep.subr.bf16.mxu0 0
      %5483 = vmatpush2.bf16.msra.mxu0 0
      %5484 = vmatprep.mubr.bf16.mxu0 0
      %5485 = vmatmul.mubr.bf16.gmra.mxu0 %v3460
      %v5486 = vpop.f32.mrf.mxu0
      %v5487 = vadd.f32 0.0, %v5486
      %v5488 = vpop.f32.mrf.mxu0
      %v5489 = vadd.f32 0.0, %v5488
      %v5490 = vpop.f32.mrf.mxu0
      %v5491 = vadd.f32 0.0, %v5490
      %v5492 = vpop.f32.mrf.mxu0
      %v5493 = vadd.f32 0.0, %v5492
      %5494 = vdwg.mxu0
      %v5495 = vpack.c.bf16 %v5491, %v5487
      %v5496 = vpack.c.bf16 %v5493, %v5489
      %s5497 = scalar_lea.vmem %s12, 528
      %v5498 = vld [vmem:[%s5497] sm:$0xff]
      %v5499 = vld [vmem:[%s5497 + $0x8] sm:$0x11]
      %v5502 = vunpack.c.l.b16 %v5498
      %v5503 = vunpack.c.h.b16 %v5498
      %v5504 = vunpack.c.l.b16 %v5499
      %v5505 = vunpack.c.h.b16 %v5499
      %v5506 = vpack.c.b16 %v5504, %v5502
      %v5507 = vpack.c.b16 %v5505, %v5503
      %v5509 = vand.u32 %v5506, %v2545
      %v5512 = vand.u32 %v5507, %v2545
      %5514 = vmatprep.subr.bf16.mxu0 0
      %5515 = vmatpush1.bf16.msra.mxu0 0
      %5516 = vmatprep.subr.bf16.mxu0 0
      %5517 = vmatpush1.bf16.msra.mxu0 0
      %5518 = vmatprep.subr.bf16.mxu0 0
      %5519 = vmatpush1.bf16.msra.mxu0 0
      %5520 = vmatprep.subr.bf16.mxu0 0
      %5521 = vmatpush1.bf16.msra.mxu0 0
      %5522 = vmatprep.subr.bf16.mxu0 0
      %5523 = vmatpush1.bf16.msra.mxu0 0
      %5524 = vmatprep.subr.bf16.mxu0 0
      %5525 = vmatpush1.bf16.msra.mxu0 0
      %5526 = vmatprep.subr.bf16.mxu0 0
      %5527 = vmatpush1.bf16.msra.mxu0 0
      %5528 = vmatprep.subr.bf16.mxu0 %v5512
      %5529 = vmatpush1.bf16.msra.mxu0 %v5509
      %5530 = vmatprep.subr.bf16.mxu0 0
      %5531 = vmatpush2.bf16.msra.mxu0 0
      %5532 = vmatprep.subr.bf16.mxu0 0
      %5533 = vmatpush2.bf16.msra.mxu0 0
      %5534 = vmatprep.subr.bf16.mxu0 0
      %5535 = vmatpush2.bf16.msra.mxu0 0
      %5536 = vmatprep.subr.bf16.mxu0 0
      %5537 = vmatpush2.bf16.msra.mxu0 0
      %5538 = vmatprep.subr.bf16.mxu0 0
      %5539 = vmatpush2.bf16.msra.mxu0 0
      %5540 = vmatprep.subr.bf16.mxu0 0
      %5541 = vmatpush2.bf16.msra.mxu0 0
      %5542 = vmatprep.subr.bf16.mxu0 0
      %5543 = vmatpush2.bf16.msra.mxu0 0
      %5544 = vmatprep.subr.bf16.mxu0 0
      %5545 = vmatpush2.bf16.msra.mxu0 0
      %5546 = vmatprep.mubr.bf16.mxu0 0
      %5547 = vmatmul.mubr.bf16.gmra.mxu0 %v3460
      %v5548 = vpop.f32.mrf.mxu0
      %v5549 = vadd.f32 0.0, %v5548
      %v5550 = vpop.f32.mrf.mxu0
      %v5551 = vadd.f32 0.0, %v5550
      %v5552 = vpop.f32.mrf.mxu0
      %v5553 = vadd.f32 0.0, %v5552
      %v5554 = vpop.f32.mrf.mxu0
      %v5555 = vadd.f32 0.0, %v5554
      %5556 = vdwg.mxu0
      %v5557 = vpack.c.bf16 %v5553, %v5549
      %v5558 = vpack.c.bf16 %v5555, %v5551
      %s5559 = scalar_lea.vmem %s12, 544
      %v5560 = vld [vmem:[%s5559] sm:$0xff]
      %v5561 = vld [vmem:[%s5559 + $0x8] sm:$0x11]
      %v5564 = vunpack.c.l.b16 %v5560
      %v5565 = vunpack.c.h.b16 %v5560
      %v5566 = vunpack.c.l.b16 %v5561
      %v5567 = vunpack.c.h.b16 %v5561
      %v5568 = vpack.c.b16 %v5566, %v5564
      %v5569 = vpack.c.b16 %v5567, %v5565
      %v5571 = vand.u32 %v5568, %v2545
      %v5574 = vand.u32 %v5569, %v2545
      %5576 = vmatprep.subr.bf16.mxu0 0
      %5577 = vmatpush1.bf16.msra.mxu0 0
      %5578 = vmatprep.subr.bf16.mxu0 0
      %5579 = vmatpush1.bf16.msra.mxu0 0
      %5580 = vmatprep.subr.bf16.mxu0 0
      %5581 = vmatpush1.bf16.msra.mxu0 0
      %5582 = vmatprep.subr.bf16.mxu0 0
      %5583 = vmatpush1.bf16.msra.mxu0 0
      %5584 = vmatprep.subr.bf16.mxu0 0
      %5585 = vmatpush1.bf16.msra.mxu0 0
      %5586 = vmatprep.subr.bf16.mxu0 0
      %5587 = vmatpush1.bf16.msra.mxu0 0
      %5588 = vmatprep.subr.bf16.mxu0 0
      %5589 = vmatpush1.bf16.msra.mxu0 0
      %5590 = vmatprep.subr.bf16.mxu0 %v5574
      %5591 = vmatpush1.bf16.msra.mxu0 %v5571
      %5592 = vmatprep.subr.bf16.mxu0 0
      %5593 = vmatpush2.bf16.msra.mxu0 0
      %5594 = vmatprep.subr.bf16.mxu0 0
      %5595 = vmatpush2.bf16.msra.mxu0 0
      %5596 = vmatprep.subr.bf16.mxu0 0
      %5597 = vmatpush2.bf16.msra.mxu0 0
      %5598 = vmatprep.subr.bf16.mxu0 0
      %5599 = vmatpush2.bf16.msra.mxu0 0
      %5600 = vmatprep.subr.bf16.mxu0 0
      %5601 = vmatpush2.bf16.msra.mxu0 0
      %5602 = vmatprep.subr.bf16.mxu0 0
      %5603 = vmatpush2.bf16.msra.mxu0 0
      %5604 = vmatprep.subr.bf16.mxu0 0
      %5605 = vmatpush2.bf16.msra.mxu0 0
      %5606 = vmatprep.subr.bf16.mxu0 0
      %5607 = vmatpush2.bf16.msra.mxu0 0
      %5608 = vmatprep.mubr.bf16.mxu0 0
      %5609 = vmatmul.mubr.bf16.gmra.mxu0 %v3460
      %v5610 = vpop.f32.mrf.mxu0
      %v5611 = vadd.f32 0.0, %v5610
      %v5612 = vpop.f32.mrf.mxu0
      %v5613 = vadd.f32 0.0, %v5612
      %v5614 = vpop.f32.mrf.mxu0
      %v5615 = vadd.f32 0.0, %v5614
      %v5616 = vpop.f32.mrf.mxu0
      %v5617 = vadd.f32 0.0, %v5616
      %5618 = vdwg.mxu0
      %v5619 = vpack.c.bf16 %v5615, %v5611
      %v5620 = vpack.c.bf16 %v5617, %v5613
      %s5621 = scalar_lea.vmem %s12, 560
      %v5622 = vld [vmem:[%s5621] sm:$0xff]
      %v5623 = vld [vmem:[%s5621 + $0x8] sm:$0x11]
      %v5626 = vunpack.c.l.b16 %v5622
      %v5627 = vunpack.c.h.b16 %v5622
      %v5628 = vunpack.c.l.b16 %v5623
      %v5629 = vunpack.c.h.b16 %v5623
      %v5630 = vpack.c.b16 %v5628, %v5626
      %v5631 = vpack.c.b16 %v5629, %v5627
      %v5633 = vand.u32 %v5630, %v2545
      %v5636 = vand.u32 %v5631, %v2545
      %5638 = vmatprep.subr.bf16.mxu0 0
      %5639 = vmatpush1.bf16.msra.mxu0 0
      %5640 = vmatprep.subr.bf16.mxu0 0
      %5641 = vmatpush1.bf16.msra.mxu0 0
      %5642 = vmatprep.subr.bf16.mxu0 0
      %5643 = vmatpush1.bf16.msra.mxu0 0
      %5644 = vmatprep.subr.bf16.mxu0 0
      %5645 = vmatpush1.bf16.msra.mxu0 0
      %5646 = vmatprep.subr.bf16.mxu0 0
      %5647 = vmatpush1.bf16.msra.mxu0 0
      %5648 = vmatprep.subr.bf16.mxu0 0
      %5649 = vmatpush1.bf16.msra.mxu0 0
      %5650 = vmatprep.subr.bf16.mxu0 0
      %5651 = vmatpush1.bf16.msra.mxu0 0
      %5652 = vmatprep.subr.bf16.mxu0 %v5636
      %5653 = vmatpush1.bf16.msra.mxu0 %v5633
      %5654 = vmatprep.subr.bf16.mxu0 0
      %5655 = vmatpush2.bf16.msra.mxu0 0
      %5656 = vmatprep.subr.bf16.mxu0 0
      %5657 = vmatpush2.bf16.msra.mxu0 0
      %5658 = vmatprep.subr.bf16.mxu0 0
      %5659 = vmatpush2.bf16.msra.mxu0 0
      %5660 = vmatprep.subr.bf16.mxu0 0
      %5661 = vmatpush2.bf16.msra.mxu0 0
      %5662 = vmatprep.subr.bf16.mxu0 0
      %5663 = vmatpush2.bf16.msra.mxu0 0
      %5664 = vmatprep.subr.bf16.mxu0 0
      %5665 = vmatpush2.bf16.msra.mxu0 0
      %5666 = vmatprep.subr.bf16.mxu0 0
      %5667 = vmatpush2.bf16.msra.mxu0 0
      %5668 = vmatprep.subr.bf16.mxu0 0
      %5669 = vmatpush2.bf16.msra.mxu0 0
      %5670 = vmatprep.mubr.bf16.mxu0 0
      %5671 = vmatmul.mubr.bf16.gmra.mxu0 %v3460
      %v5672 = vpop.f32.mrf.mxu0
      %v5673 = vadd.f32 0.0, %v5672
      %v5674 = vpop.f32.mrf.mxu0
      %v5675 = vadd.f32 0.0, %v5674
      %v5676 = vpop.f32.mrf.mxu0
      %v5677 = vadd.f32 0.0, %v5676
      %v5678 = vpop.f32.mrf.mxu0
      %v5679 = vadd.f32 0.0, %v5678
      %5680 = vdwg.mxu0
      %v5681 = vpack.c.bf16 %v5677, %v5673
      %v5682 = vpack.c.bf16 %v5679, %v5675
      %v5683 = vld [vmem:[%s13] sm:$0xff]
      %v5684 = vld [vmem:[%s13 + $0x8] sm:$0xff]
      %v5685 = vld [vmem:[%s13 + $0x10] sm:$0xf]
      %v5686 = vld [vmem:[%s14] sm:$0xff]
      %5688 = vset.pattern.permute.xlu0 0
      %5689 = vperm.xlu0 %5688, %v5686
      %v5690 = vpop.permute.xlu0 %5689
      %v5695 = vunpack.c.l.b16 %v5683
      %v5696 = vunpack.c.h.b16 %v5683
      %v5697 = vunpack.c.l.b16 %v5684
      %v5698 = vunpack.c.h.b16 %v5684
      %v5699 = vunpack.c.l.b16 %v5685
      %v5700 = vpack.c.b16 %v5695, %v5695
      %v5701 = vpack.c.b16 %v5696, %v5696
      %v5702 = vpack.c.b16 %v5697, %v5697
      %v5703 = vpack.c.b16 %v5698, %v5698
      %v5704 = vpack.c.b16 %v5699, %v5699
      %vm5709 = vcmask 523264
      %v5711 = vsel %vm5709, %v5704, 0
      %5713 = vmatprep.subr.bf16.mxu0 %v3946
      %5714 = vmatpush1.bf16.msra.mxu0 %v3945
      %5715 = vmatprep.subr.bf16.mxu0 %v3884
      %5716 = vmatpush1.bf16.msra.mxu0 %v3883
      %5717 = vmatprep.subr.bf16.mxu0 %v3822
      %5718 = vmatpush1.bf16.msra.mxu0 %v3821
      %5719 = vmatprep.subr.bf16.mxu0 %v3760
      %5720 = vmatpush1.bf16.msra.mxu0 %v3759
      %5721 = vmatprep.subr.bf16.mxu0 %v3698
      %5722 = vmatpush1.bf16.msra.mxu0 %v3697
      %5723 = vmatprep.subr.bf16.mxu0 %v3636
      %5724 = vmatpush1.bf16.msra.mxu0 %v3635
      %5725 = vmatprep.subr.bf16.mxu0 %v3574
      %5726 = vmatpush1.bf16.msra.mxu0 %v3573
      %5727 = vmatprep.subr.bf16.mxu0 %v3512
      %5728 = vmatpush1.bf16.msra.mxu0 %v3511
      %5729 = vmatprep.subr.bf16.mxu0 %v4442
      %5730 = vmatpush2.bf16.msra.mxu0 %v4441
      %5731 = vmatprep.subr.bf16.mxu0 %v4380
      %5732 = vmatpush2.bf16.msra.mxu0 %v4379
      %5733 = vmatprep.subr.bf16.mxu0 %v4318
      %5734 = vmatpush2.bf16.msra.mxu0 %v4317
      %5735 = vmatprep.subr.bf16.mxu0 %v4256
      %5736 = vmatpush2.bf16.msra.mxu0 %v4255
      %5737 = vmatprep.subr.bf16.mxu0 %v4194
      %5738 = vmatpush2.bf16.msra.mxu0 %v4193
      %5739 = vmatprep.subr.bf16.mxu0 %v4132
      %5740 = vmatpush2.bf16.msra.mxu0 %v4131
      %5741 = vmatprep.subr.bf16.mxu0 %v4070
      %5742 = vmatpush2.bf16.msra.mxu0 %v4069
      %5743 = vmatprep.subr.bf16.mxu0 %v4008
      %5744 = vmatpush2.bf16.msra.mxu0 %v4007
      %5745 = vmatprep.mubr.bf16.mxu0 %v5701
      %5746 = vmatmul.mubr.bf16.gmra.mxu0 %v5700
      %v5747 = vpop.f32.mrf.mxu0
      %v5748 = vadd.f32 %v5690, %v5747
      %v5749 = vpop.f32.mrf.mxu0
      %v5750 = vadd.f32 %v5690, %v5749
      %v5751 = vpop.f32.mrf.mxu0
      %v5752 = vpop.f32.mrf.mxu0
      %5753 = vdwg.mxu0
      %5754 = vmatprep.subr.bf16.mxu0 %v4938
      %5755 = vmatpush1.bf16.msra.mxu0 %v4937
      %5756 = vmatprep.subr.bf16.mxu0 %v4876
      %5757 = vmatpush1.bf16.msra.mxu0 %v4875
      %5758 = vmatprep.subr.bf16.mxu0 %v4814
      %5759 = vmatpush1.bf16.msra.mxu0 %v4813
      %5760 = vmatprep.subr.bf16.mxu0 %v4752
      %5761 = vmatpush1.bf16.msra.mxu0 %v4751
      %5762 = vmatprep.subr.bf16.mxu0 %v4690
      %5763 = vmatpush1.bf16.msra.mxu0 %v4689
      %5764 = vmatprep.subr.bf16.mxu0 %v4628
      %5765 = vmatpush1.bf16.msra.mxu0 %v4627
      %5766 = vmatprep.subr.bf16.mxu0 %v4566
      %5767 = vmatpush1.bf16.msra.mxu0 %v4565
      %5768 = vmatprep.subr.bf16.mxu0 %v4504
      %5769 = vmatpush1.bf16.msra.mxu0 %v4503
      %5770 = vmatprep.subr.bf16.mxu0 %v5434
      %5771 = vmatpush2.bf16.msra.mxu0 %v5433
      %5772 = vmatprep.subr.bf16.mxu0 %v5372
      %5773 = vmatpush2.bf16.msra.mxu0 %v5371
      %5774 = vmatprep.subr.bf16.mxu0 %v5310
      %5775 = vmatpush2.bf16.msra.mxu0 %v5309
      %5776 = vmatprep.subr.bf16.mxu0 %v5248
      %5777 = vmatpush2.bf16.msra.mxu0 %v5247
      %5778 = vmatprep.subr.bf16.mxu0 %v5186
      %5779 = vmatpush2.bf16.msra.mxu0 %v5185
      %5780 = vmatprep.subr.bf16.mxu0 %v5124
      %5781 = vmatpush2.bf16.msra.mxu0 %v5123
      %5782 = vmatprep.subr.bf16.mxu0 %v5062
      %5783 = vmatpush2.bf16.msra.mxu0 %v5061
      %5784 = vmatprep.subr.bf16.mxu0 %v5000
      %5785 = vmatpush2.bf16.msra.mxu0 %v4999
      %5786 = vmatprep.mubr.bf16.mxu0 %v5703
      %5787 = vmatmul.mubr.bf16.gmra.mxu0 %v5702
      %v5788 = vpop.f32.mrf.mxu0
      %v5789 = vadd.f32 %v5748, %v5788
      %v5790 = vpop.f32.mrf.mxu0
      %v5791 = vadd.f32 %v5750, %v5790
      %v5792 = vpop.f32.mrf.mxu0
      %v5793 = vpop.f32.mrf.mxu0
      %5794 = vdwg.mxu0
      %5795 = vmatprep.subr.bf16.mxu0 0
      %5796 = vmatpush1.bf16.msra.mxu0 0
      %5797 = vmatprep.subr.bf16.mxu0 0
      %5798 = vmatpush1.bf16.msra.mxu0 0
      %5799 = vmatprep.subr.bf16.mxu0 0
      %5800 = vmatpush1.bf16.msra.mxu0 0
      %5801 = vmatprep.subr.bf16.mxu0 0
      %5802 = vmatpush1.bf16.msra.mxu0 0
      %5803 = vmatprep.subr.bf16.mxu0 %v5682
      %5804 = vmatpush1.bf16.msra.mxu0 %v5681
      %5805 = vmatprep.subr.bf16.mxu0 %v5620
      %5806 = vmatpush1.bf16.msra.mxu0 %v5619
      %5807 = vmatprep.subr.bf16.mxu0 %v5558
      %5808 = vmatpush1.bf16.msra.mxu0 %v5557
      %5809 = vmatprep.subr.bf16.mxu0 %v5496
      %5810 = vmatpush1.bf16.msra.mxu0 %v5495
      %5811 = vmatprep.subr.bf16.mxu0 0
      %5812 = vmatpush2.bf16.msra.mxu0 0
      %5813 = vmatprep.subr.bf16.mxu0 0
      %5814 = vmatpush2.bf16.msra.mxu0 0
      %5815 = vmatprep.subr.bf16.mxu0 0
      %5816 = vmatpush2.bf16.msra.mxu0 0
      %5817 = vmatprep.subr.bf16.mxu0 0
      %5818 = vmatpush2.bf16.msra.mxu0 0
      %5819 = vmatprep.subr.bf16.mxu0 0
      %5820 = vmatpush2.bf16.msra.mxu0 0
      %5821 = vmatprep.subr.bf16.mxu0 0
      %5822 = vmatpush2.bf16.msra.mxu0 0
      %5823 = vmatprep.subr.bf16.mxu0 0
      %5824 = vmatpush2.bf16.msra.mxu0 0
      %5825 = vmatprep.subr.bf16.mxu0 0
      %5826 = vmatpush2.bf16.msra.mxu0 0
      %5827 = vmatprep.mubr.bf16.mxu0 0
      %5828 = vmatmul.mubr.bf16.gmra.mxu0 %v5711
      %v5829 = vpop.f32.mrf.mxu0
      %v5830 = vadd.f32 %v5789, %v5829
      %v5831 = vpop.f32.mrf.mxu0
      %v5832 = vadd.f32 %v5791, %v5831
      %v5833 = vpop.f32.mrf.mxu0
      %v5834 = vpop.f32.mrf.mxu0
      %5835 = vdwg.mxu0
      %v5836 = vmax.f32 %v5830, 0.0
      %v5837 = vmax.f32 %v5832, 0.0
      %v5838 = vpack.c.bf16 %v5836, %v5836
      %v5839 = vpack.c.bf16 %v5837, %v5837
      %v5840 = vld [vmem:[%s15] sm:$0xff]
      %v5841 = vld [vmem:[%s15 + $0x8] sm:$0xff]
      %v5842 = vld [vmem:[%s15 + $0x10] sm:$0xf]
      %v5843 = vld [vmem:[%s15 + $0x14] sm:$0xff]
      %v5844 = vld [vmem:[%s15 + $0x1c] sm:$0xff]
      %v5845 = vld [vmem:[%s15 + $0x24] sm:$0xf]
      %v5846 = vld [vmem:[%s15 + $0x28] sm:$0xff]
      %v5847 = vld [vmem:[%s15 + $0x30] sm:$0xff]
      %v5848 = vld [vmem:[%s15 + $0x38] sm:$0xf]
      %v5849 = vld [vmem:[%s15 + $0x3c] sm:$0xff]
      %v5850 = vld [vmem:[%s15 + $0x44] sm:$0xff]
      %v5851 = vld [vmem:[%s15 + $0x4c] sm:$0xf]
      %v5852 = vld [vmem:[%s15 + $0x50] sm:$0xff]
      %v5853 = vld [vmem:[%s15 + $0x58] sm:$0xff]
      %v5854 = vld [vmem:[%s15 + $0x60] sm:$0xf]
      %v5855 = vld [vmem:[%s15 + $0x64] sm:$0xff]
      %v5856 = vld [vmem:[%s15 + $0x6c] sm:$0xff]
      %v5857 = vld [vmem:[%s15 + $0x74] sm:$0xf]
      %v5858 = vld [vmem:[%s15 + $0x78] sm:$0xff]
      %v5859 = vld [vmem:[%s15 + $0x80] sm:$0xff]
      %v5860 = vld [vmem:[%s15 + $0x88] sm:$0xf]
      %v5861 = vld [vmem:[%s15 + $0x8c] sm:$0xff]
      %v5862 = vld [vmem:[%s15 + $0x94] sm:$0xff]
      %v5863 = vld [vmem:[%s15 + $0x9c] sm:$0xf]
      %v5864 = vld [vmem:[%s15 + $0xa0] sm:$0xff]
      %v5865 = vld [vmem:[%s15 + $0xa8] sm:$0xff]
      %v5866 = vld [vmem:[%s15 + $0xb0] sm:$0xf]
      %v5867 = vld [vmem:[%s15 + $0xb4] sm:$0xff]
      %v5868 = vld [vmem:[%s15 + $0xbc] sm:$0xff]
      %v5869 = vld [vmem:[%s15 + $0xc4] sm:$0xf]
      %v5870 = vld [vmem:[%s15 + $0xc8] sm:$0xff]
      %v5871 = vld [vmem:[%s15 + $0xd0] sm:$0xff]
      %v5872 = vld [vmem:[%s15 + $0xd8] sm:$0xf]
      %v5873 = vld [vmem:[%s15 + $0xdc] sm:$0xff]
      %v5874 = vld [vmem:[%s15 + $0xe4] sm:$0xff]
      %v5875 = vld [vmem:[%s15 + $0xec] sm:$0xf]
      %v5876 = vld [vmem:[%s15 + $0xf0] sm:$0xff]
      %v5877 = vld [vmem:[%s15 + $0xf8] sm:$0xff]
      %v5878 = vld [vmem:[%s15 + $0x100] sm:$0xf]
      %v5879 = vld [vmem:[%s15 + $0x104] sm:$0xff]
      %v5880 = vld [vmem:[%s15 + $0x10c] sm:$0xff]
      %v5881 = vld [vmem:[%s15 + $0x114] sm:$0xf]
      %v5882 = vld [vmem:[%s15 + $0x118] sm:$0xff]
      %v5883 = vld [vmem:[%s15 + $0x120] sm:$0xff]
      %v5884 = vld [vmem:[%s15 + $0x128] sm:$0xf]
      %v5885 = vld [vmem:[%s15 + $0x12c] sm:$0xff]
      %v5886 = vld [vmem:[%s15 + $0x134] sm:$0xff]
      %v5887 = vld [vmem:[%s15 + $0x13c] sm:$0xf]
      %v5888 = vld [vmem:[%s15 + $0x140] sm:$0xff]
      %v5889 = vld [vmem:[%s15 + $0x148] sm:$0xff]
      %v5890 = vld [vmem:[%s15 + $0x150] sm:$0xf]
      %v5891 = vld [vmem:[%s15 + $0x154] sm:$0xff]
      %v5892 = vld [vmem:[%s15 + $0x15c] sm:$0xff]
      %v5893 = vld [vmem:[%s15 + $0x164] sm:$0xf]
      %v5948 = vunpack.c.l.b16 %v5840
      %v5949 = vunpack.c.h.b16 %v5840
      %v5950 = vunpack.c.l.b16 %v5841
      %v5951 = vunpack.c.h.b16 %v5841
      %v5952 = vunpack.c.l.b16 %v5842
      %v5953 = vunpack.c.l.b16 %v5843
      %v5954 = vunpack.c.h.b16 %v5843
      %v5955 = vunpack.c.l.b16 %v5844
      %v5956 = vunpack.c.h.b16 %v5844
      %v5957 = vunpack.c.l.b16 %v5845
      %v5958 = vunpack.c.l.b16 %v5846
      %v5959 = vunpack.c.h.b16 %v5846
      %v5960 = vunpack.c.l.b16 %v5847
      %v5961 = vunpack.c.h.b16 %v5847
      %v5962 = vunpack.c.l.b16 %v5848
      %v5963 = vunpack.c.l.b16 %v5849
      %v5964 = vunpack.c.h.b16 %v5849
      %v5965 = vunpack.c.l.b16 %v5850
      %v5966 = vunpack.c.h.b16 %v5850
      %v5967 = vunpack.c.l.b16 %v5851
      %v5968 = vunpack.c.l.b16 %v5852
      %v5969 = vunpack.c.h.b16 %v5852
      %v5970 = vunpack.c.l.b16 %v5853
      %v5971 = vunpack.c.h.b16 %v5853
      %v5972 = vunpack.c.l.b16 %v5854
      %v5973 = vunpack.c.l.b16 %v5855
      %v5974 = vunpack.c.h.b16 %v5855
      %v5975 = vunpack.c.l.b16 %v5856
      %v5976 = vunpack.c.h.b16 %v5856
      %v5977 = vunpack.c.l.b16 %v5857
      %v5978 = vunpack.c.l.b16 %v5858
      %v5979 = vunpack.c.h.b16 %v5858
      %v5980 = vunpack.c.l.b16 %v5859
      %v5981 = vunpack.c.h.b16 %v5859
      %v5982 = vunpack.c.l.b16 %v5860
      %v5983 = vunpack.c.l.b16 %v5861
      %v5984 = vunpack.c.h.b16 %v5861
      %v5985 = vunpack.c.l.b16 %v5862
      %v5986 = vunpack.c.h.b16 %v5862
      %v5987 = vunpack.c.l.b16 %v5863
      %v5988 = vunpack.c.l.b16 %v5864
      %v5989 = vunpack.c.h.b16 %v5864
      %v5990 = vunpack.c.l.b16 %v5865
      %v5991 = vunpack.c.h.b16 %v5865
      %v5992 = vunpack.c.l.b16 %v5866
      %v5993 = vunpack.c.l.b16 %v5867
      %v5994 = vunpack.c.h.b16 %v5867
      %v5995 = vunpack.c.l.b16 %v5868
      %v5996 = vunpack.c.h.b16 %v5868
      %v5997 = vunpack.c.l.b16 %v5869
      %v5998 = vunpack.c.l.b16 %v5870
      %v5999 = vunpack.c.h.b16 %v5870
      %v6000 = vunpack.c.l.b16 %v5871
      %v6001 = vunpack.c.h.b16 %v5871
      %v6002 = vunpack.c.l.b16 %v5872
      %v6003 = vunpack.c.l.b16 %v5873
      %v6004 = vunpack.c.h.b16 %v5873
      %v6005 = vunpack.c.l.b16 %v5874
      %v6006 = vunpack.c.h.b16 %v5874
      %v6007 = vunpack.c.l.b16 %v5875
      %v6008 = vunpack.c.l.b16 %v5876
      %v6009 = vunpack.c.h.b16 %v5876
      %v6010 = vunpack.c.l.b16 %v5877
      %v6011 = vunpack.c.h.b16 %v5877
      %v6012 = vunpack.c.l.b16 %v5878
      %v6013 = vunpack.c.l.b16 %v5879
      %v6014 = vunpack.c.h.b16 %v5879
      %v6015 = vunpack.c.l.b16 %v5880
      %v6016 = vunpack.c.h.b16 %v5880
      %v6017 = vunpack.c.l.b16 %v5881
      %v6018 = vunpack.c.l.b16 %v5882
      %v6019 = vunpack.c.h.b16 %v5882
      %v6020 = vunpack.c.l.b16 %v5883
      %v6021 = vunpack.c.h.b16 %v5883
      %v6022 = vunpack.c.l.b16 %v5884
      %v6023 = vunpack.c.l.b16 %v5885
      %v6024 = vunpack.c.h.b16 %v5885
      %v6025 = vunpack.c.l.b16 %v5886
      %v6026 = vunpack.c.h.b16 %v5886
      %v6027 = vunpack.c.l.b16 %v5887
      %v6028 = vunpack.c.l.b16 %v5888
      %v6029 = vunpack.c.h.b16 %v5888
      %v6030 = vunpack.c.l.b16 %v5889
      %v6031 = vunpack.c.h.b16 %v5889
      %v6032 = vunpack.c.l.b16 %v5890
      %v6033 = vunpack.c.l.b16 %v5891
      %v6034 = vunpack.c.h.b16 %v5891
      %v6035 = vunpack.c.l.b16 %v5892
      %v6036 = vunpack.c.h.b16 %v5892
      %v6037 = vunpack.c.l.b16 %v5893
      %v6038 = vpack.c.b16 %v5953, %v5948
      %v6039 = vpack.c.b16 %v5954, %v5949
      %v6040 = vpack.c.b16 %v5955, %v5950
      %v6041 = vpack.c.b16 %v5956, %v5951
      %v6042 = vpack.c.b16 %v5957, %v5952
      %v6043 = vpack.c.b16 %v5963, %v5958
      %v6044 = vpack.c.b16 %v5964, %v5959
      %v6045 = vpack.c.b16 %v5965, %v5960
      %v6046 = vpack.c.b16 %v5966, %v5961
      %v6047 = vpack.c.b16 %v5967, %v5962
      %v6048 = vpack.c.b16 %v5973, %v5968
      %v6049 = vpack.c.b16 %v5974, %v5969
      %v6050 = vpack.c.b16 %v5975, %v5970
      %v6051 = vpack.c.b16 %v5976, %v5971
      %v6052 = vpack.c.b16 %v5977, %v5972
      %v6053 = vpack.c.b16 %v5983, %v5978
      %v6054 = vpack.c.b16 %v5984, %v5979
      %v6055 = vpack.c.b16 %v5985, %v5980
      %v6056 = vpack.c.b16 %v5986, %v5981
      %v6057 = vpack.c.b16 %v5987, %v5982
      %v6058 = vpack.c.b16 %v5993, %v5988
      %v6059 = vpack.c.b16 %v5994, %v5989
      %v6060 = vpack.c.b16 %v5995, %v5990
      %v6061 = vpack.c.b16 %v5996, %v5991
      %v6062 = vpack.c.b16 %v5997, %v5992
      %v6063 = vpack.c.b16 %v6003, %v5998
      %v6064 = vpack.c.b16 %v6004, %v5999
      %v6065 = vpack.c.b16 %v6005, %v6000
      %v6066 = vpack.c.b16 %v6006, %v6001
      %v6067 = vpack.c.b16 %v6007, %v6002
      %v6068 = vpack.c.b16 %v6013, %v6008
      %v6069 = vpack.c.b16 %v6014, %v6009
      %v6070 = vpack.c.b16 %v6015, %v6010
      %v6071 = vpack.c.b16 %v6016, %v6011
      %v6072 = vpack.c.b16 %v6017, %v6012
      %v6073 = vpack.c.b16 %v6023, %v6018
      %v6074 = vpack.c.b16 %v6024, %v6019
      %v6075 = vpack.c.b16 %v6025, %v6020
      %v6076 = vpack.c.b16 %v6026, %v6021
      %v6077 = vpack.c.b16 %v6027, %v6022
      %v6078 = vpack.c.b16 %v6033, %v6028
      %v6079 = vpack.c.b16 %v6034, %v6029
      %v6080 = vpack.c.b16 %v6035, %v6030
      %v6081 = vpack.c.b16 %v6036, %v6031
      %v6082 = vpack.c.b16 %v6037, %v6032
      %v6129 = vsel %vm3028, %v5839, 0
      %6131 = vmatprep.subr.bf16.mxu0 %v6074
      %6132 = vmatpush1.bf16.msra.mxu0 %v6073
      %6133 = vmatprep.subr.bf16.mxu0 %v6069
      %6134 = vmatpush1.bf16.msra.mxu0 %v6068
      %6135 = vmatprep.subr.bf16.mxu0 %v6064
      %6136 = vmatpush1.bf16.msra.mxu0 %v6063
      %6137 = vmatprep.subr.bf16.mxu0 %v6059
      %6138 = vmatpush1.bf16.msra.mxu0 %v6058
      %6139 = vmatprep.subr.bf16.mxu0 %v6054
      %6140 = vmatpush1.bf16.msra.mxu0 %v6053
      %6141 = vmatprep.subr.bf16.mxu0 %v6049
      %6142 = vmatpush1.bf16.msra.mxu0 %v6048
      %6143 = vmatprep.subr.bf16.mxu0 %v6044
      %6144 = vmatpush1.bf16.msra.mxu0 %v6043
      %6145 = vmatprep.subr.bf16.mxu0 %v6039
      %6146 = vmatpush1.bf16.msra.mxu0 %v6038
      %6147 = vmatprep.subr.bf16.mxu0 0
      %6148 = vmatpush2.bf16.msra.mxu0 0
      %6149 = vmatprep.subr.bf16.mxu0 0
      %6150 = vmatpush2.bf16.msra.mxu0 0
      %6151 = vmatprep.subr.bf16.mxu0 0
      %6152 = vmatpush2.bf16.msra.mxu0 0
      %6153 = vmatprep.subr.bf16.mxu0 0
      %6154 = vmatpush2.bf16.msra.mxu0 0
      %6155 = vmatprep.subr.bf16.mxu0 0
      %6156 = vmatpush2.bf16.msra.mxu0 0
      %6157 = vmatprep.subr.bf16.mxu0 0
      %6158 = vmatpush2.bf16.msra.mxu0 0
      %6159 = vmatprep.subr.bf16.mxu0 0
      %6160 = vmatpush2.bf16.msra.mxu0 0
      %6161 = vmatprep.subr.bf16.mxu0 %v6079
      %6162 = vmatpush2.bf16.msra.mxu0 %v6078
      %6163 = vmatprep.mubr.bf16.mxu0 %v6129
      %6164 = vmatmul.mubr.bf16.gmra.mxu0 %v5838
      %v6165 = vpop.f32.mrf.mxu0
      %v6166 = vadd.f32 0.0, %v6165
      %v6167 = vpop.f32.mrf.mxu0
      %v6168 = vadd.f32 0.0, %v6167
      %v6169 = vpop.f32.mrf.mxu0
      %v6170 = vpop.f32.mrf.mxu0
      %6171 = vdwg.mxu0
      %6172 = vmatprep.subr.bf16.mxu0 %v6076
      %6173 = vmatpush1.bf16.msra.mxu0 %v6075
      %6174 = vmatprep.subr.bf16.mxu0 %v6071
      %6175 = vmatpush1.bf16.msra.mxu0 %v6070
      %6176 = vmatprep.subr.bf16.mxu0 %v6066
      %6177 = vmatpush1.bf16.msra.mxu0 %v6065
      %6178 = vmatprep.subr.bf16.mxu0 %v6061
      %6179 = vmatpush1.bf16.msra.mxu0 %v6060
      %6180 = vmatprep.subr.bf16.mxu0 %v6056
      %6181 = vmatpush1.bf16.msra.mxu0 %v6055
      %6182 = vmatprep.subr.bf16.mxu0 %v6051
      %6183 = vmatpush1.bf16.msra.mxu0 %v6050
      %6184 = vmatprep.subr.bf16.mxu0 %v6046
      %6185 = vmatpush1.bf16.msra.mxu0 %v6045
      %6186 = vmatprep.subr.bf16.mxu0 %v6041
      %6187 = vmatpush1.bf16.msra.mxu0 %v6040
      %6188 = vmatprep.subr.bf16.mxu0 0
      %6189 = vmatpush2.bf16.msra.mxu0 0
      %6190 = vmatprep.subr.bf16.mxu0 0
      %6191 = vmatpush2.bf16.msra.mxu0 0
      %6192 = vmatprep.subr.bf16.mxu0 0
      %6193 = vmatpush2.bf16.msra.mxu0 0
      %6194 = vmatprep.subr.bf16.mxu0 0
      %6195 = vmatpush2.bf16.msra.mxu0 0
      %6196 = vmatprep.subr.bf16.mxu0 0
      %6197 = vmatpush2.bf16.msra.mxu0 0
      %6198 = vmatprep.subr.bf16.mxu0 0
      %6199 = vmatpush2.bf16.msra.mxu0 0
      %6200 = vmatprep.subr.bf16.mxu0 0
      %6201 = vmatpush2.bf16.msra.mxu0 0
      %6202 = vmatprep.subr.bf16.mxu0 %v6081
      %6203 = vmatpush2.bf16.msra.mxu0 %v6080
      %6204 = vmatprep.mubr.bf16.mxu0 %v6129
      %6205 = vmatmul.mubr.bf16.gmra.mxu0 %v5838
      %v6206 = vpop.f32.mrf.mxu0
      %v6207 = vadd.f32 0.0, %v6206
      %v6208 = vpop.f32.mrf.mxu0
      %v6209 = vadd.f32 0.0, %v6208
      %v6210 = vpop.f32.mrf.mxu0
      %v6211 = vpop.f32.mrf.mxu0
      %6212 = vdwg.mxu0
      %6213 = vmatprep.subr.bf16.mxu0 0
      %6214 = vmatpush1.bf16.msra.mxu0 %v6077
      %6215 = vmatprep.subr.bf16.mxu0 0
      %6216 = vmatpush1.bf16.msra.mxu0 %v6072
      %6217 = vmatprep.subr.bf16.mxu0 0
      %6218 = vmatpush1.bf16.msra.mxu0 %v6067
      %6219 = vmatprep.subr.bf16.mxu0 0
      %6220 = vmatpush1.bf16.msra.mxu0 %v6062
      %6221 = vmatprep.subr.bf16.mxu0 0
      %6222 = vmatpush1.bf16.msra.mxu0 %v6057
      %6223 = vmatprep.subr.bf16.mxu0 0
      %6224 = vmatpush1.bf16.msra.mxu0 %v6052
      %6225 = vmatprep.subr.bf16.mxu0 0
      %6226 = vmatpush1.bf16.msra.mxu0 %v6047
      %6227 = vmatprep.subr.bf16.mxu0 0
      %6228 = vmatpush1.bf16.msra.mxu0 %v6042
      %6229 = vmatprep.subr.bf16.mxu0 0
      %6230 = vmatpush2.bf16.msra.mxu0 0
      %6231 = vmatprep.subr.bf16.mxu0 0
      %6232 = vmatpush2.bf16.msra.mxu0 0
      %6233 = vmatprep.subr.bf16.mxu0 0
      %6234 = vmatpush2.bf16.msra.mxu0 0
      %6235 = vmatprep.subr.bf16.mxu0 0
      %6236 = vmatpush2.bf16.msra.mxu0 0
      %6237 = vmatprep.subr.bf16.mxu0 0
      %6238 = vmatpush2.bf16.msra.mxu0 0
      %6239 = vmatprep.subr.bf16.mxu0 0
      %6240 = vmatpush2.bf16.msra.mxu0 0
      %6241 = vmatprep.subr.bf16.mxu0 0
      %6242 = vmatpush2.bf16.msra.mxu0 0
      %6243 = vmatprep.subr.bf16.mxu0 0
      %6244 = vmatpush2.bf16.msra.mxu0 %v6082
      %6245 = vmatprep.mubr.bf16.mxu0 %v6129
      %6246 = vmatmul.mubr.bf16.gmra.mxu0 %v5838
      %v6247 = vpop.f32.mrf.mxu0
      %v6248 = vadd.f32 0.0, %v6247
      %v6249 = vpop.f32.mrf.mxu0
      %v6250 = vpop.f32.mrf.mxu0
      %v6251 = vpop.f32.mrf.mxu0
      %6252 = vdwg.mxu0
      %v6253 = vpack.c.bf16 %v6166, %v6166
      %v6254 = vpack.c.bf16 %v6168, %v6168
      %v6255 = vpack.c.bf16 %v6207, %v6207
      %v6256 = vpack.c.bf16 %v6209, %v6209
      %v6257 = vpack.c.bf16 %v6248, %v6248
      %s6258 = scalar_lea.vmem %s15, 360
      %v6259 = vld [vmem:[%s6258] sm:$0xff]
      %v6260 = vld [vmem:[%s6258 + $0x8] sm:$0xff]
      %v6261 = vld [vmem:[%s6258 + $0x10] sm:$0xf]
      %v6262 = vld [vmem:[%s6258 + $0x14] sm:$0xff]
      %v6263 = vld [vmem:[%s6258 + $0x1c] sm:$0xff]
      %v6264 = vld [vmem:[%s6258 + $0x24] sm:$0xf]
      %v6265 = vld [vmem:[%s6258 + $0x28] sm:$0xff]
      %v6266 = vld [vmem:[%s6258 + $0x30] sm:$0xff]
      %v6267 = vld [vmem:[%s6258 + $0x38] sm:$0xf]
      %v6268 = vld [vmem:[%s6258 + $0x3c] sm:$0xff]
      %v6269 = vld [vmem:[%s6258 + $0x44] sm:$0xff]
      %v6270 = vld [vmem:[%s6258 + $0x4c] sm:$0xf]
      %v6271 = vld [vmem:[%s6258 + $0x50] sm:$0xff]
      %v6272 = vld [vmem:[%s6258 + $0x58] sm:$0xff]
      %v6273 = vld [vmem:[%s6258 + $0x60] sm:$0xf]
      %v6274 = vld [vmem:[%s6258 + $0x64] sm:$0xff]
      %v6275 = vld [vmem:[%s6258 + $0x6c] sm:$0xff]
      %v6276 = vld [vmem:[%s6258 + $0x74] sm:$0xf]
      %v6277 = vld [vmem:[%s6258 + $0x78] sm:$0xff]
      %v6278 = vld [vmem:[%s6258 + $0x80] sm:$0xff]
      %v6279 = vld [vmem:[%s6258 + $0x88] sm:$0xf]
      %v6280 = vld [vmem:[%s6258 + $0x8c] sm:$0xff]
      %v6281 = vld [vmem:[%s6258 + $0x94] sm:$0xff]
      %v6282 = vld [vmem:[%s6258 + $0x9c] sm:$0xf]
      %v6283 = vld [vmem:[%s6258 + $0xa0] sm:$0xff]
      %v6284 = vld [vmem:[%s6258 + $0xa8] sm:$0xff]
      %v6285 = vld [vmem:[%s6258 + $0xb0] sm:$0xf]
      %v6286 = vld [vmem:[%s6258 + $0xb4] sm:$0xff]
      %v6287 = vld [vmem:[%s6258 + $0xbc] sm:$0xff]
      %v6288 = vld [vmem:[%s6258 + $0xc4] sm:$0xf]
      %v6289 = vld [vmem:[%s6258 + $0xc8] sm:$0xff]
      %v6290 = vld [vmem:[%s6258 + $0xd0] sm:$0xff]
      %v6291 = vld [vmem:[%s6258 + $0xd8] sm:$0xf]
      %v6292 = vld [vmem:[%s6258 + $0xdc] sm:$0xff]
      %v6293 = vld [vmem:[%s6258 + $0xe4] sm:$0xff]
      %v6294 = vld [vmem:[%s6258 + $0xec] sm:$0xf]
      %v6295 = vld [vmem:[%s6258 + $0xf0] sm:$0xff]
      %v6296 = vld [vmem:[%s6258 + $0xf8] sm:$0xff]
      %v6297 = vld [vmem:[%s6258 + $0x100] sm:$0xf]
      %v6298 = vld [vmem:[%s6258 + $0x104] sm:$0xff]
      %v6299 = vld [vmem:[%s6258 + $0x10c] sm:$0xff]
      %v6300 = vld [vmem:[%s6258 + $0x114] sm:$0xf]
      %v6301 = vld [vmem:[%s6258 + $0x118] sm:$0xff]
      %v6302 = vld [vmem:[%s6258 + $0x120] sm:$0xff]
      %v6303 = vld [vmem:[%s6258 + $0x128] sm:$0xf]
      %v6304 = vld [vmem:[%s6258 + $0x12c] sm:$0xff]
      %v6305 = vld [vmem:[%s6258 + $0x134] sm:$0xff]
      %v6306 = vld [vmem:[%s6258 + $0x13c] sm:$0xf]
      %v6307 = vld [vmem:[%s6258 + $0x140] sm:$0xff]
      %v6308 = vld [vmem:[%s6258 + $0x148] sm:$0xff]
      %v6309 = vld [vmem:[%s6258 + $0x150] sm:$0xf]
      %v6310 = vld [vmem:[%s6258 + $0x154] sm:$0xff]
      %v6311 = vld [vmem:[%s6258 + $0x15c] sm:$0xff]
      %v6312 = vld [vmem:[%s6258 + $0x164] sm:$0xf]
      %v6367 = vunpack.c.l.b16 %v6259
      %v6368 = vunpack.c.h.b16 %v6259
      %v6369 = vunpack.c.l.b16 %v6260
      %v6370 = vunpack.c.h.b16 %v6260
      %v6371 = vunpack.c.l.b16 %v6261
      %v6372 = vunpack.c.l.b16 %v6262
      %v6373 = vunpack.c.h.b16 %v6262
      %v6374 = vunpack.c.l.b16 %v6263
      %v6375 = vunpack.c.h.b16 %v6263
      %v6376 = vunpack.c.l.b16 %v6264
      %v6377 = vunpack.c.l.b16 %v6265
      %v6378 = vunpack.c.h.b16 %v6265
      %v6379 = vunpack.c.l.b16 %v6266
      %v6380 = vunpack.c.h.b16 %v6266
      %v6381 = vunpack.c.l.b16 %v6267
      %v6382 = vunpack.c.l.b16 %v6268
      %v6383 = vunpack.c.h.b16 %v6268
      %v6384 = vunpack.c.l.b16 %v6269
      %v6385 = vunpack.c.h.b16 %v6269
      %v6386 = vunpack.c.l.b16 %v6270
      %v6387 = vunpack.c.l.b16 %v6271
      %v6388 = vunpack.c.h.b16 %v6271
      %v6389 = vunpack.c.l.b16 %v6272
      %v6390 = vunpack.c.h.b16 %v6272
      %v6391 = vunpack.c.l.b16 %v6273
      %v6392 = vunpack.c.l.b16 %v6274
      %v6393 = vunpack.c.h.b16 %v6274
      %v6394 = vunpack.c.l.b16 %v6275
      %v6395 = vunpack.c.h.b16 %v6275
      %v6396 = vunpack.c.l.b16 %v6276
      %v6397 = vunpack.c.l.b16 %v6277
      %v6398 = vunpack.c.h.b16 %v6277
      %v6399 = vunpack.c.l.b16 %v6278
      %v6400 = vunpack.c.h.b16 %v6278
      %v6401 = vunpack.c.l.b16 %v6279
      %v6402 = vunpack.c.l.b16 %v6280
      %v6403 = vunpack.c.h.b16 %v6280
      %v6404 = vunpack.c.l.b16 %v6281
      %v6405 = vunpack.c.h.b16 %v6281
      %v6406 = vunpack.c.l.b16 %v6282
      %v6407 = vunpack.c.l.b16 %v6283
      %v6408 = vunpack.c.h.b16 %v6283
      %v6409 = vunpack.c.l.b16 %v6284
      %v6410 = vunpack.c.h.b16 %v6284
      %v6411 = vunpack.c.l.b16 %v6285
      %v6412 = vunpack.c.l.b16 %v6286
      %v6413 = vunpack.c.h.b16 %v6286
      %v6414 = vunpack.c.l.b16 %v6287
      %v6415 = vunpack.c.h.b16 %v6287
      %v6416 = vunpack.c.l.b16 %v6288
      %v6417 = vunpack.c.l.b16 %v6289
      %v6418 = vunpack.c.h.b16 %v6289
      %v6419 = vunpack.c.l.b16 %v6290
      %v6420 = vunpack.c.h.b16 %v6290
      %v6421 = vunpack.c.l.b16 %v6291
      %v6422 = vunpack.c.l.b16 %v6292
      %v6423 = vunpack.c.h.b16 %v6292
      %v6424 = vunpack.c.l.b16 %v6293
      %v6425 = vunpack.c.h.b16 %v6293
      %v6426 = vunpack.c.l.b16 %v6294
      %v6427 = vunpack.c.l.b16 %v6295
      %v6428 = vunpack.c.h.b16 %v6295
      %v6429 = vunpack.c.l.b16 %v6296
      %v6430 = vunpack.c.h.b16 %v6296
      %v6431 = vunpack.c.l.b16 %v6297
      %v6432 = vunpack.c.l.b16 %v6298
      %v6433 = vunpack.c.h.b16 %v6298
      %v6434 = vunpack.c.l.b16 %v6299
      %v6435 = vunpack.c.h.b16 %v6299
      %v6436 = vunpack.c.l.b16 %v6300
      %v6437 = vunpack.c.l.b16 %v6301
      %v6438 = vunpack.c.h.b16 %v6301
      %v6439 = vunpack.c.l.b16 %v6302
      %v6440 = vunpack.c.h.b16 %v6302
      %v6441 = vunpack.c.l.b16 %v6303
      %v6442 = vunpack.c.l.b16 %v6304
      %v6443 = vunpack.c.h.b16 %v6304
      %v6444 = vunpack.c.l.b16 %v6305
      %v6445 = vunpack.c.h.b16 %v6305
      %v6446 = vunpack.c.l.b16 %v6306
      %v6447 = vunpack.c.l.b16 %v6307
      %v6448 = vunpack.c.h.b16 %v6307
      %v6449 = vunpack.c.l.b16 %v6308
      %v6450 = vunpack.c.h.b16 %v6308
      %v6451 = vunpack.c.l.b16 %v6309
      %v6452 = vunpack.c.l.b16 %v6310
      %v6453 = vunpack.c.h.b16 %v6310
      %v6454 = vunpack.c.l.b16 %v6311
      %v6455 = vunpack.c.h.b16 %v6311
      %v6456 = vunpack.c.l.b16 %v6312
      %v6457 = vpack.c.b16 %v6372, %v6367
      %v6458 = vpack.c.b16 %v6373, %v6368
      %v6459 = vpack.c.b16 %v6374, %v6369
      %v6460 = vpack.c.b16 %v6375, %v6370
      %v6461 = vpack.c.b16 %v6376, %v6371
      %v6462 = vpack.c.b16 %v6382, %v6377
      %v6463 = vpack.c.b16 %v6383, %v6378
      %v6464 = vpack.c.b16 %v6384, %v6379
      %v6465 = vpack.c.b16 %v6385, %v6380
      %v6466 = vpack.c.b16 %v6386, %v6381
      %v6467 = vpack.c.b16 %v6392, %v6387
      %v6468 = vpack.c.b16 %v6393, %v6388
      %v6469 = vpack.c.b16 %v6394, %v6389
      %v6470 = vpack.c.b16 %v6395, %v6390
      %v6471 = vpack.c.b16 %v6396, %v6391
      %v6472 = vpack.c.b16 %v6402, %v6397
      %v6473 = vpack.c.b16 %v6403, %v6398
      %v6474 = vpack.c.b16 %v6404, %v6399
      %v6475 = vpack.c.b16 %v6405, %v6400
      %v6476 = vpack.c.b16 %v6406, %v6401
      %v6477 = vpack.c.b16 %v6412, %v6407
      %v6478 = vpack.c.b16 %v6413, %v6408
      %v6479 = vpack.c.b16 %v6414, %v6409
      %v6480 = vpack.c.b16 %v6415, %v6410
      %v6481 = vpack.c.b16 %v6416, %v6411
      %v6482 = vpack.c.b16 %v6422, %v6417
      %v6483 = vpack.c.b16 %v6423, %v6418
      %v6484 = vpack.c.b16 %v6424, %v6419
      %v6485 = vpack.c.b16 %v6425, %v6420
      %v6486 = vpack.c.b16 %v6426, %v6421
      %v6487 = vpack.c.b16 %v6432, %v6427
      %v6488 = vpack.c.b16 %v6433, %v6428
      %v6489 = vpack.c.b16 %v6434, %v6429
      %v6490 = vpack.c.b16 %v6435, %v6430
      %v6491 = vpack.c.b16 %v6436, %v6431
      %v6492 = vpack.c.b16 %v6442, %v6437
      %v6493 = vpack.c.b16 %v6443, %v6438
      %v6494 = vpack.c.b16 %v6444, %v6439
      %v6495 = vpack.c.b16 %v6445, %v6440
      %v6496 = vpack.c.b16 %v6446, %v6441
      %v6497 = vpack.c.b16 %v6452, %v6447
      %v6498 = vpack.c.b16 %v6453, %v6448
      %v6499 = vpack.c.b16 %v6454, %v6449
      %v6500 = vpack.c.b16 %v6455, %v6450
      %v6501 = vpack.c.b16 %v6456, %v6451
      %6547 = vmatprep.subr.bf16.mxu0 %v6493
      %6548 = vmatpush1.bf16.msra.mxu0 %v6492
      %6549 = vmatprep.subr.bf16.mxu0 %v6488
      %6550 = vmatpush1.bf16.msra.mxu0 %v6487
      %6551 = vmatprep.subr.bf16.mxu0 %v6483
      %6552 = vmatpush1.bf16.msra.mxu0 %v6482
      %6553 = vmatprep.subr.bf16.mxu0 %v6478
      %6554 = vmatpush1.bf16.msra.mxu0 %v6477
      %6555 = vmatprep.subr.bf16.mxu0 %v6473
      %6556 = vmatpush1.bf16.msra.mxu0 %v6472
      %6557 = vmatprep.subr.bf16.mxu0 %v6468
      %6558 = vmatpush1.bf16.msra.mxu0 %v6467
      %6559 = vmatprep.subr.bf16.mxu0 %v6463
      %6560 = vmatpush1.bf16.msra.mxu0 %v6462
      %6561 = vmatprep.subr.bf16.mxu0 %v6458
      %6562 = vmatpush1.bf16.msra.mxu0 %v6457
      %6563 = vmatprep.subr.bf16.mxu0 0
      %6564 = vmatpush2.bf16.msra.mxu0 0
      %6565 = vmatprep.subr.bf16.mxu0 0
      %6566 = vmatpush2.bf16.msra.mxu0 0
      %6567 = vmatprep.subr.bf16.mxu0 0
      %6568 = vmatpush2.bf16.msra.mxu0 0
      %6569 = vmatprep.subr.bf16.mxu0 0
      %6570 = vmatpush2.bf16.msra.mxu0 0
      %6571 = vmatprep.subr.bf16.mxu0 0
      %6572 = vmatpush2.bf16.msra.mxu0 0
      %6573 = vmatprep.subr.bf16.mxu0 0
      %6574 = vmatpush2.bf16.msra.mxu0 0
      %6575 = vmatprep.subr.bf16.mxu0 0
      %6576 = vmatpush2.bf16.msra.mxu0 0
      %6577 = vmatprep.subr.bf16.mxu0 %v6498
      %6578 = vmatpush2.bf16.msra.mxu0 %v6497
      %6579 = vmatprep.mubr.bf16.mxu0 %v6129
      %6580 = vmatmul.mubr.bf16.gmra.mxu0 %v5838
      %v6581 = vpop.f32.mrf.mxu0
      %v6582 = vadd.f32 0.0, %v6581
      %v6583 = vpop.f32.mrf.mxu0
      %v6584 = vadd.f32 0.0, %v6583
      %v6585 = vpop.f32.mrf.mxu0
      %v6586 = vpop.f32.mrf.mxu0
      %6587 = vdwg.mxu0
      %6588 = vmatprep.subr.bf16.mxu0 %v6495
      %6589 = vmatpush1.bf16.msra.mxu0 %v6494
      %6590 = vmatprep.subr.bf16.mxu0 %v6490
      %6591 = vmatpush1.bf16.msra.mxu0 %v6489
      %6592 = vmatprep.subr.bf16.mxu0 %v6485
      %6593 = vmatpush1.bf16.msra.mxu0 %v6484
      %6594 = vmatprep.subr.bf16.mxu0 %v6480
      %6595 = vmatpush1.bf16.msra.mxu0 %v6479
      %6596 = vmatprep.subr.bf16.mxu0 %v6475
      %6597 = vmatpush1.bf16.msra.mxu0 %v6474
      %6598 = vmatprep.subr.bf16.mxu0 %v6470
      %6599 = vmatpush1.bf16.msra.mxu0 %v6469
      %6600 = vmatprep.subr.bf16.mxu0 %v6465
      %6601 = vmatpush1.bf16.msra.mxu0 %v6464
      %6602 = vmatprep.subr.bf16.mxu0 %v6460
      %6603 = vmatpush1.bf16.msra.mxu0 %v6459
      %6604 = vmatprep.subr.bf16.mxu0 0
      %6605 = vmatpush2.bf16.msra.mxu0 0
      %6606 = vmatprep.subr.bf16.mxu0 0
      %6607 = vmatpush2.bf16.msra.mxu0 0
      %6608 = vmatprep.subr.bf16.mxu0 0
      %6609 = vmatpush2.bf16.msra.mxu0 0
      %6610 = vmatprep.subr.bf16.mxu0 0
      %6611 = vmatpush2.bf16.msra.mxu0 0
      %6612 = vmatprep.subr.bf16.mxu0 0
      %6613 = vmatpush2.bf16.msra.mxu0 0
      %6614 = vmatprep.subr.bf16.mxu0 0
      %6615 = vmatpush2.bf16.msra.mxu0 0
      %6616 = vmatprep.subr.bf16.mxu0 0
      %6617 = vmatpush2.bf16.msra.mxu0 0
      %6618 = vmatprep.subr.bf16.mxu0 %v6500
      %6619 = vmatpush2.bf16.msra.mxu0 %v6499
      %6620 = vmatprep.mubr.bf16.mxu0 %v6129
      %6621 = vmatmul.mubr.bf16.gmra.mxu0 %v5838
      %v6622 = vpop.f32.mrf.mxu0
      %v6623 = vadd.f32 0.0, %v6622
      %v6624 = vpop.f32.mrf.mxu0
      %v6625 = vadd.f32 0.0, %v6624
      %v6626 = vpop.f32.mrf.mxu0
      %v6627 = vpop.f32.mrf.mxu0
      %6628 = vdwg.mxu0
      %6629 = vmatprep.subr.bf16.mxu0 0
      %6630 = vmatpush1.bf16.msra.mxu0 %v6496
      %6631 = vmatprep.subr.bf16.mxu0 0
      %6632 = vmatpush1.bf16.msra.mxu0 %v6491
      %6633 = vmatprep.subr.bf16.mxu0 0
      %6634 = vmatpush1.bf16.msra.mxu0 %v6486
      %6635 = vmatprep.subr.bf16.mxu0 0
      %6636 = vmatpush1.bf16.msra.mxu0 %v6481
      %6637 = vmatprep.subr.bf16.mxu0 0
      %6638 = vmatpush1.bf16.msra.mxu0 %v6476
      %6639 = vmatprep.subr.bf16.mxu0 0
      %6640 = vmatpush1.bf16.msra.mxu0 %v6471
      %6641 = vmatprep.subr.bf16.mxu0 0
      %6642 = vmatpush1.bf16.msra.mxu0 %v6466
      %6643 = vmatprep.subr.bf16.mxu0 0
      %6644 = vmatpush1.bf16.msra.mxu0 %v6461
      %6645 = vmatprep.subr.bf16.mxu0 0
      %6646 = vmatpush2.bf16.msra.mxu0 0
      %6647 = vmatprep.subr.bf16.mxu0 0
      %6648 = vmatpush2.bf16.msra.mxu0 0
      %6649 = vmatprep.subr.bf16.mxu0 0
      %6650 = vmatpush2.bf16.msra.mxu0 0
      %6651 = vmatprep.subr.bf16.mxu0 0
      %6652 = vmatpush2.bf16.msra.mxu0 0
      %6653 = vmatprep.subr.bf16.mxu0 0
      %6654 = vmatpush2.bf16.msra.mxu0 0
      %6655 = vmatprep.subr.bf16.mxu0 0
      %6656 = vmatpush2.bf16.msra.mxu0 0
      %6657 = vmatprep.subr.bf16.mxu0 0
      %6658 = vmatpush2.bf16.msra.mxu0 0
      %6659 = vmatprep.subr.bf16.mxu0 0
      %6660 = vmatpush2.bf16.msra.mxu0 %v6501
      %6661 = vmatprep.mubr.bf16.mxu0 %v6129
      %6662 = vmatmul.mubr.bf16.gmra.mxu0 %v5838
      %v6663 = vpop.f32.mrf.mxu0
      %v6664 = vadd.f32 0.0, %v6663
      %v6665 = vpop.f32.mrf.mxu0
      %v6666 = vpop.f32.mrf.mxu0
      %v6667 = vpop.f32.mrf.mxu0
      %6668 = vdwg.mxu0
      %v6669 = vpack.c.bf16 %v6582, %v6582
      %v6670 = vpack.c.bf16 %v6584, %v6584
      %v6671 = vpack.c.bf16 %v6623, %v6623
      %v6672 = vpack.c.bf16 %v6625, %v6625
      %v6673 = vpack.c.bf16 %v6664, %v6664
      %s6674 = scalar_lea.vmem %s15, 720
      %v6675 = vld [vmem:[%s6674] sm:$0xff]
      %v6676 = vld [vmem:[%s6674 + $0x8] sm:$0xff]
      %v6677 = vld [vmem:[%s6674 + $0x10] sm:$0xf]
      %v6678 = vld [vmem:[%s6674 + $0x14] sm:$0xff]
      %v6679 = vld [vmem:[%s6674 + $0x1c] sm:$0xff]
      %v6680 = vld [vmem:[%s6674 + $0x24] sm:$0xf]
      %v6681 = vld [vmem:[%s6674 + $0x28] sm:$0xff]
      %v6682 = vld [vmem:[%s6674 + $0x30] sm:$0xff]
      %v6683 = vld [vmem:[%s6674 + $0x38] sm:$0xf]
      %v6684 = vld [vmem:[%s6674 + $0x3c] sm:$0xff]
      %v6685 = vld [vmem:[%s6674 + $0x44] sm:$0xff]
      %v6686 = vld [vmem:[%s6674 + $0x4c] sm:$0xf]
      %v6687 = vld [vmem:[%s6674 + $0x50] sm:$0xff]
      %v6688 = vld [vmem:[%s6674 + $0x58] sm:$0xff]
      %v6689 = vld [vmem:[%s6674 + $0x60] sm:$0xf]
      %v6690 = vld [vmem:[%s6674 + $0x64] sm:$0xff]
      %v6691 = vld [vmem:[%s6674 + $0x6c] sm:$0xff]
      %v6692 = vld [vmem:[%s6674 + $0x74] sm:$0xf]
      %v6693 = vld [vmem:[%s6674 + $0x78] sm:$0xff]
      %v6694 = vld [vmem:[%s6674 + $0x80] sm:$0xff]
      %v6695 = vld [vmem:[%s6674 + $0x88] sm:$0xf]
      %v6696 = vld [vmem:[%s6674 + $0x8c] sm:$0xff]
      %v6697 = vld [vmem:[%s6674 + $0x94] sm:$0xff]
      %v6698 = vld [vmem:[%s6674 + $0x9c] sm:$0xf]
      %v6699 = vld [vmem:[%s6674 + $0xa0] sm:$0xff]
      %v6700 = vld [vmem:[%s6674 + $0xa8] sm:$0xff]
      %v6701 = vld [vmem:[%s6674 + $0xb0] sm:$0xf]
      %v6702 = vld [vmem:[%s6674 + $0xb4] sm:$0xff]
      %v6703 = vld [vmem:[%s6674 + $0xbc] sm:$0xff]
      %v6704 = vld [vmem:[%s6674 + $0xc4] sm:$0xf]
      %v6705 = vld [vmem:[%s6674 + $0xc8] sm:$0xff]
      %v6706 = vld [vmem:[%s6674 + $0xd0] sm:$0xff]
      %v6707 = vld [vmem:[%s6674 + $0xd8] sm:$0xf]
      %v6708 = vld [vmem:[%s6674 + $0xdc] sm:$0xff]
      %v6709 = vld [vmem:[%s6674 + $0xe4] sm:$0xff]
      %v6710 = vld [vmem:[%s6674 + $0xec] sm:$0xf]
      %v6711 = vld [vmem:[%s6674 + $0xf0] sm:$0xff]
      %v6712 = vld [vmem:[%s6674 + $0xf8] sm:$0xff]
      %v6713 = vld [vmem:[%s6674 + $0x100] sm:$0xf]
      %v6714 = vld [vmem:[%s6674 + $0x104] sm:$0xff]
      %v6715 = vld [vmem:[%s6674 + $0x10c] sm:$0xff]
      %v6716 = vld [vmem:[%s6674 + $0x114] sm:$0xf]
      %v6717 = vld [vmem:[%s6674 + $0x118] sm:$0xff]
      %v6718 = vld [vmem:[%s6674 + $0x120] sm:$0xff]
      %v6719 = vld [vmem:[%s6674 + $0x128] sm:$0xf]
      %v6720 = vld [vmem:[%s6674 + $0x12c] sm:$0xff]
      %v6721 = vld [vmem:[%s6674 + $0x134] sm:$0xff]
      %v6722 = vld [vmem:[%s6674 + $0x13c] sm:$0xf]
      %v6723 = vld [vmem:[%s6674 + $0x140] sm:$0xff]
      %v6724 = vld [vmem:[%s6674 + $0x148] sm:$0xff]
      %v6725 = vld [vmem:[%s6674 + $0x150] sm:$0xf]
      %v6726 = vld [vmem:[%s6674 + $0x154] sm:$0xff]
      %v6727 = vld [vmem:[%s6674 + $0x15c] sm:$0xff]
      %v6728 = vld [vmem:[%s6674 + $0x164] sm:$0xf]
      %v6783 = vunpack.c.l.b16 %v6675
      %v6784 = vunpack.c.h.b16 %v6675
      %v6785 = vunpack.c.l.b16 %v6676
      %v6786 = vunpack.c.h.b16 %v6676
      %v6787 = vunpack.c.l.b16 %v6677
      %v6788 = vunpack.c.l.b16 %v6678
      %v6789 = vunpack.c.h.b16 %v6678
      %v6790 = vunpack.c.l.b16 %v6679
      %v6791 = vunpack.c.h.b16 %v6679
      %v6792 = vunpack.c.l.b16 %v6680
      %v6793 = vunpack.c.l.b16 %v6681
      %v6794 = vunpack.c.h.b16 %v6681
      %v6795 = vunpack.c.l.b16 %v6682
      %v6796 = vunpack.c.h.b16 %v6682
      %v6797 = vunpack.c.l.b16 %v6683
      %v6798 = vunpack.c.l.b16 %v6684
      %v6799 = vunpack.c.h.b16 %v6684
      %v6800 = vunpack.c.l.b16 %v6685
      %v6801 = vunpack.c.h.b16 %v6685
      %v6802 = vunpack.c.l.b16 %v6686
      %v6803 = vunpack.c.l.b16 %v6687
      %v6804 = vunpack.c.h.b16 %v6687
      %v6805 = vunpack.c.l.b16 %v6688
      %v6806 = vunpack.c.h.b16 %v6688
      %v6807 = vunpack.c.l.b16 %v6689
      %v6808 = vunpack.c.l.b16 %v6690
      %v6809 = vunpack.c.h.b16 %v6690
      %v6810 = vunpack.c.l.b16 %v6691
      %v6811 = vunpack.c.h.b16 %v6691
      %v6812 = vunpack.c.l.b16 %v6692
      %v6813 = vunpack.c.l.b16 %v6693
      %v6814 = vunpack.c.h.b16 %v6693
      %v6815 = vunpack.c.l.b16 %v6694
      %v6816 = vunpack.c.h.b16 %v6694
      %v6817 = vunpack.c.l.b16 %v6695
      %v6818 = vunpack.c.l.b16 %v6696
      %v6819 = vunpack.c.h.b16 %v6696
      %v6820 = vunpack.c.l.b16 %v6697
      %v6821 = vunpack.c.h.b16 %v6697
      %v6822 = vunpack.c.l.b16 %v6698
      %v6823 = vunpack.c.l.b16 %v6699
      %v6824 = vunpack.c.h.b16 %v6699
      %v6825 = vunpack.c.l.b16 %v6700
      %v6826 = vunpack.c.h.b16 %v6700
      %v6827 = vunpack.c.l.b16 %v6701
      %v6828 = vunpack.c.l.b16 %v6702
      %v6829 = vunpack.c.h.b16 %v6702
      %v6830 = vunpack.c.l.b16 %v6703
      %v6831 = vunpack.c.h.b16 %v6703
      %v6832 = vunpack.c.l.b16 %v6704
      %v6833 = vunpack.c.l.b16 %v6705
      %v6834 = vunpack.c.h.b16 %v6705
      %v6835 = vunpack.c.l.b16 %v6706
      %v6836 = vunpack.c.h.b16 %v6706
      %v6837 = vunpack.c.l.b16 %v6707
      %v6838 = vunpack.c.l.b16 %v6708
      %v6839 = vunpack.c.h.b16 %v6708
      %v6840 = vunpack.c.l.b16 %v6709
      %v6841 = vunpack.c.h.b16 %v6709
      %v6842 = vunpack.c.l.b16 %v6710
      %v6843 = vunpack.c.l.b16 %v6711
      %v6844 = vunpack.c.h.b16 %v6711
      %v6845 = vunpack.c.l.b16 %v6712
      %v6846 = vunpack.c.h.b16 %v6712
      %v6847 = vunpack.c.l.b16 %v6713
      %v6848 = vunpack.c.l.b16 %v6714
      %v6849 = vunpack.c.h.b16 %v6714
      %v6850 = vunpack.c.l.b16 %v6715
      %v6851 = vunpack.c.h.b16 %v6715
      %v6852 = vunpack.c.l.b16 %v6716
      %v6853 = vunpack.c.l.b16 %v6717
      %v6854 = vunpack.c.h.b16 %v6717
      %v6855 = vunpack.c.l.b16 %v6718
      %v6856 = vunpack.c.h.b16 %v6718
      %v6857 = vunpack.c.l.b16 %v6719
      %v6858 = vunpack.c.l.b16 %v6720
      %v6859 = vunpack.c.h.b16 %v6720
      %v6860 = vunpack.c.l.b16 %v6721
      %v6861 = vunpack.c.h.b16 %v6721
      %v6862 = vunpack.c.l.b16 %v6722
      %v6863 = vunpack.c.l.b16 %v6723
      %v6864 = vunpack.c.h.b16 %v6723
      %v6865 = vunpack.c.l.b16 %v6724
      %v6866 = vunpack.c.h.b16 %v6724
      %v6867 = vunpack.c.l.b16 %v6725
      %v6868 = vunpack.c.l.b16 %v6726
      %v6869 = vunpack.c.h.b16 %v6726
      %v6870 = vunpack.c.l.b16 %v6727
      %v6871 = vunpack.c.h.b16 %v6727
      %v6872 = vunpack.c.l.b16 %v6728
      %v6873 = vpack.c.b16 %v6788, %v6783
      %v6874 = vpack.c.b16 %v6789, %v6784
      %v6875 = vpack.c.b16 %v6790, %v6785
      %v6876 = vpack.c.b16 %v6791, %v6786
      %v6877 = vpack.c.b16 %v6792, %v6787
      %v6878 = vpack.c.b16 %v6798, %v6793
      %v6879 = vpack.c.b16 %v6799, %v6794
      %v6880 = vpack.c.b16 %v6800, %v6795
      %v6881 = vpack.c.b16 %v6801, %v6796
      %v6882 = vpack.c.b16 %v6802, %v6797
      %v6883 = vpack.c.b16 %v6808, %v6803
      %v6884 = vpack.c.b16 %v6809, %v6804
      %v6885 = vpack.c.b16 %v6810, %v6805
      %v6886 = vpack.c.b16 %v6811, %v6806
      %v6887 = vpack.c.b16 %v6812, %v6807
      %v6888 = vpack.c.b16 %v6818, %v6813
      %v6889 = vpack.c.b16 %v6819, %v6814
      %v6890 = vpack.c.b16 %v6820, %v6815
      %v6891 = vpack.c.b16 %v6821, %v6816
      %v6892 = vpack.c.b16 %v6822, %v6817
      %v6893 = vpack.c.b16 %v6828, %v6823
      %v6894 = vpack.c.b16 %v6829, %v6824
      %v6895 = vpack.c.b16 %v6830, %v6825
      %v6896 = vpack.c.b16 %v6831, %v6826
      %v6897 = vpack.c.b16 %v6832, %v6827
      %v6898 = vpack.c.b16 %v6838, %v6833
      %v6899 = vpack.c.b16 %v6839, %v6834
      %v6900 = vpack.c.b16 %v6840, %v6835
      %v6901 = vpack.c.b16 %v6841, %v6836
      %v6902 = vpack.c.b16 %v6842, %v6837
      %v6903 = vpack.c.b16 %v6848, %v6843
      %v6904 = vpack.c.b16 %v6849, %v6844
      %v6905 = vpack.c.b16 %v6850, %v6845
      %v6906 = vpack.c.b16 %v6851, %v6846
      %v6907 = vpack.c.b16 %v6852, %v6847
      %v6908 = vpack.c.b16 %v6858, %v6853
      %v6909 = vpack.c.b16 %v6859, %v6854
      %v6910 = vpack.c.b16 %v6860, %v6855
      %v6911 = vpack.c.b16 %v6861, %v6856
      %v6912 = vpack.c.b16 %v6862, %v6857
      %v6913 = vpack.c.b16 %v6868, %v6863
      %v6914 = vpack.c.b16 %v6869, %v6864
      %v6915 = vpack.c.b16 %v6870, %v6865
      %v6916 = vpack.c.b16 %v6871, %v6866
      %v6917 = vpack.c.b16 %v6872, %v6867
      %6963 = vmatprep.subr.bf16.mxu0 %v6909
      %6964 = vmatpush1.bf16.msra.mxu0 %v6908
      %6965 = vmatprep.subr.bf16.mxu0 %v6904
      %6966 = vmatpush1.bf16.msra.mxu0 %v6903
      %6967 = vmatprep.subr.bf16.mxu0 %v6899
      %6968 = vmatpush1.bf16.msra.mxu0 %v6898
      %6969 = vmatprep.subr.bf16.mxu0 %v6894
      %6970 = vmatpush1.bf16.msra.mxu0 %v6893
      %6971 = vmatprep.subr.bf16.mxu0 %v6889
      %6972 = vmatpush1.bf16.msra.mxu0 %v6888
      %6973 = vmatprep.subr.bf16.mxu0 %v6884
      %6974 = vmatpush1.bf16.msra.mxu0 %v6883
      %6975 = vmatprep.subr.bf16.mxu0 %v6879
      %6976 = vmatpush1.bf16.msra.mxu0 %v6878
      %6977 = vmatprep.subr.bf16.mxu0 %v6874
      %6978 = vmatpush1.bf16.msra.mxu0 %v6873
      %6979 = vmatprep.subr.bf16.mxu0 0
      %6980 = vmatpush2.bf16.msra.mxu0 0
      %6981 = vmatprep.subr.bf16.mxu0 0
      %6982 = vmatpush2.bf16.msra.mxu0 0
      %6983 = vmatprep.subr.bf16.mxu0 0
      %6984 = vmatpush2.bf16.msra.mxu0 0
      %6985 = vmatprep.subr.bf16.mxu0 0
      %6986 = vmatpush2.bf16.msra.mxu0 0
      %6987 = vmatprep.subr.bf16.mxu0 0
      %6988 = vmatpush2.bf16.msra.mxu0 0
      %6989 = vmatprep.subr.bf16.mxu0 0
      %6990 = vmatpush2.bf16.msra.mxu0 0
      %6991 = vmatprep.subr.bf16.mxu0 0
      %6992 = vmatpush2.bf16.msra.mxu0 0
      %6993 = vmatprep.subr.bf16.mxu0 %v6914
      %6994 = vmatpush2.bf16.msra.mxu0 %v6913
      %6995 = vmatprep.mubr.bf16.mxu0 %v6129
      %6996 = vmatmul.mubr.bf16.gmra.mxu0 %v5838
      %v6997 = vpop.f32.mrf.mxu0
      %v6998 = vadd.f32 0.0, %v6997
      %v6999 = vpop.f32.mrf.mxu0
      %v7000 = vadd.f32 0.0, %v6999
      %v7001 = vpop.f32.mrf.mxu0
      %v7002 = vpop.f32.mrf.mxu0
      %7003 = vdwg.mxu0
      %7004 = vmatprep.subr.bf16.mxu0 %v6911
      %7005 = vmatpush1.bf16.msra.mxu0 %v6910
      %7006 = vmatprep.subr.bf16.mxu0 %v6906
      %7007 = vmatpush1.bf16.msra.mxu0 %v6905
      %7008 = vmatprep.subr.bf16.mxu0 %v6901
      %7009 = vmatpush1.bf16.msra.mxu0 %v6900
      %7010 = vmatprep.subr.bf16.mxu0 %v6896
      %7011 = vmatpush1.bf16.msra.mxu0 %v6895
      %7012 = vmatprep.subr.bf16.mxu0 %v6891
      %7013 = vmatpush1.bf16.msra.mxu0 %v6890
      %7014 = vmatprep.subr.bf16.mxu0 %v6886
      %7015 = vmatpush1.bf16.msra.mxu0 %v6885
      %7016 = vmatprep.subr.bf16.mxu0 %v6881
      %7017 = vmatpush1.bf16.msra.mxu0 %v6880
      %7018 = vmatprep.subr.bf16.mxu0 %v6876
      %7019 = vmatpush1.bf16.msra.mxu0 %v6875
      %7020 = vmatprep.subr.bf16.mxu0 0
      %7021 = vmatpush2.bf16.msra.mxu0 0
      %7022 = vmatprep.subr.bf16.mxu0 0
      %7023 = vmatpush2.bf16.msra.mxu0 0
      %7024 = vmatprep.subr.bf16.mxu0 0
      %7025 = vmatpush2.bf16.msra.mxu0 0
      %7026 = vmatprep.subr.bf16.mxu0 0
      %7027 = vmatpush2.bf16.msra.mxu0 0
      %7028 = vmatprep.subr.bf16.mxu0 0
      %7029 = vmatpush2.bf16.msra.mxu0 0
      %7030 = vmatprep.subr.bf16.mxu0 0
      %7031 = vmatpush2.bf16.msra.mxu0 0
      %7032 = vmatprep.subr.bf16.mxu0 0
      %7033 = vmatpush2.bf16.msra.mxu0 0
      %7034 = vmatprep.subr.bf16.mxu0 %v6916
      %7035 = vmatpush2.bf16.msra.mxu0 %v6915
      %7036 = vmatprep.mubr.bf16.mxu0 %v6129
      %7037 = vmatmul.mubr.bf16.gmra.mxu0 %v5838
      %v7038 = vpop.f32.mrf.mxu0
      %v7039 = vadd.f32 0.0, %v7038
      %v7040 = vpop.f32.mrf.mxu0
      %v7041 = vadd.f32 0.0, %v7040
      %v7042 = vpop.f32.mrf.mxu0
      %v7043 = vpop.f32.mrf.mxu0
      %7044 = vdwg.mxu0
      %7045 = vmatprep.subr.bf16.mxu0 0
      %7046 = vmatpush1.bf16.msra.mxu0 %v6912
      %7047 = vmatprep.subr.bf16.mxu0 0
      %7048 = vmatpush1.bf16.msra.mxu0 %v6907
      %7049 = vmatprep.subr.bf16.mxu0 0
      %7050 = vmatpush1.bf16.msra.mxu0 %v6902
      %7051 = vmatprep.subr.bf16.mxu0 0
      %7052 = vmatpush1.bf16.msra.mxu0 %v6897
      %7053 = vmatprep.subr.bf16.mxu0 0
      %7054 = vmatpush1.bf16.msra.mxu0 %v6892
      %7055 = vmatprep.subr.bf16.mxu0 0
      %7056 = vmatpush1.bf16.msra.mxu0 %v6887
      %7057 = vmatprep.subr.bf16.mxu0 0
      %7058 = vmatpush1.bf16.msra.mxu0 %v6882
      %7059 = vmatprep.subr.bf16.mxu0 0
      %7060 = vmatpush1.bf16.msra.mxu0 %v6877
      %7061 = vmatprep.subr.bf16.mxu0 0
      %7062 = vmatpush2.bf16.msra.mxu0 0
      %7063 = vmatprep.subr.bf16.mxu0 0
      %7064 = vmatpush2.bf16.msra.mxu0 0
      %7065 = vmatprep.subr.bf16.mxu0 0
      %7066 = vmatpush2.bf16.msra.mxu0 0
      %7067 = vmatprep.subr.bf16.mxu0 0
      %7068 = vmatpush2.bf16.msra.mxu0 0
      %7069 = vmatprep.subr.bf16.mxu0 0
      %7070 = vmatpush2.bf16.msra.mxu0 0
      %7071 = vmatprep.subr.bf16.mxu0 0
      %7072 = vmatpush2.bf16.msra.mxu0 0
      %7073 = vmatprep.subr.bf16.mxu0 0
      %7074 = vmatpush2.bf16.msra.mxu0 0
      %7075 = vmatprep.subr.bf16.mxu0 0
      %7076 = vmatpush2.bf16.msra.mxu0 %v6917
      %7077 = vmatprep.mubr.bf16.mxu0 %v6129
      %7078 = vmatmul.mubr.bf16.gmra.mxu0 %v5838
      %v7079 = vpop.f32.mrf.mxu0
      %v7080 = vadd.f32 0.0, %v7079
      %v7081 = vpop.f32.mrf.mxu0
      %v7082 = vpop.f32.mrf.mxu0
      %v7083 = vpop.f32.mrf.mxu0
      %7084 = vdwg.mxu0
      %v7085 = vpack.c.bf16 %v6998, %v6998
      %v7086 = vpack.c.bf16 %v7000, %v7000
      %v7087 = vpack.c.bf16 %v7039, %v7039
      %v7088 = vpack.c.bf16 %v7041, %v7041
      %v7089 = vpack.c.bf16 %v7080, %v7080
      %s7090 = scalar_lea.vmem %s15, 1080
      %v7091 = vld [vmem:[%s7090] sm:$0xff]
      %v7092 = vld [vmem:[%s7090 + $0x8] sm:$0xff]
      %v7093 = vld [vmem:[%s7090 + $0x10] sm:$0xf]
      %v7094 = vld [vmem:[%s7090 + $0x14] sm:$0xff]
      %v7095 = vld [vmem:[%s7090 + $0x1c] sm:$0xff]
      %v7096 = vld [vmem:[%s7090 + $0x24] sm:$0xf]
      %v7097 = vld [vmem:[%s7090 + $0x28] sm:$0xff]
      %v7098 = vld [vmem:[%s7090 + $0x30] sm:$0xff]
      %v7099 = vld [vmem:[%s7090 + $0x38] sm:$0xf]
      %v7100 = vld [vmem:[%s7090 + $0x3c] sm:$0xff]
      %v7101 = vld [vmem:[%s7090 + $0x44] sm:$0xff]
      %v7102 = vld [vmem:[%s7090 + $0x4c] sm:$0xf]
      %v7103 = vld [vmem:[%s7090 + $0x50] sm:$0xff]
      %v7104 = vld [vmem:[%s7090 + $0x58] sm:$0xff]
      %v7105 = vld [vmem:[%s7090 + $0x60] sm:$0xf]
      %v7106 = vld [vmem:[%s7090 + $0x64] sm:$0xff]
      %v7107 = vld [vmem:[%s7090 + $0x6c] sm:$0xff]
      %v7108 = vld [vmem:[%s7090 + $0x74] sm:$0xf]
      %v7109 = vld [vmem:[%s7090 + $0x78] sm:$0xff]
      %v7110 = vld [vmem:[%s7090 + $0x80] sm:$0xff]
      %v7111 = vld [vmem:[%s7090 + $0x88] sm:$0xf]
      %v7112 = vld [vmem:[%s7090 + $0x8c] sm:$0xff]
      %v7113 = vld [vmem:[%s7090 + $0x94] sm:$0xff]
      %v7114 = vld [vmem:[%s7090 + $0x9c] sm:$0xf]
      %v7115 = vld [vmem:[%s7090 + $0xa0] sm:$0xff]
      %v7116 = vld [vmem:[%s7090 + $0xa8] sm:$0xff]
      %v7117 = vld [vmem:[%s7090 + $0xb0] sm:$0xf]
      %v7118 = vld [vmem:[%s7090 + $0xb4] sm:$0xff]
      %v7119 = vld [vmem:[%s7090 + $0xbc] sm:$0xff]
      %v7120 = vld [vmem:[%s7090 + $0xc4] sm:$0xf]
      %v7121 = vld [vmem:[%s7090 + $0xc8] sm:$0xff]
      %v7122 = vld [vmem:[%s7090 + $0xd0] sm:$0xff]
      %v7123 = vld [vmem:[%s7090 + $0xd8] sm:$0xf]
      %v7124 = vld [vmem:[%s7090 + $0xdc] sm:$0xff]
      %v7125 = vld [vmem:[%s7090 + $0xe4] sm:$0xff]
      %v7126 = vld [vmem:[%s7090 + $0xec] sm:$0xf]
      %v7127 = vld [vmem:[%s7090 + $0xf0] sm:$0xff]
      %v7128 = vld [vmem:[%s7090 + $0xf8] sm:$0xff]
      %v7129 = vld [vmem:[%s7090 + $0x100] sm:$0xf]
      %v7130 = vld [vmem:[%s7090 + $0x104] sm:$0xff]
      %v7131 = vld [vmem:[%s7090 + $0x10c] sm:$0xff]
      %v7132 = vld [vmem:[%s7090 + $0x114] sm:$0xf]
      %v7133 = vld [vmem:[%s7090 + $0x118] sm:$0xff]
      %v7134 = vld [vmem:[%s7090 + $0x120] sm:$0xff]
      %v7135 = vld [vmem:[%s7090 + $0x128] sm:$0xf]
      %v7136 = vld [vmem:[%s7090 + $0x12c] sm:$0xff]
      %v7137 = vld [vmem:[%s7090 + $0x134] sm:$0xff]
      %v7138 = vld [vmem:[%s7090 + $0x13c] sm:$0xf]
      %v7139 = vld [vmem:[%s7090 + $0x140] sm:$0xff]
      %v7140 = vld [vmem:[%s7090 + $0x148] sm:$0xff]
      %v7141 = vld [vmem:[%s7090 + $0x150] sm:$0xf]
      %v7142 = vld [vmem:[%s7090 + $0x154] sm:$0xff]
      %v7143 = vld [vmem:[%s7090 + $0x15c] sm:$0xff]
      %v7144 = vld [vmem:[%s7090 + $0x164] sm:$0xf]
      %v7199 = vunpack.c.l.b16 %v7091
      %v7200 = vunpack.c.h.b16 %v7091
      %v7201 = vunpack.c.l.b16 %v7092
      %v7202 = vunpack.c.h.b16 %v7092
      %v7203 = vunpack.c.l.b16 %v7093
      %v7204 = vunpack.c.l.b16 %v7094
      %v7205 = vunpack.c.h.b16 %v7094
      %v7206 = vunpack.c.l.b16 %v7095
      %v7207 = vunpack.c.h.b16 %v7095
      %v7208 = vunpack.c.l.b16 %v7096
      %v7209 = vunpack.c.l.b16 %v7097
      %v7210 = vunpack.c.h.b16 %v7097
      %v7211 = vunpack.c.l.b16 %v7098
      %v7212 = vunpack.c.h.b16 %v7098
      %v7213 = vunpack.c.l.b16 %v7099
      %v7214 = vunpack.c.l.b16 %v7100
      %v7215 = vunpack.c.h.b16 %v7100
      %v7216 = vunpack.c.l.b16 %v7101
      %v7217 = vunpack.c.h.b16 %v7101
      %v7218 = vunpack.c.l.b16 %v7102
      %v7219 = vunpack.c.l.b16 %v7103
      %v7220 = vunpack.c.h.b16 %v7103
      %v7221 = vunpack.c.l.b16 %v7104
      %v7222 = vunpack.c.h.b16 %v7104
      %v7223 = vunpack.c.l.b16 %v7105
      %v7224 = vunpack.c.l.b16 %v7106
      %v7225 = vunpack.c.h.b16 %v7106
      %v7226 = vunpack.c.l.b16 %v7107
      %v7227 = vunpack.c.h.b16 %v7107
      %v7228 = vunpack.c.l.b16 %v7108
      %v7229 = vunpack.c.l.b16 %v7109
      %v7230 = vunpack.c.h.b16 %v7109
      %v7231 = vunpack.c.l.b16 %v7110
      %v7232 = vunpack.c.h.b16 %v7110
      %v7233 = vunpack.c.l.b16 %v7111
      %v7234 = vunpack.c.l.b16 %v7112
      %v7235 = vunpack.c.h.b16 %v7112
      %v7236 = vunpack.c.l.b16 %v7113
      %v7237 = vunpack.c.h.b16 %v7113
      %v7238 = vunpack.c.l.b16 %v7114
      %v7239 = vunpack.c.l.b16 %v7115
      %v7240 = vunpack.c.h.b16 %v7115
      %v7241 = vunpack.c.l.b16 %v7116
      %v7242 = vunpack.c.h.b16 %v7116
      %v7243 = vunpack.c.l.b16 %v7117
      %v7244 = vunpack.c.l.b16 %v7118
      %v7245 = vunpack.c.h.b16 %v7118
      %v7246 = vunpack.c.l.b16 %v7119
      %v7247 = vunpack.c.h.b16 %v7119
      %v7248 = vunpack.c.l.b16 %v7120
      %v7249 = vunpack.c.l.b16 %v7121
      %v7250 = vunpack.c.h.b16 %v7121
      %v7251 = vunpack.c.l.b16 %v7122
      %v7252 = vunpack.c.h.b16 %v7122
      %v7253 = vunpack.c.l.b16 %v7123
      %v7254 = vunpack.c.l.b16 %v7124
      %v7255 = vunpack.c.h.b16 %v7124
      %v7256 = vunpack.c.l.b16 %v7125
      %v7257 = vunpack.c.h.b16 %v7125
      %v7258 = vunpack.c.l.b16 %v7126
      %v7259 = vunpack.c.l.b16 %v7127
      %v7260 = vunpack.c.h.b16 %v7127
      %v7261 = vunpack.c.l.b16 %v7128
      %v7262 = vunpack.c.h.b16 %v7128
      %v7263 = vunpack.c.l.b16 %v7129
      %v7264 = vunpack.c.l.b16 %v7130
      %v7265 = vunpack.c.h.b16 %v7130
      %v7266 = vunpack.c.l.b16 %v7131
      %v7267 = vunpack.c.h.b16 %v7131
      %v7268 = vunpack.c.l.b16 %v7132
      %v7269 = vunpack.c.l.b16 %v7133
      %v7270 = vunpack.c.h.b16 %v7133
      %v7271 = vunpack.c.l.b16 %v7134
      %v7272 = vunpack.c.h.b16 %v7134
      %v7273 = vunpack.c.l.b16 %v7135
      %v7274 = vunpack.c.l.b16 %v7136
      %v7275 = vunpack.c.h.b16 %v7136
      %v7276 = vunpack.c.l.b16 %v7137
      %v7277 = vunpack.c.h.b16 %v7137
      %v7278 = vunpack.c.l.b16 %v7138
      %v7279 = vunpack.c.l.b16 %v7139
      %v7280 = vunpack.c.h.b16 %v7139
      %v7281 = vunpack.c.l.b16 %v7140
      %v7282 = vunpack.c.h.b16 %v7140
      %v7283 = vunpack.c.l.b16 %v7141
      %v7284 = vunpack.c.l.b16 %v7142
      %v7285 = vunpack.c.h.b16 %v7142
      %v7286 = vunpack.c.l.b16 %v7143
      %v7287 = vunpack.c.h.b16 %v7143
      %v7288 = vunpack.c.l.b16 %v7144
      %v7289 = vpack.c.b16 %v7204, %v7199
      %v7290 = vpack.c.b16 %v7205, %v7200
      %v7291 = vpack.c.b16 %v7206, %v7201
      %v7292 = vpack.c.b16 %v7207, %v7202
      %v7293 = vpack.c.b16 %v7208, %v7203
      %v7294 = vpack.c.b16 %v7214, %v7209
      %v7295 = vpack.c.b16 %v7215, %v7210
      %v7296 = vpack.c.b16 %v7216, %v7211
      %v7297 = vpack.c.b16 %v7217, %v7212
      %v7298 = vpack.c.b16 %v7218, %v7213
      %v7299 = vpack.c.b16 %v7224, %v7219
      %v7300 = vpack.c.b16 %v7225, %v7220
      %v7301 = vpack.c.b16 %v7226, %v7221
      %v7302 = vpack.c.b16 %v7227, %v7222
      %v7303 = vpack.c.b16 %v7228, %v7223
      %v7304 = vpack.c.b16 %v7234, %v7229
      %v7305 = vpack.c.b16 %v7235, %v7230
      %v7306 = vpack.c.b16 %v7236, %v7231
      %v7307 = vpack.c.b16 %v7237, %v7232
      %v7308 = vpack.c.b16 %v7238, %v7233
      %v7309 = vpack.c.b16 %v7244, %v7239
      %v7310 = vpack.c.b16 %v7245, %v7240
      %v7311 = vpack.c.b16 %v7246, %v7241
      %v7312 = vpack.c.b16 %v7247, %v7242
      %v7313 = vpack.c.b16 %v7248, %v7243
      %v7314 = vpack.c.b16 %v7254, %v7249
      %v7315 = vpack.c.b16 %v7255, %v7250
      %v7316 = vpack.c.b16 %v7256, %v7251
      %v7317 = vpack.c.b16 %v7257, %v7252
      %v7318 = vpack.c.b16 %v7258, %v7253
      %v7319 = vpack.c.b16 %v7264, %v7259
      %v7320 = vpack.c.b16 %v7265, %v7260
      %v7321 = vpack.c.b16 %v7266, %v7261
      %v7322 = vpack.c.b16 %v7267, %v7262
      %v7323 = vpack.c.b16 %v7268, %v7263
      %v7324 = vpack.c.b16 %v7274, %v7269
      %v7325 = vpack.c.b16 %v7275, %v7270
      %v7326 = vpack.c.b16 %v7276, %v7271
      %v7327 = vpack.c.b16 %v7277, %v7272
      %v7328 = vpack.c.b16 %v7278, %v7273
      %v7329 = vpack.c.b16 %v7284, %v7279
      %v7330 = vpack.c.b16 %v7285, %v7280
      %v7331 = vpack.c.b16 %v7286, %v7281
      %v7332 = vpack.c.b16 %v7287, %v7282
      %v7333 = vpack.c.b16 %v7288, %v7283
      %7379 = vmatprep.subr.bf16.mxu0 %v7325
      %7380 = vmatpush1.bf16.msra.mxu0 %v7324
      %7381 = vmatprep.subr.bf16.mxu0 %v7320
      %7382 = vmatpush1.bf16.msra.mxu0 %v7319
      %7383 = vmatprep.subr.bf16.mxu0 %v7315
      %7384 = vmatpush1.bf16.msra.mxu0 %v7314
      %7385 = vmatprep.subr.bf16.mxu0 %v7310
      %7386 = vmatpush1.bf16.msra.mxu0 %v7309
      %7387 = vmatprep.subr.bf16.mxu0 %v7305
      %7388 = vmatpush1.bf16.msra.mxu0 %v7304
      %7389 = vmatprep.subr.bf16.mxu0 %v7300
      %7390 = vmatpush1.bf16.msra.mxu0 %v7299
      %7391 = vmatprep.subr.bf16.mxu0 %v7295
      %7392 = vmatpush1.bf16.msra.mxu0 %v7294
      %7393 = vmatprep.subr.bf16.mxu0 %v7290
      %7394 = vmatpush1.bf16.msra.mxu0 %v7289
      %7395 = vmatprep.subr.bf16.mxu0 0
      %7396 = vmatpush2.bf16.msra.mxu0 0
      %7397 = vmatprep.subr.bf16.mxu0 0
      %7398 = vmatpush2.bf16.msra.mxu0 0
      %7399 = vmatprep.subr.bf16.mxu0 0
      %7400 = vmatpush2.bf16.msra.mxu0 0
      %7401 = vmatprep.subr.bf16.mxu0 0
      %7402 = vmatpush2.bf16.msra.mxu0 0
      %7403 = vmatprep.subr.bf16.mxu0 0
      %7404 = vmatpush2.bf16.msra.mxu0 0
      %7405 = vmatprep.subr.bf16.mxu0 0
      %7406 = vmatpush2.bf16.msra.mxu0 0
      %7407 = vmatprep.subr.bf16.mxu0 0
      %7408 = vmatpush2.bf16.msra.mxu0 0
      %7409 = vmatprep.subr.bf16.mxu0 %v7330
      %7410 = vmatpush2.bf16.msra.mxu0 %v7329
      %7411 = vmatprep.mubr.bf16.mxu0 %v6129
      %7412 = vmatmul.mubr.bf16.gmra.mxu0 %v5838
      %v7413 = vpop.f32.mrf.mxu0
      %v7414 = vadd.f32 0.0, %v7413
      %v7415 = vpop.f32.mrf.mxu0
      %v7416 = vadd.f32 0.0, %v7415
      %v7417 = vpop.f32.mrf.mxu0
      %v7418 = vpop.f32.mrf.mxu0
      %7419 = vdwg.mxu0
      %7420 = vmatprep.subr.bf16.mxu0 %v7327
      %7421 = vmatpush1.bf16.msra.mxu0 %v7326
      %7422 = vmatprep.subr.bf16.mxu0 %v7322
      %7423 = vmatpush1.bf16.msra.mxu0 %v7321
      %7424 = vmatprep.subr.bf16.mxu0 %v7317
      %7425 = vmatpush1.bf16.msra.mxu0 %v7316
      %7426 = vmatprep.subr.bf16.mxu0 %v7312
      %7427 = vmatpush1.bf16.msra.mxu0 %v7311
      %7428 = vmatprep.subr.bf16.mxu0 %v7307
      %7429 = vmatpush1.bf16.msra.mxu0 %v7306
      %7430 = vmatprep.subr.bf16.mxu0 %v7302
      %7431 = vmatpush1.bf16.msra.mxu0 %v7301
      %7432 = vmatprep.subr.bf16.mxu0 %v7297
      %7433 = vmatpush1.bf16.msra.mxu0 %v7296
      %7434 = vmatprep.subr.bf16.mxu0 %v7292
      %7435 = vmatpush1.bf16.msra.mxu0 %v7291
      %7436 = vmatprep.subr.bf16.mxu0 0
      %7437 = vmatpush2.bf16.msra.mxu0 0
      %7438 = vmatprep.subr.bf16.mxu0 0
      %7439 = vmatpush2.bf16.msra.mxu0 0
      %7440 = vmatprep.subr.bf16.mxu0 0
      %7441 = vmatpush2.bf16.msra.mxu0 0
      %7442 = vmatprep.subr.bf16.mxu0 0
      %7443 = vmatpush2.bf16.msra.mxu0 0
      %7444 = vmatprep.subr.bf16.mxu0 0
      %7445 = vmatpush2.bf16.msra.mxu0 0
      %7446 = vmatprep.subr.bf16.mxu0 0
      %7447 = vmatpush2.bf16.msra.mxu0 0
      %7448 = vmatprep.subr.bf16.mxu0 0
      %7449 = vmatpush2.bf16.msra.mxu0 0
      %7450 = vmatprep.subr.bf16.mxu0 %v7332
      %7451 = vmatpush2.bf16.msra.mxu0 %v7331
      %7452 = vmatprep.mubr.bf16.mxu0 %v6129
      %7453 = vmatmul.mubr.bf16.gmra.mxu0 %v5838
      %v7454 = vpop.f32.mrf.mxu0
      %v7455 = vadd.f32 0.0, %v7454
      %v7456 = vpop.f32.mrf.mxu0
      %v7457 = vadd.f32 0.0, %v7456
      %v7458 = vpop.f32.mrf.mxu0
      %v7459 = vpop.f32.mrf.mxu0
      %7460 = vdwg.mxu0
      %7461 = vmatprep.subr.bf16.mxu0 0
      %7462 = vmatpush1.bf16.msra.mxu0 %v7328
      %7463 = vmatprep.subr.bf16.mxu0 0
      %7464 = vmatpush1.bf16.msra.mxu0 %v7323
      %7465 = vmatprep.subr.bf16.mxu0 0
      %7466 = vmatpush1.bf16.msra.mxu0 %v7318
      %7467 = vmatprep.subr.bf16.mxu0 0
      %7468 = vmatpush1.bf16.msra.mxu0 %v7313
      %7469 = vmatprep.subr.bf16.mxu0 0
      %7470 = vmatpush1.bf16.msra.mxu0 %v7308
      %7471 = vmatprep.subr.bf16.mxu0 0
      %7472 = vmatpush1.bf16.msra.mxu0 %v7303
      %7473 = vmatprep.subr.bf16.mxu0 0
      %7474 = vmatpush1.bf16.msra.mxu0 %v7298
      %7475 = vmatprep.subr.bf16.mxu0 0
      %7476 = vmatpush1.bf16.msra.mxu0 %v7293
      %7477 = vmatprep.subr.bf16.mxu0 0
      %7478 = vmatpush2.bf16.msra.mxu0 0
      %7479 = vmatprep.subr.bf16.mxu0 0
      %7480 = vmatpush2.bf16.msra.mxu0 0
      %7481 = vmatprep.subr.bf16.mxu0 0
      %7482 = vmatpush2.bf16.msra.mxu0 0
      %7483 = vmatprep.subr.bf16.mxu0 0
      %7484 = vmatpush2.bf16.msra.mxu0 0
      %7485 = vmatprep.subr.bf16.mxu0 0
      %7486 = vmatpush2.bf16.msra.mxu0 0
      %7487 = vmatprep.subr.bf16.mxu0 0
      %7488 = vmatpush2.bf16.msra.mxu0 0
      %7489 = vmatprep.subr.bf16.mxu0 0
      %7490 = vmatpush2.bf16.msra.mxu0 0
      %7491 = vmatprep.subr.bf16.mxu0 0
      %7492 = vmatpush2.bf16.msra.mxu0 %v7333
      %7493 = vmatprep.mubr.bf16.mxu0 %v6129
      %7494 = vmatmul.mubr.bf16.gmra.mxu0 %v5838
      %v7495 = vpop.f32.mrf.mxu0
      %v7496 = vadd.f32 0.0, %v7495
      %v7497 = vpop.f32.mrf.mxu0
      %v7498 = vpop.f32.mrf.mxu0
      %v7499 = vpop.f32.mrf.mxu0
      %7500 = vdwg.mxu0
      %v7501 = vpack.c.bf16 %v7414, %v7414
      %v7502 = vpack.c.bf16 %v7416, %v7416
      %v7503 = vpack.c.bf16 %v7455, %v7455
      %v7504 = vpack.c.bf16 %v7457, %v7457
      %v7505 = vpack.c.bf16 %v7496, %v7496
      %v7511 = vrot.slane %v6669, 4
      %v7512 = vrot.slane %v6670, 4
      %v7513 = vrot.slane %v6671, 4
      %v7514 = vrot.slane %v6672, 4
      %v7515 = vrot.slane %v6673, 4
      %v7521 = vrot.slane %v7501, 4
      %v7522 = vrot.slane %v7502, 4
      %v7523 = vrot.slane %v7503, 4
      %v7524 = vrot.slane %v7504, 4
      %v7525 = vrot.slane %v7505, 4
      %v7528 = vsel %vm2186, %v6253, %v7511
      %v7532 = vsel %vm2186, %v6254, %v7512
      %v7536 = vsel %vm2186, %v6255, %v7513
      %v7540 = vsel %vm2186, %v6256, %v7514
      %v7544 = vsel %vm2186, %v6257, %v7515
      %v7548 = vsel %vm2186, %v7085, %v7521
      %v7552 = vsel %vm2186, %v7086, %v7522
      %v7556 = vsel %vm2186, %v7087, %v7523
      %v7560 = vsel %vm2186, %v7088, %v7524
      %v7564 = vsel %vm2186, %v7089, %v7525
      %v7566 = vld [vmem:[%s16] sm:$0x3]
      %v7567 = vld [vmem:[%s17] sm:$0x7]
      %7569 = vset.pattern.permute.xlu0 0
      %7570 = vperm.xlu0 %7569, %v7567
      %v7571 = vpop.permute.xlu0 %7570
      %vm7573 = vcmask 261120
      %v7575 = vsel %vm7573, %v7566, 0
      %7577 = vmatprep.subr.bf16.mxu0 0
      %7578 = vmatpush1.bf16.msra.mxu0 0
      %7579 = vmatprep.subr.bf16.mxu0 0
      %7580 = vmatpush1.bf16.msra.mxu0 0
      %7581 = vmatprep.subr.bf16.mxu0 0
      %7582 = vmatpush1.bf16.msra.mxu0 0
      %7583 = vmatprep.subr.bf16.mxu0 0
      %7584 = vmatpush1.bf16.msra.mxu0 0
      %7585 = vmatprep.subr.bf16.mxu0 0
      %7586 = vmatpush1.bf16.msra.mxu0 0
      %7587 = vmatprep.subr.bf16.mxu0 0
      %7588 = vmatpush1.bf16.msra.mxu0 0
      %7589 = vmatprep.subr.bf16.mxu0 %v7552
      %7590 = vmatpush1.bf16.msra.mxu0 %v7548
      %7591 = vmatprep.subr.bf16.mxu0 %v7532
      %7592 = vmatpush1.bf16.msra.mxu0 %v7528
      %7593 = vmatprep.subr.bf16.mxu0 0
      %7594 = vmatpush2.bf16.msra.mxu0 0
      %7595 = vmatprep.subr.bf16.mxu0 0
      %7596 = vmatpush2.bf16.msra.mxu0 0
      %7597 = vmatprep.subr.bf16.mxu0 0
      %7598 = vmatpush2.bf16.msra.mxu0 0
      %7599 = vmatprep.subr.bf16.mxu0 0
      %7600 = vmatpush2.bf16.msra.mxu0 0
      %7601 = vmatprep.subr.bf16.mxu0 0
      %7602 = vmatpush2.bf16.msra.mxu0 0
      %7603 = vmatprep.subr.bf16.mxu0 0
      %7604 = vmatpush2.bf16.msra.mxu0 0
      %7605 = vmatprep.subr.bf16.mxu0 0
      %7606 = vmatpush2.bf16.msra.mxu0 0
      %7607 = vmatprep.subr.bf16.mxu0 0
      %7608 = vmatpush2.bf16.msra.mxu0 0
      %7609 = vmatprep.mubr.bf16.mxu0 0
      %7610 = vmatmul.mubr.bf16.gmra.mxu0 %v7575
      %v7611 = vpop.f32.mrf.mxu0
      %v7612 = vadd.f32 %v7571, %v7611
      %v7613 = vpop.f32.mrf.mxu0
      %v7614 = vadd.f32 %v7571, %v7613
      %v7615 = vpop.f32.mrf.mxu0
      %v7616 = vpop.f32.mrf.mxu0
      %7617 = vdwg.mxu0
      %7618 = vmatprep.subr.bf16.mxu0 0
      %7619 = vmatpush1.bf16.msra.mxu0 0
      %7620 = vmatprep.subr.bf16.mxu0 0
      %7621 = vmatpush1.bf16.msra.mxu0 0
      %7622 = vmatprep.subr.bf16.mxu0 0
      %7623 = vmatpush1.bf16.msra.mxu0 0
      %7624 = vmatprep.subr.bf16.mxu0 0
      %7625 = vmatpush1.bf16.msra.mxu0 0
      %7626 = vmatprep.subr.bf16.mxu0 0
      %7627 = vmatpush1.bf16.msra.mxu0 0
      %7628 = vmatprep.subr.bf16.mxu0 0
      %7629 = vmatpush1.bf16.msra.mxu0 0
      %7630 = vmatprep.subr.bf16.mxu0 %v7560
      %7631 = vmatpush1.bf16.msra.mxu0 %v7556
      %7632 = vmatprep.subr.bf16.mxu0 %v7540
      %7633 = vmatpush1.bf16.msra.mxu0 %v7536
      %7634 = vmatprep.subr.bf16.mxu0 0
      %7635 = vmatpush2.bf16.msra.mxu0 0
      %7636 = vmatprep.subr.bf16.mxu0 0
      %7637 = vmatpush2.bf16.msra.mxu0 0
      %7638 = vmatprep.subr.bf16.mxu0 0
      %7639 = vmatpush2.bf16.msra.mxu0 0
      %7640 = vmatprep.subr.bf16.mxu0 0
      %7641 = vmatpush2.bf16.msra.mxu0 0
      %7642 = vmatprep.subr.bf16.mxu0 0
      %7643 = vmatpush2.bf16.msra.mxu0 0
      %7644 = vmatprep.subr.bf16.mxu0 0
      %7645 = vmatpush2.bf16.msra.mxu0 0
      %7646 = vmatprep.subr.bf16.mxu0 0
      %7647 = vmatpush2.bf16.msra.mxu0 0
      %7648 = vmatprep.subr.bf16.mxu0 0
      %7649 = vmatpush2.bf16.msra.mxu0 0
      %7650 = vmatprep.mubr.bf16.mxu0 0
      %7651 = vmatmul.mubr.bf16.gmra.mxu0 %v7575
      %v7652 = vpop.f32.mrf.mxu0
      %v7653 = vadd.f32 %v7571, %v7652
      %v7654 = vpop.f32.mrf.mxu0
      %v7655 = vadd.f32 %v7571, %v7654
      %v7656 = vpop.f32.mrf.mxu0
      %v7657 = vpop.f32.mrf.mxu0
      %7658 = vdwg.mxu0
      %7659 = vmatprep.subr.bf16.mxu0 0
      %7660 = vmatpush1.bf16.msra.mxu0 0
      %7661 = vmatprep.subr.bf16.mxu0 0
      %7662 = vmatpush1.bf16.msra.mxu0 0
      %7663 = vmatprep.subr.bf16.mxu0 0
      %7664 = vmatpush1.bf16.msra.mxu0 0
      %7665 = vmatprep.subr.bf16.mxu0 0
      %7666 = vmatpush1.bf16.msra.mxu0 0
      %7667 = vmatprep.subr.bf16.mxu0 0
      %7668 = vmatpush1.bf16.msra.mxu0 0
      %7669 = vmatprep.subr.bf16.mxu0 0
      %7670 = vmatpush1.bf16.msra.mxu0 0
      %7671 = vmatprep.subr.bf16.mxu0 0
      %7672 = vmatpush1.bf16.msra.mxu0 %v7564
      %7673 = vmatprep.subr.bf16.mxu0 0
      %7674 = vmatpush1.bf16.msra.mxu0 %v7544
      %7675 = vmatprep.subr.bf16.mxu0 0
      %7676 = vmatpush2.bf16.msra.mxu0 0
      %7677 = vmatprep.subr.bf16.mxu0 0
      %7678 = vmatpush2.bf16.msra.mxu0 0
      %7679 = vmatprep.subr.bf16.mxu0 0
      %7680 = vmatpush2.bf16.msra.mxu0 0
      %7681 = vmatprep.subr.bf16.mxu0 0
      %7682 = vmatpush2.bf16.msra.mxu0 0
      %7683 = vmatprep.subr.bf16.mxu0 0
      %7684 = vmatpush2.bf16.msra.mxu0 0
      %7685 = vmatprep.subr.bf16.mxu0 0
      %7686 = vmatpush2.bf16.msra.mxu0 0
      %7687 = vmatprep.subr.bf16.mxu0 0
      %7688 = vmatpush2.bf16.msra.mxu0 0
      %7689 = vmatprep.subr.bf16.mxu0 0
      %7690 = vmatpush2.bf16.msra.mxu0 0
      %7691 = vmatprep.mubr.bf16.mxu0 0
      %7692 = vmatmul.mubr.bf16.gmra.mxu0 %v7575
      %v7693 = vpop.f32.mrf.mxu0
      %v7694 = vadd.f32 %v7571, %v7693
      %v7695 = vpop.f32.mrf.mxu0
      %v7696 = vpop.f32.mrf.mxu0
      %v7697 = vpop.f32.mrf.mxu0
      %7698 = vdwg.mxu0
      %v7699 = vtanh.pop %v7612
      %v7700 = vtanh.pop %v7614
      %v7701 = vtanh.pop %v7653
      %v7702 = vtanh.pop %v7655
      %v7703 = vtanh.pop %v7694
      %v7708 = vcombine.low %v7699, %v7700
      %v7709 = vcombine.low %v7701, %v7702
      %7712 = vst [vmem:[%s575] sm:$0x77] %v7708
      %7713 = vst [vmem:[%s575 + $0x8] sm:$0x77] %v7709
      %vm7714 = vcmask 518144
      %7715 = vst.msk [vmem:[%s575 + $0x10] sm:$0x7] %vm7714, %v7703
      %p7716 = scmp.lt.s32.totalorder %s29, 1
      %s7717 = scalar_select %p7716, %s29, 1
      %s7718 = smul.addr %s7717, 5
      %s7719 = smul.addr %s7718, 4
      %s7720 = scalar_lea.vmem %s18, %s7719
      // Predicated region
      $region93: #{forward.1} parent=91 // pred_check
        %p7721 = pneg %p430
      $region94: #{forward.1} parent=91 // pred_check_branch
        %7723 = sbr.rel (%p7721) target = $region96
      $region95: #{forward.1} parent=91 // pred_region
        _
      $region96: #{forward.1} parent=91 // pred_fallthru
        _
    $region92: #{forward.1} parent=5 // pred_fallthru
      _
    %p7724 = scmp.le.s32.totalorder 2, %s24
    // Predicated region
    $region97: #{forward.1} parent=5 // pred_check
      %p7725 = pneg %p7724
    $region98: #{forward.1} parent=5 // pred_check_branch
      %7727 = sbr.rel (%p7725) target = $region100
    $region99: #{forward.1} parent=5 // pred_region
      %s7728 = ssub.s32 %s24, 2
      // Predicated region
      $region101: #{forward.1} parent=99 // pred_check
        %p7729 = pneg %p436
      $region102: #{forward.1} parent=99 // pred_check_branch
        %7731 = sbr.rel (%p7729) target = $region104
      $region103: #{forward.1} parent=99 // pred_region
        %p7732 = scmp.lt.s32.totalorder %s30, 1
        %s7733 = scalar_select %p7732, %s30, 1
        %s7734 = smul.addr %s7733, 5
        %s7735 = smul.addr %s7734, 4
        %s7736 = scalar_lea.vmem %s18, %s7735
      $region104: #{forward.1} parent=99 // pred_fallthru
        _
    $region100: #{forward.1} parent=5 // pred_fallthru
      _
  $region6: #{forward.1} parent=0 // loop_footer
    %s28 = sadd.s32 1, %s24
  $region7: #{forward.1} parent=0 // loop_footer_branch
    %23 = sbr.rel target = $region3
  $region8: #{forward.1} parent=0 // loop_exit
    _

</llo_original>
